<compile_context>
chip_gen: v7x
topology: tpu7x:2x2x1
jax: 0.10.0
libtpu: 0.0.40
codegen_flags: <defaults>
</compile_context>

<pallas_src>
import numpy as np
import jax
import jax.numpy as jnp
from jax.experimental import pallas as pl
from jax.experimental.pallas import tpu as pltpu

# ---------------------------------------------------------------------------
# Static geometry for the 16x16 test input (all Python ints -> fully unrolled).
# ---------------------------------------------------------------------------
H0 = W0 = 16                  # conv1/conv2 spatial size
NPIX1 = H0 * W0               # 256 pixels in stage 1
K1COLS = 5 * 5 * 3            # conv1 im2col contraction (75)
K1PAD = 80                    # padded to a multiple of 8

HO2 = (H0 - 3) // 2 + 1       # 7   : maxpool1 output / conv3 spatial
WP2 = HO2 + 2 * 2             # 11  : conv3 padded grid width (padding=2)
NF2 = WP2 * WP2               # 121 : flattened padded grid, stage 2
L2 = (HO2 - 1) * WP2 + HO2    # 73  : rows per stage-2 tap matmul

HO3 = (HO2 - 3) // 2 + 1      # 3   : maxpool2 output spatial
WP3 = HO3 + 2 * 3             # 9   : conv5 padded grid width (padding=3)
NF3 = WP3 * WP3               # 81  : flattened padded grid, stage 3
HO5 = WP3 - 3 + 1             # 7   : conv5/conv6/conv7 spatial
L3 = (HO5 - 1) * WP3 + HO5    # 61  : rows per stage-3 tap matmul


# ---------------------------------------------------------------------------
# Fused forward kernel: one grid step == one image, everything stays in VMEM.
# ---------------------------------------------------------------------------
def _fused_kernel(patches_ref,
                  w1_ref, b1_ref, w2_ref, b2_ref,
                  w3_ref, b3_ref, w4_ref, b4_ref,
                  w5_ref, b5_ref, w6_ref, b6_ref,
                  w7_ref, b7_ref,
                  o_ref,
                  a2_ref, xf1_ref, xf2_ref):
    f32 = jnp.float32
    bf16 = jnp.bfloat16

    # ---- stage 1: conv1 (im2col, K=80) + ReLU, conv2 (1x1) + ReLU -----------
    # processed in 128-row chunks to keep the live f32 accumulators small.
    for c in range(NPIX1 // 128):
        p = patches_ref[0, pl.ds(c * 128, 128), :]                    # (128, 80) bf16
        h1 = jnp.dot(p, w1_ref[...], preferred_element_type=f32)
        h1 = jnp.maximum(h1 + b1_ref[...], 0.0).astype(bf16)          # (128, 96)
        h2 = jnp.dot(h1, w2_ref[...], preferred_element_type=f32)
        h2 = jnp.maximum(h2 + b2_ref[...], 0.0)                       # (128, 96) f32
        a2_ref[pl.ds(c * 128, 128), :] = h2

    # ---- maxpool1: 3x3 / stride 2 on the 16x16 grid -> 7x7 ------------------
    # written (including the stride-2 subsample) straight into the zero-padded
    # flattened 11x11 grid used by conv3.
    xf1_ref[...] = jnp.zeros_like(xf1_ref)
    for oi in range(HO2):
        r0 = a2_ref[pl.ds((2 * oi + 0) * W0, W0), :]
        r1 = a2_ref[pl.ds((2 * oi + 1) * W0, W0), :]
        r2 = a2_ref[pl.ds((2 * oi + 2) * W0, W0), :]
        hmax = jnp.maximum(jnp.maximum(r0, r1), r2)                   # (16, 96)
        cols = [jnp.max(hmax[2 * oj:2 * oj + 3, :], axis=0, keepdims=True)
                for oj in range(HO2)]
        xf1_ref[pl.ds((2 + oi) * WP2 + 2, HO2), :] = jnp.concatenate(cols, axis=0)

    # ---- stage 2: conv3 (5x5) + ReLU, conv4 (1x1) + ReLU --------------------
    # one (L2, 96) @ (96, 192) dot per (kh, kw) tap over the flattened grid.
    xf1 = xf1_ref[...].astype(bf16)                                   # (121, 96)
    acc3 = jnp.zeros((L2, 192), f32)
    for kh in range(5):
        for kw in range(5):
            d = kh * WP2 + kw
            acc3 = acc3 + jnp.dot(xf1[d:d + L2, :], w3_ref[kh * 5 + kw],
                                  preferred_element_type=f32)
    a3 = jnp.maximum(acc3 + b3_ref[...], 0.0).astype(bf16)
    a4 = jnp.dot(a3, w4_ref[...], preferred_element_type=f32)
    a4 = jnp.maximum(a4 + b4_ref[...], 0.0)                           # (73, 192) f32

    # ---- maxpool2: 3x3 / stride 2 on the 7x7 grid -> 3x3 --------------------
    # written into the zero-padded flattened 9x9 grid used by conv5 (padding=3).
    xf2_ref[...] = jnp.zeros_like(xf2_ref)
    for oi in range(HO3):
        rows = [a4[(2 * oi + kh) * WP2:(2 * oi + kh) * WP2 + HO2, :]
                for kh in range(3)]
        hmax = jnp.maximum(jnp.maximum(rows[0], rows[1]), rows[2])    # (7, 192)
        cols = [jnp.max(hmax[2 * oj:2 * oj + 3, :], axis=0, keepdims=True)
                for oj in range(HO3)]
        xf2_ref[pl.ds((3 + oi) * WP3 + 3, HO3), :] = jnp.concatenate(cols, axis=0)

    # ---- stage 3: conv5 (3x3, pad 3) + ReLU, conv6 (1x1) + ReLU,
    #               conv7 (1x1) + ReLU, fused 6x6 average pool ---------------
    xf2 = xf2_ref[...].astype(bf16)                                   # (81, 192)
    acc5 = jnp.zeros((L3, 192), f32)
    for kh in range(3):
        for kw in range(3):
            d = kh * WP3 + kw
            acc5 = acc5 + jnp.dot(xf2[d:d + L3, :], w5_ref[kh * 3 + kw],
                                  preferred_element_type=f32)
    a5 = jnp.maximum(acc5 + b5_ref[...], 0.0).astype(bf16)
    a6 = jnp.dot(a5, w6_ref[...], preferred_element_type=f32)
    a6 = jnp.maximum(a6 + b6_ref[...], 0.0).astype(bf16)
    a7 = jnp.dot(a6, w7_ref[...], preferred_element_type=f32)
    a7 = jnp.maximum(a7 + b7_ref[...], 0.0)                           # (61, 10)

    # AvgPool2d(6): average the top-left 6x6 window of the 7x7 conv7 output.
    s = jnp.zeros((1, 10), f32)
    for i in range(6):
        s = s + jnp.sum(a7[i * WP3:i * WP3 + 6, :], axis=0, keepdims=True)
    o_ref[0] = (s * (1.0 / 36.0)).astype(o_ref.dtype)


# ---------------------------------------------------------------------------
# Wrapper: wrapper-side im2col for conv1 (Cin=3), weight reshapes, pallas_call.
# ---------------------------------------------------------------------------
def _im2col_conv1(x_nhwc):
    # (N, 16, 16, 3) -> (N, 256, 80) bf16 patch matrix (K = 5*5*3 = 75, padded).
    n = x_nhwc.shape[0]
    xp = jnp.pad(x_nhwc, ((0, 0), (2, 2), (2, 2), (0, 0)))
    slabs = [xp[:, kh:kh + H0, kw:kw + W0, :] for kh in range(5) for kw in range(5)]
    pat = jnp.concatenate(slabs, axis=-1).reshape(n, NPIX1, K1COLS)
    pat = jnp.pad(pat, ((0, 0), (0, 0), (0, K1PAD - K1COLS)))
    return pat.astype(jnp.bfloat16)


def _prep_params(params):
    bf16 = jnp.bfloat16
    w1, b1 = params["conv1"]
    w2, b2 = params["conv2"]
    w3, b3 = params["conv3"]
    w4, b4 = params["conv4"]
    w5, b5 = params["conv5"]
    w6, b6 = params["conv6"]
    w7, b7 = params["conv7"]
    w1m = jnp.pad(w1.reshape(K1COLS, 96), ((0, K1PAD - K1COLS), (0, 0))).astype(bf16)
    w2m = w2.reshape(96, 96).astype(bf16)
    w3m = w3.reshape(25, 96, 192).astype(bf16)      # (kh*5+kw, Cin, Cout)
    w4m = w4.reshape(192, 192).astype(bf16)
    w5m = w5.reshape(9, 192, 192).astype(bf16)      # (kh*3+kw, Cin, Cout)
    w6m = w6.reshape(192, 192).astype(bf16)
    w7m = w7.reshape(192, 10).astype(bf16)
    bs = [b.reshape(1, -1).astype(jnp.float32) for b in (b1, b2, b3, b4, b5, b6, b7)]
    return (w1m, bs[0], w2m, bs[1], w3m, bs[2], w4m, bs[3],
            w5m, bs[4], w6m, bs[5], w7m, bs[6])


def _const_spec(a):
    return pl.BlockSpec(a.shape, lambda n, nd=a.ndim: (0,) * nd)


def basenet_b_forward(x_nchw, params):
    x = jnp.transpose(x_nchw, (0, 2, 3, 1)).astype(jnp.float32)   # NCHW -> NHWC
    n, h, w, c = x.shape
    assert (h, w, c) == (H0, W0, 3) and NPIX1 % 128 == 0

    patches = _im2col_conv1(x)
    prepped = _prep_params(params)

    out = pl.pallas_call(
        _fused_kernel,
        out_shape=jax.ShapeDtypeStruct((n, 1, 10), jnp.float32),
        grid=(n,),
        in_specs=[pl.BlockSpec((1, NPIX1, K1PAD), lambda i: (i, 0, 0))]
                 + [_const_spec(a) for a in prepped],
        out_specs=pl.BlockSpec((1, 1, 10), lambda i: (i, 0, 0)),
        scratch_shapes=[
            pltpu.VMEM((NPIX1, 96), jnp.float32),   # stage-1 activations
            pltpu.VMEM((NF2, 96), jnp.float32),     # padded flat grid for conv3
            pltpu.VMEM((NF3, 192), jnp.float32),    # padded flat grid for conv5
        ],
        compiler_params=pltpu.CompilerParams(
            dimension_semantics=("parallel",)),
    )(patches, *prepped)
    return out.reshape(n, 10)


# ---------------------------------------------------------------------------
# Deterministic parameter init (kaiming_normal_ weights, zero bias), HWIO layout
# ---------------------------------------------------------------------------
def init_params(key):
    specs = {
        "conv1": (5, 5, 3, 96),
        "conv2": (1, 1, 96, 96),
        "conv3": (5, 5, 96, 192),
        "conv4": (1, 1, 192, 192),
        "conv5": (3, 3, 192, 192),
        "conv6": (1, 1, 192, 192),
        "conv7": (1, 1, 192, 10),
    }
    keys = jax.random.split(key, len(specs))
    params = {}
    for (name, (kh, kw, ci, co)), k in zip(specs.items(), keys):
        std = float(np.sqrt(2.0 / (kh * kw * ci)))   # kaiming_normal_ (fan_in, relu)
        wgt = jax.random.normal(k, (kh, kw, ci, co), jnp.float32) * std
        b = jnp.zeros((co,), jnp.float32)
        params[name] = (wgt, b)
    return params


if __name__ == "__main__":
    root = jax.random.PRNGKey(0)
    k_x, k_w = jax.random.split(root)
    params = init_params(k_w)

    # Small deterministic input: batch=2, 3 channels, 16x16 spatial (NCHW).
    x = jax.random.normal(k_x, (2, 3, 16, 16), jnp.float32)

    fwd = jax.jit(basenet_b_forward)
    out = jax.block_until_ready(fwd(x, params))
    assert out.shape == (2, 10), out.shape
    assert bool(jnp.all(jnp.isfinite(out)))
    print("KERNEL_OK")
</pallas_src>

<mosaic_0001>
module attributes {stable_mosaic.version = 11 : i64} {
  func.func @_fused_kernel(%arg0: i32, %arg1: memref<1x256x80xbf16, #tpu.memory_space<vmem>>, %arg2: memref<80x96xbf16, #tpu.memory_space<vmem>>, %arg3: memref<1x96xf32, #tpu.memory_space<vmem>>, %arg4: memref<96x96xbf16, #tpu.memory_space<vmem>>, %arg5: memref<1x96xf32, #tpu.memory_space<vmem>>, %arg6: memref<25x96x192xbf16, #tpu.memory_space<vmem>>, %arg7: memref<1x192xf32, #tpu.memory_space<vmem>>, %arg8: memref<192x192xbf16, #tpu.memory_space<vmem>>, %arg9: memref<1x192xf32, #tpu.memory_space<vmem>>, %arg10: memref<9x192x192xbf16, #tpu.memory_space<vmem>>, %arg11: memref<1x192xf32, #tpu.memory_space<vmem>>, %arg12: memref<192x192xbf16, #tpu.memory_space<vmem>>, %arg13: memref<1x192xf32, #tpu.memory_space<vmem>>, %arg14: memref<192x10xbf16, #tpu.memory_space<vmem>>, %arg15: memref<1x10xf32, #tpu.memory_space<vmem>>, %arg16: memref<1x1x10xf32, #tpu.memory_space<vmem>>, %arg17: memref<256x96xf32, #tpu.memory_space<vmem>>, %arg18: memref<121x96xf32, #tpu.memory_space<vmem>>, %arg19: memref<81x192xf32, #tpu.memory_space<vmem>>) attributes {dimension_semantics = [#tpu.dimension_semantics<parallel>], iteration_bounds = array<i64: 2>, scalar_prefetch = 0 : i64, scratch_operands = 3 : i64, tpu.core_type = #tpu.core_type<tc>, window_params = [{transform_indices = @transform_0, window_bounds = array<i64: 1, 256, 80>}, {pipeline_mode = #tpu.pipeline_mode<synchronous>, transform_indices = @transform_1, window_bounds = array<i64: 80, 96>}, {pipeline_mode = #tpu.pipeline_mode<synchronous>, transform_indices = @transform_2, window_bounds = array<i64: 1, 96>}, {pipeline_mode = #tpu.pipeline_mode<synchronous>, transform_indices = @transform_3, window_bounds = array<i64: 96, 96>}, {pipeline_mode = #tpu.pipeline_mode<synchronous>, transform_indices = @transform_4, window_bounds = array<i64: 1, 96>}, {pipeline_mode = #tpu.pipeline_mode<synchronous>, transform_indices = @transform_5, window_bounds = array<i64: 25, 96, 192>}, {pipeline_mode = #tpu.pipeline_mode<synchronous>, transform_indices = @transform_6, window_bounds = array<i64: 1, 192>}, {pipeline_mode = #tpu.pipeline_mode<synchronous>, transform_indices = @transform_7, window_bounds = array<i64: 192, 192>}, {pipeline_mode = #tpu.pipeline_mode<synchronous>, transform_indices = @transform_8, window_bounds = array<i64: 1, 192>}, {pipeline_mode = #tpu.pipeline_mode<synchronous>, transform_indices = @transform_9, window_bounds = array<i64: 9, 192, 192>}, {pipeline_mode = #tpu.pipeline_mode<synchronous>, transform_indices = @transform_10, window_bounds = array<i64: 1, 192>}, {pipeline_mode = #tpu.pipeline_mode<synchronous>, transform_indices = @transform_11, window_bounds = array<i64: 192, 192>}, {pipeline_mode = #tpu.pipeline_mode<synchronous>, transform_indices = @transform_12, window_bounds = array<i64: 1, 192>}, {pipeline_mode = #tpu.pipeline_mode<synchronous>, transform_indices = @transform_13, window_bounds = array<i64: 192, 10>}, {pipeline_mode = #tpu.pipeline_mode<synchronous>, transform_indices = @transform_14, window_bounds = array<i64: 1, 10>}, {transform_indices = @transform_15, window_bounds = array<i64: 1, 1, 10>}]} {
    %c0 = arith.constant 0 : index
    %c0_0 = arith.constant 0 : index
    %c0_1 = arith.constant 0 : index
    %0 = vector.load %arg1[%c0, %c0_0, %c0_1] : memref<1x256x80xbf16, #tpu.memory_space<vmem>>, vector<1x128x80xbf16>
    %1 = vector.shape_cast %0 : vector<1x128x80xbf16> to vector<128x80xbf16>
    %c0_2 = arith.constant 0 : index
    %c0_3 = arith.constant 0 : index
    %2 = vector.load %arg2[%c0_2, %c0_3] : memref<80x96xbf16, #tpu.memory_space<vmem>>, vector<80x96xbf16>
    %cst = arith.constant dense<0.000000e+00> : vector<128x96xf32>
    %3 = tpu.matmul %1, %2, %cst {dimension_numbers = #tpu.dot_dimension_numbers<[1], [0], [0], [1], [0, 0, 1, 1], [], []>} : vector<128x80xbf16>, vector<80x96xbf16>, vector<128x96xf32> -> vector<128x96xf32>
    %c0_4 = arith.constant 0 : index
    %c0_5 = arith.constant 0 : index
    %4 = vector.load %arg3[%c0_4, %c0_5] : memref<1x96xf32, #tpu.memory_space<vmem>>, vector<1x96xf32>
    %5 = vector.broadcast %4 : vector<1x96xf32> to vector<128x96xf32>
    %6 = arith.addf %3, %5 : vector<128x96xf32>
    %cst_6 = arith.constant 0.000000e+00 : f32
    %7 = vector.broadcast %cst_6 : f32 to vector<128x96xf32>
    %8 = arith.maximumf %6, %7 : vector<128x96xf32>
    %9 = arith.truncf %8 : vector<128x96xf32> to vector<128x96xbf16>
    %c0_7 = arith.constant 0 : index
    %c0_8 = arith.constant 0 : index
    %10 = vector.load %arg4[%c0_7, %c0_8] : memref<96x96xbf16, #tpu.memory_space<vmem>>, vector<96x96xbf16>
    %cst_9 = arith.constant dense<0.000000e+00> : vector<128x96xf32>
    %11 = tpu.matmul %9, %10, %cst_9 {dimension_numbers = #tpu.dot_dimension_numbers<[1], [0], [0], [1], [0, 0, 1, 1], [], []>} : vector<128x96xbf16>, vector<96x96xbf16>, vector<128x96xf32> -> vector<128x96xf32>
    %c0_10 = arith.constant 0 : index
    %c0_11 = arith.constant 0 : index
    %12 = vector.load %arg5[%c0_10, %c0_11] : memref<1x96xf32, #tpu.memory_space<vmem>>, vector<1x96xf32>
    %13 = vector.broadcast %12 : vector<1x96xf32> to vector<128x96xf32>
    %14 = arith.addf %11, %13 : vector<128x96xf32>
    %cst_12 = arith.constant 0.000000e+00 : f32
    %15 = vector.broadcast %cst_12 : f32 to vector<128x96xf32>
    %16 = arith.maximumf %14, %15 : vector<128x96xf32>
    %c0_13 = arith.constant 0 : index
    %c0_14 = arith.constant 0 : index
    %17 = vector.load %arg17[%c0_13, %c0_14] : memref<256x96xf32, #tpu.memory_space<vmem>>, vector<128x96xf32>
    tpu.vector_store %arg17[%c0_13, %c0_14], %16 {strides = array<i32>} : memref<256x96xf32, #tpu.memory_space<vmem>>, vector<128x96xf32>,
    %c0_15 = arith.constant 0 : index
    %c128 = arith.constant 128 : index
    %c0_16 = arith.constant 0 : index
    %18 = vector.load %arg1[%c0_15, %c128, %c0_16] : memref<1x256x80xbf16, #tpu.memory_space<vmem>>, vector<1x128x80xbf16>
    %19 = vector.shape_cast %18 : vector<1x128x80xbf16> to vector<128x80xbf16>
    %c0_17 = arith.constant 0 : index
    %c0_18 = arith.constant 0 : index
    %20 = vector.load %arg2[%c0_17, %c0_18] : memref<80x96xbf16, #tpu.memory_space<vmem>>, vector<80x96xbf16>
    %cst_19 = arith.constant dense<0.000000e+00> : vector<128x96xf32>
    %21 = tpu.matmul %19, %20, %cst_19 {dimension_numbers = #tpu.dot_dimension_numbers<[1], [0], [0], [1], [0, 0, 1, 1], [], []>} : vector<128x80xbf16>, vector<80x96xbf16>, vector<128x96xf32> -> vector<128x96xf32>
    %c0_20 = arith.constant 0 : index
    %c0_21 = arith.constant 0 : index
    %22 = vector.load %arg3[%c0_20, %c0_21] : memref<1x96xf32, #tpu.memory_space<vmem>>, vector<1x96xf32>
    %23 = vector.broadcast %22 : vector<1x96xf32> to vector<128x96xf32>
    %24 = arith.addf %21, %23 : vector<128x96xf32>
    %cst_22 = arith.constant 0.000000e+00 : f32
    %25 = vector.broadcast %cst_22 : f32 to vector<128x96xf32>
    %26 = arith.maximumf %24, %25 : vector<128x96xf32>
    %27 = arith.truncf %26 : vector<128x96xf32> to vector<128x96xbf16>
    %c0_23 = arith.constant 0 : index
    %c0_24 = arith.constant 0 : index
    %28 = vector.load %arg4[%c0_23, %c0_24] : memref<96x96xbf16, #tpu.memory_space<vmem>>, vector<96x96xbf16>
    %cst_25 = arith.constant dense<0.000000e+00> : vector<128x96xf32>
    %29 = tpu.matmul %27, %28, %cst_25 {dimension_numbers = #tpu.dot_dimension_numbers<[1], [0], [0], [1], [0, 0, 1, 1], [], []>} : vector<128x96xbf16>, vector<96x96xbf16>, vector<128x96xf32> -> vector<128x96xf32>
    %c0_26 = arith.constant 0 : index
    %c0_27 = arith.constant 0 : index
    %30 = vector.load %arg5[%c0_26, %c0_27] : memref<1x96xf32, #tpu.memory_space<vmem>>, vector<1x96xf32>
    %31 = vector.broadcast %30 : vector<1x96xf32> to vector<128x96xf32>
    %32 = arith.addf %29, %31 : vector<128x96xf32>
    %cst_28 = arith.constant 0.000000e+00 : f32
    %33 = vector.broadcast %cst_28 : f32 to vector<128x96xf32>
    %34 = arith.maximumf %32, %33 : vector<128x96xf32>
    %c128_29 = arith.constant 128 : index
    %c0_30 = arith.constant 0 : index
    %35 = vector.load %arg17[%c128_29, %c0_30] : memref<256x96xf32, #tpu.memory_space<vmem>>, vector<128x96xf32>
    tpu.vector_store %arg17[%c128_29, %c0_30], %34 {strides = array<i32>} : memref<256x96xf32, #tpu.memory_space<vmem>>, vector<128x96xf32>,
    %cst_31 = arith.constant 0.000000e+00 : f32
    %36 = vector.broadcast %cst_31 : f32 to vector<121x96xf32>
    %c0_32 = arith.constant 0 : index
    %c0_33 = arith.constant 0 : index
    %37 = vector.load %arg18[%c0_32, %c0_33] : memref<121x96xf32, #tpu.memory_space<vmem>>, vector<121x96xf32>
    tpu.vector_store %arg18[%c0_32, %c0_33], %36 {strides = array<i32>} : memref<121x96xf32, #tpu.memory_space<vmem>>, vector<121x96xf32>,
    %c0_34 = arith.constant 0 : index
    %c0_35 = arith.constant 0 : index
    %38 = vector.load %arg17[%c0_34, %c0_35] : memref<256x96xf32, #tpu.memory_space<vmem>>, vector<16x96xf32>
    %c16 = arith.constant 16 : index
    %c0_36 = arith.constant 0 : index
    %39 = vector.load %arg17[%c16, %c0_36] : memref<256x96xf32, #tpu.memory_space<vmem>>, vector<16x96xf32>
    %c32 = arith.constant 32 : index
    %c0_37 = arith.constant 0 : index
    %40 = vector.load %arg17[%c32, %c0_37] : memref<256x96xf32, #tpu.memory_space<vmem>>, vector<16x96xf32>
    %41 = arith.maximumf %38, %39 : vector<16x96xf32>
    %42 = arith.maximumf %41, %40 : vector<16x96xf32>
    %43 = vector.extract_strided_slice %42 {offsets = [0, 0], sizes = [3, 96], strides = [1, 1]} : vector<16x96xf32> to vector<3x96xf32>
    %cst_38 = arith.constant dense<0xFF800000> : vector<96xf32>
    %44 = vector.multi_reduction <maximumf>, %43, %cst_38 [0] : vector<3x96xf32> to vector<96xf32>
    %45 = vector.shape_cast %44 : vector<96xf32> to vector<1x96xf32>
    %46 = vector.extract_strided_slice %42 {offsets = [2, 0], sizes = [3, 96], strides = [1, 1]} : vector<16x96xf32> to vector<3x96xf32>
    %cst_39 = arith.constant dense<0xFF800000> : vector<96xf32>
    %47 = vector.multi_reduction <maximumf>, %46, %cst_39 [0] : vector<3x96xf32> to vector<96xf32>
    %48 = vector.shape_cast %47 : vector<96xf32> to vector<1x96xf32>
    %49 = vector.extract_strided_slice %42 {offsets = [4, 0], sizes = [3, 96], strides = [1, 1]} : vector<16x96xf32> to vector<3x96xf32>
    %cst_40 = arith.constant dense<0xFF800000> : vector<96xf32>
    %50 = vector.multi_reduction <maximumf>, %49, %cst_40 [0] : vector<3x96xf32> to vector<96xf32>
    %51 = vector.shape_cast %50 : vector<96xf32> to vector<1x96xf32>
    %52 = vector.extract_strided_slice %42 {offsets = [6, 0], sizes = [3, 96], strides = [1, 1]} : vector<16x96xf32> to vector<3x96xf32>
    %cst_41 = arith.constant dense<0xFF800000> : vector<96xf32>
    %53 = vector.multi_reduction <maximumf>, %52, %cst_41 [0] : vector<3x96xf32> to vector<96xf32>
    %54 = vector.shape_cast %53 : vector<96xf32> to vector<1x96xf32>
    %55 = vector.extract_strided_slice %42 {offsets = [8, 0], sizes = [3, 96], strides = [1, 1]} : vector<16x96xf32> to vector<3x96xf32>
    %cst_42 = arith.constant dense<0xFF800000> : vector<96xf32>
    %56 = vector.multi_reduction <maximumf>, %55, %cst_42 [0] : vector<3x96xf32> to vector<96xf32>
    %57 = vector.shape_cast %56 : vector<96xf32> to vector<1x96xf32>
    %58 = vector.extract_strided_slice %42 {offsets = [10, 0], sizes = [3, 96], strides = [1, 1]} : vector<16x96xf32> to vector<3x96xf32>
    %cst_43 = arith.constant dense<0xFF800000> : vector<96xf32>
    %59 = vector.multi_reduction <maximumf>, %58, %cst_43 [0] : vector<3x96xf32> to vector<96xf32>
    %60 = vector.shape_cast %59 : vector<96xf32> to vector<1x96xf32>
    %61 = vector.extract_strided_slice %42 {offsets = [12, 0], sizes = [3, 96], strides = [1, 1]} : vector<16x96xf32> to vector<3x96xf32>
    %cst_44 = arith.constant dense<0xFF800000> : vector<96xf32>
    %62 = vector.multi_reduction <maximumf>, %61, %cst_44 [0] : vector<3x96xf32> to vector<96xf32>
    %63 = vector.shape_cast %62 : vector<96xf32> to vector<1x96xf32>
    %64 = tpu.concatenate %45, %48, %51, %54, %57, %60, %63 in 0 : vector<1x96xf32>, vector<1x96xf32>, vector<1x96xf32>, vector<1x96xf32>, vector<1x96xf32>, vector<1x96xf32>, vector<1x96xf32> -> vector<7x96xf32>
    %c24 = arith.constant 24 : index
    %c0_45 = arith.constant 0 : index
    %65 = vector.load %arg18[%c24, %c0_45] : memref<121x96xf32, #tpu.memory_space<vmem>>, vector<7x96xf32>
    tpu.vector_store %arg18[%c24, %c0_45], %64 {strides = array<i32>} : memref<121x96xf32, #tpu.memory_space<vmem>>, vector<7x96xf32>,
    %c32_46 = arith.constant 32 : index
    %c0_47 = arith.constant 0 : index
    %66 = vector.load %arg17[%c32_46, %c0_47] : memref<256x96xf32, #tpu.memory_space<vmem>>, vector<16x96xf32>
    %c48 = arith.constant 48 : index
    %c0_48 = arith.constant 0 : index
    %67 = vector.load %arg17[%c48, %c0_48] : memref<256x96xf32, #tpu.memory_space<vmem>>, vector<16x96xf32>
    %c64 = arith.constant 64 : index
    %c0_49 = arith.constant 0 : index
    %68 = vector.load %arg17[%c64, %c0_49] : memref<256x96xf32, #tpu.memory_space<vmem>>, vector<16x96xf32>
    %69 = arith.maximumf %66, %67 : vector<16x96xf32>
    %70 = arith.maximumf %69, %68 : vector<16x96xf32>
    %71 = vector.extract_strided_slice %70 {offsets = [0, 0], sizes = [3, 96], strides = [1, 1]} : vector<16x96xf32> to vector<3x96xf32>
    %cst_50 = arith.constant dense<0xFF800000> : vector<96xf32>
    %72 = vector.multi_reduction <maximumf>, %71, %cst_50 [0] : vector<3x96xf32> to vector<96xf32>
    %73 = vector.shape_cast %72 : vector<96xf32> to vector<1x96xf32>
    %74 = vector.extract_strided_slice %70 {offsets = [2, 0], sizes = [3, 96], strides = [1, 1]} : vector<16x96xf32> to vector<3x96xf32>
    %cst_51 = arith.constant dense<0xFF800000> : vector<96xf32>
    %75 = vector.multi_reduction <maximumf>, %74, %cst_51 [0] : vector<3x96xf32> to vector<96xf32>
    %76 = vector.shape_cast %75 : vector<96xf32> to vector<1x96xf32>
    %77 = vector.extract_strided_slice %70 {offsets = [4, 0], sizes = [3, 96], strides = [1, 1]} : vector<16x96xf32> to vector<3x96xf32>
    %cst_52 = arith.constant dense<0xFF800000> : vector<96xf32>
    %78 = vector.multi_reduction <maximumf>, %77, %cst_52 [0] : vector<3x96xf32> to vector<96xf32>
    %79 = vector.shape_cast %78 : vector<96xf32> to vector<1x96xf32>
    %80 = vector.extract_strided_slice %70 {offsets = [6, 0], sizes = [3, 96], strides = [1, 1]} : vector<16x96xf32> to vector<3x96xf32>
    %cst_53 = arith.constant dense<0xFF800000> : vector<96xf32>
    %81 = vector.multi_reduction <maximumf>, %80, %cst_53 [0] : vector<3x96xf32> to vector<96xf32>
    %82 = vector.shape_cast %81 : vector<96xf32> to vector<1x96xf32>
    %83 = vector.extract_strided_slice %70 {offsets = [8, 0], sizes = [3, 96], strides = [1, 1]} : vector<16x96xf32> to vector<3x96xf32>
    %cst_54 = arith.constant dense<0xFF800000> : vector<96xf32>
    %84 = vector.multi_reduction <maximumf>, %83, %cst_54 [0] : vector<3x96xf32> to vector<96xf32>
    %85 = vector.shape_cast %84 : vector<96xf32> to vector<1x96xf32>
    %86 = vector.extract_strided_slice %70 {offsets = [10, 0], sizes = [3, 96], strides = [1, 1]} : vector<16x96xf32> to vector<3x96xf32>
    %cst_55 = arith.constant dense<0xFF800000> : vector<96xf32>
    %87 = vector.multi_reduction <maximumf>, %86, %cst_55 [0] : vector<3x96xf32> to vector<96xf32>
    %88 = vector.shape_cast %87 : vector<96xf32> to vector<1x96xf32>
    %89 = vector.extract_strided_slice %70 {offsets = [12, 0], sizes = [3, 96], strides = [1, 1]} : vector<16x96xf32> to vector<3x96xf32>
    %cst_56 = arith.constant dense<0xFF800000> : vector<96xf32>
    %90 = vector.multi_reduction <maximumf>, %89, %cst_56 [0] : vector<3x96xf32> to vector<96xf32>
    %91 = vector.shape_cast %90 : vector<96xf32> to vector<1x96xf32>
    %92 = tpu.concatenate %73, %76, %79, %82, %85, %88, %91 in 0 : vector<1x96xf32>, vector<1x96xf32>, vector<1x96xf32>, vector<1x96xf32>, vector<1x96xf32>, vector<1x96xf32>, vector<1x96xf32> -> vector<7x96xf32>
    %c35 = arith.constant 35 : index
    %c0_57 = arith.constant 0 : index
    %93 = vector.load %arg18[%c35, %c0_57] : memref<121x96xf32, #tpu.memory_space<vmem>>, vector<7x96xf32>
    tpu.vector_store %arg18[%c35, %c0_57], %92 {strides = array<i32>} : memref<121x96xf32, #tpu.memory_space<vmem>>, vector<7x96xf32>,
    %c64_58 = arith.constant 64 : index
    %c0_59 = arith.constant 0 : index
    %94 = vector.load %arg17[%c64_58, %c0_59] : memref<256x96xf32, #tpu.memory_space<vmem>>, vector<16x96xf32>
    %c80 = arith.constant 80 : index
    %c0_60 = arith.constant 0 : index
    %95 = vector.load %arg17[%c80, %c0_60] : memref<256x96xf32, #tpu.memory_space<vmem>>, vector<16x96xf32>
    %c96 = arith.constant 96 : index
    %c0_61 = arith.constant 0 : index
    %96 = vector.load %arg17[%c96, %c0_61] : memref<256x96xf32, #tpu.memory_space<vmem>>, vector<16x96xf32>
    %97 = arith.maximumf %94, %95 : vector<16x96xf32>
    %98 = arith.maximumf %97, %96 : vector<16x96xf32>
    %99 = vector.extract_strided_slice %98 {offsets = [0, 0], sizes = [3, 96], strides = [1, 1]} : vector<16x96xf32> to vector<3x96xf32>
    %cst_62 = arith.constant dense<0xFF800000> : vector<96xf32>
    %100 = vector.multi_reduction <maximumf>, %99, %cst_62 [0] : vector<3x96xf32> to vector<96xf32>
    %101 = vector.shape_cast %100 : vector<96xf32> to vector<1x96xf32>
    %102 = vector.extract_strided_slice %98 {offsets = [2, 0], sizes = [3, 96], strides = [1, 1]} : vector<16x96xf32> to vector<3x96xf32>
    %cst_63 = arith.constant dense<0xFF800000> : vector<96xf32>
    %103 = vector.multi_reduction <maximumf>, %102, %cst_63 [0] : vector<3x96xf32> to vector<96xf32>
    %104 = vector.shape_cast %103 : vector<96xf32> to vector<1x96xf32>
    %105 = vector.extract_strided_slice %98 {offsets = [4, 0], sizes = [3, 96], strides = [1, 1]} : vector<16x96xf32> to vector<3x96xf32>
    %cst_64 = arith.constant dense<0xFF800000> : vector<96xf32>
    %106 = vector.multi_reduction <maximumf>, %105, %cst_64 [0] : vector<3x96xf32> to vector<96xf32>
    %107 = vector.shape_cast %106 : vector<96xf32> to vector<1x96xf32>
    %108 = vector.extract_strided_slice %98 {offsets = [6, 0], sizes = [3, 96], strides = [1, 1]} : vector<16x96xf32> to vector<3x96xf32>
    %cst_65 = arith.constant dense<0xFF800000> : vector<96xf32>
    %109 = vector.multi_reduction <maximumf>, %108, %cst_65 [0] : vector<3x96xf32> to vector<96xf32>
    %110 = vector.shape_cast %109 : vector<96xf32> to vector<1x96xf32>
    %111 = vector.extract_strided_slice %98 {offsets = [8, 0], sizes = [3, 96], strides = [1, 1]} : vector<16x96xf32> to vector<3x96xf32>
    %cst_66 = arith.constant dense<0xFF800000> : vector<96xf32>
    %112 = vector.multi_reduction <maximumf>, %111, %cst_66 [0] : vector<3x96xf32> to vector<96xf32>
    %113 = vector.shape_cast %112 : vector<96xf32> to vector<1x96xf32>
    %114 = vector.extract_strided_slice %98 {offsets = [10, 0], sizes = [3, 96], strides = [1, 1]} : vector<16x96xf32> to vector<3x96xf32>
    %cst_67 = arith.constant dense<0xFF800000> : vector<96xf32>
    %115 = vector.multi_reduction <maximumf>, %114, %cst_67 [0] : vector<3x96xf32> to vector<96xf32>
    %116 = vector.shape_cast %115 : vector<96xf32> to vector<1x96xf32>
    %117 = vector.extract_strided_slice %98 {offsets = [12, 0], sizes = [3, 96], strides = [1, 1]} : vector<16x96xf32> to vector<3x96xf32>
    %cst_68 = arith.constant dense<0xFF800000> : vector<96xf32>
    %118 = vector.multi_reduction <maximumf>, %117, %cst_68 [0] : vector<3x96xf32> to vector<96xf32>
    %119 = vector.shape_cast %118 : vector<96xf32> to vector<1x96xf32>
    %120 = tpu.concatenate %101, %104, %107, %110, %113, %116, %119 in 0 : vector<1x96xf32>, vector<1x96xf32>, vector<1x96xf32>, vector<1x96xf32>, vector<1x96xf32>, vector<1x96xf32>, vector<1x96xf32> -> vector<7x96xf32>
    %c46 = arith.constant 46 : index
    %c0_69 = arith.constant 0 : index
    %121 = vector.load %arg18[%c46, %c0_69] : memref<121x96xf32, #tpu.memory_space<vmem>>, vector<7x96xf32>
    tpu.vector_store %arg18[%c46, %c0_69], %120 {strides = array<i32>} : memref<121x96xf32, #tpu.memory_space<vmem>>, vector<7x96xf32>,
    %c96_70 = arith.constant 96 : index
    %c0_71 = arith.constant 0 : index
    %122 = vector.load %arg17[%c96_70, %c0_71] : memref<256x96xf32, #tpu.memory_space<vmem>>, vector<16x96xf32>
    %c112 = arith.constant 112 : index
    %c0_72 = arith.constant 0 : index
    %123 = vector.load %arg17[%c112, %c0_72] : memref<256x96xf32, #tpu.memory_space<vmem>>, vector<16x96xf32>
    %c128_73 = arith.constant 128 : index
    %c0_74 = arith.constant 0 : index
    %124 = vector.load %arg17[%c128_73, %c0_74] : memref<256x96xf32, #tpu.memory_space<vmem>>, vector<16x96xf32>
    %125 = arith.maximumf %122, %123 : vector<16x96xf32>
    %126 = arith.maximumf %125, %124 : vector<16x96xf32>
    %127 = vector.extract_strided_slice %126 {offsets = [0, 0], sizes = [3, 96], strides = [1, 1]} : vector<16x96xf32> to vector<3x96xf32>
    %cst_75 = arith.constant dense<0xFF800000> : vector<96xf32>
    %128 = vector.multi_reduction <maximumf>, %127, %cst_75 [0] : vector<3x96xf32> to vector<96xf32>
    %129 = vector.shape_cast %128 : vector<96xf32> to vector<1x96xf32>
    %130 = vector.extract_strided_slice %126 {offsets = [2, 0], sizes = [3, 96], strides = [1, 1]} : vector<16x96xf32> to vector<3x96xf32>
    %cst_76 = arith.constant dense<0xFF800000> : vector<96xf32>
    %131 = vector.multi_reduction <maximumf>, %130, %cst_76 [0] : vector<3x96xf32> to vector<96xf32>
    %132 = vector.shape_cast %131 : vector<96xf32> to vector<1x96xf32>
    %133 = vector.extract_strided_slice %126 {offsets = [4, 0], sizes = [3, 96], strides = [1, 1]} : vector<16x96xf32> to vector<3x96xf32>
    %cst_77 = arith.constant dense<0xFF800000> : vector<96xf32>
    %134 = vector.multi_reduction <maximumf>, %133, %cst_77 [0] : vector<3x96xf32> to vector<96xf32>
    %135 = vector.shape_cast %134 : vector<96xf32> to vector<1x96xf32>
    %136 = vector.extract_strided_slice %126 {offsets = [6, 0], sizes = [3, 96], strides = [1, 1]} : vector<16x96xf32> to vector<3x96xf32>
    %cst_78 = arith.constant dense<0xFF800000> : vector<96xf32>
    %137 = vector.multi_reduction <maximumf>, %136, %cst_78 [0] : vector<3x96xf32> to vector<96xf32>
    %138 = vector.shape_cast %137 : vector<96xf32> to vector<1x96xf32>
    %139 = vector.extract_strided_slice %126 {offsets = [8, 0], sizes = [3, 96], strides = [1, 1]} : vector<16x96xf32> to vector<3x96xf32>
    %cst_79 = arith.constant dense<0xFF800000> : vector<96xf32>
    %140 = vector.multi_reduction <maximumf>, %139, %cst_79 [0] : vector<3x96xf32> to vector<96xf32>
    %141 = vector.shape_cast %140 : vector<96xf32> to vector<1x96xf32>
    %142 = vector.extract_strided_slice %126 {offsets = [10, 0], sizes = [3, 96], strides = [1, 1]} : vector<16x96xf32> to vector<3x96xf32>
    %cst_80 = arith.constant dense<0xFF800000> : vector<96xf32>
    %143 = vector.multi_reduction <maximumf>, %142, %cst_80 [0] : vector<3x96xf32> to vector<96xf32>
    %144 = vector.shape_cast %143 : vector<96xf32> to vector<1x96xf32>
    %145 = vector.extract_strided_slice %126 {offsets = [12, 0], sizes = [3, 96], strides = [1, 1]} : vector<16x96xf32> to vector<3x96xf32>
    %cst_81 = arith.constant dense<0xFF800000> : vector<96xf32>
    %146 = vector.multi_reduction <maximumf>, %145, %cst_81 [0] : vector<3x96xf32> to vector<96xf32>
    %147 = vector.shape_cast %146 : vector<96xf32> to vector<1x96xf32>
    %148 = tpu.concatenate %129, %132, %135, %138, %141, %144, %147 in 0 : vector<1x96xf32>, vector<1x96xf32>, vector<1x96xf32>, vector<1x96xf32>, vector<1x96xf32>, vector<1x96xf32>, vector<1x96xf32> -> vector<7x96xf32>
    %c57 = arith.constant 57 : index
    %c0_82 = arith.constant 0 : index
    %149 = vector.load %arg18[%c57, %c0_82] : memref<121x96xf32, #tpu.memory_space<vmem>>, vector<7x96xf32>
    tpu.vector_store %arg18[%c57, %c0_82], %148 {strides = array<i32>} : memref<121x96xf32, #tpu.memory_space<vmem>>, vector<7x96xf32>,
    %c128_83 = arith.constant 128 : index
    %c0_84 = arith.constant 0 : index
    %150 = vector.load %arg17[%c128_83, %c0_84] : memref<256x96xf32, #tpu.memory_space<vmem>>, vector<16x96xf32>
    %c144 = arith.constant 144 : index
    %c0_85 = arith.constant 0 : index
    %151 = vector.load %arg17[%c144, %c0_85] : memref<256x96xf32, #tpu.memory_space<vmem>>, vector<16x96xf32>
    %c160 = arith.constant 160 : index
    %c0_86 = arith.constant 0 : index
    %152 = vector.load %arg17[%c160, %c0_86] : memref<256x96xf32, #tpu.memory_space<vmem>>, vector<16x96xf32>
    %153 = arith.maximumf %150, %151 : vector<16x96xf32>
    %154 = arith.maximumf %153, %152 : vector<16x96xf32>
    %155 = vector.extract_strided_slice %154 {offsets = [0, 0], sizes = [3, 96], strides = [1, 1]} : vector<16x96xf32> to vector<3x96xf32>
    %cst_87 = arith.constant dense<0xFF800000> : vector<96xf32>
    %156 = vector.multi_reduction <maximumf>, %155, %cst_87 [0] : vector<3x96xf32> to vector<96xf32>
    %157 = vector.shape_cast %156 : vector<96xf32> to vector<1x96xf32>
    %158 = vector.extract_strided_slice %154 {offsets = [2, 0], sizes = [3, 96], strides = [1, 1]} : vector<16x96xf32> to vector<3x96xf32>
    %cst_88 = arith.constant dense<0xFF800000> : vector<96xf32>
    %159 = vector.multi_reduction <maximumf>, %158, %cst_88 [0] : vector<3x96xf32> to vector<96xf32>
    %160 = vector.shape_cast %159 : vector<96xf32> to vector<1x96xf32>
    %161 = vector.extract_strided_slice %154 {offsets = [4, 0], sizes = [3, 96], strides = [1, 1]} : vector<16x96xf32> to vector<3x96xf32>
    %cst_89 = arith.constant dense<0xFF800000> : vector<96xf32>
    %162 = vector.multi_reduction <maximumf>, %161, %cst_89 [0] : vector<3x96xf32> to vector<96xf32>
    %163 = vector.shape_cast %162 : vector<96xf32> to vector<1x96xf32>
    %164 = vector.extract_strided_slice %154 {offsets = [6, 0], sizes = [3, 96], strides = [1, 1]} : vector<16x96xf32> to vector<3x96xf32>
    %cst_90 = arith.constant dense<0xFF800000> : vector<96xf32>
    %165 = vector.multi_reduction <maximumf>, %164, %cst_90 [0] : vector<3x96xf32> to vector<96xf32>
    %166 = vector.shape_cast %165 : vector<96xf32> to vector<1x96xf32>
    %167 = vector.extract_strided_slice %154 {offsets = [8, 0], sizes = [3, 96], strides = [1, 1]} : vector<16x96xf32> to vector<3x96xf32>
    %cst_91 = arith.constant dense<0xFF800000> : vector<96xf32>
    %168 = vector.multi_reduction <maximumf>, %167, %cst_91 [0] : vector<3x96xf32> to vector<96xf32>
    %169 = vector.shape_cast %168 : vector<96xf32> to vector<1x96xf32>
    %170 = vector.extract_strided_slice %154 {offsets = [10, 0], sizes = [3, 96], strides = [1, 1]} : vector<16x96xf32> to vector<3x96xf32>
    %cst_92 = arith.constant dense<0xFF800000> : vector<96xf32>
    %171 = vector.multi_reduction <maximumf>, %170, %cst_92 [0] : vector<3x96xf32> to vector<96xf32>
    %172 = vector.shape_cast %171 : vector<96xf32> to vector<1x96xf32>
    %173 = vector.extract_strided_slice %154 {offsets = [12, 0], sizes = [3, 96], strides = [1, 1]} : vector<16x96xf32> to vector<3x96xf32>
    %cst_93 = arith.constant dense<0xFF800000> : vector<96xf32>
    %174 = vector.multi_reduction <maximumf>, %173, %cst_93 [0] : vector<3x96xf32> to vector<96xf32>
    %175 = vector.shape_cast %174 : vector<96xf32> to vector<1x96xf32>
    %176 = tpu.concatenate %157, %160, %163, %166, %169, %172, %175 in 0 : vector<1x96xf32>, vector<1x96xf32>, vector<1x96xf32>, vector<1x96xf32>, vector<1x96xf32>, vector<1x96xf32>, vector<1x96xf32> -> vector<7x96xf32>
    %c68 = arith.constant 68 : index
    %c0_94 = arith.constant 0 : index
    %177 = vector.load %arg18[%c68, %c0_94] : memref<121x96xf32, #tpu.memory_space<vmem>>, vector<7x96xf32>
    tpu.vector_store %arg18[%c68, %c0_94], %176 {strides = array<i32>} : memref<121x96xf32, #tpu.memory_space<vmem>>, vector<7x96xf32>,
    %c160_95 = arith.constant 160 : index
    %c0_96 = arith.constant 0 : index
    %178 = vector.load %arg17[%c160_95, %c0_96] : memref<256x96xf32, #tpu.memory_space<vmem>>, vector<16x96xf32>
    %c176 = arith.constant 176 : index
    %c0_97 = arith.constant 0 : index
    %179 = vector.load %arg17[%c176, %c0_97] : memref<256x96xf32, #tpu.memory_space<vmem>>, vector<16x96xf32>
    %c192 = arith.constant 192 : index
    %c0_98 = arith.constant 0 : index
    %180 = vector.load %arg17[%c192, %c0_98] : memref<256x96xf32, #tpu.memory_space<vmem>>, vector<16x96xf32>
    %181 = arith.maximumf %178, %179 : vector<16x96xf32>
    %182 = arith.maximumf %181, %180 : vector<16x96xf32>
    %183 = vector.extract_strided_slice %182 {offsets = [0, 0], sizes = [3, 96], strides = [1, 1]} : vector<16x96xf32> to vector<3x96xf32>
    %cst_99 = arith.constant dense<0xFF800000> : vector<96xf32>
    %184 = vector.multi_reduction <maximumf>, %183, %cst_99 [0] : vector<3x96xf32> to vector<96xf32>
    %185 = vector.shape_cast %184 : vector<96xf32> to vector<1x96xf32>
    %186 = vector.extract_strided_slice %182 {offsets = [2, 0], sizes = [3, 96], strides = [1, 1]} : vector<16x96xf32> to vector<3x96xf32>
    %cst_100 = arith.constant dense<0xFF800000> : vector<96xf32>
    %187 = vector.multi_reduction <maximumf>, %186, %cst_100 [0] : vector<3x96xf32> to vector<96xf32>
    %188 = vector.shape_cast %187 : vector<96xf32> to vector<1x96xf32>
    %189 = vector.extract_strided_slice %182 {offsets = [4, 0], sizes = [3, 96], strides = [1, 1]} : vector<16x96xf32> to vector<3x96xf32>
    %cst_101 = arith.constant dense<0xFF800000> : vector<96xf32>
    %190 = vector.multi_reduction <maximumf>, %189, %cst_101 [0] : vector<3x96xf32> to vector<96xf32>
    %191 = vector.shape_cast %190 : vector<96xf32> to vector<1x96xf32>
    %192 = vector.extract_strided_slice %182 {offsets = [6, 0], sizes = [3, 96], strides = [1, 1]} : vector<16x96xf32> to vector<3x96xf32>
    %cst_102 = arith.constant dense<0xFF800000> : vector<96xf32>
    %193 = vector.multi_reduction <maximumf>, %192, %cst_102 [0] : vector<3x96xf32> to vector<96xf32>
    %194 = vector.shape_cast %193 : vector<96xf32> to vector<1x96xf32>
    %195 = vector.extract_strided_slice %182 {offsets = [8, 0], sizes = [3, 96], strides = [1, 1]} : vector<16x96xf32> to vector<3x96xf32>
    %cst_103 = arith.constant dense<0xFF800000> : vector<96xf32>
    %196 = vector.multi_reduction <maximumf>, %195, %cst_103 [0] : vector<3x96xf32> to vector<96xf32>
    %197 = vector.shape_cast %196 : vector<96xf32> to vector<1x96xf32>
    %198 = vector.extract_strided_slice %182 {offsets = [10, 0], sizes = [3, 96], strides = [1, 1]} : vector<16x96xf32> to vector<3x96xf32>
    %cst_104 = arith.constant dense<0xFF800000> : vector<96xf32>
    %199 = vector.multi_reduction <maximumf>, %198, %cst_104 [0] : vector<3x96xf32> to vector<96xf32>
    %200 = vector.shape_cast %199 : vector<96xf32> to vector<1x96xf32>
    %201 = vector.extract_strided_slice %182 {offsets = [12, 0], sizes = [3, 96], strides = [1, 1]} : vector<16x96xf32> to vector<3x96xf32>
    %cst_105 = arith.constant dense<0xFF800000> : vector<96xf32>
    %202 = vector.multi_reduction <maximumf>, %201, %cst_105 [0] : vector<3x96xf32> to vector<96xf32>
    %203 = vector.shape_cast %202 : vector<96xf32> to vector<1x96xf32>
    %204 = tpu.concatenate %185, %188, %191, %194, %197, %200, %203 in 0 : vector<1x96xf32>, vector<1x96xf32>, vector<1x96xf32>, vector<1x96xf32>, vector<1x96xf32>, vector<1x96xf32>, vector<1x96xf32> -> vector<7x96xf32>
    %c79 = arith.constant 79 : index
    %c0_106 = arith.constant 0 : index
    %205 = vector.load %arg18[%c79, %c0_106] : memref<121x96xf32, #tpu.memory_space<vmem>>, vector<7x96xf32>
    tpu.vector_store %arg18[%c79, %c0_106], %204 {strides = array<i32>} : memref<121x96xf32, #tpu.memory_space<vmem>>, vector<7x96xf32>,
    %c192_107 = arith.constant 192 : index
    %c0_108 = arith.constant 0 : index
    %206 = vector.load %arg17[%c192_107, %c0_108] : memref<256x96xf32, #tpu.memory_space<vmem>>, vector<16x96xf32>
    %c208 = arith.constant 208 : index
    %c0_109 = arith.constant 0 : index
    %207 = vector.load %arg17[%c208, %c0_109] : memref<256x96xf32, #tpu.memory_space<vmem>>, vector<16x96xf32>
    %c224 = arith.constant 224 : index
    %c0_110 = arith.constant 0 : index
    %208 = vector.load %arg17[%c224, %c0_110] : memref<256x96xf32, #tpu.memory_space<vmem>>, vector<16x96xf32>
    %209 = arith.maximumf %206, %207 : vector<16x96xf32>
    %210 = arith.maximumf %209, %208 : vector<16x96xf32>
    %211 = vector.extract_strided_slice %210 {offsets = [0, 0], sizes = [3, 96], strides = [1, 1]} : vector<16x96xf32> to vector<3x96xf32>
    %cst_111 = arith.constant dense<0xFF800000> : vector<96xf32>
    %212 = vector.multi_reduction <maximumf>, %211, %cst_111 [0] : vector<3x96xf32> to vector<96xf32>
    %213 = vector.shape_cast %212 : vector<96xf32> to vector<1x96xf32>
    %214 = vector.extract_strided_slice %210 {offsets = [2, 0], sizes = [3, 96], strides = [1, 1]} : vector<16x96xf32> to vector<3x96xf32>
    %cst_112 = arith.constant dense<0xFF800000> : vector<96xf32>
    %215 = vector.multi_reduction <maximumf>, %214, %cst_112 [0] : vector<3x96xf32> to vector<96xf32>
    %216 = vector.shape_cast %215 : vector<96xf32> to vector<1x96xf32>
    %217 = vector.extract_strided_slice %210 {offsets = [4, 0], sizes = [3, 96], strides = [1, 1]} : vector<16x96xf32> to vector<3x96xf32>
    %cst_113 = arith.constant dense<0xFF800000> : vector<96xf32>
    %218 = vector.multi_reduction <maximumf>, %217, %cst_113 [0] : vector<3x96xf32> to vector<96xf32>
    %219 = vector.shape_cast %218 : vector<96xf32> to vector<1x96xf32>
    %220 = vector.extract_strided_slice %210 {offsets = [6, 0], sizes = [3, 96], strides = [1, 1]} : vector<16x96xf32> to vector<3x96xf32>
    %cst_114 = arith.constant dense<0xFF800000> : vector<96xf32>
    %221 = vector.multi_reduction <maximumf>, %220, %cst_114 [0] : vector<3x96xf32> to vector<96xf32>
    %222 = vector.shape_cast %221 : vector<96xf32> to vector<1x96xf32>
    %223 = vector.extract_strided_slice %210 {offsets = [8, 0], sizes = [3, 96], strides = [1, 1]} : vector<16x96xf32> to vector<3x96xf32>
    %cst_115 = arith.constant dense<0xFF800000> : vector<96xf32>
    %224 = vector.multi_reduction <maximumf>, %223, %cst_115 [0] : vector<3x96xf32> to vector<96xf32>
    %225 = vector.shape_cast %224 : vector<96xf32> to vector<1x96xf32>
    %226 = vector.extract_strided_slice %210 {offsets = [10, 0], sizes = [3, 96], strides = [1, 1]} : vector<16x96xf32> to vector<3x96xf32>
    %cst_116 = arith.constant dense<0xFF800000> : vector<96xf32>
    %227 = vector.multi_reduction <maximumf>, %226, %cst_116 [0] : vector<3x96xf32> to vector<96xf32>
    %228 = vector.shape_cast %227 : vector<96xf32> to vector<1x96xf32>
    %229 = vector.extract_strided_slice %210 {offsets = [12, 0], sizes = [3, 96], strides = [1, 1]} : vector<16x96xf32> to vector<3x96xf32>
    %cst_117 = arith.constant dense<0xFF800000> : vector<96xf32>
    %230 = vector.multi_reduction <maximumf>, %229, %cst_117 [0] : vector<3x96xf32> to vector<96xf32>
    %231 = vector.shape_cast %230 : vector<96xf32> to vector<1x96xf32>
    %232 = tpu.concatenate %213, %216, %219, %222, %225, %228, %231 in 0 : vector<1x96xf32>, vector<1x96xf32>, vector<1x96xf32>, vector<1x96xf32>, vector<1x96xf32>, vector<1x96xf32>, vector<1x96xf32> -> vector<7x96xf32>
    %c90 = arith.constant 90 : index
    %c0_118 = arith.constant 0 : index
    %233 = vector.load %arg18[%c90, %c0_118] : memref<121x96xf32, #tpu.memory_space<vmem>>, vector<7x96xf32>
    tpu.vector_store %arg18[%c90, %c0_118], %232 {strides = array<i32>} : memref<121x96xf32, #tpu.memory_space<vmem>>, vector<7x96xf32>,
    %c0_119 = arith.constant 0 : index
    %c0_120 = arith.constant 0 : index
    %234 = vector.load %arg18[%c0_119, %c0_120] : memref<121x96xf32, #tpu.memory_space<vmem>>, vector<121x96xf32>
    %235 = arith.truncf %234 : vector<121x96xf32> to vector<121x96xbf16>
    %cst_121 = arith.constant 0.000000e+00 : f32
    %236 = vector.broadcast %cst_121 : f32 to vector<73x192xf32>
    %237 = vector.extract_strided_slice %235 {offsets = [0, 0], sizes = [73, 96], strides = [1, 1]} : vector<121x96xbf16> to vector<73x96xbf16>
    %c0_122 = arith.constant 0 : index
    %c0_123 = arith.constant 0 : index
    %c0_124 = arith.constant 0 : index
    %238 = vector.load %arg6[%c0_122, %c0_123, %c0_124] : memref<25x96x192xbf16, #tpu.memory_space<vmem>>, vector<1x96x192xbf16>
    %239 = vector.shape_cast %238 : vector<1x96x192xbf16> to vector<96x192xbf16>
    %cst_125 = arith.constant dense<0.000000e+00> : vector<73x192xf32>
    %240 = tpu.matmul %237, %239, %cst_125 {dimension_numbers = #tpu.dot_dimension_numbers<[1], [0], [0], [1], [0, 0, 1, 1], [], []>} : vector<73x96xbf16>, vector<96x192xbf16>, vector<73x192xf32> -> vector<73x192xf32>
    %241 = arith.addf %236, %240 : vector<73x192xf32>
    %242 = vector.extract_strided_slice %235 {offsets = [1, 0], sizes = [73, 96], strides = [1, 1]} : vector<121x96xbf16> to vector<73x96xbf16>
    %c1 = arith.constant 1 : index
    %c0_126 = arith.constant 0 : index
    %c0_127 = arith.constant 0 : index
    %243 = vector.load %arg6[%c1, %c0_126, %c0_127] : memref<25x96x192xbf16, #tpu.memory_space<vmem>>, vector<1x96x192xbf16>
    %244 = vector.shape_cast %243 : vector<1x96x192xbf16> to vector<96x192xbf16>
    %cst_128 = arith.constant dense<0.000000e+00> : vector<73x192xf32>
    %245 = tpu.matmul %242, %244, %cst_128 {dimension_numbers = #tpu.dot_dimension_numbers<[1], [0], [0], [1], [0, 0, 1, 1], [], []>} : vector<73x96xbf16>, vector<96x192xbf16>, vector<73x192xf32> -> vector<73x192xf32>
    %246 = arith.addf %241, %245 : vector<73x192xf32>
    %247 = vector.extract_strided_slice %235 {offsets = [2, 0], sizes = [73, 96], strides = [1, 1]} : vector<121x96xbf16> to vector<73x96xbf16>
    %c2 = arith.constant 2 : index
    %c0_129 = arith.constant 0 : index
    %c0_130 = arith.constant 0 : index
    %248 = vector.load %arg6[%c2, %c0_129, %c0_130] : memref<25x96x192xbf16, #tpu.memory_space<vmem>>, vector<1x96x192xbf16>
    %249 = vector.shape_cast %248 : vector<1x96x192xbf16> to vector<96x192xbf16>
    %cst_131 = arith.constant dense<0.000000e+00> : vector<73x192xf32>
    %250 = tpu.matmul %247, %249, %cst_131 {dimension_numbers = #tpu.dot_dimension_numbers<[1], [0], [0], [1], [0, 0, 1, 1], [], []>} : vector<73x96xbf16>, vector<96x192xbf16>, vector<73x192xf32> -> vector<73x192xf32>
    %251 = arith.addf %246, %250 : vector<73x192xf32>
    %252 = vector.extract_strided_slice %235 {offsets = [3, 0], sizes = [73, 96], strides = [1, 1]} : vector<121x96xbf16> to vector<73x96xbf16>
    %c3 = arith.constant 3 : index
    %c0_132 = arith.constant 0 : index
    %c0_133 = arith.constant 0 : index
    %253 = vector.load %arg6[%c3, %c0_132, %c0_133] : memref<25x96x192xbf16, #tpu.memory_space<vmem>>, vector<1x96x192xbf16>
    %254 = vector.shape_cast %253 : vector<1x96x192xbf16> to vector<96x192xbf16>
    %cst_134 = arith.constant dense<0.000000e+00> : vector<73x192xf32>
    %255 = tpu.matmul %252, %254, %cst_134 {dimension_numbers = #tpu.dot_dimension_numbers<[1], [0], [0], [1], [0, 0, 1, 1], [], []>} : vector<73x96xbf16>, vector<96x192xbf16>, vector<73x192xf32> -> vector<73x192xf32>
    %256 = arith.addf %251, %255 : vector<73x192xf32>
    %257 = vector.extract_strided_slice %235 {offsets = [4, 0], sizes = [73, 96], strides = [1, 1]} : vector<121x96xbf16> to vector<73x96xbf16>
    %c4 = arith.constant 4 : index
    %c0_135 = arith.constant 0 : index
    %c0_136 = arith.constant 0 : index
    %258 = vector.load %arg6[%c4, %c0_135, %c0_136] : memref<25x96x192xbf16, #tpu.memory_space<vmem>>, vector<1x96x192xbf16>
    %259 = vector.shape_cast %258 : vector<1x96x192xbf16> to vector<96x192xbf16>
    %cst_137 = arith.constant dense<0.000000e+00> : vector<73x192xf32>
    %260 = tpu.matmul %257, %259, %cst_137 {dimension_numbers = #tpu.dot_dimension_numbers<[1], [0], [0], [1], [0, 0, 1, 1], [], []>} : vector<73x96xbf16>, vector<96x192xbf16>, vector<73x192xf32> -> vector<73x192xf32>
    %261 = arith.addf %256, %260 : vector<73x192xf32>
    %262 = vector.extract_strided_slice %235 {offsets = [11, 0], sizes = [73, 96], strides = [1, 1]} : vector<121x96xbf16> to vector<73x96xbf16>
    %c5 = arith.constant 5 : index
    %c0_138 = arith.constant 0 : index
    %c0_139 = arith.constant 0 : index
    %263 = vector.load %arg6[%c5, %c0_138, %c0_139] : memref<25x96x192xbf16, #tpu.memory_space<vmem>>, vector<1x96x192xbf16>
    %264 = vector.shape_cast %263 : vector<1x96x192xbf16> to vector<96x192xbf16>
    %cst_140 = arith.constant dense<0.000000e+00> : vector<73x192xf32>
    %265 = tpu.matmul %262, %264, %cst_140 {dimension_numbers = #tpu.dot_dimension_numbers<[1], [0], [0], [1], [0, 0, 1, 1], [], []>} : vector<73x96xbf16>, vector<96x192xbf16>, vector<73x192xf32> -> vector<73x192xf32>
    %266 = arith.addf %261, %265 : vector<73x192xf32>
    %267 = vector.extract_strided_slice %235 {offsets = [12, 0], sizes = [73, 96], strides = [1, 1]} : vector<121x96xbf16> to vector<73x96xbf16>
    %c6 = arith.constant 6 : index
    %c0_141 = arith.constant 0 : index
    %c0_142 = arith.constant 0 : index
    %268 = vector.load %arg6[%c6, %c0_141, %c0_142] : memref<25x96x192xbf16, #tpu.memory_space<vmem>>, vector<1x96x192xbf16>
    %269 = vector.shape_cast %268 : vector<1x96x192xbf16> to vector<96x192xbf16>
    %cst_143 = arith.constant dense<0.000000e+00> : vector<73x192xf32>
    %270 = tpu.matmul %267, %269, %cst_143 {dimension_numbers = #tpu.dot_dimension_numbers<[1], [0], [0], [1], [0, 0, 1, 1], [], []>} : vector<73x96xbf16>, vector<96x192xbf16>, vector<73x192xf32> -> vector<73x192xf32>
    %271 = arith.addf %266, %270 : vector<73x192xf32>
    %272 = vector.extract_strided_slice %235 {offsets = [13, 0], sizes = [73, 96], strides = [1, 1]} : vector<121x96xbf16> to vector<73x96xbf16>
    %c7 = arith.constant 7 : index
    %c0_144 = arith.constant 0 : index
    %c0_145 = arith.constant 0 : index
    %273 = vector.load %arg6[%c7, %c0_144, %c0_145] : memref<25x96x192xbf16, #tpu.memory_space<vmem>>, vector<1x96x192xbf16>
    %274 = vector.shape_cast %273 : vector<1x96x192xbf16> to vector<96x192xbf16>
    %cst_146 = arith.constant dense<0.000000e+00> : vector<73x192xf32>
    %275 = tpu.matmul %272, %274, %cst_146 {dimension_numbers = #tpu.dot_dimension_numbers<[1], [0], [0], [1], [0, 0, 1, 1], [], []>} : vector<73x96xbf16>, vector<96x192xbf16>, vector<73x192xf32> -> vector<73x192xf32>
    %276 = arith.addf %271, %275 : vector<73x192xf32>
    %277 = vector.extract_strided_slice %235 {offsets = [14, 0], sizes = [73, 96], strides = [1, 1]} : vector<121x96xbf16> to vector<73x96xbf16>
    %c8 = arith.constant 8 : index
    %c0_147 = arith.constant 0 : index
    %c0_148 = arith.constant 0 : index
    %278 = vector.load %arg6[%c8, %c0_147, %c0_148] : memref<25x96x192xbf16, #tpu.memory_space<vmem>>, vector<1x96x192xbf16>
    %279 = vector.shape_cast %278 : vector<1x96x192xbf16> to vector<96x192xbf16>
    %cst_149 = arith.constant dense<0.000000e+00> : vector<73x192xf32>
    %280 = tpu.matmul %277, %279, %cst_149 {dimension_numbers = #tpu.dot_dimension_numbers<[1], [0], [0], [1], [0, 0, 1, 1], [], []>} : vector<73x96xbf16>, vector<96x192xbf16>, vector<73x192xf32> -> vector<73x192xf32>
    %281 = arith.addf %276, %280 : vector<73x192xf32>
    %282 = vector.extract_strided_slice %235 {offsets = [15, 0], sizes = [73, 96], strides = [1, 1]} : vector<121x96xbf16> to vector<73x96xbf16>
    %c9 = arith.constant 9 : index
    %c0_150 = arith.constant 0 : index
    %c0_151 = arith.constant 0 : index
    %283 = vector.load %arg6[%c9, %c0_150, %c0_151] : memref<25x96x192xbf16, #tpu.memory_space<vmem>>, vector<1x96x192xbf16>
    %284 = vector.shape_cast %283 : vector<1x96x192xbf16> to vector<96x192xbf16>
    %cst_152 = arith.constant dense<0.000000e+00> : vector<73x192xf32>
    %285 = tpu.matmul %282, %284, %cst_152 {dimension_numbers = #tpu.dot_dimension_numbers<[1], [0], [0], [1], [0, 0, 1, 1], [], []>} : vector<73x96xbf16>, vector<96x192xbf16>, vector<73x192xf32> -> vector<73x192xf32>
    %286 = arith.addf %281, %285 : vector<73x192xf32>
    %287 = vector.extract_strided_slice %235 {offsets = [22, 0], sizes = [73, 96], strides = [1, 1]} : vector<121x96xbf16> to vector<73x96xbf16>
    %c10 = arith.constant 10 : index
    %c0_153 = arith.constant 0 : index
    %c0_154 = arith.constant 0 : index
    %288 = vector.load %arg6[%c10, %c0_153, %c0_154] : memref<25x96x192xbf16, #tpu.memory_space<vmem>>, vector<1x96x192xbf16>
    %289 = vector.shape_cast %288 : vector<1x96x192xbf16> to vector<96x192xbf16>
    %cst_155 = arith.constant dense<0.000000e+00> : vector<73x192xf32>
    %290 = tpu.matmul %287, %289, %cst_155 {dimension_numbers = #tpu.dot_dimension_numbers<[1], [0], [0], [1], [0, 0, 1, 1], [], []>} : vector<73x96xbf16>, vector<96x192xbf16>, vector<73x192xf32> -> vector<73x192xf32>
    %291 = arith.addf %286, %290 : vector<73x192xf32>
    %292 = vector.extract_strided_slice %235 {offsets = [23, 0], sizes = [73, 96], strides = [1, 1]} : vector<121x96xbf16> to vector<73x96xbf16>
    %c11 = arith.constant 11 : index
    %c0_156 = arith.constant 0 : index
    %c0_157 = arith.constant 0 : index
    %293 = vector.load %arg6[%c11, %c0_156, %c0_157] : memref<25x96x192xbf16, #tpu.memory_space<vmem>>, vector<1x96x192xbf16>
    %294 = vector.shape_cast %293 : vector<1x96x192xbf16> to vector<96x192xbf16>
    %cst_158 = arith.constant dense<0.000000e+00> : vector<73x192xf32>
    %295 = tpu.matmul %292, %294, %cst_158 {dimension_numbers = #tpu.dot_dimension_numbers<[1], [0], [0], [1], [0, 0, 1, 1], [], []>} : vector<73x96xbf16>, vector<96x192xbf16>, vector<73x192xf32> -> vector<73x192xf32>
    %296 = arith.addf %291, %295 : vector<73x192xf32>
    %297 = vector.extract_strided_slice %235 {offsets = [24, 0], sizes = [73, 96], strides = [1, 1]} : vector<121x96xbf16> to vector<73x96xbf16>
    %c12 = arith.constant 12 : index
    %c0_159 = arith.constant 0 : index
    %c0_160 = arith.constant 0 : index
    %298 = vector.load %arg6[%c12, %c0_159, %c0_160] : memref<25x96x192xbf16, #tpu.memory_space<vmem>>, vector<1x96x192xbf16>
    %299 = vector.shape_cast %298 : vector<1x96x192xbf16> to vector<96x192xbf16>
    %cst_161 = arith.constant dense<0.000000e+00> : vector<73x192xf32>
    %300 = tpu.matmul %297, %299, %cst_161 {dimension_numbers = #tpu.dot_dimension_numbers<[1], [0], [0], [1], [0, 0, 1, 1], [], []>} : vector<73x96xbf16>, vector<96x192xbf16>, vector<73x192xf32> -> vector<73x192xf32>
    %301 = arith.addf %296, %300 : vector<73x192xf32>
    %302 = vector.extract_strided_slice %235 {offsets = [25, 0], sizes = [73, 96], strides = [1, 1]} : vector<121x96xbf16> to vector<73x96xbf16>
    %c13 = arith.constant 13 : index
    %c0_162 = arith.constant 0 : index
    %c0_163 = arith.constant 0 : index
    %303 = vector.load %arg6[%c13, %c0_162, %c0_163] : memref<25x96x192xbf16, #tpu.memory_space<vmem>>, vector<1x96x192xbf16>
    %304 = vector.shape_cast %303 : vector<1x96x192xbf16> to vector<96x192xbf16>
    %cst_164 = arith.constant dense<0.000000e+00> : vector<73x192xf32>
    %305 = tpu.matmul %302, %304, %cst_164 {dimension_numbers = #tpu.dot_dimension_numbers<[1], [0], [0], [1], [0, 0, 1, 1], [], []>} : vector<73x96xbf16>, vector<96x192xbf16>, vector<73x192xf32> -> vector<73x192xf32>
    %306 = arith.addf %301, %305 : vector<73x192xf32>
    %307 = vector.extract_strided_slice %235 {offsets = [26, 0], sizes = [73, 96], strides = [1, 1]} : vector<121x96xbf16> to vector<73x96xbf16>
    %c14 = arith.constant 14 : index
    %c0_165 = arith.constant 0 : index
    %c0_166 = arith.constant 0 : index
    %308 = vector.load %arg6[%c14, %c0_165, %c0_166] : memref<25x96x192xbf16, #tpu.memory_space<vmem>>, vector<1x96x192xbf16>
    %309 = vector.shape_cast %308 : vector<1x96x192xbf16> to vector<96x192xbf16>
    %cst_167 = arith.constant dense<0.000000e+00> : vector<73x192xf32>
    %310 = tpu.matmul %307, %309, %cst_167 {dimension_numbers = #tpu.dot_dimension_numbers<[1], [0], [0], [1], [0, 0, 1, 1], [], []>} : vector<73x96xbf16>, vector<96x192xbf16>, vector<73x192xf32> -> vector<73x192xf32>
    %311 = arith.addf %306, %310 : vector<73x192xf32>
    %312 = vector.extract_strided_slice %235 {offsets = [33, 0], sizes = [73, 96], strides = [1, 1]} : vector<121x96xbf16> to vector<73x96xbf16>
    %c15 = arith.constant 15 : index
    %c0_168 = arith.constant 0 : index
    %c0_169 = arith.constant 0 : index
    %313 = vector.load %arg6[%c15, %c0_168, %c0_169] : memref<25x96x192xbf16, #tpu.memory_space<vmem>>, vector<1x96x192xbf16>
    %314 = vector.shape_cast %313 : vector<1x96x192xbf16> to vector<96x192xbf16>
    %cst_170 = arith.constant dense<0.000000e+00> : vector<73x192xf32>
    %315 = tpu.matmul %312, %314, %cst_170 {dimension_numbers = #tpu.dot_dimension_numbers<[1], [0], [0], [1], [0, 0, 1, 1], [], []>} : vector<73x96xbf16>, vector<96x192xbf16>, vector<73x192xf32> -> vector<73x192xf32>
    %316 = arith.addf %311, %315 : vector<73x192xf32>
    %317 = vector.extract_strided_slice %235 {offsets = [34, 0], sizes = [73, 96], strides = [1, 1]} : vector<121x96xbf16> to vector<73x96xbf16>
    %c16_171 = arith.constant 16 : index
    %c0_172 = arith.constant 0 : index
    %c0_173 = arith.constant 0 : index
    %318 = vector.load %arg6[%c16_171, %c0_172, %c0_173] : memref<25x96x192xbf16, #tpu.memory_space<vmem>>, vector<1x96x192xbf16>
    %319 = vector.shape_cast %318 : vector<1x96x192xbf16> to vector<96x192xbf16>
    %cst_174 = arith.constant dense<0.000000e+00> : vector<73x192xf32>
    %320 = tpu.matmul %317, %319, %cst_174 {dimension_numbers = #tpu.dot_dimension_numbers<[1], [0], [0], [1], [0, 0, 1, 1], [], []>} : vector<73x96xbf16>, vector<96x192xbf16>, vector<73x192xf32> -> vector<73x192xf32>
    %321 = arith.addf %316, %320 : vector<73x192xf32>
    %322 = vector.extract_strided_slice %235 {offsets = [35, 0], sizes = [73, 96], strides = [1, 1]} : vector<121x96xbf16> to vector<73x96xbf16>
    %c17 = arith.constant 17 : index
    %c0_175 = arith.constant 0 : index
    %c0_176 = arith.constant 0 : index
    %323 = vector.load %arg6[%c17, %c0_175, %c0_176] : memref<25x96x192xbf16, #tpu.memory_space<vmem>>, vector<1x96x192xbf16>
    %324 = vector.shape_cast %323 : vector<1x96x192xbf16> to vector<96x192xbf16>
    %cst_177 = arith.constant dense<0.000000e+00> : vector<73x192xf32>
    %325 = tpu.matmul %322, %324, %cst_177 {dimension_numbers = #tpu.dot_dimension_numbers<[1], [0], [0], [1], [0, 0, 1, 1], [], []>} : vector<73x96xbf16>, vector<96x192xbf16>, vector<73x192xf32> -> vector<73x192xf32>
    %326 = arith.addf %321, %325 : vector<73x192xf32>
    %327 = vector.extract_strided_slice %235 {offsets = [36, 0], sizes = [73, 96], strides = [1, 1]} : vector<121x96xbf16> to vector<73x96xbf16>
    %c18 = arith.constant 18 : index
    %c0_178 = arith.constant 0 : index
    %c0_179 = arith.constant 0 : index
    %328 = vector.load %arg6[%c18, %c0_178, %c0_179] : memref<25x96x192xbf16, #tpu.memory_space<vmem>>, vector<1x96x192xbf16>
    %329 = vector.shape_cast %328 : vector<1x96x192xbf16> to vector<96x192xbf16>
    %cst_180 = arith.constant dense<0.000000e+00> : vector<73x192xf32>
    %330 = tpu.matmul %327, %329, %cst_180 {dimension_numbers = #tpu.dot_dimension_numbers<[1], [0], [0], [1], [0, 0, 1, 1], [], []>} : vector<73x96xbf16>, vector<96x192xbf16>, vector<73x192xf32> -> vector<73x192xf32>
    %331 = arith.addf %326, %330 : vector<73x192xf32>
    %332 = vector.extract_strided_slice %235 {offsets = [37, 0], sizes = [73, 96], strides = [1, 1]} : vector<121x96xbf16> to vector<73x96xbf16>
    %c19 = arith.constant 19 : index
    %c0_181 = arith.constant 0 : index
    %c0_182 = arith.constant 0 : index
    %333 = vector.load %arg6[%c19, %c0_181, %c0_182] : memref<25x96x192xbf16, #tpu.memory_space<vmem>>, vector<1x96x192xbf16>
    %334 = vector.shape_cast %333 : vector<1x96x192xbf16> to vector<96x192xbf16>
    %cst_183 = arith.constant dense<0.000000e+00> : vector<73x192xf32>
    %335 = tpu.matmul %332, %334, %cst_183 {dimension_numbers = #tpu.dot_dimension_numbers<[1], [0], [0], [1], [0, 0, 1, 1], [], []>} : vector<73x96xbf16>, vector<96x192xbf16>, vector<73x192xf32> -> vector<73x192xf32>
    %336 = arith.addf %331, %335 : vector<73x192xf32>
    %337 = vector.extract_strided_slice %235 {offsets = [44, 0], sizes = [73, 96], strides = [1, 1]} : vector<121x96xbf16> to vector<73x96xbf16>
    %c20 = arith.constant 20 : index
    %c0_184 = arith.constant 0 : index
    %c0_185 = arith.constant 0 : index
    %338 = vector.load %arg6[%c20, %c0_184, %c0_185] : memref<25x96x192xbf16, #tpu.memory_space<vmem>>, vector<1x96x192xbf16>
    %339 = vector.shape_cast %338 : vector<1x96x192xbf16> to vector<96x192xbf16>
    %cst_186 = arith.constant dense<0.000000e+00> : vector<73x192xf32>
    %340 = tpu.matmul %337, %339, %cst_186 {dimension_numbers = #tpu.dot_dimension_numbers<[1], [0], [0], [1], [0, 0, 1, 1], [], []>} : vector<73x96xbf16>, vector<96x192xbf16>, vector<73x192xf32> -> vector<73x192xf32>
    %341 = arith.addf %336, %340 : vector<73x192xf32>
    %342 = vector.extract_strided_slice %235 {offsets = [45, 0], sizes = [73, 96], strides = [1, 1]} : vector<121x96xbf16> to vector<73x96xbf16>
    %c21 = arith.constant 21 : index
    %c0_187 = arith.constant 0 : index
    %c0_188 = arith.constant 0 : index
    %343 = vector.load %arg6[%c21, %c0_187, %c0_188] : memref<25x96x192xbf16, #tpu.memory_space<vmem>>, vector<1x96x192xbf16>
    %344 = vector.shape_cast %343 : vector<1x96x192xbf16> to vector<96x192xbf16>
    %cst_189 = arith.constant dense<0.000000e+00> : vector<73x192xf32>
    %345 = tpu.matmul %342, %344, %cst_189 {dimension_numbers = #tpu.dot_dimension_numbers<[1], [0], [0], [1], [0, 0, 1, 1], [], []>} : vector<73x96xbf16>, vector<96x192xbf16>, vector<73x192xf32> -> vector<73x192xf32>
    %346 = arith.addf %341, %345 : vector<73x192xf32>
    %347 = vector.extract_strided_slice %235 {offsets = [46, 0], sizes = [73, 96], strides = [1, 1]} : vector<121x96xbf16> to vector<73x96xbf16>
    %c22 = arith.constant 22 : index
    %c0_190 = arith.constant 0 : index
    %c0_191 = arith.constant 0 : index
    %348 = vector.load %arg6[%c22, %c0_190, %c0_191] : memref<25x96x192xbf16, #tpu.memory_space<vmem>>, vector<1x96x192xbf16>
    %349 = vector.shape_cast %348 : vector<1x96x192xbf16> to vector<96x192xbf16>
    %cst_192 = arith.constant dense<0.000000e+00> : vector<73x192xf32>
    %350 = tpu.matmul %347, %349, %cst_192 {dimension_numbers = #tpu.dot_dimension_numbers<[1], [0], [0], [1], [0, 0, 1, 1], [], []>} : vector<73x96xbf16>, vector<96x192xbf16>, vector<73x192xf32> -> vector<73x192xf32>
    %351 = arith.addf %346, %350 : vector<73x192xf32>
    %352 = vector.extract_strided_slice %235 {offsets = [47, 0], sizes = [73, 96], strides = [1, 1]} : vector<121x96xbf16> to vector<73x96xbf16>
    %c23 = arith.constant 23 : index
    %c0_193 = arith.constant 0 : index
    %c0_194 = arith.constant 0 : index
    %353 = vector.load %arg6[%c23, %c0_193, %c0_194] : memref<25x96x192xbf16, #tpu.memory_space<vmem>>, vector<1x96x192xbf16>
    %354 = vector.shape_cast %353 : vector<1x96x192xbf16> to vector<96x192xbf16>
    %cst_195 = arith.constant dense<0.000000e+00> : vector<73x192xf32>
    %355 = tpu.matmul %352, %354, %cst_195 {dimension_numbers = #tpu.dot_dimension_numbers<[1], [0], [0], [1], [0, 0, 1, 1], [], []>} : vector<73x96xbf16>, vector<96x192xbf16>, vector<73x192xf32> -> vector<73x192xf32>
    %356 = arith.addf %351, %355 : vector<73x192xf32>
    %357 = vector.extract_strided_slice %235 {offsets = [48, 0], sizes = [73, 96], strides = [1, 1]} : vector<121x96xbf16> to vector<73x96xbf16>
    %c24_196 = arith.constant 24 : index
    %c0_197 = arith.constant 0 : index
    %c0_198 = arith.constant 0 : index
    %358 = vector.load %arg6[%c24_196, %c0_197, %c0_198] : memref<25x96x192xbf16, #tpu.memory_space<vmem>>, vector<1x96x192xbf16>
    %359 = vector.shape_cast %358 : vector<1x96x192xbf16> to vector<96x192xbf16>
    %cst_199 = arith.constant dense<0.000000e+00> : vector<73x192xf32>
    %360 = tpu.matmul %357, %359, %cst_199 {dimension_numbers = #tpu.dot_dimension_numbers<[1], [0], [0], [1], [0, 0, 1, 1], [], []>} : vector<73x96xbf16>, vector<96x192xbf16>, vector<73x192xf32> -> vector<73x192xf32>
    %361 = arith.addf %356, %360 : vector<73x192xf32>
    %c0_200 = arith.constant 0 : index
    %c0_201 = arith.constant 0 : index
    %362 = vector.load %arg7[%c0_200, %c0_201] : memref<1x192xf32, #tpu.memory_space<vmem>>, vector<1x192xf32>
    %363 = vector.broadcast %362 : vector<1x192xf32> to vector<73x192xf32>
    %364 = arith.addf %361, %363 : vector<73x192xf32>
    %cst_202 = arith.constant 0.000000e+00 : f32
    %365 = vector.broadcast %cst_202 : f32 to vector<73x192xf32>
    %366 = arith.maximumf %364, %365 : vector<73x192xf32>
    %367 = arith.truncf %366 : vector<73x192xf32> to vector<73x192xbf16>
    %c0_203 = arith.constant 0 : index
    %c0_204 = arith.constant 0 : index
    %368 = vector.load %arg8[%c0_203, %c0_204] : memref<192x192xbf16, #tpu.memory_space<vmem>>, vector<192x192xbf16>
    %cst_205 = arith.constant dense<0.000000e+00> : vector<73x192xf32>
    %369 = tpu.matmul %367, %368, %cst_205 {dimension_numbers = #tpu.dot_dimension_numbers<[1], [0], [0], [1], [0, 0, 1, 1], [], []>} : vector<73x192xbf16>, vector<192x192xbf16>, vector<73x192xf32> -> vector<73x192xf32>
    %c0_206 = arith.constant 0 : index
    %c0_207 = arith.constant 0 : index
    %370 = vector.load %arg9[%c0_206, %c0_207] : memref<1x192xf32, #tpu.memory_space<vmem>>, vector<1x192xf32>
    %371 = vector.broadcast %370 : vector<1x192xf32> to vector<73x192xf32>
    %372 = arith.addf %369, %371 : vector<73x192xf32>
    %cst_208 = arith.constant 0.000000e+00 : f32
    %373 = vector.broadcast %cst_208 : f32 to vector<73x192xf32>
    %374 = arith.maximumf %372, %373 : vector<73x192xf32>
    %cst_209 = arith.constant 0.000000e+00 : f32
    %375 = vector.broadcast %cst_209 : f32 to vector<81x192xf32>
    %c0_210 = arith.constant 0 : index
    %c0_211 = arith.constant 0 : index
    %376 = vector.load %arg19[%c0_210, %c0_211] : memref<81x192xf32, #tpu.memory_space<vmem>>, vector<81x192xf32>
    tpu.vector_store %arg19[%c0_210, %c0_211], %375 {strides = array<i32>} : memref<81x192xf32, #tpu.memory_space<vmem>>, vector<81x192xf32>,
    %377 = vector.extract_strided_slice %374 {offsets = [0, 0], sizes = [7, 192], strides = [1, 1]} : vector<73x192xf32> to vector<7x192xf32>
    %378 = vector.extract_strided_slice %374 {offsets = [11, 0], sizes = [7, 192], strides = [1, 1]} : vector<73x192xf32> to vector<7x192xf32>
    %379 = vector.extract_strided_slice %374 {offsets = [22, 0], sizes = [7, 192], strides = [1, 1]} : vector<73x192xf32> to vector<7x192xf32>
    %380 = arith.maximumf %377, %378 : vector<7x192xf32>
    %381 = arith.maximumf %380, %379 : vector<7x192xf32>
    %382 = vector.extract_strided_slice %381 {offsets = [0, 0], sizes = [3, 192], strides = [1, 1]} : vector<7x192xf32> to vector<3x192xf32>
    %cst_212 = arith.constant dense<0xFF800000> : vector<192xf32>
    %383 = vector.multi_reduction <maximumf>, %382, %cst_212 [0] : vector<3x192xf32> to vector<192xf32>
    %384 = vector.shape_cast %383 : vector<192xf32> to vector<1x192xf32>
    %385 = vector.extract_strided_slice %381 {offsets = [2, 0], sizes = [3, 192], strides = [1, 1]} : vector<7x192xf32> to vector<3x192xf32>
    %cst_213 = arith.constant dense<0xFF800000> : vector<192xf32>
    %386 = vector.multi_reduction <maximumf>, %385, %cst_213 [0] : vector<3x192xf32> to vector<192xf32>
    %387 = vector.shape_cast %386 : vector<192xf32> to vector<1x192xf32>
    %388 = vector.extract_strided_slice %381 {offsets = [4, 0], sizes = [3, 192], strides = [1, 1]} : vector<7x192xf32> to vector<3x192xf32>
    %cst_214 = arith.constant dense<0xFF800000> : vector<192xf32>
    %389 = vector.multi_reduction <maximumf>, %388, %cst_214 [0] : vector<3x192xf32> to vector<192xf32>
    %390 = vector.shape_cast %389 : vector<192xf32> to vector<1x192xf32>
    %391 = tpu.concatenate %384, %387, %390 in 0 : vector<1x192xf32>, vector<1x192xf32>, vector<1x192xf32> -> vector<3x192xf32>
    %c30 = arith.constant 30 : index
    %c0_215 = arith.constant 0 : index
    %392 = vector.load %arg19[%c30, %c0_215] : memref<81x192xf32, #tpu.memory_space<vmem>>, vector<3x192xf32>
    tpu.vector_store %arg19[%c30, %c0_215], %391 {strides = array<i32>} : memref<81x192xf32, #tpu.memory_space<vmem>>, vector<3x192xf32>,
    %393 = vector.extract_strided_slice %374 {offsets = [22, 0], sizes = [7, 192], strides = [1, 1]} : vector<73x192xf32> to vector<7x192xf32>
    %394 = vector.extract_strided_slice %374 {offsets = [33, 0], sizes = [7, 192], strides = [1, 1]} : vector<73x192xf32> to vector<7x192xf32>
    %395 = vector.extract_strided_slice %374 {offsets = [44, 0], sizes = [7, 192], strides = [1, 1]} : vector<73x192xf32> to vector<7x192xf32>
    %396 = arith.maximumf %393, %394 : vector<7x192xf32>
    %397 = arith.maximumf %396, %395 : vector<7x192xf32>
    %398 = vector.extract_strided_slice %397 {offsets = [0, 0], sizes = [3, 192], strides = [1, 1]} : vector<7x192xf32> to vector<3x192xf32>
    %cst_216 = arith.constant dense<0xFF800000> : vector<192xf32>
    %399 = vector.multi_reduction <maximumf>, %398, %cst_216 [0] : vector<3x192xf32> to vector<192xf32>
    %400 = vector.shape_cast %399 : vector<192xf32> to vector<1x192xf32>
    %401 = vector.extract_strided_slice %397 {offsets = [2, 0], sizes = [3, 192], strides = [1, 1]} : vector<7x192xf32> to vector<3x192xf32>
    %cst_217 = arith.constant dense<0xFF800000> : vector<192xf32>
    %402 = vector.multi_reduction <maximumf>, %401, %cst_217 [0] : vector<3x192xf32> to vector<192xf32>
    %403 = vector.shape_cast %402 : vector<192xf32> to vector<1x192xf32>
    %404 = vector.extract_strided_slice %397 {offsets = [4, 0], sizes = [3, 192], strides = [1, 1]} : vector<7x192xf32> to vector<3x192xf32>
    %cst_218 = arith.constant dense<0xFF800000> : vector<192xf32>
    %405 = vector.multi_reduction <maximumf>, %404, %cst_218 [0] : vector<3x192xf32> to vector<192xf32>
    %406 = vector.shape_cast %405 : vector<192xf32> to vector<1x192xf32>
    %407 = tpu.concatenate %400, %403, %406 in 0 : vector<1x192xf32>, vector<1x192xf32>, vector<1x192xf32> -> vector<3x192xf32>
    %c39 = arith.constant 39 : index
    %c0_219 = arith.constant 0 : index
    %408 = vector.load %arg19[%c39, %c0_219] : memref<81x192xf32, #tpu.memory_space<vmem>>, vector<3x192xf32>
    tpu.vector_store %arg19[%c39, %c0_219], %407 {strides = array<i32>} : memref<81x192xf32, #tpu.memory_space<vmem>>, vector<3x192xf32>,
    %409 = vector.extract_strided_slice %374 {offsets = [44, 0], sizes = [7, 192], strides = [1, 1]} : vector<73x192xf32> to vector<7x192xf32>
    %410 = vector.extract_strided_slice %374 {offsets = [55, 0], sizes = [7, 192], strides = [1, 1]} : vector<73x192xf32> to vector<7x192xf32>
    %411 = vector.extract_strided_slice %374 {offsets = [66, 0], sizes = [7, 192], strides = [1, 1]} : vector<73x192xf32> to vector<7x192xf32>
    %412 = arith.maximumf %409, %410 : vector<7x192xf32>
    %413 = arith.maximumf %412, %411 : vector<7x192xf32>
    %414 = vector.extract_strided_slice %413 {offsets = [0, 0], sizes = [3, 192], strides = [1, 1]} : vector<7x192xf32> to vector<3x192xf32>
    %cst_220 = arith.constant dense<0xFF800000> : vector<192xf32>
    %415 = vector.multi_reduction <maximumf>, %414, %cst_220 [0] : vector<3x192xf32> to vector<192xf32>
    %416 = vector.shape_cast %415 : vector<192xf32> to vector<1x192xf32>
    %417 = vector.extract_strided_slice %413 {offsets = [2, 0], sizes = [3, 192], strides = [1, 1]} : vector<7x192xf32> to vector<3x192xf32>
    %cst_221 = arith.constant dense<0xFF800000> : vector<192xf32>
    %418 = vector.multi_reduction <maximumf>, %417, %cst_221 [0] : vector<3x192xf32> to vector<192xf32>
    %419 = vector.shape_cast %418 : vector<192xf32> to vector<1x192xf32>
    %420 = vector.extract_strided_slice %413 {offsets = [4, 0], sizes = [3, 192], strides = [1, 1]} : vector<7x192xf32> to vector<3x192xf32>
    %cst_222 = arith.constant dense<0xFF800000> : vector<192xf32>
    %421 = vector.multi_reduction <maximumf>, %420, %cst_222 [0] : vector<3x192xf32> to vector<192xf32>
    %422 = vector.shape_cast %421 : vector<192xf32> to vector<1x192xf32>
    %423 = tpu.concatenate %416, %419, %422 in 0 : vector<1x192xf32>, vector<1x192xf32>, vector<1x192xf32> -> vector<3x192xf32>
    %c48_223 = arith.constant 48 : index
    %c0_224 = arith.constant 0 : index
    %424 = vector.load %arg19[%c48_223, %c0_224] : memref<81x192xf32, #tpu.memory_space<vmem>>, vector<3x192xf32>
    tpu.vector_store %arg19[%c48_223, %c0_224], %423 {strides = array<i32>} : memref<81x192xf32, #tpu.memory_space<vmem>>, vector<3x192xf32>,
    %c0_225 = arith.constant 0 : index
    %c0_226 = arith.constant 0 : index
    %425 = vector.load %arg19[%c0_225, %c0_226] : memref<81x192xf32, #tpu.memory_space<vmem>>, vector<81x192xf32>
    %426 = arith.truncf %425 : vector<81x192xf32> to vector<81x192xbf16>
    %cst_227 = arith.constant 0.000000e+00 : f32
    %427 = vector.broadcast %cst_227 : f32 to vector<61x192xf32>
    %428 = vector.extract_strided_slice %426 {offsets = [0, 0], sizes = [61, 192], strides = [1, 1]} : vector<81x192xbf16> to vector<61x192xbf16>
    %c0_228 = arith.constant 0 : index
    %c0_229 = arith.constant 0 : index
    %c0_230 = arith.constant 0 : index
    %429 = vector.load %arg10[%c0_228, %c0_229, %c0_230] : memref<9x192x192xbf16, #tpu.memory_space<vmem>>, vector<1x192x192xbf16>
    %430 = vector.shape_cast %429 : vector<1x192x192xbf16> to vector<192x192xbf16>
    %cst_231 = arith.constant dense<0.000000e+00> : vector<61x192xf32>
    %431 = tpu.matmul %428, %430, %cst_231 {dimension_numbers = #tpu.dot_dimension_numbers<[1], [0], [0], [1], [0, 0, 1, 1], [], []>} : vector<61x192xbf16>, vector<192x192xbf16>, vector<61x192xf32> -> vector<61x192xf32>
    %432 = arith.addf %427, %431 : vector<61x192xf32>
    %433 = vector.extract_strided_slice %426 {offsets = [1, 0], sizes = [61, 192], strides = [1, 1]} : vector<81x192xbf16> to vector<61x192xbf16>
    %c1_232 = arith.constant 1 : index
    %c0_233 = arith.constant 0 : index
    %c0_234 = arith.constant 0 : index
    %434 = vector.load %arg10[%c1_232, %c0_233, %c0_234] : memref<9x192x192xbf16, #tpu.memory_space<vmem>>, vector<1x192x192xbf16>
    %435 = vector.shape_cast %434 : vector<1x192x192xbf16> to vector<192x192xbf16>
    %cst_235 = arith.constant dense<0.000000e+00> : vector<61x192xf32>
    %436 = tpu.matmul %433, %435, %cst_235 {dimension_numbers = #tpu.dot_dimension_numbers<[1], [0], [0], [1], [0, 0, 1, 1], [], []>} : vector<61x192xbf16>, vector<192x192xbf16>, vector<61x192xf32> -> vector<61x192xf32>
    %437 = arith.addf %432, %436 : vector<61x192xf32>
    %438 = vector.extract_strided_slice %426 {offsets = [2, 0], sizes = [61, 192], strides = [1, 1]} : vector<81x192xbf16> to vector<61x192xbf16>
    %c2_236 = arith.constant 2 : index
    %c0_237 = arith.constant 0 : index
    %c0_238 = arith.constant 0 : index
    %439 = vector.load %arg10[%c2_236, %c0_237, %c0_238] : memref<9x192x192xbf16, #tpu.memory_space<vmem>>, vector<1x192x192xbf16>
    %440 = vector.shape_cast %439 : vector<1x192x192xbf16> to vector<192x192xbf16>
    %cst_239 = arith.constant dense<0.000000e+00> : vector<61x192xf32>
    %441 = tpu.matmul %438, %440, %cst_239 {dimension_numbers = #tpu.dot_dimension_numbers<[1], [0], [0], [1], [0, 0, 1, 1], [], []>} : vector<61x192xbf16>, vector<192x192xbf16>, vector<61x192xf32> -> vector<61x192xf32>
    %442 = arith.addf %437, %441 : vector<61x192xf32>
    %443 = vector.extract_strided_slice %426 {offsets = [9, 0], sizes = [61, 192], strides = [1, 1]} : vector<81x192xbf16> to vector<61x192xbf16>
    %c3_240 = arith.constant 3 : index
    %c0_241 = arith.constant 0 : index
    %c0_242 = arith.constant 0 : index
    %444 = vector.load %arg10[%c3_240, %c0_241, %c0_242] : memref<9x192x192xbf16, #tpu.memory_space<vmem>>, vector<1x192x192xbf16>
    %445 = vector.shape_cast %444 : vector<1x192x192xbf16> to vector<192x192xbf16>
    %cst_243 = arith.constant dense<0.000000e+00> : vector<61x192xf32>
    %446 = tpu.matmul %443, %445, %cst_243 {dimension_numbers = #tpu.dot_dimension_numbers<[1], [0], [0], [1], [0, 0, 1, 1], [], []>} : vector<61x192xbf16>, vector<192x192xbf16>, vector<61x192xf32> -> vector<61x192xf32>
    %447 = arith.addf %442, %446 : vector<61x192xf32>
    %448 = vector.extract_strided_slice %426 {offsets = [10, 0], sizes = [61, 192], strides = [1, 1]} : vector<81x192xbf16> to vector<61x192xbf16>
    %c4_244 = arith.constant 4 : index
    %c0_245 = arith.constant 0 : index
    %c0_246 = arith.constant 0 : index
    %449 = vector.load %arg10[%c4_244, %c0_245, %c0_246] : memref<9x192x192xbf16, #tpu.memory_space<vmem>>, vector<1x192x192xbf16>
    %450 = vector.shape_cast %449 : vector<1x192x192xbf16> to vector<192x192xbf16>
    %cst_247 = arith.constant dense<0.000000e+00> : vector<61x192xf32>
    %451 = tpu.matmul %448, %450, %cst_247 {dimension_numbers = #tpu.dot_dimension_numbers<[1], [0], [0], [1], [0, 0, 1, 1], [], []>} : vector<61x192xbf16>, vector<192x192xbf16>, vector<61x192xf32> -> vector<61x192xf32>
    %452 = arith.addf %447, %451 : vector<61x192xf32>
    %453 = vector.extract_strided_slice %426 {offsets = [11, 0], sizes = [61, 192], strides = [1, 1]} : vector<81x192xbf16> to vector<61x192xbf16>
    %c5_248 = arith.constant 5 : index
    %c0_249 = arith.constant 0 : index
    %c0_250 = arith.constant 0 : index
    %454 = vector.load %arg10[%c5_248, %c0_249, %c0_250] : memref<9x192x192xbf16, #tpu.memory_space<vmem>>, vector<1x192x192xbf16>
    %455 = vector.shape_cast %454 : vector<1x192x192xbf16> to vector<192x192xbf16>
    %cst_251 = arith.constant dense<0.000000e+00> : vector<61x192xf32>
    %456 = tpu.matmul %453, %455, %cst_251 {dimension_numbers = #tpu.dot_dimension_numbers<[1], [0], [0], [1], [0, 0, 1, 1], [], []>} : vector<61x192xbf16>, vector<192x192xbf16>, vector<61x192xf32> -> vector<61x192xf32>
    %457 = arith.addf %452, %456 : vector<61x192xf32>
    %458 = vector.extract_strided_slice %426 {offsets = [18, 0], sizes = [61, 192], strides = [1, 1]} : vector<81x192xbf16> to vector<61x192xbf16>
    %c6_252 = arith.constant 6 : index
    %c0_253 = arith.constant 0 : index
    %c0_254 = arith.constant 0 : index
    %459 = vector.load %arg10[%c6_252, %c0_253, %c0_254] : memref<9x192x192xbf16, #tpu.memory_space<vmem>>, vector<1x192x192xbf16>
    %460 = vector.shape_cast %459 : vector<1x192x192xbf16> to vector<192x192xbf16>
    %cst_255 = arith.constant dense<0.000000e+00> : vector<61x192xf32>
    %461 = tpu.matmul %458, %460, %cst_255 {dimension_numbers = #tpu.dot_dimension_numbers<[1], [0], [0], [1], [0, 0, 1, 1], [], []>} : vector<61x192xbf16>, vector<192x192xbf16>, vector<61x192xf32> -> vector<61x192xf32>
    %462 = arith.addf %457, %461 : vector<61x192xf32>
    %463 = vector.extract_strided_slice %426 {offsets = [19, 0], sizes = [61, 192], strides = [1, 1]} : vector<81x192xbf16> to vector<61x192xbf16>
    %c7_256 = arith.constant 7 : index
    %c0_257 = arith.constant 0 : index
    %c0_258 = arith.constant 0 : index
    %464 = vector.load %arg10[%c7_256, %c0_257, %c0_258] : memref<9x192x192xbf16, #tpu.memory_space<vmem>>, vector<1x192x192xbf16>
    %465 = vector.shape_cast %464 : vector<1x192x192xbf16> to vector<192x192xbf16>
    %cst_259 = arith.constant dense<0.000000e+00> : vector<61x192xf32>
    %466 = tpu.matmul %463, %465, %cst_259 {dimension_numbers = #tpu.dot_dimension_numbers<[1], [0], [0], [1], [0, 0, 1, 1], [], []>} : vector<61x192xbf16>, vector<192x192xbf16>, vector<61x192xf32> -> vector<61x192xf32>
    %467 = arith.addf %462, %466 : vector<61x192xf32>
    %468 = vector.extract_strided_slice %426 {offsets = [20, 0], sizes = [61, 192], strides = [1, 1]} : vector<81x192xbf16> to vector<61x192xbf16>
    %c8_260 = arith.constant 8 : index
    %c0_261 = arith.constant 0 : index
    %c0_262 = arith.constant 0 : index
    %469 = vector.load %arg10[%c8_260, %c0_261, %c0_262] : memref<9x192x192xbf16, #tpu.memory_space<vmem>>, vector<1x192x192xbf16>
    %470 = vector.shape_cast %469 : vector<1x192x192xbf16> to vector<192x192xbf16>
    %cst_263 = arith.constant dense<0.000000e+00> : vector<61x192xf32>
    %471 = tpu.matmul %468, %470, %cst_263 {dimension_numbers = #tpu.dot_dimension_numbers<[1], [0], [0], [1], [0, 0, 1, 1], [], []>} : vector<61x192xbf16>, vector<192x192xbf16>, vector<61x192xf32> -> vector<61x192xf32>
    %472 = arith.addf %467, %471 : vector<61x192xf32>
    %c0_264 = arith.constant 0 : index
    %c0_265 = arith.constant 0 : index
    %473 = vector.load %arg11[%c0_264, %c0_265] : memref<1x192xf32, #tpu.memory_space<vmem>>, vector<1x192xf32>
    %474 = vector.broadcast %473 : vector<1x192xf32> to vector<61x192xf32>
    %475 = arith.addf %472, %474 : vector<61x192xf32>
    %cst_266 = arith.constant 0.000000e+00 : f32
    %476 = vector.broadcast %cst_266 : f32 to vector<61x192xf32>
    %477 = arith.maximumf %475, %476 : vector<61x192xf32>
    %478 = arith.truncf %477 : vector<61x192xf32> to vector<61x192xbf16>
    %c0_267 = arith.constant 0 : index
    %c0_268 = arith.constant 0 : index
    %479 = vector.load %arg12[%c0_267, %c0_268] : memref<192x192xbf16, #tpu.memory_space<vmem>>, vector<192x192xbf16>
    %cst_269 = arith.constant dense<0.000000e+00> : vector<61x192xf32>
    %480 = tpu.matmul %478, %479, %cst_269 {dimension_numbers = #tpu.dot_dimension_numbers<[1], [0], [0], [1], [0, 0, 1, 1], [], []>} : vector<61x192xbf16>, vector<192x192xbf16>, vector<61x192xf32> -> vector<61x192xf32>
    %c0_270 = arith.constant 0 : index
    %c0_271 = arith.constant 0 : index
    %481 = vector.load %arg13[%c0_270, %c0_271] : memref<1x192xf32, #tpu.memory_space<vmem>>, vector<1x192xf32>
    %482 = vector.broadcast %481 : vector<1x192xf32> to vector<61x192xf32>
    %483 = arith.addf %480, %482 : vector<61x192xf32>
    %cst_272 = arith.constant 0.000000e+00 : f32
    %484 = vector.broadcast %cst_272 : f32 to vector<61x192xf32>
    %485 = arith.maximumf %483, %484 : vector<61x192xf32>
    %486 = arith.truncf %485 : vector<61x192xf32> to vector<61x192xbf16>
    %c0_273 = arith.constant 0 : index
    %c0_274 = arith.constant 0 : index
    %487 = vector.load %arg14[%c0_273, %c0_274] : memref<192x10xbf16, #tpu.memory_space<vmem>>, vector<192x10xbf16>
    %cst_275 = arith.constant dense<0.000000e+00> : vector<61x10xf32>
    %488 = tpu.matmul %486, %487, %cst_275 {dimension_numbers = #tpu.dot_dimension_numbers<[1], [0], [0], [1], [0, 0, 1, 1], [], []>} : vector<61x192xbf16>, vector<192x10xbf16>, vector<61x10xf32> -> vector<61x10xf32>
    %c0_276 = arith.constant 0 : index
    %c0_277 = arith.constant 0 : index
    %489 = vector.load %arg15[%c0_276, %c0_277] : memref<1x10xf32, #tpu.memory_space<vmem>>, vector<1x10xf32>
    %490 = vector.broadcast %489 : vector<1x10xf32> to vector<61x10xf32>
    %491 = arith.addf %488, %490 : vector<61x10xf32>
    %cst_278 = arith.constant 0.000000e+00 : f32
    %492 = vector.broadcast %cst_278 : f32 to vector<61x10xf32>
    %493 = arith.maximumf %491, %492 : vector<61x10xf32>
    %cst_279 = arith.constant 0.000000e+00 : f32
    %494 = vector.broadcast %cst_279 : f32 to vector<1x10xf32>
    %495 = vector.extract_strided_slice %493 {offsets = [0, 0], sizes = [6, 10], strides = [1, 1]} : vector<61x10xf32> to vector<6x10xf32>
    %cst_280 = arith.constant dense<0.000000e+00> : vector<10xf32>
    %496 = vector.multi_reduction <add>, %495, %cst_280 [0] : vector<6x10xf32> to vector<10xf32>
    %497 = vector.shape_cast %496 : vector<10xf32> to vector<1x10xf32>
    %498 = arith.addf %494, %497 : vector<1x10xf32>
    %499 = vector.extract_strided_slice %493 {offsets = [9, 0], sizes = [6, 10], strides = [1, 1]} : vector<61x10xf32> to vector<6x10xf32>
    %cst_281 = arith.constant dense<0.000000e+00> : vector<10xf32>
    %500 = vector.multi_reduction <add>, %499, %cst_281 [0] : vector<6x10xf32> to vector<10xf32>
    %501 = vector.shape_cast %500 : vector<10xf32> to vector<1x10xf32>
    %502 = arith.addf %498, %501 : vector<1x10xf32>
    %503 = vector.extract_strided_slice %493 {offsets = [18, 0], sizes = [6, 10], strides = [1, 1]} : vector<61x10xf32> to vector<6x10xf32>
    %cst_282 = arith.constant dense<0.000000e+00> : vector<10xf32>
    %504 = vector.multi_reduction <add>, %503, %cst_282 [0] : vector<6x10xf32> to vector<10xf32>
    %505 = vector.shape_cast %504 : vector<10xf32> to vector<1x10xf32>
    %506 = arith.addf %502, %505 : vector<1x10xf32>
    %507 = vector.extract_strided_slice %493 {offsets = [27, 0], sizes = [6, 10], strides = [1, 1]} : vector<61x10xf32> to vector<6x10xf32>
    %cst_283 = arith.constant dense<0.000000e+00> : vector<10xf32>
    %508 = vector.multi_reduction <add>, %507, %cst_283 [0] : vector<6x10xf32> to vector<10xf32>
    %509 = vector.shape_cast %508 : vector<10xf32> to vector<1x10xf32>
    %510 = arith.addf %506, %509 : vector<1x10xf32>
    %511 = vector.extract_strided_slice %493 {offsets = [36, 0], sizes = [6, 10], strides = [1, 1]} : vector<61x10xf32> to vector<6x10xf32>
    %cst_284 = arith.constant dense<0.000000e+00> : vector<10xf32>
    %512 = vector.multi_reduction <add>, %511, %cst_284 [0] : vector<6x10xf32> to vector<10xf32>
    %513 = vector.shape_cast %512 : vector<10xf32> to vector<1x10xf32>
    %514 = arith.addf %510, %513 : vector<1x10xf32>
    %515 = vector.extract_strided_slice %493 {offsets = [45, 0], sizes = [6, 10], strides = [1, 1]} : vector<61x10xf32> to vector<6x10xf32>
    %cst_285 = arith.constant dense<0.000000e+00> : vector<10xf32>
    %516 = vector.multi_reduction <add>, %515, %cst_285 [0] : vector<6x10xf32> to vector<10xf32>
    %517 = vector.shape_cast %516 : vector<10xf32> to vector<1x10xf32>
    %518 = arith.addf %514, %517 : vector<1x10xf32>
    %cst_286 = arith.constant 0.027777778 : f32
    %519 = vector.broadcast %cst_286 : f32 to vector<1x10xf32>
    %520 = arith.mulf %518, %519 : vector<1x10xf32>
    %c0_287 = arith.constant 0 : index
    %c0_288 = arith.constant 0 : index
    %c0_289 = arith.constant 0 : index
    %521 = vector.load %arg16[%c0_287, %c0_288, %c0_289] : memref<1x1x10xf32, #tpu.memory_space<vmem>>, vector<1x1x10xf32>
    %522 = vector.shape_cast %521 : vector<1x1x10xf32> to vector<1x10xf32>
    %523 = vector.shape_cast %520 : vector<1x10xf32> to vector<1x1x10xf32>
    tpu.vector_store %arg16[%c0_287, %c0_288, %c0_289], %523 {strides = array<i32>} : memref<1x1x10xf32, #tpu.memory_space<vmem>>, vector<1x1x10xf32>,
    return
  }
  func.func @transform_0(%arg0: i32) -> (i32, i32, i32) {
    %c0_i32 = arith.constant 0 : i32
    %c0_i32_0 = arith.constant 0 : i32
    %c0_i32_1 = arith.constant 0 : i32
    return %arg0, %c0_i32, %c0_i32_0 : i32, i32, i32
  }
  func.func @transform_1(%arg0: i32) -> (i32, i32) {
    %c0_i32 = arith.constant 0 : i32
    %c0_i32_0 = arith.constant 0 : i32
    %c0_i32_1 = arith.constant 0 : i32
    return %c0_i32, %c0_i32_0 : i32, i32
  }
  func.func @transform_2(%arg0: i32) -> (i32, i32) {
    %c0_i32 = arith.constant 0 : i32
    %c0_i32_0 = arith.constant 0 : i32
    %c0_i32_1 = arith.constant 0 : i32
    return %c0_i32, %c0_i32_0 : i32, i32
  }
  func.func @transform_3(%arg0: i32) -> (i32, i32) {
    %c0_i32 = arith.constant 0 : i32
    %c0_i32_0 = arith.constant 0 : i32
    %c0_i32_1 = arith.constant 0 : i32
    return %c0_i32, %c0_i32_0 : i32, i32
  }
  func.func @transform_4(%arg0: i32) -> (i32, i32) {
    %c0_i32 = arith.constant 0 : i32
    %c0_i32_0 = arith.constant 0 : i32
    %c0_i32_1 = arith.constant 0 : i32
    return %c0_i32, %c0_i32_0 : i32, i32
  }
  func.func @transform_5(%arg0: i32) -> (i32, i32, i32) {
    %c0_i32 = arith.constant 0 : i32
    %c0_i32_0 = arith.constant 0 : i32
    %c0_i32_1 = arith.constant 0 : i32
    %c0_i32_2 = arith.constant 0 : i32
    return %c0_i32, %c0_i32_0, %c0_i32_1 : i32, i32, i32
  }
  func.func @transform_6(%arg0: i32) -> (i32, i32) {
    %c0_i32 = arith.constant 0 : i32
    %c0_i32_0 = arith.constant 0 : i32
    %c0_i32_1 = arith.constant 0 : i32
    return %c0_i32, %c0_i32_0 : i32, i32
  }
  func.func @transform_7(%arg0: i32) -> (i32, i32) {
    %c0_i32 = arith.constant 0 : i32
    %c0_i32_0 = arith.constant 0 : i32
    %c0_i32_1 = arith.constant 0 : i32
    return %c0_i32, %c0_i32_0 : i32, i32
  }
  func.func @transform_8(%arg0: i32) -> (i32, i32) {
    %c0_i32 = arith.constant 0 : i32
    %c0_i32_0 = arith.constant 0 : i32
    %c0_i32_1 = arith.constant 0 : i32
    return %c0_i32, %c0_i32_0 : i32, i32
  }
  func.func @transform_9(%arg0: i32) -> (i32, i32, i32) {
    %c0_i32 = arith.constant 0 : i32
    %c0_i32_0 = arith.constant 0 : i32
    %c0_i32_1 = arith.constant 0 : i32
    %c0_i32_2 = arith.constant 0 : i32
    return %c0_i32, %c0_i32_0, %c0_i32_1 : i32, i32, i32
  }
  func.func @transform_10(%arg0: i32) -> (i32, i32) {
    %c0_i32 = arith.constant 0 : i32
    %c0_i32_0 = arith.constant 0 : i32
    %c0_i32_1 = arith.constant 0 : i32
    return %c0_i32, %c0_i32_0 : i32, i32
  }
  func.func @transform_11(%arg0: i32) -> (i32, i32) {
    %c0_i32 = arith.constant 0 : i32
    %c0_i32_0 = arith.constant 0 : i32
    %c0_i32_1 = arith.constant 0 : i32
    return %c0_i32, %c0_i32_0 : i32, i32
  }
  func.func @transform_12(%arg0: i32) -> (i32, i32) {
    %c0_i32 = arith.constant 0 : i32
    %c0_i32_0 = arith.constant 0 : i32
    %c0_i32_1 = arith.constant 0 : i32
    return %c0_i32, %c0_i32_0 : i32, i32
  }
  func.func @transform_13(%arg0: i32) -> (i32, i32) {
    %c0_i32 = arith.constant 0 : i32
    %c0_i32_0 = arith.constant 0 : i32
    %c0_i32_1 = arith.constant 0 : i32
    return %c0_i32, %c0_i32_0 : i32, i32
  }
  func.func @transform_14(%arg0: i32) -> (i32, i32) {
    %c0_i32 = arith.constant 0 : i32
    %c0_i32_0 = arith.constant 0 : i32
    %c0_i32_1 = arith.constant 0 : i32
    return %c0_i32, %c0_i32_0 : i32, i32
  }
  func.func @transform_15(%arg0: i32) -> (i32, i32, i32) {
    %c0_i32 = arith.constant 0 : i32
    %c0_i32_0 = arith.constant 0 : i32
    %c0_i32_1 = arith.constant 0 : i32
    return %arg0, %c0_i32, %c0_i32_0 : i32, i32, i32
  }
}

</mosaic_0001>

<llo_original>
// kernel: basenet_b_forward.1
$region0: #{basenet_b_forward.1}
  #allocation0 [shape = 'u32[]', space=smem, size = 0x4, offset = 0x4, fixed_abs, tag = 'smem constant byte address 0x4 - core index']
  #allocation1 [shape = 'u32[144,128]{1,0:T(1,128)}', space=vmem, size = 0x12000, scoped, tag = 'internal scratch']
  #allocation2 [shape = 'f32[256,96]{1,0:T(8,128)}', space=vmem, size = 0x20000, scoped, tag = 'scratch operand']
  #allocation3 [shape = 'f32[121,96]{1,0:T(8,128)}', space=vmem, size = 0x10000, scoped, tag = 'scratch operand']
  #allocation4 [shape = 'f32[81,192]{1,0:T(8,128)}', space=vmem, size = 0x16000, scoped, tag = 'scratch operand']
  %s0 = inlined_call_operand.vmem [shape: bf16[2,256,80], index: 0, kind: input, shape index: {}]
  %s1 = inlined_call_operand.vmem [shape: bf16[80,96], index: 1, kind: input, shape index: {}]
  %s2 = inlined_call_operand.vmem [shape: f32[1,96], index: 2, kind: input, shape index: {}]
  %s3 = inlined_call_operand.vmem [shape: bf16[96,96], index: 3, kind: input, shape index: {}]
  %s4 = inlined_call_operand.vmem [shape: f32[1,96], index: 4, kind: input, shape index: {}]
  %s5 = inlined_call_operand.vmem [shape: bf16[25,96,192], index: 5, kind: input, shape index: {}]
  %s6 = inlined_call_operand.vmem [shape: f32[1,192], index: 6, kind: input, shape index: {}]
  %s7 = inlined_call_operand.vmem [shape: bf16[192,192], index: 7, kind: input, shape index: {}]
  %s8 = inlined_call_operand.vmem [shape: f32[1,192], index: 8, kind: input, shape index: {}]
  %s9 = inlined_call_operand.vmem [shape: bf16[9,192,192], index: 9, kind: input, shape index: {}]
  %s10 = inlined_call_operand.vmem [shape: f32[1,192], index: 10, kind: input, shape index: {}]
  %s11 = inlined_call_operand.vmem [shape: bf16[192,192], index: 11, kind: input, shape index: {}]
  %s12 = inlined_call_operand.vmem [shape: f32[1,192], index: 12, kind: input, shape index: {}]
  %s13 = inlined_call_operand.vmem [shape: bf16[192,10], index: 13, kind: input, shape index: {}]
  %s14 = inlined_call_operand.vmem [shape: f32[1,10], index: 14, kind: input, shape index: {}]
  %s15 = inlined_call_operand.hbm [shape: f32[2,1,10], index: 15, kind: output, shape index: {}]
  %s16 = sld [smem:[#allocation0]]
  $region93: #{basenet_b_forward.1} parent=0
    _
  %s18 = ssub.s32 1, %s16
  %s19 = scalar_select 0, %s18, %s16
  $region1: #{basenet_b_forward.1} parent=0
    #allocation5 [shape = 'u8[1024]{0}', space=vmem, size = 0x400, scoped, tag = 'output window, operand 0']
    #allocation6 [shape = 's32[2]{0}', space=sflag, size = 0x8, scoped, tag = 'scoped memory for basenet_b_forward.1']
    %20 = vsyncpa [#allocation6], 0
    %s21 = scalar_lea.sflag [#allocation6], 1
    %22 = vsyncpa %s21, 0
    loop: start=0, step=1, limit=4
    $region2: #{basenet_b_forward.1} parent=1 // loop_pre_header
      _
    $region3: #{basenet_b_forward.1} parent=1 // loop_header
      %s24 = sphi 0, %s28
      %p25 = scmp.ge.s32.totalorder %s24, 4
      %s34 = sphi 0, %s36
      %s37 = sphi 0, %s34
      %s38 = sphi 0, %s37
      %s54 = sphi 0, %s38
      %s58 = sphi 0, %s58
      %s60 = sphi 0, %s58
      %s61 = sphi 0, %s60
      %s75 = sphi 0, %s61
      %s79 = sphi 0, %s79
      %s81 = sphi 0, %s79
      %s82 = sphi 0, %s81
      %s96 = sphi 0, %s82
      %s100 = sphi 0, %s100
      %s102 = sphi 0, %s100
      %s103 = sphi 0, %s102
      %s117 = sphi 0, %s103
      %s121 = sphi 0, %s121
      %s123 = sphi 0, %s121
      %s124 = sphi 0, %s123
      %s138 = sphi 0, %s124
      %s142 = sphi 0, %s142
      %s144 = sphi 0, %s142
      %s145 = sphi 0, %s144
      %s159 = sphi 0, %s145
      %s163 = sphi 0, %s163
      %s165 = sphi 0, %s163
      %s166 = sphi 0, %s165
      %s180 = sphi 0, %s166
      %s184 = sphi 0, %s184
      %s186 = sphi 0, %s184
      %s187 = sphi 0, %s186
      %s201 = sphi 0, %s187
      %s205 = sphi 0, %s205
      %s207 = sphi 0, %s205
      %s208 = sphi 0, %s207
      %s222 = sphi 0, %s208
      %s226 = sphi 0, %s226
      %s228 = sphi 0, %s226
      %s229 = sphi 0, %s228
      %s243 = sphi 0, %s229
      %s247 = sphi 0, %s247
      %s249 = sphi 0, %s247
      %s250 = sphi 0, %s249
      %s264 = sphi 0, %s250
      %s268 = sphi 0, %s268
      %s270 = sphi 0, %s268
      %s271 = sphi 0, %s270
      %s285 = sphi 0, %s271
      %s289 = sphi 0, %s289
      %s291 = sphi 0, %s289
      %s292 = sphi 0, %s291
      %s306 = sphi 0, %s292
      %s310 = sphi 0, %s310
      %s312 = sphi 0, %s310
      %s313 = sphi 0, %s312
      %s327 = sphi 0, %s313
      %s331 = sphi 0, %s331
      %s333 = sphi 0, %s331
      %s334 = sphi 0, %s333
      %s348 = sphi 0, %s334
      %s354 = sphi 0, %s356
      %s357 = sphi 0, %s354
      %s358 = sphi 0, %s357
      %s374 = sphi 0, %s358
    $region4: #{basenet_b_forward.1} parent=1 // loop_header_branch
      %27 = sbr.rel (%p25) target = $region8
    $region5: #{basenet_b_forward.1} parent=1 // loop_body
      %s29 = ssub.s32 %s24, 1
      %s30 = ssub.s32 %s24, 2
      %s31 = sadd.s32 %s24, 1
      %s32 = ssub.s32 %s24, %s31
      %p33 = scmp.eq.s32.totalorder %s32, 0
      %s35 = sadd.s32 %s34, 1
      %s36 = scalar_select %p33, %s34, %s35
      %p39 = pneg %p33
      %p40 = scmp.eq.s32.totalorder %s24, 1
      %p41 = por %p39, %p40
      %p42 = scmp.ne.s32.totalorder %s34, %s37
      %p43 = scmp.eq.s32.totalorder %s24, 0
      %p44 = por %p42, %p43
      %p45 = scmp.ne.s32.totalorder %s34, %s37
      %p46 = scmp.eq.s32.totalorder %s29, 1
      %p47 = por %p45, %p46
      %p48 = scmp.ne.s32.totalorder %s37, %s38
      %p49 = scmp.eq.s32.totalorder %s29, 0
      %p50 = por %p48, %p49
      %p51 = scmp.ne.s32.totalorder %s37, %s38
      %p52 = scmp.eq.s32.totalorder %s30, 1
      %p53 = por %p51, %p52
      %p55 = scmp.ne.s32.totalorder %s38, %s54
      %p56 = scmp.eq.s32.totalorder %s30, 0
      %p57 = por %p55, %p56
      %s59 = sadd.s32 %s58, 1
      %p62 = scmp.eq.s32.totalorder %s24, 1
      %p63 = scmp.ne.s32.totalorder %s58, %s60
      %p64 = scmp.eq.s32.totalorder %s24, 0
      %p65 = por %p63, %p64
      %p66 = scmp.ne.s32.totalorder %s58, %s60
      %p67 = scmp.eq.s32.totalorder %s29, 1
      %p68 = por %p66, %p67
      %p69 = scmp.ne.s32.totalorder %s60, %s61
      %p70 = scmp.eq.s32.totalorder %s29, 0
      %p71 = por %p69, %p70
      %p72 = scmp.ne.s32.totalorder %s60, %s61
      %p73 = scmp.eq.s32.totalorder %s30, 1
      %p74 = por %p72, %p73
      %p76 = scmp.ne.s32.totalorder %s61, %s75
      %p77 = scmp.eq.s32.totalorder %s30, 0
      %p78 = por %p76, %p77
      %s80 = sadd.s32 %s79, 1
      %p83 = scmp.eq.s32.totalorder %s24, 1
      %p84 = scmp.ne.s32.totalorder %s79, %s81
      %p85 = scmp.eq.s32.totalorder %s24, 0
      %p86 = por %p84, %p85
      %p87 = scmp.ne.s32.totalorder %s79, %s81
      %p88 = scmp.eq.s32.totalorder %s29, 1
      %p89 = por %p87, %p88
      %p90 = scmp.ne.s32.totalorder %s81, %s82
      %p91 = scmp.eq.s32.totalorder %s29, 0
      %p92 = por %p90, %p91
      %p93 = scmp.ne.s32.totalorder %s81, %s82
      %p94 = scmp.eq.s32.totalorder %s30, 1
      %p95 = por %p93, %p94
      %p97 = scmp.ne.s32.totalorder %s82, %s96
      %p98 = scmp.eq.s32.totalorder %s30, 0
      %p99 = por %p97, %p98
      %s101 = sadd.s32 %s100, 1
      %p104 = scmp.eq.s32.totalorder %s24, 1
      %p105 = scmp.ne.s32.totalorder %s100, %s102
      %p106 = scmp.eq.s32.totalorder %s24, 0
      %p107 = por %p105, %p106
      %p108 = scmp.ne.s32.totalorder %s100, %s102
      %p109 = scmp.eq.s32.totalorder %s29, 1
      %p110 = por %p108, %p109
      %p111 = scmp.ne.s32.totalorder %s102, %s103
      %p112 = scmp.eq.s32.totalorder %s29, 0
      %p113 = por %p111, %p112
      %p114 = scmp.ne.s32.totalorder %s102, %s103
      %p115 = scmp.eq.s32.totalorder %s30, 1
      %p116 = por %p114, %p115
      %p118 = scmp.ne.s32.totalorder %s103, %s117
      %p119 = scmp.eq.s32.totalorder %s30, 0
      %p120 = por %p118, %p119
      %s122 = sadd.s32 %s121, 1
      %p125 = scmp.eq.s32.totalorder %s24, 1
      %p126 = scmp.ne.s32.totalorder %s121, %s123
      %p127 = scmp.eq.s32.totalorder %s24, 0
      %p128 = por %p126, %p127
      %p129 = scmp.ne.s32.totalorder %s121, %s123
      %p130 = scmp.eq.s32.totalorder %s29, 1
      %p131 = por %p129, %p130
      %p132 = scmp.ne.s32.totalorder %s123, %s124
      %p133 = scmp.eq.s32.totalorder %s29, 0
      %p134 = por %p132, %p133
      %p135 = scmp.ne.s32.totalorder %s123, %s124
      %p136 = scmp.eq.s32.totalorder %s30, 1
      %p137 = por %p135, %p136
      %p139 = scmp.ne.s32.totalorder %s124, %s138
      %p140 = scmp.eq.s32.totalorder %s30, 0
      %p141 = por %p139, %p140
      %s143 = sadd.s32 %s142, 1
      %p146 = scmp.eq.s32.totalorder %s24, 1
      %p147 = scmp.ne.s32.totalorder %s142, %s144
      %p148 = scmp.eq.s32.totalorder %s24, 0
      %p149 = por %p147, %p148
      %p150 = scmp.ne.s32.totalorder %s142, %s144
      %p151 = scmp.eq.s32.totalorder %s29, 1
      %p152 = por %p150, %p151
      %p153 = scmp.ne.s32.totalorder %s144, %s145
      %p154 = scmp.eq.s32.totalorder %s29, 0
      %p155 = por %p153, %p154
      %p156 = scmp.ne.s32.totalorder %s144, %s145
      %p157 = scmp.eq.s32.totalorder %s30, 1
      %p158 = por %p156, %p157
      %p160 = scmp.ne.s32.totalorder %s145, %s159
      %p161 = scmp.eq.s32.totalorder %s30, 0
      %p162 = por %p160, %p161
      %s164 = sadd.s32 %s163, 1
      %p167 = scmp.eq.s32.totalorder %s24, 1
      %p168 = scmp.ne.s32.totalorder %s163, %s165
      %p169 = scmp.eq.s32.totalorder %s24, 0
      %p170 = por %p168, %p169
      %p171 = scmp.ne.s32.totalorder %s163, %s165
      %p172 = scmp.eq.s32.totalorder %s29, 1
      %p173 = por %p171, %p172
      %p174 = scmp.ne.s32.totalorder %s165, %s166
      %p175 = scmp.eq.s32.totalorder %s29, 0
      %p176 = por %p174, %p175
      %p177 = scmp.ne.s32.totalorder %s165, %s166
      %p178 = scmp.eq.s32.totalorder %s30, 1
      %p179 = por %p177, %p178
      %p181 = scmp.ne.s32.totalorder %s166, %s180
      %p182 = scmp.eq.s32.totalorder %s30, 0
      %p183 = por %p181, %p182
      %s185 = sadd.s32 %s184, 1
      %p188 = scmp.eq.s32.totalorder %s24, 1
      %p189 = scmp.ne.s32.totalorder %s184, %s186
      %p190 = scmp.eq.s32.totalorder %s24, 0
      %p191 = por %p189, %p190
      %p192 = scmp.ne.s32.totalorder %s184, %s186
      %p193 = scmp.eq.s32.totalorder %s29, 1
      %p194 = por %p192, %p193
      %p195 = scmp.ne.s32.totalorder %s186, %s187
      %p196 = scmp.eq.s32.totalorder %s29, 0
      %p197 = por %p195, %p196
      %p198 = scmp.ne.s32.totalorder %s186, %s187
      %p199 = scmp.eq.s32.totalorder %s30, 1
      %p200 = por %p198, %p199
      %p202 = scmp.ne.s32.totalorder %s187, %s201
      %p203 = scmp.eq.s32.totalorder %s30, 0
      %p204 = por %p202, %p203
      %s206 = sadd.s32 %s205, 1
      %p209 = scmp.eq.s32.totalorder %s24, 1
      %p210 = scmp.ne.s32.totalorder %s205, %s207
      %p211 = scmp.eq.s32.totalorder %s24, 0
      %p212 = por %p210, %p211
      %p213 = scmp.ne.s32.totalorder %s205, %s207
      %p214 = scmp.eq.s32.totalorder %s29, 1
      %p215 = por %p213, %p214
      %p216 = scmp.ne.s32.totalorder %s207, %s208
      %p217 = scmp.eq.s32.totalorder %s29, 0
      %p218 = por %p216, %p217
      %p219 = scmp.ne.s32.totalorder %s207, %s208
      %p220 = scmp.eq.s32.totalorder %s30, 1
      %p221 = por %p219, %p220
      %p223 = scmp.ne.s32.totalorder %s208, %s222
      %p224 = scmp.eq.s32.totalorder %s30, 0
      %p225 = por %p223, %p224
      %s227 = sadd.s32 %s226, 1
      %p230 = scmp.eq.s32.totalorder %s24, 1
      %p231 = scmp.ne.s32.totalorder %s226, %s228
      %p232 = scmp.eq.s32.totalorder %s24, 0
      %p233 = por %p231, %p232
      %p234 = scmp.ne.s32.totalorder %s226, %s228
      %p235 = scmp.eq.s32.totalorder %s29, 1
      %p236 = por %p234, %p235
      %p237 = scmp.ne.s32.totalorder %s228, %s229
      %p238 = scmp.eq.s32.totalorder %s29, 0
      %p239 = por %p237, %p238
      %p240 = scmp.ne.s32.totalorder %s228, %s229
      %p241 = scmp.eq.s32.totalorder %s30, 1
      %p242 = por %p240, %p241
      %p244 = scmp.ne.s32.totalorder %s229, %s243
      %p245 = scmp.eq.s32.totalorder %s30, 0
      %p246 = por %p244, %p245
      %s248 = sadd.s32 %s247, 1
      %p251 = scmp.eq.s32.totalorder %s24, 1
      %p252 = scmp.ne.s32.totalorder %s247, %s249
      %p253 = scmp.eq.s32.totalorder %s24, 0
      %p254 = por %p252, %p253
      %p255 = scmp.ne.s32.totalorder %s247, %s249
      %p256 = scmp.eq.s32.totalorder %s29, 1
      %p257 = por %p255, %p256
      %p258 = scmp.ne.s32.totalorder %s249, %s250
      %p259 = scmp.eq.s32.totalorder %s29, 0
      %p260 = por %p258, %p259
      %p261 = scmp.ne.s32.totalorder %s249, %s250
      %p262 = scmp.eq.s32.totalorder %s30, 1
      %p263 = por %p261, %p262
      %p265 = scmp.ne.s32.totalorder %s250, %s264
      %p266 = scmp.eq.s32.totalorder %s30, 0
      %p267 = por %p265, %p266
      %s269 = sadd.s32 %s268, 1
      %p272 = scmp.eq.s32.totalorder %s24, 1
      %p273 = scmp.ne.s32.totalorder %s268, %s270
      %p274 = scmp.eq.s32.totalorder %s24, 0
      %p275 = por %p273, %p274
      %p276 = scmp.ne.s32.totalorder %s268, %s270
      %p277 = scmp.eq.s32.totalorder %s29, 1
      %p278 = por %p276, %p277
      %p279 = scmp.ne.s32.totalorder %s270, %s271
      %p280 = scmp.eq.s32.totalorder %s29, 0
      %p281 = por %p279, %p280
      %p282 = scmp.ne.s32.totalorder %s270, %s271
      %p283 = scmp.eq.s32.totalorder %s30, 1
      %p284 = por %p282, %p283
      %p286 = scmp.ne.s32.totalorder %s271, %s285
      %p287 = scmp.eq.s32.totalorder %s30, 0
      %p288 = por %p286, %p287
      %s290 = sadd.s32 %s289, 1
      %p293 = scmp.eq.s32.totalorder %s24, 1
      %p294 = scmp.ne.s32.totalorder %s289, %s291
      %p295 = scmp.eq.s32.totalorder %s24, 0
      %p296 = por %p294, %p295
      %p297 = scmp.ne.s32.totalorder %s289, %s291
      %p298 = scmp.eq.s32.totalorder %s29, 1
      %p299 = por %p297, %p298
      %p300 = scmp.ne.s32.totalorder %s291, %s292
      %p301 = scmp.eq.s32.totalorder %s29, 0
      %p302 = por %p300, %p301
      %p303 = scmp.ne.s32.totalorder %s291, %s292
      %p304 = scmp.eq.s32.totalorder %s30, 1
      %p305 = por %p303, %p304
      %p307 = scmp.ne.s32.totalorder %s292, %s306
      %p308 = scmp.eq.s32.totalorder %s30, 0
      %p309 = por %p307, %p308
      %s311 = sadd.s32 %s310, 1
      %p314 = scmp.eq.s32.totalorder %s24, 1
      %p315 = scmp.ne.s32.totalorder %s310, %s312
      %p316 = scmp.eq.s32.totalorder %s24, 0
      %p317 = por %p315, %p316
      %p318 = scmp.ne.s32.totalorder %s310, %s312
      %p319 = scmp.eq.s32.totalorder %s29, 1
      %p320 = por %p318, %p319
      %p321 = scmp.ne.s32.totalorder %s312, %s313
      %p322 = scmp.eq.s32.totalorder %s29, 0
      %p323 = por %p321, %p322
      %p324 = scmp.ne.s32.totalorder %s312, %s313
      %p325 = scmp.eq.s32.totalorder %s30, 1
      %p326 = por %p324, %p325
      %p328 = scmp.ne.s32.totalorder %s313, %s327
      %p329 = scmp.eq.s32.totalorder %s30, 0
      %p330 = por %p328, %p329
      %s332 = sadd.s32 %s331, 1
      %p335 = scmp.eq.s32.totalorder %s24, 1
      %p336 = scmp.ne.s32.totalorder %s331, %s333
      %p337 = scmp.eq.s32.totalorder %s24, 0
      %p338 = por %p336, %p337
      %p339 = scmp.ne.s32.totalorder %s331, %s333
      %p340 = scmp.eq.s32.totalorder %s29, 1
      %p341 = por %p339, %p340
      %p342 = scmp.ne.s32.totalorder %s333, %s334
      %p343 = scmp.eq.s32.totalorder %s29, 0
      %p344 = por %p342, %p343
      %p345 = scmp.ne.s32.totalorder %s333, %s334
      %p346 = scmp.eq.s32.totalorder %s30, 1
      %p347 = por %p345, %p346
      %p349 = scmp.ne.s32.totalorder %s334, %s348
      %p350 = scmp.eq.s32.totalorder %s30, 0
      %p351 = por %p349, %p350
      %s352 = ssub.s32 %s24, %s31
      %p353 = scmp.eq.s32.totalorder %s352, 0
      %s355 = sadd.s32 %s354, 1
      %s356 = scalar_select %p353, %s354, %s355
      %p359 = pneg %p353
      %p360 = scmp.eq.s32.totalorder %s24, 1
      %p361 = por %p359, %p360
      %p362 = scmp.ne.s32.totalorder %s354, %s357
      %p363 = scmp.eq.s32.totalorder %s24, 0
      %p364 = por %p362, %p363
      %p365 = scmp.ne.s32.totalorder %s354, %s357
      %p366 = scmp.eq.s32.totalorder %s29, 1
      %p367 = por %p365, %p366
      %p368 = scmp.ne.s32.totalorder %s357, %s358
      %p369 = scmp.eq.s32.totalorder %s29, 0
      %p370 = por %p368, %p369
      %p371 = scmp.ne.s32.totalorder %s357, %s358
      %p372 = scmp.eq.s32.totalorder %s30, 1
      %p373 = por %p371, %p372
      %p375 = scmp.ne.s32.totalorder %s358, %s374
      %p376 = scmp.eq.s32.totalorder %s30, 0
      %p377 = por %p375, %p376
      %p378 = scmp.le.s32.totalorder 1, %s24
      %p379 = scmp.lt.s32.totalorder %s24, 3
      %p380 = pnand %p378, %p379
      %p381 = pneg %p380
      // Predicated region
      $region9: #{basenet_b_forward.1} parent=5 // pred_check
        _
      $region10: #{basenet_b_forward.1} parent=5 // pred_check_branch
        %383 = sbr.rel (%p380) target = $region12
      $region11: #{basenet_b_forward.1} parent=5 // pred_region
        %s384 = ssub.s32 %s24, 1
        // Predicated region
        $region13: #{basenet_b_forward.1} parent=11 // pred_check
          %p385 = pneg %p71
        $region14: #{basenet_b_forward.1} parent=11 // pred_check_branch
          %387 = sbr.rel (%p385) target = $region16
        $region15: #{basenet_b_forward.1} parent=11 // pred_region
          _
        $region16: #{basenet_b_forward.1} parent=11 // pred_fallthru
          _
        // Predicated region
        $region17: #{basenet_b_forward.1} parent=11 // pred_check
          %p388 = pneg %p92
        $region18: #{basenet_b_forward.1} parent=11 // pred_check_branch
          %390 = sbr.rel (%p388) target = $region20
        $region19: #{basenet_b_forward.1} parent=11 // pred_region
          _
        $region20: #{basenet_b_forward.1} parent=11 // pred_fallthru
          _
        // Predicated region
        $region21: #{basenet_b_forward.1} parent=11 // pred_check
          %p391 = pneg %p113
        $region22: #{basenet_b_forward.1} parent=11 // pred_check_branch
          %393 = sbr.rel (%p391) target = $region24
        $region23: #{basenet_b_forward.1} parent=11 // pred_region
          _
        $region24: #{basenet_b_forward.1} parent=11 // pred_fallthru
          _
        // Predicated region
        $region25: #{basenet_b_forward.1} parent=11 // pred_check
          %p394 = pneg %p134
        $region26: #{basenet_b_forward.1} parent=11 // pred_check_branch
          %396 = sbr.rel (%p394) target = $region28
        $region27: #{basenet_b_forward.1} parent=11 // pred_region
          _
        $region28: #{basenet_b_forward.1} parent=11 // pred_fallthru
          _
        // Predicated region
        $region29: #{basenet_b_forward.1} parent=11 // pred_check
          %p397 = pneg %p155
        $region30: #{basenet_b_forward.1} parent=11 // pred_check_branch
          %399 = sbr.rel (%p397) target = $region32
        $region31: #{basenet_b_forward.1} parent=11 // pred_region
          _
        $region32: #{basenet_b_forward.1} parent=11 // pred_fallthru
          _
        // Predicated region
        $region33: #{basenet_b_forward.1} parent=11 // pred_check
          %p400 = pneg %p176
        $region34: #{basenet_b_forward.1} parent=11 // pred_check_branch
          %402 = sbr.rel (%p400) target = $region36
        $region35: #{basenet_b_forward.1} parent=11 // pred_region
          _
        $region36: #{basenet_b_forward.1} parent=11 // pred_fallthru
          _
        // Predicated region
        $region37: #{basenet_b_forward.1} parent=11 // pred_check
          %p403 = pneg %p197
        $region38: #{basenet_b_forward.1} parent=11 // pred_check_branch
          %405 = sbr.rel (%p403) target = $region40
        $region39: #{basenet_b_forward.1} parent=11 // pred_region
          _
        $region40: #{basenet_b_forward.1} parent=11 // pred_fallthru
          _
        // Predicated region
        $region41: #{basenet_b_forward.1} parent=11 // pred_check
          %p406 = pneg %p218
        $region42: #{basenet_b_forward.1} parent=11 // pred_check_branch
          %408 = sbr.rel (%p406) target = $region44
        $region43: #{basenet_b_forward.1} parent=11 // pred_region
          _
        $region44: #{basenet_b_forward.1} parent=11 // pred_fallthru
          _
        // Predicated region
        $region45: #{basenet_b_forward.1} parent=11 // pred_check
          %p409 = pneg %p239
        $region46: #{basenet_b_forward.1} parent=11 // pred_check_branch
          %411 = sbr.rel (%p409) target = $region48
        $region47: #{basenet_b_forward.1} parent=11 // pred_region
          _
        $region48: #{basenet_b_forward.1} parent=11 // pred_fallthru
          _
        // Predicated region
        $region49: #{basenet_b_forward.1} parent=11 // pred_check
          %p412 = pneg %p260
        $region50: #{basenet_b_forward.1} parent=11 // pred_check_branch
          %414 = sbr.rel (%p412) target = $region52
        $region51: #{basenet_b_forward.1} parent=11 // pred_region
          _
        $region52: #{basenet_b_forward.1} parent=11 // pred_fallthru
          _
        // Predicated region
        $region53: #{basenet_b_forward.1} parent=11 // pred_check
          %p415 = pneg %p281
        $region54: #{basenet_b_forward.1} parent=11 // pred_check_branch
          %417 = sbr.rel (%p415) target = $region56
        $region55: #{basenet_b_forward.1} parent=11 // pred_region
          _
        $region56: #{basenet_b_forward.1} parent=11 // pred_fallthru
          _
        // Predicated region
        $region57: #{basenet_b_forward.1} parent=11 // pred_check
          %p418 = pneg %p302
        $region58: #{basenet_b_forward.1} parent=11 // pred_check_branch
          %420 = sbr.rel (%p418) target = $region60
        $region59: #{basenet_b_forward.1} parent=11 // pred_region
          _
        $region60: #{basenet_b_forward.1} parent=11 // pred_fallthru
          _
        // Predicated region
        $region61: #{basenet_b_forward.1} parent=11 // pred_check
          %p421 = pneg %p323
        $region62: #{basenet_b_forward.1} parent=11 // pred_check_branch
          %423 = sbr.rel (%p421) target = $region64
        $region63: #{basenet_b_forward.1} parent=11 // pred_region
          _
        $region64: #{basenet_b_forward.1} parent=11 // pred_fallthru
          _
        // Predicated region
        $region65: #{basenet_b_forward.1} parent=11 // pred_check
          %p424 = pneg %p344
        $region66: #{basenet_b_forward.1} parent=11 // pred_check_branch
          %426 = sbr.rel (%p424) target = $region68
        $region67: #{basenet_b_forward.1} parent=11 // pred_region
          _
        $region68: #{basenet_b_forward.1} parent=11 // pred_fallthru
          _
      $region12: #{basenet_b_forward.1} parent=5 // pred_fallthru
        _
      %p427 = scmp.lt.s32.totalorder %s24, 2
      // Predicated region
      $region69: #{basenet_b_forward.1} parent=5 // pred_check
        %p428 = pneg %p427
      $region70: #{basenet_b_forward.1} parent=5 // pred_check_branch
        %430 = sbr.rel (%p428) target = $region72
      $region71: #{basenet_b_forward.1} parent=5 // pred_region
        // Predicated region
        $region73: #{basenet_b_forward.1} parent=71 // pred_check
          %p431 = pneg %p44
        $region74: #{basenet_b_forward.1} parent=71 // pred_check_branch
          %433 = sbr.rel (%p431) target = $region76
        $region75: #{basenet_b_forward.1} parent=71 // pred_region
          %p434 = scmp.lt.s32.totalorder %s24, 1
          %s435 = scalar_select %p434, %s24, 1
          %s436 = smul.addr %s435, 32
          %s437 = smul.addr %s436, 4
          %s438 = scalar_lea.vmem %s0, %s437
        $region76: #{basenet_b_forward.1} parent=71 // pred_fallthru
          _
      $region72: #{basenet_b_forward.1} parent=5 // pred_fallthru
        _
      %p439 = scmp.le.s32.totalorder 1, %s24
      %p440 = scmp.lt.s32.totalorder %s24, 3
      %p441 = pnand %p439, %p440
      %p442 = pneg %p441
      // Predicated region
      $region77: #{basenet_b_forward.1} parent=5 // pred_check
        _
      $region78: #{basenet_b_forward.1} parent=5 // pred_check_branch
        %444 = sbr.rel (%p441) target = $region80
      $region79: #{basenet_b_forward.1} parent=5 // pred_region
        %s445 = ssub.s32 %s24, 1
        %p446 = scmp.lt.s32.totalorder %s29, 1
        %s447 = scalar_select %p446, %s29, 1
        %s448 = smul.addr %s447, 32
        %s449 = smul.addr %s448, 4
        %s450 = scalar_lea.vmem %s0, %s449
        %p451 = pneg %p50
        %p452 = pneg %p47
        %p453 = pneg %p71
        %p454 = pneg %p68
        %p455 = pneg %p92
        %p456 = pneg %p89
        %p457 = pneg %p113
        %p458 = pneg %p110
        %p459 = pneg %p134
        %p460 = pneg %p131
        %p461 = pneg %p155
        %p462 = pneg %p152
        %p463 = pneg %p176
        %p464 = pneg %p173
        %p465 = pneg %p197
        %p466 = pneg %p194
        %p467 = pneg %p218
        %p468 = pneg %p215
        %p469 = pneg %p239
        %p470 = pneg %p236
        %p471 = pneg %p260
        %p472 = pneg %p257
        %p473 = pneg %p281
        %p474 = pneg %p278
        %p475 = pneg %p302
        %p476 = pneg %p299
        %p477 = pneg %p323
        %p478 = pneg %p320
        %p479 = pneg %p344
        %p480 = pneg %p341
        %p481 = pneg %p370
        %p482 = pneg %p367
        %s483 = sand.u32 %s357, 1
        %s484 = scalar_lea.sflag [#allocation6], %s483
        %s485 = sand.u32 %s357, 1
        %s486 = scalar_lea.vmem [#allocation5], %s485
        %p487 = scmp.lt.s32.totalorder %s29, 1
        %s488 = scalar_select %p487, %s29, 1
        %s489 = smul.addr %s488, 32
        %s490 = smul.addr %s489, 4
        %s491 = scalar_lea.vmem %s0, %s490
        %v493 = vld [vmem:[%s491] sm:$0xf]
        %v494 = vld [vmem:[%s491 + $0x4] sm:$0xf]
        %v495 = vld [vmem:[%s491 + $0x8] sm:$0xf]
        %v496 = vld [vmem:[%s491 + $0xc] sm:$0xf]
        %v497 = vld [vmem:[%s491 + $0x10] sm:$0xf]
        %v498 = vld [vmem:[%s491 + $0x14] sm:$0xf]
        %v499 = vld [vmem:[%s491 + $0x18] sm:$0xf]
        %v500 = vld [vmem:[%s491 + $0x1c] sm:$0xf]
        %v501 = vld [vmem:[%s491 + $0x20] sm:$0xf]
        %v502 = vld [vmem:[%s491 + $0x24] sm:$0xf]
        %v503 = vld [vmem:[%s491 + $0x28] sm:$0xf]
        %v504 = vld [vmem:[%s491 + $0x2c] sm:$0xf]
        %v505 = vld [vmem:[%s491 + $0x30] sm:$0xf]
        %v506 = vld [vmem:[%s491 + $0x34] sm:$0xf]
        %v507 = vld [vmem:[%s491 + $0x38] sm:$0xf]
        %v508 = vld [vmem:[%s491 + $0x3c] sm:$0xf]
        %v509 = vld [vmem:[%s1] sm:$0xf]
        %v510 = vld [vmem:[%s1 + $0x4] sm:$0xf]
        %v511 = vld [vmem:[%s1 + $0x8] sm:$0xf]
        %v512 = vld [vmem:[%s1 + $0xc] sm:$0xf]
        %v513 = vld [vmem:[%s1 + $0x10] sm:$0xf]
        %v514 = vld [vmem:[%s1 + $0x14] sm:$0xf]
        %v515 = vld [vmem:[%s1 + $0x18] sm:$0xf]
        %v516 = vld [vmem:[%s1 + $0x1c] sm:$0xf]
        %v517 = vld [vmem:[%s1 + $0x20] sm:$0xf]
        %v518 = vld [vmem:[%s1 + $0x24] sm:$0xf]
        %v519 = vld [vmem:[%s2] sm:$0x1]
        %v521 = vlaneseq
        %v522 = vshrl.u32 %v521, 7
        %v523 = vsub.s32 0, %v522
        %v524 = vrot.slane %v519, %v523
        %v542 = vunpack.c.l.b16 %v493
        %v543 = vunpack.c.l.b16 %v494
        %v544 = vunpack.c.l.b16 %v495
        %v545 = vunpack.c.l.b16 %v496
        %v546 = vunpack.c.l.b16 %v497
        %v547 = vunpack.c.l.b16 %v498
        %v548 = vunpack.c.l.b16 %v499
        %v549 = vunpack.c.l.b16 %v500
        %v550 = vunpack.c.l.b16 %v501
        %v551 = vunpack.c.l.b16 %v502
        %v552 = vunpack.c.l.b16 %v503
        %v553 = vunpack.c.l.b16 %v504
        %v554 = vunpack.c.l.b16 %v505
        %v555 = vunpack.c.l.b16 %v506
        %v556 = vunpack.c.l.b16 %v507
        %v557 = vunpack.c.l.b16 %v508
        %v558 = vpack.c.b16 %v543, %v542
        %v559 = vpack.c.b16 %v545, %v544
        %v560 = vpack.c.b16 %v547, %v546
        %v561 = vpack.c.b16 %v549, %v548
        %v562 = vpack.c.b16 %v551, %v550
        %v563 = vpack.c.b16 %v553, %v552
        %v564 = vpack.c.b16 %v555, %v554
        %v565 = vpack.c.b16 %v557, %v556
        %v576 = vunpack.c.l.b16 %v509
        %v577 = vunpack.c.l.b16 %v510
        %v578 = vunpack.c.l.b16 %v511
        %v579 = vunpack.c.l.b16 %v512
        %v580 = vunpack.c.l.b16 %v513
        %v581 = vunpack.c.l.b16 %v514
        %v582 = vunpack.c.l.b16 %v515
        %v583 = vunpack.c.l.b16 %v516
        %v584 = vunpack.c.l.b16 %v517
        %v585 = vunpack.c.l.b16 %v518
        %v586 = vpack.c.b16 %v577, %v576
        %v587 = vpack.c.b16 %v579, %v578
        %v588 = vpack.c.b16 %v581, %v580
        %v589 = vpack.c.b16 %v583, %v582
        %v590 = vpack.c.b16 %v585, %v584
        %vm596 = vcmask 654336
        %v598 = vsel %vm596, %v558, 0
        %v601 = vsel %vm596, %v559, 0
        %v604 = vsel %vm596, %v560, 0
        %v607 = vsel %vm596, %v561, 0
        %v610 = vsel %vm596, %v562, 0
        %v613 = vsel %vm596, %v563, 0
        %v616 = vsel %vm596, %v564, 0
        %v619 = vsel %vm596, %v565, 0
        %621 = vmatprep.subr.bf16.mxu0 0
        %622 = vmatpush1.bf16.msra.mxu0 %v586
        %623 = vmatprep.subr.bf16.mxu0 0
        %624 = vmatpush1.bf16.msra.mxu0 %v587
        %625 = vmatprep.subr.bf16.mxu0 0
        %626 = vmatpush1.bf16.msra.mxu0 %v588
        %627 = vmatprep.subr.bf16.mxu0 0
        %628 = vmatpush1.bf16.msra.mxu0 %v589
        %629 = vmatprep.subr.bf16.mxu0 0
        %630 = vmatpush1.bf16.msra.mxu0 %v590
        %631 = vmatprep.subr.bf16.mxu0 0
        %632 = vmatpush1.bf16.msra.mxu0 0
        %633 = vmatprep.subr.bf16.mxu0 0
        %634 = vmatpush1.bf16.msra.mxu0 0
        %635 = vmatprep.subr.bf16.mxu0 0
        %636 = vmatpush1.bf16.msra.mxu0 0
        %637 = vmatprep.subr.bf16.mxu0 0
        %638 = vmatpush1.bf16.msra.mxu0 0
        %639 = vmatprep.subr.bf16.mxu0 0
        %640 = vmatpush1.bf16.msra.mxu0 0
        %641 = vmatprep.subr.bf16.mxu0 0
        %642 = vmatpush1.bf16.msra.mxu0 0
        %643 = vmatprep.subr.bf16.mxu0 0
        %644 = vmatpush1.bf16.msra.mxu0 0
        %645 = vmatprep.subr.bf16.mxu0 0
        %646 = vmatpush1.bf16.msra.mxu0 0
        %647 = vmatprep.subr.bf16.mxu0 0
        %648 = vmatpush1.bf16.msra.mxu0 0
        %649 = vmatprep.subr.bf16.mxu0 0
        %650 = vmatpush1.bf16.msra.mxu0 0
        %651 = vmatprep.subr.bf16.mxu0 0
        %652 = vmatpush1.bf16.msra.mxu0 0
        %653 = vmatprep.mubr.bf16.mxu0 0
        %654 = vmatmul.mubr.bf16.gmra.mrb[0].mxu0 %v598
        %v655 = vpop.f32.mrb[0].mxu0
        %v656 = vadd.f32 %v524, %v655
        %v657 = vpop.f32.mrb[0].mxu0
        %v658 = vpop.f32.mrb[0].mxu0
        %v659 = vadd.f32 %v524, %v658
        %v660 = vpop.f32.mrb[0].mxu0
        %661 = vmatprep.mubr.bf16.mxu0 0
        %662 = vmatmul.mubr.bf16.gmra.mrb[0].mxu0 %v601
        %v663 = vpop.f32.mrb[0].mxu0
        %v664 = vadd.f32 %v524, %v663
        %v665 = vpop.f32.mrb[0].mxu0
        %v666 = vpop.f32.mrb[0].mxu0
        %v667 = vadd.f32 %v524, %v666
        %v668 = vpop.f32.mrb[0].mxu0
        %669 = vmatprep.mubr.bf16.mxu0 0
        %670 = vmatmul.mubr.bf16.gmra.mrb[0].mxu0 %v604
        %v671 = vpop.f32.mrb[0].mxu0
        %v672 = vadd.f32 %v524, %v671
        %v673 = vpop.f32.mrb[0].mxu0
        %v674 = vpop.f32.mrb[0].mxu0
        %v675 = vadd.f32 %v524, %v674
        %v676 = vpop.f32.mrb[0].mxu0
        %677 = vmatprep.mubr.bf16.mxu0 0
        %678 = vmatmul.mubr.bf16.gmra.mrb[0].mxu0 %v607
        %v679 = vpop.f32.mrb[0].mxu0
        %v680 = vadd.f32 %v524, %v679
        %v681 = vpop.f32.mrb[0].mxu0
        %v682 = vpop.f32.mrb[0].mxu0
        %v683 = vadd.f32 %v524, %v682
        %v684 = vpop.f32.mrb[0].mxu0
        %685 = vmatprep.mubr.bf16.mxu0 0
        %686 = vmatmul.mubr.bf16.gmra.mrb[0].mxu0 %v610
        %v687 = vpop.f32.mrb[0].mxu0
        %v688 = vadd.f32 %v524, %v687
        %v689 = vpop.f32.mrb[0].mxu0
        %v690 = vpop.f32.mrb[0].mxu0
        %v691 = vadd.f32 %v524, %v690
        %v692 = vpop.f32.mrb[0].mxu0
        %693 = vmatprep.mubr.bf16.mxu0 0
        %694 = vmatmul.mubr.bf16.gmra.mrb[0].mxu0 %v613
        %v695 = vpop.f32.mrb[0].mxu0
        %v696 = vadd.f32 %v524, %v695
        %v697 = vpop.f32.mrb[0].mxu0
        %v698 = vpop.f32.mrb[0].mxu0
        %v699 = vadd.f32 %v524, %v698
        %v700 = vpop.f32.mrb[0].mxu0
        %701 = vmatprep.mubr.bf16.mxu0 0
        %702 = vmatmul.mubr.bf16.gmra.mrb[0].mxu0 %v616
        %v703 = vpop.f32.mrb[0].mxu0
        %v704 = vadd.f32 %v524, %v703
        %v705 = vpop.f32.mrb[0].mxu0
        %v706 = vpop.f32.mrb[0].mxu0
        %v707 = vadd.f32 %v524, %v706
        %v708 = vpop.f32.mrb[0].mxu0
        %709 = vmatprep.mubr.bf16.mxu0 0
        %710 = vmatmul.mubr.bf16.gmra.mrb[0].mxu0 %v619
        %v711 = vpop.f32.mrb[0].mxu0
        %v712 = vadd.f32 %v524, %v711
        %v713 = vpop.f32.mrb[0].mxu0
        %v714 = vpop.f32.mrb[0].mxu0
        %v715 = vadd.f32 %v524, %v714
        %v716 = vpop.f32.mrb[0].mxu0
        %717 = vdwg.mxu0
        %v718 = vmax.f32 %v656, 0.0
        %v719 = vmax.f32 %v659, 0.0
        %v720 = vmax.f32 %v664, 0.0
        %v721 = vmax.f32 %v667, 0.0
        %v722 = vmax.f32 %v672, 0.0
        %v723 = vmax.f32 %v675, 0.0
        %v724 = vmax.f32 %v680, 0.0
        %v725 = vmax.f32 %v683, 0.0
        %v726 = vmax.f32 %v688, 0.0
        %v727 = vmax.f32 %v691, 0.0
        %v728 = vmax.f32 %v696, 0.0
        %v729 = vmax.f32 %v699, 0.0
        %v730 = vmax.f32 %v704, 0.0
        %v731 = vmax.f32 %v707, 0.0
        %v732 = vmax.f32 %v712, 0.0
        %v733 = vmax.f32 %v715, 0.0
        %v734 = vpack.c.bf16 %v719, %v718
        %v735 = vpack.c.bf16 %v721, %v720
        %v736 = vpack.c.bf16 %v723, %v722
        %v737 = vpack.c.bf16 %v725, %v724
        %v738 = vpack.c.bf16 %v727, %v726
        %v739 = vpack.c.bf16 %v729, %v728
        %v740 = vpack.c.bf16 %v731, %v730
        %v741 = vpack.c.bf16 %v733, %v732
        %v742 = vld [vmem:[%s3] sm:$0xf]
        %v743 = vld [vmem:[%s3 + $0x4] sm:$0xf]
        %v744 = vld [vmem:[%s3 + $0x8] sm:$0xf]
        %v745 = vld [vmem:[%s3 + $0xc] sm:$0xf]
        %v746 = vld [vmem:[%s3 + $0x10] sm:$0xf]
        %v747 = vld [vmem:[%s3 + $0x14] sm:$0xf]
        %v748 = vld [vmem:[%s3 + $0x18] sm:$0xf]
        %v749 = vld [vmem:[%s3 + $0x1c] sm:$0xf]
        %v750 = vld [vmem:[%s3 + $0x20] sm:$0xf]
        %v751 = vld [vmem:[%s3 + $0x24] sm:$0xf]
        %v752 = vld [vmem:[%s3 + $0x28] sm:$0xf]
        %v753 = vld [vmem:[%s3 + $0x2c] sm:$0xf]
        %v754 = vld [vmem:[%s4] sm:$0x1]
        %v756 = vlaneseq
        %v757 = vshrl.u32 %v756, 7
        %v758 = vsub.s32 0, %v757
        %v759 = vrot.slane %v754, %v758
        %v773 = vunpack.c.l.b16 %v742
        %v774 = vunpack.c.l.b16 %v743
        %v775 = vunpack.c.l.b16 %v744
        %v776 = vunpack.c.l.b16 %v745
        %v777 = vunpack.c.l.b16 %v746
        %v778 = vunpack.c.l.b16 %v747
        %v779 = vunpack.c.l.b16 %v748
        %v780 = vunpack.c.l.b16 %v749
        %v781 = vunpack.c.l.b16 %v750
        %v782 = vunpack.c.l.b16 %v751
        %v783 = vunpack.c.l.b16 %v752
        %v784 = vunpack.c.l.b16 %v753
        %v785 = vpack.c.b16 %v774, %v773
        %v786 = vpack.c.b16 %v776, %v775
        %v787 = vpack.c.b16 %v778, %v777
        %v788 = vpack.c.b16 %v780, %v779
        %v789 = vpack.c.b16 %v782, %v781
        %v790 = vpack.c.b16 %v784, %v783
        %vm797 = vcmask 785408
        %v799 = vsel %vm797, %v734, 0
        %v802 = vsel %vm797, %v735, 0
        %v805 = vsel %vm797, %v736, 0
        %v808 = vsel %vm797, %v737, 0
        %v811 = vsel %vm797, %v738, 0
        %v814 = vsel %vm797, %v739, 0
        %v817 = vsel %vm797, %v740, 0
        %v820 = vsel %vm797, %v741, 0
        %822 = vmatprep.subr.bf16.mxu0 0
        %823 = vmatpush1.bf16.msra.mxu0 %v785
        %824 = vmatprep.subr.bf16.mxu0 0
        %825 = vmatpush1.bf16.msra.mxu0 %v786
        %826 = vmatprep.subr.bf16.mxu0 0
        %827 = vmatpush1.bf16.msra.mxu0 %v787
        %828 = vmatprep.subr.bf16.mxu0 0
        %829 = vmatpush1.bf16.msra.mxu0 %v788
        %830 = vmatprep.subr.bf16.mxu0 0
        %831 = vmatpush1.bf16.msra.mxu0 %v789
        %832 = vmatprep.subr.bf16.mxu0 0
        %833 = vmatpush1.bf16.msra.mxu0 %v790
        %834 = vmatprep.subr.bf16.mxu0 0
        %835 = vmatpush1.bf16.msra.mxu0 0
        %836 = vmatprep.subr.bf16.mxu0 0
        %837 = vmatpush1.bf16.msra.mxu0 0
        %838 = vmatprep.subr.bf16.mxu0 0
        %839 = vmatpush1.bf16.msra.mxu0 0
        %840 = vmatprep.subr.bf16.mxu0 0
        %841 = vmatpush1.bf16.msra.mxu0 0
        %842 = vmatprep.subr.bf16.mxu0 0
        %843 = vmatpush1.bf16.msra.mxu0 0
        %844 = vmatprep.subr.bf16.mxu0 0
        %845 = vmatpush1.bf16.msra.mxu0 0
        %846 = vmatprep.subr.bf16.mxu0 0
        %847 = vmatpush1.bf16.msra.mxu0 0
        %848 = vmatprep.subr.bf16.mxu0 0
        %849 = vmatpush1.bf16.msra.mxu0 0
        %850 = vmatprep.subr.bf16.mxu0 0
        %851 = vmatpush1.bf16.msra.mxu0 0
        %852 = vmatprep.subr.bf16.mxu0 0
        %853 = vmatpush1.bf16.msra.mxu0 0
        %854 = vmatprep.mubr.bf16.mxu0 0
        %855 = vmatmul.mubr.bf16.gmra.mrb[0].mxu0 %v799
        %v856 = vpop.f32.mrb[0].mxu0
        %v857 = vadd.f32 %v759, %v856
        %v858 = vpop.f32.mrb[0].mxu0
        %v859 = vpop.f32.mrb[0].mxu0
        %v860 = vadd.f32 %v759, %v859
        %v861 = vpop.f32.mrb[0].mxu0
        %862 = vmatprep.mubr.bf16.mxu0 0
        %863 = vmatmul.mubr.bf16.gmra.mrb[0].mxu0 %v802
        %v864 = vpop.f32.mrb[0].mxu0
        %v865 = vadd.f32 %v759, %v864
        %v866 = vpop.f32.mrb[0].mxu0
        %v867 = vpop.f32.mrb[0].mxu0
        %v868 = vadd.f32 %v759, %v867
        %v869 = vpop.f32.mrb[0].mxu0
        %870 = vmatprep.mubr.bf16.mxu0 0
        %871 = vmatmul.mubr.bf16.gmra.mrb[0].mxu0 %v805
        %v872 = vpop.f32.mrb[0].mxu0
        %v873 = vadd.f32 %v759, %v872
        %v874 = vpop.f32.mrb[0].mxu0
        %v875 = vpop.f32.mrb[0].mxu0
        %v876 = vadd.f32 %v759, %v875
        %v877 = vpop.f32.mrb[0].mxu0
        %878 = vmatprep.mubr.bf16.mxu0 0
        %879 = vmatmul.mubr.bf16.gmra.mrb[0].mxu0 %v808
        %v880 = vpop.f32.mrb[0].mxu0
        %v881 = vadd.f32 %v759, %v880
        %v882 = vpop.f32.mrb[0].mxu0
        %v883 = vpop.f32.mrb[0].mxu0
        %v884 = vadd.f32 %v759, %v883
        %v885 = vpop.f32.mrb[0].mxu0
        %886 = vmatprep.mubr.bf16.mxu0 0
        %887 = vmatmul.mubr.bf16.gmra.mrb[0].mxu0 %v811
        %v888 = vpop.f32.mrb[0].mxu0
        %v889 = vadd.f32 %v759, %v888
        %v890 = vpop.f32.mrb[0].mxu0
        %v891 = vpop.f32.mrb[0].mxu0
        %v892 = vadd.f32 %v759, %v891
        %v893 = vpop.f32.mrb[0].mxu0
        %894 = vmatprep.mubr.bf16.mxu0 0
        %895 = vmatmul.mubr.bf16.gmra.mrb[0].mxu0 %v814
        %v896 = vpop.f32.mrb[0].mxu0
        %v897 = vadd.f32 %v759, %v896
        %v898 = vpop.f32.mrb[0].mxu0
        %v899 = vpop.f32.mrb[0].mxu0
        %v900 = vadd.f32 %v759, %v899
        %v901 = vpop.f32.mrb[0].mxu0
        %902 = vmatprep.mubr.bf16.mxu0 0
        %903 = vmatmul.mubr.bf16.gmra.mrb[0].mxu0 %v817
        %v904 = vpop.f32.mrb[0].mxu0
        %v905 = vadd.f32 %v759, %v904
        %v906 = vpop.f32.mrb[0].mxu0
        %v907 = vpop.f32.mrb[0].mxu0
        %v908 = vadd.f32 %v759, %v907
        %v909 = vpop.f32.mrb[0].mxu0
        %910 = vmatprep.mubr.bf16.mxu0 0
        %911 = vmatmul.mubr.bf16.gmra.mrb[0].mxu0 %v820
        %v912 = vpop.f32.mrb[0].mxu0
        %v913 = vadd.f32 %v759, %v912
        %v914 = vpop.f32.mrb[0].mxu0
        %v915 = vpop.f32.mrb[0].mxu0
        %v916 = vadd.f32 %v759, %v915
        %v917 = vpop.f32.mrb[0].mxu0
        %918 = vdwg.mxu0
        %v919 = vmax.f32 %v857, 0.0
        %v920 = vmax.f32 %v860, 0.0
        %v921 = vmax.f32 %v865, 0.0
        %v922 = vmax.f32 %v868, 0.0
        %v923 = vmax.f32 %v873, 0.0
        %v924 = vmax.f32 %v876, 0.0
        %v925 = vmax.f32 %v881, 0.0
        %v926 = vmax.f32 %v884, 0.0
        %v927 = vmax.f32 %v889, 0.0
        %v928 = vmax.f32 %v892, 0.0
        %v929 = vmax.f32 %v897, 0.0
        %v930 = vmax.f32 %v900, 0.0
        %v931 = vmax.f32 %v905, 0.0
        %v932 = vmax.f32 %v908, 0.0
        %v933 = vmax.f32 %v913, 0.0
        %v934 = vmax.f32 %v916, 0.0
        %935 = vst.msk [vmem:[#allocation2] sm:$0xff] %vm797, %v919
        %936 = vst.msk [vmem:[#allocation2 + $0x8] sm:$0xff] %vm797, %v920
        %937 = vst.msk [vmem:[#allocation2 + $0x10] sm:$0xff] %vm797, %v921
        %938 = vst.msk [vmem:[#allocation2 + $0x18] sm:$0xff] %vm797, %v922
        %939 = vst.msk [vmem:[#allocation2 + $0x20] sm:$0xff] %vm797, %v923
        %940 = vst.msk [vmem:[#allocation2 + $0x28] sm:$0xff] %vm797, %v924
        %941 = vst.msk [vmem:[#allocation2 + $0x30] sm:$0xff] %vm797, %v925
        %942 = vst.msk [vmem:[#allocation2 + $0x38] sm:$0xff] %vm797, %v926
        %943 = vst.msk [vmem:[#allocation2 + $0x40] sm:$0xff] %vm797, %v927
        %944 = vst.msk [vmem:[#allocation2 + $0x48] sm:$0xff] %vm797, %v928
        %945 = vst.msk [vmem:[#allocation2 + $0x50] sm:$0xff] %vm797, %v929
        %946 = vst.msk [vmem:[#allocation2 + $0x58] sm:$0xff] %vm797, %v930
        %947 = vst.msk [vmem:[#allocation2 + $0x60] sm:$0xff] %vm797, %v931
        %948 = vst.msk [vmem:[#allocation2 + $0x68] sm:$0xff] %vm797, %v932
        %949 = vst.msk [vmem:[#allocation2 + $0x70] sm:$0xff] %vm797, %v933
        %950 = vst.msk [vmem:[#allocation2 + $0x78] sm:$0xff] %vm797, %v934
        %v951 = vld [vmem:[%s491 + $0x40] sm:$0xf]
        %v952 = vld [vmem:[%s491 + $0x44] sm:$0xf]
        %v953 = vld [vmem:[%s491 + $0x48] sm:$0xf]
        %v954 = vld [vmem:[%s491 + $0x4c] sm:$0xf]
        %v955 = vld [vmem:[%s491 + $0x50] sm:$0xf]
        %v956 = vld [vmem:[%s491 + $0x54] sm:$0xf]
        %v957 = vld [vmem:[%s491 + $0x58] sm:$0xf]
        %v958 = vld [vmem:[%s491 + $0x5c] sm:$0xf]
        %v959 = vld [vmem:[%s491 + $0x60] sm:$0xf]
        %v960 = vld [vmem:[%s491 + $0x64] sm:$0xf]
        %v961 = vld [vmem:[%s491 + $0x68] sm:$0xf]
        %v962 = vld [vmem:[%s491 + $0x6c] sm:$0xf]
        %v963 = vld [vmem:[%s491 + $0x70] sm:$0xf]
        %v964 = vld [vmem:[%s491 + $0x74] sm:$0xf]
        %v965 = vld [vmem:[%s491 + $0x78] sm:$0xf]
        %v966 = vld [vmem:[%s491 + $0x7c] sm:$0xf]
        %v967 = vld [vmem:[%s1] sm:$0xf]
        %v968 = vld [vmem:[%s1 + $0x4] sm:$0xf]
        %v969 = vld [vmem:[%s1 + $0x8] sm:$0xf]
        %v970 = vld [vmem:[%s1 + $0xc] sm:$0xf]
        %v971 = vld [vmem:[%s1 + $0x10] sm:$0xf]
        %v972 = vld [vmem:[%s1 + $0x14] sm:$0xf]
        %v973 = vld [vmem:[%s1 + $0x18] sm:$0xf]
        %v974 = vld [vmem:[%s1 + $0x1c] sm:$0xf]
        %v975 = vld [vmem:[%s1 + $0x20] sm:$0xf]
        %v976 = vld [vmem:[%s1 + $0x24] sm:$0xf]
        %v977 = vld [vmem:[%s2] sm:$0x1]
        %v979 = vlaneseq
        %v980 = vshrl.u32 %v979, 7
        %v981 = vsub.s32 0, %v980
        %v982 = vrot.slane %v977, %v981
        %v1000 = vunpack.c.l.b16 %v951
        %v1001 = vunpack.c.l.b16 %v952
        %v1002 = vunpack.c.l.b16 %v953
        %v1003 = vunpack.c.l.b16 %v954
        %v1004 = vunpack.c.l.b16 %v955
        %v1005 = vunpack.c.l.b16 %v956
        %v1006 = vunpack.c.l.b16 %v957
        %v1007 = vunpack.c.l.b16 %v958
        %v1008 = vunpack.c.l.b16 %v959
        %v1009 = vunpack.c.l.b16 %v960
        %v1010 = vunpack.c.l.b16 %v961
        %v1011 = vunpack.c.l.b16 %v962
        %v1012 = vunpack.c.l.b16 %v963
        %v1013 = vunpack.c.l.b16 %v964
        %v1014 = vunpack.c.l.b16 %v965
        %v1015 = vunpack.c.l.b16 %v966
        %v1016 = vpack.c.b16 %v1001, %v1000
        %v1017 = vpack.c.b16 %v1003, %v1002
        %v1018 = vpack.c.b16 %v1005, %v1004
        %v1019 = vpack.c.b16 %v1007, %v1006
        %v1020 = vpack.c.b16 %v1009, %v1008
        %v1021 = vpack.c.b16 %v1011, %v1010
        %v1022 = vpack.c.b16 %v1013, %v1012
        %v1023 = vpack.c.b16 %v1015, %v1014
        %v1034 = vunpack.c.l.b16 %v967
        %v1035 = vunpack.c.l.b16 %v968
        %v1036 = vunpack.c.l.b16 %v969
        %v1037 = vunpack.c.l.b16 %v970
        %v1038 = vunpack.c.l.b16 %v971
        %v1039 = vunpack.c.l.b16 %v972
        %v1040 = vunpack.c.l.b16 %v973
        %v1041 = vunpack.c.l.b16 %v974
        %v1042 = vunpack.c.l.b16 %v975
        %v1043 = vunpack.c.l.b16 %v976
        %v1044 = vpack.c.b16 %v1035, %v1034
        %v1045 = vpack.c.b16 %v1037, %v1036
        %v1046 = vpack.c.b16 %v1039, %v1038
        %v1047 = vpack.c.b16 %v1041, %v1040
        %v1048 = vpack.c.b16 %v1043, %v1042
        %v1055 = vsel %vm596, %v1016, 0
        %v1058 = vsel %vm596, %v1017, 0
        %v1061 = vsel %vm596, %v1018, 0
        %v1064 = vsel %vm596, %v1019, 0
        %v1067 = vsel %vm596, %v1020, 0
        %v1070 = vsel %vm596, %v1021, 0
        %v1073 = vsel %vm596, %v1022, 0
        %v1076 = vsel %vm596, %v1023, 0
        %1078 = vmatprep.subr.bf16.mxu0 0
        %1079 = vmatpush1.bf16.msra.mxu0 %v1044
        %1080 = vmatprep.subr.bf16.mxu0 0
        %1081 = vmatpush1.bf16.msra.mxu0 %v1045
        %1082 = vmatprep.subr.bf16.mxu0 0
        %1083 = vmatpush1.bf16.msra.mxu0 %v1046
        %1084 = vmatprep.subr.bf16.mxu0 0
        %1085 = vmatpush1.bf16.msra.mxu0 %v1047
        %1086 = vmatprep.subr.bf16.mxu0 0
        %1087 = vmatpush1.bf16.msra.mxu0 %v1048
        %1088 = vmatprep.subr.bf16.mxu0 0
        %1089 = vmatpush1.bf16.msra.mxu0 0
        %1090 = vmatprep.subr.bf16.mxu0 0
        %1091 = vmatpush1.bf16.msra.mxu0 0
        %1092 = vmatprep.subr.bf16.mxu0 0
        %1093 = vmatpush1.bf16.msra.mxu0 0
        %1094 = vmatprep.subr.bf16.mxu0 0
        %1095 = vmatpush1.bf16.msra.mxu0 0
        %1096 = vmatprep.subr.bf16.mxu0 0
        %1097 = vmatpush1.bf16.msra.mxu0 0
        %1098 = vmatprep.subr.bf16.mxu0 0
        %1099 = vmatpush1.bf16.msra.mxu0 0
        %1100 = vmatprep.subr.bf16.mxu0 0
        %1101 = vmatpush1.bf16.msra.mxu0 0
        %1102 = vmatprep.subr.bf16.mxu0 0
        %1103 = vmatpush1.bf16.msra.mxu0 0
        %1104 = vmatprep.subr.bf16.mxu0 0
        %1105 = vmatpush1.bf16.msra.mxu0 0
        %1106 = vmatprep.subr.bf16.mxu0 0
        %1107 = vmatpush1.bf16.msra.mxu0 0
        %1108 = vmatprep.subr.bf16.mxu0 0
        %1109 = vmatpush1.bf16.msra.mxu0 0
        %1110 = vmatprep.mubr.bf16.mxu0 0
        %1111 = vmatmul.mubr.bf16.gmra.mrb[0].mxu0 %v1055
        %v1112 = vpop.f32.mrb[0].mxu0
        %v1113 = vadd.f32 %v982, %v1112
        %v1114 = vpop.f32.mrb[0].mxu0
        %v1115 = vpop.f32.mrb[0].mxu0
        %v1116 = vadd.f32 %v982, %v1115
        %v1117 = vpop.f32.mrb[0].mxu0
        %1118 = vmatprep.mubr.bf16.mxu0 0
        %1119 = vmatmul.mubr.bf16.gmra.mrb[0].mxu0 %v1058
        %v1120 = vpop.f32.mrb[0].mxu0
        %v1121 = vadd.f32 %v982, %v1120
        %v1122 = vpop.f32.mrb[0].mxu0
        %v1123 = vpop.f32.mrb[0].mxu0
        %v1124 = vadd.f32 %v982, %v1123
        %v1125 = vpop.f32.mrb[0].mxu0
        %1126 = vmatprep.mubr.bf16.mxu0 0
        %1127 = vmatmul.mubr.bf16.gmra.mrb[0].mxu0 %v1061
        %v1128 = vpop.f32.mrb[0].mxu0
        %v1129 = vadd.f32 %v982, %v1128
        %v1130 = vpop.f32.mrb[0].mxu0
        %v1131 = vpop.f32.mrb[0].mxu0
        %v1132 = vadd.f32 %v982, %v1131
        %v1133 = vpop.f32.mrb[0].mxu0
        %1134 = vmatprep.mubr.bf16.mxu0 0
        %1135 = vmatmul.mubr.bf16.gmra.mrb[0].mxu0 %v1064
        %v1136 = vpop.f32.mrb[0].mxu0
        %v1137 = vadd.f32 %v982, %v1136
        %v1138 = vpop.f32.mrb[0].mxu0
        %v1139 = vpop.f32.mrb[0].mxu0
        %v1140 = vadd.f32 %v982, %v1139
        %v1141 = vpop.f32.mrb[0].mxu0
        %1142 = vmatprep.mubr.bf16.mxu0 0
        %1143 = vmatmul.mubr.bf16.gmra.mrb[0].mxu0 %v1067
        %v1144 = vpop.f32.mrb[0].mxu0
        %v1145 = vadd.f32 %v982, %v1144
        %v1146 = vpop.f32.mrb[0].mxu0
        %v1147 = vpop.f32.mrb[0].mxu0
        %v1148 = vadd.f32 %v982, %v1147
        %v1149 = vpop.f32.mrb[0].mxu0
        %1150 = vmatprep.mubr.bf16.mxu0 0
        %1151 = vmatmul.mubr.bf16.gmra.mrb[0].mxu0 %v1070
        %v1152 = vpop.f32.mrb[0].mxu0
        %v1153 = vadd.f32 %v982, %v1152
        %v1154 = vpop.f32.mrb[0].mxu0
        %v1155 = vpop.f32.mrb[0].mxu0
        %v1156 = vadd.f32 %v982, %v1155
        %v1157 = vpop.f32.mrb[0].mxu0
        %1158 = vmatprep.mubr.bf16.mxu0 0
        %1159 = vmatmul.mubr.bf16.gmra.mrb[0].mxu0 %v1073
        %v1160 = vpop.f32.mrb[0].mxu0
        %v1161 = vadd.f32 %v982, %v1160
        %v1162 = vpop.f32.mrb[0].mxu0
        %v1163 = vpop.f32.mrb[0].mxu0
        %v1164 = vadd.f32 %v982, %v1163
        %v1165 = vpop.f32.mrb[0].mxu0
        %1166 = vmatprep.mubr.bf16.mxu0 0
        %1167 = vmatmul.mubr.bf16.gmra.mrb[0].mxu0 %v1076
        %v1168 = vpop.f32.mrb[0].mxu0
        %v1169 = vadd.f32 %v982, %v1168
        %v1170 = vpop.f32.mrb[0].mxu0
        %v1171 = vpop.f32.mrb[0].mxu0
        %v1172 = vadd.f32 %v982, %v1171
        %v1173 = vpop.f32.mrb[0].mxu0
        %1174 = vdwg.mxu0
        %v1175 = vmax.f32 %v1113, 0.0
        %v1176 = vmax.f32 %v1116, 0.0
        %v1177 = vmax.f32 %v1121, 0.0
        %v1178 = vmax.f32 %v1124, 0.0
        %v1179 = vmax.f32 %v1129, 0.0
        %v1180 = vmax.f32 %v1132, 0.0
        %v1181 = vmax.f32 %v1137, 0.0
        %v1182 = vmax.f32 %v1140, 0.0
        %v1183 = vmax.f32 %v1145, 0.0
        %v1184 = vmax.f32 %v1148, 0.0
        %v1185 = vmax.f32 %v1153, 0.0
        %v1186 = vmax.f32 %v1156, 0.0
        %v1187 = vmax.f32 %v1161, 0.0
        %v1188 = vmax.f32 %v1164, 0.0
        %v1189 = vmax.f32 %v1169, 0.0
        %v1190 = vmax.f32 %v1172, 0.0
        %v1191 = vpack.c.bf16 %v1176, %v1175
        %v1192 = vpack.c.bf16 %v1178, %v1177
        %v1193 = vpack.c.bf16 %v1180, %v1179
        %v1194 = vpack.c.bf16 %v1182, %v1181
        %v1195 = vpack.c.bf16 %v1184, %v1183
        %v1196 = vpack.c.bf16 %v1186, %v1185
        %v1197 = vpack.c.bf16 %v1188, %v1187
        %v1198 = vpack.c.bf16 %v1190, %v1189
        %v1199 = vld [vmem:[%s3] sm:$0xf]
        %v1200 = vld [vmem:[%s3 + $0x4] sm:$0xf]
        %v1201 = vld [vmem:[%s3 + $0x8] sm:$0xf]
        %v1202 = vld [vmem:[%s3 + $0xc] sm:$0xf]
        %v1203 = vld [vmem:[%s3 + $0x10] sm:$0xf]
        %v1204 = vld [vmem:[%s3 + $0x14] sm:$0xf]
        %v1205 = vld [vmem:[%s3 + $0x18] sm:$0xf]
        %v1206 = vld [vmem:[%s3 + $0x1c] sm:$0xf]
        %v1207 = vld [vmem:[%s3 + $0x20] sm:$0xf]
        %v1208 = vld [vmem:[%s3 + $0x24] sm:$0xf]
        %v1209 = vld [vmem:[%s3 + $0x28] sm:$0xf]
        %v1210 = vld [vmem:[%s3 + $0x2c] sm:$0xf]
        %v1211 = vld [vmem:[%s4] sm:$0x1]
        %v1213 = vlaneseq
        %v1214 = vshrl.u32 %v1213, 7
        %v1215 = vsub.s32 0, %v1214
        %v1216 = vrot.slane %v1211, %v1215
        %v1230 = vunpack.c.l.b16 %v1199
        %v1231 = vunpack.c.l.b16 %v1200
        %v1232 = vunpack.c.l.b16 %v1201
        %v1233 = vunpack.c.l.b16 %v1202
        %v1234 = vunpack.c.l.b16 %v1203
        %v1235 = vunpack.c.l.b16 %v1204
        %v1236 = vunpack.c.l.b16 %v1205
        %v1237 = vunpack.c.l.b16 %v1206
        %v1238 = vunpack.c.l.b16 %v1207
        %v1239 = vunpack.c.l.b16 %v1208
        %v1240 = vunpack.c.l.b16 %v1209
        %v1241 = vunpack.c.l.b16 %v1210
        %v1242 = vpack.c.b16 %v1231, %v1230
        %v1243 = vpack.c.b16 %v1233, %v1232
        %v1244 = vpack.c.b16 %v1235, %v1234
        %v1245 = vpack.c.b16 %v1237, %v1236
        %v1246 = vpack.c.b16 %v1239, %v1238
        %v1247 = vpack.c.b16 %v1241, %v1240
        %v1255 = vsel %vm797, %v1191, 0
        %v1258 = vsel %vm797, %v1192, 0
        %v1261 = vsel %vm797, %v1193, 0
        %v1264 = vsel %vm797, %v1194, 0
        %v1267 = vsel %vm797, %v1195, 0
        %v1270 = vsel %vm797, %v1196, 0
        %v1273 = vsel %vm797, %v1197, 0
        %v1276 = vsel %vm797, %v1198, 0
        %1278 = vmatprep.subr.bf16.mxu0 0
        %1279 = vmatpush1.bf16.msra.mxu0 %v1242
        %1280 = vmatprep.subr.bf16.mxu0 0
        %1281 = vmatpush1.bf16.msra.mxu0 %v1243
        %1282 = vmatprep.subr.bf16.mxu0 0
        %1283 = vmatpush1.bf16.msra.mxu0 %v1244
        %1284 = vmatprep.subr.bf16.mxu0 0
        %1285 = vmatpush1.bf16.msra.mxu0 %v1245
        %1286 = vmatprep.subr.bf16.mxu0 0
        %1287 = vmatpush1.bf16.msra.mxu0 %v1246
        %1288 = vmatprep.subr.bf16.mxu0 0
        %1289 = vmatpush1.bf16.msra.mxu0 %v1247
        %1290 = vmatprep.subr.bf16.mxu0 0
        %1291 = vmatpush1.bf16.msra.mxu0 0
        %1292 = vmatprep.subr.bf16.mxu0 0
        %1293 = vmatpush1.bf16.msra.mxu0 0
        %1294 = vmatprep.subr.bf16.mxu0 0
        %1295 = vmatpush1.bf16.msra.mxu0 0
        %1296 = vmatprep.subr.bf16.mxu0 0
        %1297 = vmatpush1.bf16.msra.mxu0 0
        %1298 = vmatprep.subr.bf16.mxu0 0
        %1299 = vmatpush1.bf16.msra.mxu0 0
        %1300 = vmatprep.subr.bf16.mxu0 0
        %1301 = vmatpush1.bf16.msra.mxu0 0
        %1302 = vmatprep.subr.bf16.mxu0 0
        %1303 = vmatpush1.bf16.msra.mxu0 0
        %1304 = vmatprep.subr.bf16.mxu0 0
        %1305 = vmatpush1.bf16.msra.mxu0 0
        %1306 = vmatprep.subr.bf16.mxu0 0
        %1307 = vmatpush1.bf16.msra.mxu0 0
        %1308 = vmatprep.subr.bf16.mxu0 0
        %1309 = vmatpush1.bf16.msra.mxu0 0
        %1310 = vmatprep.mubr.bf16.mxu0 0
        %1311 = vmatmul.mubr.bf16.gmra.mrb[0].mxu0 %v1255
        %v1312 = vpop.f32.mrb[0].mxu0
        %v1313 = vadd.f32 %v1216, %v1312
        %v1314 = vpop.f32.mrb[0].mxu0
        %v1315 = vpop.f32.mrb[0].mxu0
        %v1316 = vadd.f32 %v1216, %v1315
        %v1317 = vpop.f32.mrb[0].mxu0
        %1318 = vmatprep.mubr.bf16.mxu0 0
        %1319 = vmatmul.mubr.bf16.gmra.mrb[0].mxu0 %v1258
        %v1320 = vpop.f32.mrb[0].mxu0
        %v1321 = vadd.f32 %v1216, %v1320
        %v1322 = vpop.f32.mrb[0].mxu0
        %v1323 = vpop.f32.mrb[0].mxu0
        %v1324 = vadd.f32 %v1216, %v1323
        %v1325 = vpop.f32.mrb[0].mxu0
        %1326 = vmatprep.mubr.bf16.mxu0 0
        %1327 = vmatmul.mubr.bf16.gmra.mrb[0].mxu0 %v1261
        %v1328 = vpop.f32.mrb[0].mxu0
        %v1329 = vadd.f32 %v1216, %v1328
        %v1330 = vpop.f32.mrb[0].mxu0
        %v1331 = vpop.f32.mrb[0].mxu0
        %v1332 = vadd.f32 %v1216, %v1331
        %v1333 = vpop.f32.mrb[0].mxu0
        %1334 = vmatprep.mubr.bf16.mxu0 0
        %1335 = vmatmul.mubr.bf16.gmra.mrb[0].mxu0 %v1264
        %v1336 = vpop.f32.mrb[0].mxu0
        %v1337 = vadd.f32 %v1216, %v1336
        %v1338 = vpop.f32.mrb[0].mxu0
        %v1339 = vpop.f32.mrb[0].mxu0
        %v1340 = vadd.f32 %v1216, %v1339
        %v1341 = vpop.f32.mrb[0].mxu0
        %1342 = vmatprep.mubr.bf16.mxu0 0
        %1343 = vmatmul.mubr.bf16.gmra.mrb[0].mxu0 %v1267
        %v1344 = vpop.f32.mrb[0].mxu0
        %v1345 = vadd.f32 %v1216, %v1344
        %v1346 = vpop.f32.mrb[0].mxu0
        %v1347 = vpop.f32.mrb[0].mxu0
        %v1348 = vadd.f32 %v1216, %v1347
        %v1349 = vpop.f32.mrb[0].mxu0
        %1350 = vmatprep.mubr.bf16.mxu0 0
        %1351 = vmatmul.mubr.bf16.gmra.mrb[0].mxu0 %v1270
        %v1352 = vpop.f32.mrb[0].mxu0
        %v1353 = vadd.f32 %v1216, %v1352
        %v1354 = vpop.f32.mrb[0].mxu0
        %v1355 = vpop.f32.mrb[0].mxu0
        %v1356 = vadd.f32 %v1216, %v1355
        %v1357 = vpop.f32.mrb[0].mxu0
        %1358 = vmatprep.mubr.bf16.mxu0 0
        %1359 = vmatmul.mubr.bf16.gmra.mrb[0].mxu0 %v1273
        %v1360 = vpop.f32.mrb[0].mxu0
        %v1361 = vadd.f32 %v1216, %v1360
        %v1362 = vpop.f32.mrb[0].mxu0
        %v1363 = vpop.f32.mrb[0].mxu0
        %v1364 = vadd.f32 %v1216, %v1363
        %v1365 = vpop.f32.mrb[0].mxu0
        %1366 = vmatprep.mubr.bf16.mxu0 0
        %1367 = vmatmul.mubr.bf16.gmra.mrb[0].mxu0 %v1276
        %v1368 = vpop.f32.mrb[0].mxu0
        %v1369 = vadd.f32 %v1216, %v1368
        %v1370 = vpop.f32.mrb[0].mxu0
        %v1371 = vpop.f32.mrb[0].mxu0
        %v1372 = vadd.f32 %v1216, %v1371
        %v1373 = vpop.f32.mrb[0].mxu0
        %1374 = vdwg.mxu0
        %v1375 = vmax.f32 %v1313, 0.0
        %v1376 = vmax.f32 %v1316, 0.0
        %v1377 = vmax.f32 %v1321, 0.0
        %v1378 = vmax.f32 %v1324, 0.0
        %v1379 = vmax.f32 %v1329, 0.0
        %v1380 = vmax.f32 %v1332, 0.0
        %v1381 = vmax.f32 %v1337, 0.0
        %v1382 = vmax.f32 %v1340, 0.0
        %v1383 = vmax.f32 %v1345, 0.0
        %v1384 = vmax.f32 %v1348, 0.0
        %v1385 = vmax.f32 %v1353, 0.0
        %v1386 = vmax.f32 %v1356, 0.0
        %v1387 = vmax.f32 %v1361, 0.0
        %v1388 = vmax.f32 %v1364, 0.0
        %v1389 = vmax.f32 %v1369, 0.0
        %v1390 = vmax.f32 %v1372, 0.0
        %1391 = vst.msk [vmem:[#allocation2 + $0x80] sm:$0xff] %vm797, %v1375
        %1392 = vst.msk [vmem:[#allocation2 + $0x88] sm:$0xff] %vm797, %v1376
        %1393 = vst.msk [vmem:[#allocation2 + $0x90] sm:$0xff] %vm797, %v1377
        %1394 = vst.msk [vmem:[#allocation2 + $0x98] sm:$0xff] %vm797, %v1378
        %1395 = vst.msk [vmem:[#allocation2 + $0xa0] sm:$0xff] %vm797, %v1379
        %1396 = vst.msk [vmem:[#allocation2 + $0xa8] sm:$0xff] %vm797, %v1380
        %1397 = vst.msk [vmem:[#allocation2 + $0xb0] sm:$0xff] %vm797, %v1381
        %1398 = vst.msk [vmem:[#allocation2 + $0xb8] sm:$0xff] %vm797, %v1382
        %1399 = vst.msk [vmem:[#allocation2 + $0xc0] sm:$0xff] %vm797, %v1383
        %1400 = vst.msk [vmem:[#allocation2 + $0xc8] sm:$0xff] %vm797, %v1384
        %1401 = vst.msk [vmem:[#allocation2 + $0xd0] sm:$0xff] %vm797, %v1385
        %1402 = vst.msk [vmem:[#allocation2 + $0xd8] sm:$0xff] %vm797, %v1386
        %1403 = vst.msk [vmem:[#allocation2 + $0xe0] sm:$0xff] %vm797, %v1387
        %1404 = vst.msk [vmem:[#allocation2 + $0xe8] sm:$0xff] %vm797, %v1388
        %1405 = vst.msk [vmem:[#allocation2 + $0xf0] sm:$0xff] %vm797, %v1389
        %1406 = vst.msk [vmem:[#allocation2 + $0xf8] sm:$0xff] %vm797, %v1390
        %1407 = vst.msk [vmem:[#allocation3] sm:$0xff] %vm797, 0.0
        %1408 = vst.msk [vmem:[#allocation3 + $0x8] sm:$0xff] %vm797, 0.0
        %1409 = vst.msk [vmem:[#allocation3 + $0x10] sm:$0xff] %vm797, 0.0
        %1410 = vst.msk [vmem:[#allocation3 + $0x18] sm:$0xff] %vm797, 0.0
        %1411 = vst.msk [vmem:[#allocation3 + $0x20] sm:$0xff] %vm797, 0.0
        %1412 = vst.msk [vmem:[#allocation3 + $0x28] sm:$0xff] %vm797, 0.0
        %1413 = vst.msk [vmem:[#allocation3 + $0x30] sm:$0xff] %vm797, 0.0
        %1414 = vst.msk [vmem:[#allocation3 + $0x38] sm:$0xff] %vm797, 0.0
        %1415 = vst.msk [vmem:[#allocation3 + $0x40] sm:$0xff] %vm797, 0.0
        %1416 = vst.msk [vmem:[#allocation3 + $0x48] sm:$0xff] %vm797, 0.0
        %1417 = vst.msk [vmem:[#allocation3 + $0x50] sm:$0xff] %vm797, 0.0
        %1418 = vst.msk [vmem:[#allocation3 + $0x58] sm:$0xff] %vm797, 0.0
        %1419 = vst.msk [vmem:[#allocation3 + $0x60] sm:$0xff] %vm797, 0.0
        %1420 = vst.msk [vmem:[#allocation3 + $0x68] sm:$0xff] %vm797, 0.0
        %1421 = vst.msk [vmem:[#allocation3 + $0x70] sm:$0xff] %vm797, 0.0
        %vm1422 = vcmask 778240
        %1423 = vst.msk [vmem:[#allocation3 + $0x78] sm:$0x1] %vm1422, 0.0
        %v1424 = vld [vmem:[#allocation2] sm:$0xff]
        %v1425 = vld [vmem:[#allocation2 + $0x8] sm:$0xff]
        %v1426 = vld [vmem:[#allocation2 + $0x10] sm:$0xff]
        %v1427 = vld [vmem:[#allocation2 + $0x18] sm:$0xff]
        %v1428 = vld [vmem:[#allocation2 + $0x20] sm:$0xff]
        %v1429 = vld [vmem:[#allocation2 + $0x28] sm:$0xff]
        %v1430 = vmax.f32 %v1424, %v1426
        %v1431 = vmax.f32 %v1425, %v1427
        %v1432 = vmax.f32 %v1430, %v1428
        %v1433 = vmax.f32 %v1431, %v1429
        %vm1434 = vcmask 780288
        %v1435 = vsel %vm1434, %v1432, -inf
        %v1436 = vrot.slane %v1435, 4
        %v1437 = vmax.f32 %v1435, %v1436
        %v1438 = vrot.slane %v1437, 2
        %v1439 = vmax.f32 %v1437, %v1438
        %v1440 = vrot.slane %v1439, 1
        %v1441 = vmax.f32 %v1439, %v1440
        %vm1442 = vcmask 782338
        %v1443 = vsel %vm1442, %v1432, -inf
        %v1444 = vrot.slane %v1443, 4
        %v1445 = vmax.f32 %v1443, %v1444
        %v1446 = vrot.slane %v1445, 2
        %v1447 = vmax.f32 %v1445, %v1446
        %v1448 = vrot.slane %v1447, 1
        %v1449 = vmax.f32 %v1447, %v1448
        %vm1450 = vcmask 784388
        %v1451 = vsel %vm1450, %v1432, -inf
        %v1452 = vrot.slane %v1451, 4
        %v1453 = vmax.f32 %v1451, %v1452
        %v1454 = vrot.slane %v1453, 2
        %v1455 = vmax.f32 %v1453, %v1454
        %v1456 = vrot.slane %v1455, 1
        %v1457 = vmax.f32 %v1455, %v1456
        %vm1458 = vcmask 785414
        %v1459 = vsel %vm1458, %v1432, -inf
        %v1460 = vsel %vm1422, %v1433, -inf
        %v1461 = vmax.f32 %v1459, %v1460
        %v1462 = vrot.slane %v1461, 4
        %v1463 = vmax.f32 %v1461, %v1462
        %v1464 = vrot.slane %v1463, 2
        %v1465 = vmax.f32 %v1463, %v1464
        %v1466 = vrot.slane %v1465, 1
        %v1467 = vmax.f32 %v1465, %v1466
        %v1468 = vsel %vm1434, %v1433, -inf
        %v1469 = vrot.slane %v1468, 4
        %v1470 = vmax.f32 %v1468, %v1469
        %v1471 = vrot.slane %v1470, 2
        %v1472 = vmax.f32 %v1470, %v1471
        %v1473 = vrot.slane %v1472, 1
        %v1474 = vmax.f32 %v1472, %v1473
        %v1475 = vsel %vm1442, %v1433, -inf
        %v1476 = vrot.slane %v1475, 4
        %v1477 = vmax.f32 %v1475, %v1476
        %v1478 = vrot.slane %v1477, 2
        %v1479 = vmax.f32 %v1477, %v1478
        %v1480 = vrot.slane %v1479, 1
        %v1481 = vmax.f32 %v1479, %v1480
        %v1482 = vsel %vm1450, %v1433, -inf
        %v1483 = vrot.slane %v1482, 4
        %v1484 = vmax.f32 %v1482, %v1483
        %v1485 = vrot.slane %v1484, 2
        %v1486 = vmax.f32 %v1484, %v1485
        %v1487 = vrot.slane %v1486, 1
        %v1488 = vmax.f32 %v1486, %v1487
        %vm1489 = vcmask 1040384
        %v1490 = vsel %vm1489, %v1441, %v1449
        %vm1491 = vcmask 1041408
        %v1492 = vsel %vm1491, %v1490, %v1457
        %vm1493 = vcmask 1042432
        %v1494 = vsel %vm1493, %v1492, %v1467
        %vm1495 = vcmask 1043456
        %v1496 = vsel %vm1495, %v1494, %v1474
        %vm1497 = vcmask 1044480
        %v1498 = vsel %vm1497, %v1496, %v1481
        %vm1499 = vcmask 1045504
        %v1500 = vsel %vm1499, %v1498, %v1488
        %vm1501 = vcmask 784384
        %1502 = vst.msk [vmem:[#allocation3 + $0x18] sm:$0x7f] %vm1501, %v1500
        %v1503 = vld [vmem:[#allocation2 + $0x20] sm:$0xff]
        %v1504 = vld [vmem:[#allocation2 + $0x28] sm:$0xff]
        %v1505 = vld [vmem:[#allocation2 + $0x30] sm:$0xff]
        %v1506 = vld [vmem:[#allocation2 + $0x38] sm:$0xff]
        %v1507 = vld [vmem:[#allocation2 + $0x40] sm:$0xff]
        %v1508 = vld [vmem:[#allocation2 + $0x48] sm:$0xff]
        %v1509 = vmax.f32 %v1503, %v1505
        %v1510 = vmax.f32 %v1504, %v1506
        %v1511 = vmax.f32 %v1509, %v1507
        %v1512 = vmax.f32 %v1510, %v1508
        %v1513 = vsel %vm1434, %v1511, -inf
        %v1514 = vrot.slane %v1513, 4
        %v1515 = vmax.f32 %v1513, %v1514
        %v1516 = vrot.slane %v1515, 2
        %v1517 = vmax.f32 %v1515, %v1516
        %v1518 = vrot.slane %v1517, 1
        %v1519 = vmax.f32 %v1517, %v1518
        %v1520 = vsel %vm1442, %v1511, -inf
        %v1521 = vrot.slane %v1520, 4
        %v1522 = vmax.f32 %v1520, %v1521
        %v1523 = vrot.slane %v1522, 2
        %v1524 = vmax.f32 %v1522, %v1523
        %v1525 = vrot.slane %v1524, 1
        %v1526 = vmax.f32 %v1524, %v1525
        %v1527 = vsel %vm1450, %v1511, -inf
        %v1528 = vrot.slane %v1527, 4
        %v1529 = vmax.f32 %v1527, %v1528
        %v1530 = vrot.slane %v1529, 2
        %v1531 = vmax.f32 %v1529, %v1530
        %v1532 = vrot.slane %v1531, 1
        %v1533 = vmax.f32 %v1531, %v1532
        %v1534 = vsel %vm1458, %v1511, -inf
        %v1535 = vsel %vm1422, %v1512, -inf
        %v1536 = vmax.f32 %v1534, %v1535
        %v1537 = vrot.slane %v1536, 4
        %v1538 = vmax.f32 %v1536, %v1537
        %v1539 = vrot.slane %v1538, 2
        %v1540 = vmax.f32 %v1538, %v1539
        %v1541 = vrot.slane %v1540, 1
        %v1542 = vmax.f32 %v1540, %v1541
        %v1543 = vsel %vm1434, %v1512, -inf
        %v1544 = vrot.slane %v1543, 4
        %v1545 = vmax.f32 %v1543, %v1544
        %v1546 = vrot.slane %v1545, 2
        %v1547 = vmax.f32 %v1545, %v1546
        %v1548 = vrot.slane %v1547, 1
        %v1549 = vmax.f32 %v1547, %v1548
        %v1550 = vsel %vm1442, %v1512, -inf
        %v1551 = vrot.slane %v1550, 4
        %v1552 = vmax.f32 %v1550, %v1551
        %v1553 = vrot.slane %v1552, 2
        %v1554 = vmax.f32 %v1552, %v1553
        %v1555 = vrot.slane %v1554, 1
        %v1556 = vmax.f32 %v1554, %v1555
        %v1557 = vsel %vm1450, %v1512, -inf
        %v1558 = vrot.slane %v1557, 4
        %v1559 = vmax.f32 %v1557, %v1558
        %v1560 = vrot.slane %v1559, 2
        %v1561 = vmax.f32 %v1559, %v1560
        %v1562 = vrot.slane %v1561, 1
        %v1563 = vmax.f32 %v1561, %v1562
        %v1564 = vsel %vm1489, %v1519, %v1526
        %v1565 = vsel %vm1491, %v1564, %v1533
        %v1566 = vsel %vm1493, %v1565, %v1542
        %v1567 = vsel %vm1495, %v1566, %v1549
        %v1568 = vsel %vm1497, %v1567, %v1556
        %v1569 = vsel %vm1499, %v1568, %v1563
        %1570 = vst.msk [vmem:[#allocation3 + $0x23] sm:$0x7f] %vm1501, %v1569
        %v1571 = vld [vmem:[#allocation2 + $0x40] sm:$0xff]
        %v1572 = vld [vmem:[#allocation2 + $0x48] sm:$0xff]
        %v1573 = vld [vmem:[#allocation2 + $0x50] sm:$0xff]
        %v1574 = vld [vmem:[#allocation2 + $0x58] sm:$0xff]
        %v1575 = vld [vmem:[#allocation2 + $0x60] sm:$0xff]
        %v1576 = vld [vmem:[#allocation2 + $0x68] sm:$0xff]
        %v1577 = vmax.f32 %v1571, %v1573
        %v1578 = vmax.f32 %v1572, %v1574
        %v1579 = vmax.f32 %v1577, %v1575
        %v1580 = vmax.f32 %v1578, %v1576
        %v1581 = vsel %vm1434, %v1579, -inf
        %v1582 = vrot.slane %v1581, 4
        %v1583 = vmax.f32 %v1581, %v1582
        %v1584 = vrot.slane %v1583, 2
        %v1585 = vmax.f32 %v1583, %v1584
        %v1586 = vrot.slane %v1585, 1
        %v1587 = vmax.f32 %v1585, %v1586
        %v1588 = vsel %vm1442, %v1579, -inf
        %v1589 = vrot.slane %v1588, 4
        %v1590 = vmax.f32 %v1588, %v1589
        %v1591 = vrot.slane %v1590, 2
        %v1592 = vmax.f32 %v1590, %v1591
        %v1593 = vrot.slane %v1592, 1
        %v1594 = vmax.f32 %v1592, %v1593
        %v1595 = vsel %vm1450, %v1579, -inf
        %v1596 = vrot.slane %v1595, 4
        %v1597 = vmax.f32 %v1595, %v1596
        %v1598 = vrot.slane %v1597, 2
        %v1599 = vmax.f32 %v1597, %v1598
        %v1600 = vrot.slane %v1599, 1
        %v1601 = vmax.f32 %v1599, %v1600
        %v1602 = vsel %vm1458, %v1579, -inf
        %v1603 = vsel %vm1422, %v1580, -inf
        %v1604 = vmax.f32 %v1602, %v1603
        %v1605 = vrot.slane %v1604, 4
        %v1606 = vmax.f32 %v1604, %v1605
        %v1607 = vrot.slane %v1606, 2
        %v1608 = vmax.f32 %v1606, %v1607
        %v1609 = vrot.slane %v1608, 1
        %v1610 = vmax.f32 %v1608, %v1609
        %v1611 = vsel %vm1434, %v1580, -inf
        %v1612 = vrot.slane %v1611, 4
        %v1613 = vmax.f32 %v1611, %v1612
        %v1614 = vrot.slane %v1613, 2
        %v1615 = vmax.f32 %v1613, %v1614
        %v1616 = vrot.slane %v1615, 1
        %v1617 = vmax.f32 %v1615, %v1616
        %v1618 = vsel %vm1442, %v1580, -inf
        %v1619 = vrot.slane %v1618, 4
        %v1620 = vmax.f32 %v1618, %v1619
        %v1621 = vrot.slane %v1620, 2
        %v1622 = vmax.f32 %v1620, %v1621
        %v1623 = vrot.slane %v1622, 1
        %v1624 = vmax.f32 %v1622, %v1623
        %v1625 = vsel %vm1450, %v1580, -inf
        %v1626 = vrot.slane %v1625, 4
        %v1627 = vmax.f32 %v1625, %v1626
        %v1628 = vrot.slane %v1627, 2
        %v1629 = vmax.f32 %v1627, %v1628
        %v1630 = vrot.slane %v1629, 1
        %v1631 = vmax.f32 %v1629, %v1630
        %v1632 = vsel %vm1489, %v1587, %v1594
        %v1633 = vsel %vm1491, %v1632, %v1601
        %v1634 = vsel %vm1493, %v1633, %v1610
        %v1635 = vsel %vm1495, %v1634, %v1617
        %v1636 = vsel %vm1497, %v1635, %v1624
        %v1637 = vsel %vm1499, %v1636, %v1631
        %1638 = vst.msk [vmem:[#allocation3 + $0x2e] sm:$0x7f] %vm1501, %v1637
        %v1639 = vld [vmem:[#allocation2 + $0x60] sm:$0xff]
        %v1640 = vld [vmem:[#allocation2 + $0x68] sm:$0xff]
        %v1641 = vld [vmem:[#allocation2 + $0x70] sm:$0xff]
        %v1642 = vld [vmem:[#allocation2 + $0x78] sm:$0xff]
        %v1643 = vld [vmem:[#allocation2 + $0x80] sm:$0xff]
        %v1644 = vld [vmem:[#allocation2 + $0x88] sm:$0xff]
        %v1645 = vmax.f32 %v1639, %v1641
        %v1646 = vmax.f32 %v1640, %v1642
        %v1647 = vmax.f32 %v1645, %v1643
        %v1648 = vmax.f32 %v1646, %v1644
        %v1649 = vsel %vm1434, %v1647, -inf
        %v1650 = vrot.slane %v1649, 4
        %v1651 = vmax.f32 %v1649, %v1650
        %v1652 = vrot.slane %v1651, 2
        %v1653 = vmax.f32 %v1651, %v1652
        %v1654 = vrot.slane %v1653, 1
        %v1655 = vmax.f32 %v1653, %v1654
        %v1656 = vsel %vm1442, %v1647, -inf
        %v1657 = vrot.slane %v1656, 4
        %v1658 = vmax.f32 %v1656, %v1657
        %v1659 = vrot.slane %v1658, 2
        %v1660 = vmax.f32 %v1658, %v1659
        %v1661 = vrot.slane %v1660, 1
        %v1662 = vmax.f32 %v1660, %v1661
        %v1663 = vsel %vm1450, %v1647, -inf
        %v1664 = vrot.slane %v1663, 4
        %v1665 = vmax.f32 %v1663, %v1664
        %v1666 = vrot.slane %v1665, 2
        %v1667 = vmax.f32 %v1665, %v1666
        %v1668 = vrot.slane %v1667, 1
        %v1669 = vmax.f32 %v1667, %v1668
        %v1670 = vsel %vm1458, %v1647, -inf
        %v1671 = vsel %vm1422, %v1648, -inf
        %v1672 = vmax.f32 %v1670, %v1671
        %v1673 = vrot.slane %v1672, 4
        %v1674 = vmax.f32 %v1672, %v1673
        %v1675 = vrot.slane %v1674, 2
        %v1676 = vmax.f32 %v1674, %v1675
        %v1677 = vrot.slane %v1676, 1
        %v1678 = vmax.f32 %v1676, %v1677
        %v1679 = vsel %vm1434, %v1648, -inf
        %v1680 = vrot.slane %v1679, 4
        %v1681 = vmax.f32 %v1679, %v1680
        %v1682 = vrot.slane %v1681, 2
        %v1683 = vmax.f32 %v1681, %v1682
        %v1684 = vrot.slane %v1683, 1
        %v1685 = vmax.f32 %v1683, %v1684
        %v1686 = vsel %vm1442, %v1648, -inf
        %v1687 = vrot.slane %v1686, 4
        %v1688 = vmax.f32 %v1686, %v1687
        %v1689 = vrot.slane %v1688, 2
        %v1690 = vmax.f32 %v1688, %v1689
        %v1691 = vrot.slane %v1690, 1
        %v1692 = vmax.f32 %v1690, %v1691
        %v1693 = vsel %vm1450, %v1648, -inf
        %v1694 = vrot.slane %v1693, 4
        %v1695 = vmax.f32 %v1693, %v1694
        %v1696 = vrot.slane %v1695, 2
        %v1697 = vmax.f32 %v1695, %v1696
        %v1698 = vrot.slane %v1697, 1
        %v1699 = vmax.f32 %v1697, %v1698
        %v1700 = vsel %vm1489, %v1655, %v1662
        %v1701 = vsel %vm1491, %v1700, %v1669
        %v1702 = vsel %vm1493, %v1701, %v1678
        %v1703 = vsel %vm1495, %v1702, %v1685
        %v1704 = vsel %vm1497, %v1703, %v1692
        %v1705 = vsel %vm1499, %v1704, %v1699
        %1706 = vst.msk [vmem:[#allocation3 + $0x39] sm:$0x7f] %vm1501, %v1705
        %v1707 = vld [vmem:[#allocation2 + $0x80] sm:$0xff]
        %v1708 = vld [vmem:[#allocation2 + $0x88] sm:$0xff]
        %v1709 = vld [vmem:[#allocation2 + $0x90] sm:$0xff]
        %v1710 = vld [vmem:[#allocation2 + $0x98] sm:$0xff]
        %v1711 = vld [vmem:[#allocation2 + $0xa0] sm:$0xff]
        %v1712 = vld [vmem:[#allocation2 + $0xa8] sm:$0xff]
        %v1713 = vmax.f32 %v1707, %v1709
        %v1714 = vmax.f32 %v1708, %v1710
        %v1715 = vmax.f32 %v1713, %v1711
        %v1716 = vmax.f32 %v1714, %v1712
        %v1717 = vsel %vm1434, %v1715, -inf
        %v1718 = vrot.slane %v1717, 4
        %v1719 = vmax.f32 %v1717, %v1718
        %v1720 = vrot.slane %v1719, 2
        %v1721 = vmax.f32 %v1719, %v1720
        %v1722 = vrot.slane %v1721, 1
        %v1723 = vmax.f32 %v1721, %v1722
        %v1724 = vsel %vm1442, %v1715, -inf
        %v1725 = vrot.slane %v1724, 4
        %v1726 = vmax.f32 %v1724, %v1725
        %v1727 = vrot.slane %v1726, 2
        %v1728 = vmax.f32 %v1726, %v1727
        %v1729 = vrot.slane %v1728, 1
        %v1730 = vmax.f32 %v1728, %v1729
        %v1731 = vsel %vm1450, %v1715, -inf
        %v1732 = vrot.slane %v1731, 4
        %v1733 = vmax.f32 %v1731, %v1732
        %v1734 = vrot.slane %v1733, 2
        %v1735 = vmax.f32 %v1733, %v1734
        %v1736 = vrot.slane %v1735, 1
        %v1737 = vmax.f32 %v1735, %v1736
        %v1738 = vsel %vm1458, %v1715, -inf
        %v1739 = vsel %vm1422, %v1716, -inf
        %v1740 = vmax.f32 %v1738, %v1739
        %v1741 = vrot.slane %v1740, 4
        %v1742 = vmax.f32 %v1740, %v1741
        %v1743 = vrot.slane %v1742, 2
        %v1744 = vmax.f32 %v1742, %v1743
        %v1745 = vrot.slane %v1744, 1
        %v1746 = vmax.f32 %v1744, %v1745
        %v1747 = vsel %vm1434, %v1716, -inf
        %v1748 = vrot.slane %v1747, 4
        %v1749 = vmax.f32 %v1747, %v1748
        %v1750 = vrot.slane %v1749, 2
        %v1751 = vmax.f32 %v1749, %v1750
        %v1752 = vrot.slane %v1751, 1
        %v1753 = vmax.f32 %v1751, %v1752
        %v1754 = vsel %vm1442, %v1716, -inf
        %v1755 = vrot.slane %v1754, 4
        %v1756 = vmax.f32 %v1754, %v1755
        %v1757 = vrot.slane %v1756, 2
        %v1758 = vmax.f32 %v1756, %v1757
        %v1759 = vrot.slane %v1758, 1
        %v1760 = vmax.f32 %v1758, %v1759
        %v1761 = vsel %vm1450, %v1716, -inf
        %v1762 = vrot.slane %v1761, 4
        %v1763 = vmax.f32 %v1761, %v1762
        %v1764 = vrot.slane %v1763, 2
        %v1765 = vmax.f32 %v1763, %v1764
        %v1766 = vrot.slane %v1765, 1
        %v1767 = vmax.f32 %v1765, %v1766
        %v1768 = vsel %vm1489, %v1723, %v1730
        %v1769 = vsel %vm1491, %v1768, %v1737
        %v1770 = vsel %vm1493, %v1769, %v1746
        %v1771 = vsel %vm1495, %v1770, %v1753
        %v1772 = vsel %vm1497, %v1771, %v1760
        %v1773 = vsel %vm1499, %v1772, %v1767
        %1774 = vst.msk [vmem:[#allocation3 + $0x44] sm:$0x7f] %vm1501, %v1773
        %v1775 = vld [vmem:[#allocation2 + $0xa0] sm:$0xff]
        %v1776 = vld [vmem:[#allocation2 + $0xa8] sm:$0xff]
        %v1777 = vld [vmem:[#allocation2 + $0xb0] sm:$0xff]
        %v1778 = vld [vmem:[#allocation2 + $0xb8] sm:$0xff]
        %v1779 = vld [vmem:[#allocation2 + $0xc0] sm:$0xff]
        %v1780 = vld [vmem:[#allocation2 + $0xc8] sm:$0xff]
        %v1781 = vmax.f32 %v1775, %v1777
        %v1782 = vmax.f32 %v1776, %v1778
        %v1783 = vmax.f32 %v1781, %v1779
        %v1784 = vmax.f32 %v1782, %v1780
        %v1785 = vsel %vm1434, %v1783, -inf
        %v1786 = vrot.slane %v1785, 4
        %v1787 = vmax.f32 %v1785, %v1786
        %v1788 = vrot.slane %v1787, 2
        %v1789 = vmax.f32 %v1787, %v1788
        %v1790 = vrot.slane %v1789, 1
        %v1791 = vmax.f32 %v1789, %v1790
        %v1792 = vsel %vm1442, %v1783, -inf
        %v1793 = vrot.slane %v1792, 4
        %v1794 = vmax.f32 %v1792, %v1793
        %v1795 = vrot.slane %v1794, 2
        %v1796 = vmax.f32 %v1794, %v1795
        %v1797 = vrot.slane %v1796, 1
        %v1798 = vmax.f32 %v1796, %v1797
        %v1799 = vsel %vm1450, %v1783, -inf
        %v1800 = vrot.slane %v1799, 4
        %v1801 = vmax.f32 %v1799, %v1800
        %v1802 = vrot.slane %v1801, 2
        %v1803 = vmax.f32 %v1801, %v1802
        %v1804 = vrot.slane %v1803, 1
        %v1805 = vmax.f32 %v1803, %v1804
        %v1806 = vsel %vm1458, %v1783, -inf
        %v1807 = vsel %vm1422, %v1784, -inf
        %v1808 = vmax.f32 %v1806, %v1807
        %v1809 = vrot.slane %v1808, 4
        %v1810 = vmax.f32 %v1808, %v1809
        %v1811 = vrot.slane %v1810, 2
        %v1812 = vmax.f32 %v1810, %v1811
        %v1813 = vrot.slane %v1812, 1
        %v1814 = vmax.f32 %v1812, %v1813
        %v1815 = vsel %vm1434, %v1784, -inf
        %v1816 = vrot.slane %v1815, 4
        %v1817 = vmax.f32 %v1815, %v1816
        %v1818 = vrot.slane %v1817, 2
        %v1819 = vmax.f32 %v1817, %v1818
        %v1820 = vrot.slane %v1819, 1
        %v1821 = vmax.f32 %v1819, %v1820
        %v1822 = vsel %vm1442, %v1784, -inf
        %v1823 = vrot.slane %v1822, 4
        %v1824 = vmax.f32 %v1822, %v1823
        %v1825 = vrot.slane %v1824, 2
        %v1826 = vmax.f32 %v1824, %v1825
        %v1827 = vrot.slane %v1826, 1
        %v1828 = vmax.f32 %v1826, %v1827
        %v1829 = vsel %vm1450, %v1784, -inf
        %v1830 = vrot.slane %v1829, 4
        %v1831 = vmax.f32 %v1829, %v1830
        %v1832 = vrot.slane %v1831, 2
        %v1833 = vmax.f32 %v1831, %v1832
        %v1834 = vrot.slane %v1833, 1
        %v1835 = vmax.f32 %v1833, %v1834
        %v1836 = vsel %vm1489, %v1791, %v1798
        %v1837 = vsel %vm1491, %v1836, %v1805
        %v1838 = vsel %vm1493, %v1837, %v1814
        %v1839 = vsel %vm1495, %v1838, %v1821
        %v1840 = vsel %vm1497, %v1839, %v1828
        %v1841 = vsel %vm1499, %v1840, %v1835
        %1842 = vst.msk [vmem:[#allocation3 + $0x4f] sm:$0x7f] %vm1501, %v1841
        %v1843 = vld [vmem:[#allocation2 + $0xc0] sm:$0xff]
        %v1844 = vld [vmem:[#allocation2 + $0xc8] sm:$0xff]
        %v1845 = vld [vmem:[#allocation2 + $0xd0] sm:$0xff]
        %v1846 = vld [vmem:[#allocation2 + $0xd8] sm:$0xff]
        %v1847 = vld [vmem:[#allocation2 + $0xe0] sm:$0xff]
        %v1848 = vld [vmem:[#allocation2 + $0xe8] sm:$0xff]
        %v1849 = vmax.f32 %v1843, %v1845
        %v1850 = vmax.f32 %v1844, %v1846
        %v1851 = vmax.f32 %v1849, %v1847
        %v1852 = vmax.f32 %v1850, %v1848
        %v1853 = vsel %vm1434, %v1851, -inf
        %v1854 = vrot.slane %v1853, 4
        %v1855 = vmax.f32 %v1853, %v1854
        %v1856 = vrot.slane %v1855, 2
        %v1857 = vmax.f32 %v1855, %v1856
        %v1858 = vrot.slane %v1857, 1
        %v1859 = vmax.f32 %v1857, %v1858
        %v1860 = vsel %vm1442, %v1851, -inf
        %v1861 = vrot.slane %v1860, 4
        %v1862 = vmax.f32 %v1860, %v1861
        %v1863 = vrot.slane %v1862, 2
        %v1864 = vmax.f32 %v1862, %v1863
        %v1865 = vrot.slane %v1864, 1
        %v1866 = vmax.f32 %v1864, %v1865
        %v1867 = vsel %vm1450, %v1851, -inf
        %v1868 = vrot.slane %v1867, 4
        %v1869 = vmax.f32 %v1867, %v1868
        %v1870 = vrot.slane %v1869, 2
        %v1871 = vmax.f32 %v1869, %v1870
        %v1872 = vrot.slane %v1871, 1
        %v1873 = vmax.f32 %v1871, %v1872
        %v1874 = vsel %vm1458, %v1851, -inf
        %v1875 = vsel %vm1422, %v1852, -inf
        %v1876 = vmax.f32 %v1874, %v1875
        %v1877 = vrot.slane %v1876, 4
        %v1878 = vmax.f32 %v1876, %v1877
        %v1879 = vrot.slane %v1878, 2
        %v1880 = vmax.f32 %v1878, %v1879
        %v1881 = vrot.slane %v1880, 1
        %v1882 = vmax.f32 %v1880, %v1881
        %v1883 = vsel %vm1434, %v1852, -inf
        %v1884 = vrot.slane %v1883, 4
        %v1885 = vmax.f32 %v1883, %v1884
        %v1886 = vrot.slane %v1885, 2
        %v1887 = vmax.f32 %v1885, %v1886
        %v1888 = vrot.slane %v1887, 1
        %v1889 = vmax.f32 %v1887, %v1888
        %v1890 = vsel %vm1442, %v1852, -inf
        %v1891 = vrot.slane %v1890, 4
        %v1892 = vmax.f32 %v1890, %v1891
        %v1893 = vrot.slane %v1892, 2
        %v1894 = vmax.f32 %v1892, %v1893
        %v1895 = vrot.slane %v1894, 1
        %v1896 = vmax.f32 %v1894, %v1895
        %v1897 = vsel %vm1450, %v1852, -inf
        %v1898 = vrot.slane %v1897, 4
        %v1899 = vmax.f32 %v1897, %v1898
        %v1900 = vrot.slane %v1899, 2
        %v1901 = vmax.f32 %v1899, %v1900
        %v1902 = vrot.slane %v1901, 1
        %v1903 = vmax.f32 %v1901, %v1902
        %v1904 = vsel %vm1489, %v1859, %v1866
        %v1905 = vsel %vm1491, %v1904, %v1873
        %v1906 = vsel %vm1493, %v1905, %v1882
        %v1907 = vsel %vm1495, %v1906, %v1889
        %v1908 = vsel %vm1497, %v1907, %v1896
        %v1909 = vsel %vm1499, %v1908, %v1903
        %1910 = vst.msk [vmem:[#allocation3 + $0x5a] sm:$0x7f] %vm1501, %v1909
        %v1911 = vld [vmem:[#allocation3] sm:$0xff]
        %v1912 = vld [vmem:[#allocation3 + $0x8] sm:$0xff]
        %v1913 = vld [vmem:[#allocation3 + $0x10] sm:$0xff]
        %v1914 = vld [vmem:[#allocation3 + $0x18] sm:$0xff]
        %v1915 = vld [vmem:[#allocation3 + $0x20] sm:$0xff]
        %v1916 = vld [vmem:[#allocation3 + $0x28] sm:$0xff]
        %v1917 = vld [vmem:[#allocation3 + $0x30] sm:$0xff]
        %v1918 = vld [vmem:[#allocation3 + $0x38] sm:$0xff]
        %v1919 = vld [vmem:[#allocation3 + $0x40] sm:$0xff]
        %v1920 = vld [vmem:[#allocation3 + $0x48] sm:$0xff]
        %v1921 = vld [vmem:[#allocation3 + $0x50] sm:$0xff]
        %v1922 = vld [vmem:[#allocation3 + $0x58] sm:$0xff]
        %v1923 = vld [vmem:[#allocation3 + $0x60] sm:$0xff]
        %v1924 = vld [vmem:[#allocation3 + $0x68] sm:$0xff]
        %v1925 = vld [vmem:[#allocation3 + $0x70] sm:$0xff]
        %v1926 = vld [vmem:[#allocation3 + $0x78] sm:$0x1]
        %v1927 = vpack.c.bf16 %v1912, %v1911
        %v1928 = vpack.c.bf16 %v1914, %v1913
        %v1929 = vpack.c.bf16 %v1916, %v1915
        %v1930 = vpack.c.bf16 %v1918, %v1917
        %v1931 = vpack.c.bf16 %v1920, %v1919
        %v1932 = vpack.c.bf16 %v1922, %v1921
        %v1933 = vpack.c.bf16 %v1924, %v1923
        %v1934 = vpack.c.bf16 %v1926, %v1925
        %v1935 = vld [vmem:[%s5] sm:$0xff]
        %v1936 = vld [vmem:[%s5 + $0x8] sm:$0xff]
        %v1937 = vld [vmem:[%s5 + $0x10] sm:$0xff]
        %v1938 = vld [vmem:[%s5 + $0x18] sm:$0xff]
        %v1939 = vld [vmem:[%s5 + $0x20] sm:$0xff]
        %v1940 = vld [vmem:[%s5 + $0x28] sm:$0xff]
        %v1941 = vld [vmem:[%s5 + $0x30] sm:$0xff]
        %v1942 = vld [vmem:[%s5 + $0x38] sm:$0xff]
        %v1943 = vld [vmem:[%s5 + $0x40] sm:$0xff]
        %v1944 = vld [vmem:[%s5 + $0x48] sm:$0xff]
        %v1945 = vld [vmem:[%s5 + $0x50] sm:$0xff]
        %v1946 = vld [vmem:[%s5 + $0x58] sm:$0xff]
        %s1947 = scalar_lea.vmem %s5, 96
        %v1948 = vld [vmem:[%s1947] sm:$0xff]
        %v1949 = vld [vmem:[%s1947 + $0x8] sm:$0xff]
        %v1950 = vld [vmem:[%s1947 + $0x10] sm:$0xff]
        %v1951 = vld [vmem:[%s1947 + $0x18] sm:$0xff]
        %v1952 = vld [vmem:[%s1947 + $0x20] sm:$0xff]
        %v1953 = vld [vmem:[%s1947 + $0x28] sm:$0xff]
        %v1954 = vld [vmem:[%s1947 + $0x30] sm:$0xff]
        %v1955 = vld [vmem:[%s1947 + $0x38] sm:$0xff]
        %v1956 = vld [vmem:[%s1947 + $0x40] sm:$0xff]
        %v1957 = vld [vmem:[%s1947 + $0x48] sm:$0xff]
        %v1958 = vld [vmem:[%s1947 + $0x50] sm:$0xff]
        %v1959 = vld [vmem:[%s1947 + $0x58] sm:$0xff]
        %vm1960 = vsmask.f32 7424
        %v1962 = vshrl.u32 %v1927, 16
        %v1964 = vshll.u32 %v1927, 16
        %v1966 = vrot.slane %v1964, 1
        %v1967 = vor.u32 %v1962, %v1966
        %v1969 = vshll.u32 %v1928, 16
        %v1971 = vrot.slane %v1969, 1
        %v1972 = vsel %vm1960, %v1967, %v1971
        %v1973 = vshrl.u32 %v1928, 16
        %v1975 = vor.u32 %v1973, %v1971
        %v1977 = vshll.u32 %v1929, 16
        %v1979 = vrot.slane %v1977, 1
        %v1980 = vsel %vm1960, %v1975, %v1979
        %v1981 = vshrl.u32 %v1929, 16
        %v1983 = vor.u32 %v1981, %v1979
        %v1985 = vshll.u32 %v1930, 16
        %v1987 = vrot.slane %v1985, 1
        %v1988 = vsel %vm1960, %v1983, %v1987
        %v1989 = vshrl.u32 %v1930, 16
        %v1991 = vor.u32 %v1989, %v1987
        %v1993 = vshll.u32 %v1931, 16
        %v1995 = vrot.slane %v1993, 1
        %v1996 = vsel %vm1960, %v1991, %v1995
        %v1997 = vshrl.u32 %v1931, 16
        %v1999 = vor.u32 %v1997, %v1995
        %v2012 = vunpack.c.l.b16 %v1948
        %v2013 = vunpack.c.h.b16 %v1948
        %v2014 = vunpack.c.l.b16 %v1949
        %v2015 = vunpack.c.h.b16 %v1949
        %v2016 = vunpack.c.l.b16 %v1950
        %v2017 = vunpack.c.h.b16 %v1950
        %v2018 = vunpack.c.l.b16 %v1951
        %v2019 = vunpack.c.h.b16 %v1951
        %v2020 = vunpack.c.l.b16 %v1952
        %v2021 = vunpack.c.h.b16 %v1952
        %v2022 = vunpack.c.l.b16 %v1953
        %v2023 = vunpack.c.h.b16 %v1953
        %v2024 = vunpack.c.l.b16 %v1954
        %v2025 = vunpack.c.h.b16 %v1954
        %v2026 = vunpack.c.l.b16 %v1955
        %v2027 = vunpack.c.h.b16 %v1955
        %v2028 = vunpack.c.l.b16 %v1956
        %v2029 = vunpack.c.h.b16 %v1956
        %v2030 = vunpack.c.l.b16 %v1957
        %v2031 = vunpack.c.h.b16 %v1957
        %v2032 = vunpack.c.l.b16 %v1958
        %v2033 = vunpack.c.h.b16 %v1958
        %v2034 = vunpack.c.l.b16 %v1959
        %v2035 = vunpack.c.h.b16 %v1959
        %v2036 = vpack.c.b16 %v2014, %v2012
        %v2037 = vpack.c.b16 %v2015, %v2013
        %v2038 = vpack.c.b16 %v2018, %v2016
        %v2039 = vpack.c.b16 %v2019, %v2017
        %v2040 = vpack.c.b16 %v2022, %v2020
        %v2041 = vpack.c.b16 %v2023, %v2021
        %v2042 = vpack.c.b16 %v2026, %v2024
        %v2043 = vpack.c.b16 %v2027, %v2025
        %v2044 = vpack.c.b16 %v2030, %v2028
        %v2045 = vpack.c.b16 %v2031, %v2029
        %v2046 = vpack.c.b16 %v2034, %v2032
        %v2047 = vpack.c.b16 %v2035, %v2033
        %v2061 = vsel %vm797, %v1972, 0
        %v2064 = vsel %vm797, %v1980, 0
        %v2067 = vsel %vm797, %v1988, 0
        %v2070 = vsel %vm797, %v1996, 0
        %v2073 = vsel %vm797, %v1999, 0
        %2075 = vmatprep.subr.bf16.mxu0 %v2037
        %2076 = vmatpush1.bf16.msra.mxu0 %v2036
        %2077 = vmatprep.subr.bf16.mxu0 %v2039
        %2078 = vmatpush1.bf16.msra.mxu0 %v2038
        %2079 = vmatprep.subr.bf16.mxu0 %v2041
        %2080 = vmatpush1.bf16.msra.mxu0 %v2040
        %2081 = vmatprep.subr.bf16.mxu0 %v2043
        %2082 = vmatpush1.bf16.msra.mxu0 %v2042
        %2083 = vmatprep.subr.bf16.mxu0 %v2045
        %2084 = vmatpush1.bf16.msra.mxu0 %v2044
        %2085 = vmatprep.subr.bf16.mxu0 %v2047
        %2086 = vmatpush1.bf16.msra.mxu0 %v2046
        %2087 = vmatprep.subr.bf16.mxu0 0
        %2088 = vmatpush1.bf16.msra.mxu0 0
        %2089 = vmatprep.subr.bf16.mxu0 0
        %2090 = vmatpush1.bf16.msra.mxu0 0
        %2091 = vmatprep.subr.bf16.mxu0 0
        %2092 = vmatpush1.bf16.msra.mxu0 0
        %2093 = vmatprep.subr.bf16.mxu0 0
        %2094 = vmatpush1.bf16.msra.mxu0 0
        %2095 = vmatprep.subr.bf16.mxu0 0
        %2096 = vmatpush1.bf16.msra.mxu0 0
        %2097 = vmatprep.subr.bf16.mxu0 0
        %2098 = vmatpush1.bf16.msra.mxu0 0
        %2099 = vmatprep.subr.bf16.mxu0 0
        %2100 = vmatpush1.bf16.msra.mxu0 0
        %2101 = vmatprep.subr.bf16.mxu0 0
        %2102 = vmatpush1.bf16.msra.mxu0 0
        %2103 = vmatprep.subr.bf16.mxu0 0
        %2104 = vmatpush1.bf16.msra.mxu0 0
        %2105 = vmatprep.subr.bf16.mxu0 0
        %2106 = vmatpush1.bf16.msra.mxu0 0
        %2107 = vmatprep.mubr.bf16.mxu0 0
        %2108 = vmatmul.mubr.bf16.gmra.mrb[0].mxu0 %v2061
        %v2109 = vpop.f32.mrb[0].mxu0
        %v2110 = vadd.f32 0.0, %v2109
        %v2111 = vpop.f32.mrb[0].mxu0
        %v2112 = vadd.f32 0.0, %v2111
        %v2113 = vpop.f32.mrb[0].mxu0
        %v2114 = vadd.f32 0.0, %v2113
        %v2115 = vpop.f32.mrb[0].mxu0
        %v2116 = vadd.f32 0.0, %v2115
        %2117 = vmatprep.mubr.bf16.mxu0 0
        %2118 = vmatmul.mubr.bf16.gmra.mrb[0].mxu0 %v2064
        %v2119 = vpop.f32.mrb[0].mxu0
        %v2120 = vadd.f32 0.0, %v2119
        %v2121 = vpop.f32.mrb[0].mxu0
        %v2122 = vadd.f32 0.0, %v2121
        %v2123 = vpop.f32.mrb[0].mxu0
        %v2124 = vadd.f32 0.0, %v2123
        %v2125 = vpop.f32.mrb[0].mxu0
        %v2126 = vadd.f32 0.0, %v2125
        %2127 = vmatprep.mubr.bf16.mxu0 0
        %2128 = vmatmul.mubr.bf16.gmra.mrb[0].mxu0 %v2067
        %v2129 = vpop.f32.mrb[0].mxu0
        %v2130 = vadd.f32 0.0, %v2129
        %v2131 = vpop.f32.mrb[0].mxu0
        %v2132 = vadd.f32 0.0, %v2131
        %v2133 = vpop.f32.mrb[0].mxu0
        %v2134 = vadd.f32 0.0, %v2133
        %v2135 = vpop.f32.mrb[0].mxu0
        %v2136 = vadd.f32 0.0, %v2135
        %2137 = vmatprep.mubr.bf16.mxu0 0
        %2138 = vmatmul.mubr.bf16.gmra.mrb[0].mxu0 %v2070
        %v2139 = vpop.f32.mrb[0].mxu0
        %v2140 = vadd.f32 0.0, %v2139
        %v2141 = vpop.f32.mrb[0].mxu0
        %v2142 = vadd.f32 0.0, %v2141
        %v2143 = vpop.f32.mrb[0].mxu0
        %v2144 = vadd.f32 0.0, %v2143
        %v2145 = vpop.f32.mrb[0].mxu0
        %v2146 = vadd.f32 0.0, %v2145
        %2147 = vmatprep.mubr.bf16.mxu0 0
        %2148 = vmatmul.mubr.bf16.gmra.mrb[0].mxu0 %v2073
        %v2149 = vpop.f32.mrb[0].mxu0
        %v2150 = vadd.f32 0.0, %v2149
        %v2151 = vpop.f32.mrb[0].mxu0
        %v2152 = vadd.f32 0.0, %v2151
        %v2153 = vpop.f32.mrb[0].mxu0
        %v2154 = vadd.f32 0.0, %v2153
        %v2155 = vpop.f32.mrb[0].mxu0
        %v2156 = vadd.f32 0.0, %v2155
        %2157 = vdwg.mxu0
        %v2170 = vunpack.c.l.b16 %v1935
        %v2171 = vunpack.c.h.b16 %v1935
        %v2172 = vunpack.c.l.b16 %v1936
        %v2173 = vunpack.c.h.b16 %v1936
        %v2174 = vunpack.c.l.b16 %v1937
        %v2175 = vunpack.c.h.b16 %v1937
        %v2176 = vunpack.c.l.b16 %v1938
        %v2177 = vunpack.c.h.b16 %v1938
        %v2178 = vunpack.c.l.b16 %v1939
        %v2179 = vunpack.c.h.b16 %v1939
        %v2180 = vunpack.c.l.b16 %v1940
        %v2181 = vunpack.c.h.b16 %v1940
        %v2182 = vunpack.c.l.b16 %v1941
        %v2183 = vunpack.c.h.b16 %v1941
        %v2184 = vunpack.c.l.b16 %v1942
        %v2185 = vunpack.c.h.b16 %v1942
        %v2186 = vunpack.c.l.b16 %v1943
        %v2187 = vunpack.c.h.b16 %v1943
        %v2188 = vunpack.c.l.b16 %v1944
        %v2189 = vunpack.c.h.b16 %v1944
        %v2190 = vunpack.c.l.b16 %v1945
        %v2191 = vunpack.c.h.b16 %v1945
        %v2192 = vunpack.c.l.b16 %v1946
        %v2193 = vunpack.c.h.b16 %v1946
        %v2194 = vpack.c.b16 %v2172, %v2170
        %v2195 = vpack.c.b16 %v2173, %v2171
        %v2196 = vpack.c.b16 %v2176, %v2174
        %v2197 = vpack.c.b16 %v2177, %v2175
        %v2198 = vpack.c.b16 %v2180, %v2178
        %v2199 = vpack.c.b16 %v2181, %v2179
        %v2200 = vpack.c.b16 %v2184, %v2182
        %v2201 = vpack.c.b16 %v2185, %v2183
        %v2202 = vpack.c.b16 %v2188, %v2186
        %v2203 = vpack.c.b16 %v2189, %v2187
        %v2204 = vpack.c.b16 %v2192, %v2190
        %v2205 = vpack.c.b16 %v2193, %v2191
        %v2218 = vsel %vm797, %v1927, 0
        %v2220 = vsel %vm797, %v1928, 0
        %v2222 = vsel %vm797, %v1929, 0
        %v2224 = vsel %vm797, %v1930, 0
        %v2226 = vsel %vm797, %v1931, 0
        %2228 = vmatprep.subr.bf16.mxu0 %v2195
        %2229 = vmatpush1.bf16.msra.mxu0 %v2194
        %2230 = vmatprep.subr.bf16.mxu0 %v2197
        %2231 = vmatpush1.bf16.msra.mxu0 %v2196
        %2232 = vmatprep.subr.bf16.mxu0 %v2199
        %2233 = vmatpush1.bf16.msra.mxu0 %v2198
        %2234 = vmatprep.subr.bf16.mxu0 %v2201
        %2235 = vmatpush1.bf16.msra.mxu0 %v2200
        %2236 = vmatprep.subr.bf16.mxu0 %v2203
        %2237 = vmatpush1.bf16.msra.mxu0 %v2202
        %2238 = vmatprep.subr.bf16.mxu0 %v2205
        %2239 = vmatpush1.bf16.msra.mxu0 %v2204
        %2240 = vmatprep.subr.bf16.mxu0 0
        %2241 = vmatpush1.bf16.msra.mxu0 0
        %2242 = vmatprep.subr.bf16.mxu0 0
        %2243 = vmatpush1.bf16.msra.mxu0 0
        %2244 = vmatprep.subr.bf16.mxu0 0
        %2245 = vmatpush1.bf16.msra.mxu0 0
        %2246 = vmatprep.subr.bf16.mxu0 0
        %2247 = vmatpush1.bf16.msra.mxu0 0
        %2248 = vmatprep.subr.bf16.mxu0 0
        %2249 = vmatpush1.bf16.msra.mxu0 0
        %2250 = vmatprep.subr.bf16.mxu0 0
        %2251 = vmatpush1.bf16.msra.mxu0 0
        %2252 = vmatprep.subr.bf16.mxu0 0
        %2253 = vmatpush1.bf16.msra.mxu0 0
        %2254 = vmatprep.subr.bf16.mxu0 0
        %2255 = vmatpush1.bf16.msra.mxu0 0
        %2256 = vmatprep.subr.bf16.mxu0 0
        %2257 = vmatpush1.bf16.msra.mxu0 0
        %2258 = vmatprep.subr.bf16.mxu0 0
        %2259 = vmatpush1.bf16.msra.mxu0 0
        %2260 = vmatprep.mubr.bf16.mxu0 0
        %2261 = vmatmul.mubr.bf16.gmra.mrb[0].mxu0 %v2218
        %v2262 = vpop.f32.mrb[0].mxu0
        %v2263 = vadd.f32 %v2110, %v2262
        %v2264 = vpop.f32.mrb[0].mxu0
        %v2265 = vadd.f32 %v2112, %v2264
        %v2266 = vpop.f32.mrb[0].mxu0
        %v2267 = vadd.f32 %v2114, %v2266
        %v2268 = vpop.f32.mrb[0].mxu0
        %v2269 = vadd.f32 %v2116, %v2268
        %2270 = vmatprep.mubr.bf16.mxu0 0
        %2271 = vmatmul.mubr.bf16.gmra.mrb[0].mxu0 %v2220
        %v2272 = vpop.f32.mrb[0].mxu0
        %v2273 = vadd.f32 %v2120, %v2272
        %v2274 = vpop.f32.mrb[0].mxu0
        %v2275 = vadd.f32 %v2122, %v2274
        %v2276 = vpop.f32.mrb[0].mxu0
        %v2277 = vadd.f32 %v2124, %v2276
        %v2278 = vpop.f32.mrb[0].mxu0
        %v2279 = vadd.f32 %v2126, %v2278
        %2280 = vmatprep.mubr.bf16.mxu0 0
        %2281 = vmatmul.mubr.bf16.gmra.mrb[0].mxu0 %v2222
        %v2282 = vpop.f32.mrb[0].mxu0
        %v2283 = vadd.f32 %v2130, %v2282
        %v2284 = vpop.f32.mrb[0].mxu0
        %v2285 = vadd.f32 %v2132, %v2284
        %v2286 = vpop.f32.mrb[0].mxu0
        %v2287 = vadd.f32 %v2134, %v2286
        %v2288 = vpop.f32.mrb[0].mxu0
        %v2289 = vadd.f32 %v2136, %v2288
        %2290 = vmatprep.mubr.bf16.mxu0 0
        %2291 = vmatmul.mubr.bf16.gmra.mrb[0].mxu0 %v2224
        %v2292 = vpop.f32.mrb[0].mxu0
        %v2293 = vadd.f32 %v2140, %v2292
        %v2294 = vpop.f32.mrb[0].mxu0
        %v2295 = vadd.f32 %v2142, %v2294
        %v2296 = vpop.f32.mrb[0].mxu0
        %v2297 = vadd.f32 %v2144, %v2296
        %v2298 = vpop.f32.mrb[0].mxu0
        %v2299 = vadd.f32 %v2146, %v2298
        %2300 = vmatprep.mubr.bf16.mxu0 0
        %2301 = vmatmul.mubr.bf16.gmra.mrb[0].mxu0 %v2226
        %v2302 = vpop.f32.mrb[0].mxu0
        %v2303 = vadd.f32 %v2150, %v2302
        %v2304 = vpop.f32.mrb[0].mxu0
        %v2305 = vadd.f32 %v2152, %v2304
        %v2306 = vpop.f32.mrb[0].mxu0
        %v2307 = vadd.f32 %v2154, %v2306
        %v2308 = vpop.f32.mrb[0].mxu0
        %v2309 = vadd.f32 %v2156, %v2308
        %2310 = vdwg.mxu0
        %s2311 = scalar_lea.vmem %s5, 192
        %v2312 = vld [vmem:[%s2311] sm:$0xff]
        %v2313 = vld [vmem:[%s2311 + $0x8] sm:$0xff]
        %v2314 = vld [vmem:[%s2311 + $0x10] sm:$0xff]
        %v2315 = vld [vmem:[%s2311 + $0x18] sm:$0xff]
        %v2316 = vld [vmem:[%s2311 + $0x20] sm:$0xff]
        %v2317 = vld [vmem:[%s2311 + $0x28] sm:$0xff]
        %v2318 = vld [vmem:[%s2311 + $0x30] sm:$0xff]
        %v2319 = vld [vmem:[%s2311 + $0x38] sm:$0xff]
        %v2320 = vld [vmem:[%s2311 + $0x40] sm:$0xff]
        %v2321 = vld [vmem:[%s2311 + $0x48] sm:$0xff]
        %v2322 = vld [vmem:[%s2311 + $0x50] sm:$0xff]
        %v2323 = vld [vmem:[%s2311 + $0x58] sm:$0xff]
        %vm2329 = vcmask 1046528
        %v2330 = vrot.slane %v1927, 1
        %v2331 = vrot.slane %v1928, 1
        %v2332 = vsel %vm2329, %v2330, %v2331
        %v2333 = vrot.slane %v1929, 1
        %v2334 = vsel %vm2329, %v2331, %v2333
        %v2335 = vrot.slane %v1930, 1
        %v2336 = vsel %vm2329, %v2333, %v2335
        %v2337 = vrot.slane %v1931, 1
        %v2338 = vsel %vm2329, %v2335, %v2337
        %v2351 = vunpack.c.l.b16 %v2312
        %v2352 = vunpack.c.h.b16 %v2312
        %v2353 = vunpack.c.l.b16 %v2313
        %v2354 = vunpack.c.h.b16 %v2313
        %v2355 = vunpack.c.l.b16 %v2314
        %v2356 = vunpack.c.h.b16 %v2314
        %v2357 = vunpack.c.l.b16 %v2315
        %v2358 = vunpack.c.h.b16 %v2315
        %v2359 = vunpack.c.l.b16 %v2316
        %v2360 = vunpack.c.h.b16 %v2316
        %v2361 = vunpack.c.l.b16 %v2317
        %v2362 = vunpack.c.h.b16 %v2317
        %v2363 = vunpack.c.l.b16 %v2318
        %v2364 = vunpack.c.h.b16 %v2318
        %v2365 = vunpack.c.l.b16 %v2319
        %v2366 = vunpack.c.h.b16 %v2319
        %v2367 = vunpack.c.l.b16 %v2320
        %v2368 = vunpack.c.h.b16 %v2320
        %v2369 = vunpack.c.l.b16 %v2321
        %v2370 = vunpack.c.h.b16 %v2321
        %v2371 = vunpack.c.l.b16 %v2322
        %v2372 = vunpack.c.h.b16 %v2322
        %v2373 = vunpack.c.l.b16 %v2323
        %v2374 = vunpack.c.h.b16 %v2323
        %v2375 = vpack.c.b16 %v2353, %v2351
        %v2376 = vpack.c.b16 %v2354, %v2352
        %v2377 = vpack.c.b16 %v2357, %v2355
        %v2378 = vpack.c.b16 %v2358, %v2356
        %v2379 = vpack.c.b16 %v2361, %v2359
        %v2380 = vpack.c.b16 %v2362, %v2360
        %v2381 = vpack.c.b16 %v2365, %v2363
        %v2382 = vpack.c.b16 %v2366, %v2364
        %v2383 = vpack.c.b16 %v2369, %v2367
        %v2384 = vpack.c.b16 %v2370, %v2368
        %v2385 = vpack.c.b16 %v2373, %v2371
        %v2386 = vpack.c.b16 %v2374, %v2372
        %v2400 = vsel %vm797, %v2332, 0
        %v2403 = vsel %vm797, %v2334, 0
        %v2406 = vsel %vm797, %v2336, 0
        %v2409 = vsel %vm797, %v2338, 0
        %v2412 = vsel %vm797, %v2337, 0
        %2414 = vmatprep.subr.bf16.mxu0 %v2376
        %2415 = vmatpush1.bf16.msra.mxu0 %v2375
        %2416 = vmatprep.subr.bf16.mxu0 %v2378
        %2417 = vmatpush1.bf16.msra.mxu0 %v2377
        %2418 = vmatprep.subr.bf16.mxu0 %v2380
        %2419 = vmatpush1.bf16.msra.mxu0 %v2379
        %2420 = vmatprep.subr.bf16.mxu0 %v2382
        %2421 = vmatpush1.bf16.msra.mxu0 %v2381
        %2422 = vmatprep.subr.bf16.mxu0 %v2384
        %2423 = vmatpush1.bf16.msra.mxu0 %v2383
        %2424 = vmatprep.subr.bf16.mxu0 %v2386
        %2425 = vmatpush1.bf16.msra.mxu0 %v2385
        %2426 = vmatprep.subr.bf16.mxu0 0
        %2427 = vmatpush1.bf16.msra.mxu0 0
        %2428 = vmatprep.subr.bf16.mxu0 0
        %2429 = vmatpush1.bf16.msra.mxu0 0
        %2430 = vmatprep.subr.bf16.mxu0 0
        %2431 = vmatpush1.bf16.msra.mxu0 0
        %2432 = vmatprep.subr.bf16.mxu0 0
        %2433 = vmatpush1.bf16.msra.mxu0 0
        %2434 = vmatprep.subr.bf16.mxu0 0
        %2435 = vmatpush1.bf16.msra.mxu0 0
        %2436 = vmatprep.subr.bf16.mxu0 0
        %2437 = vmatpush1.bf16.msra.mxu0 0
        %2438 = vmatprep.subr.bf16.mxu0 0
        %2439 = vmatpush1.bf16.msra.mxu0 0
        %2440 = vmatprep.subr.bf16.mxu0 0
        %2441 = vmatpush1.bf16.msra.mxu0 0
        %2442 = vmatprep.subr.bf16.mxu0 0
        %2443 = vmatpush1.bf16.msra.mxu0 0
        %2444 = vmatprep.subr.bf16.mxu0 0
        %2445 = vmatpush1.bf16.msra.mxu0 0
        %2446 = vmatprep.mubr.bf16.mxu0 0
        %2447 = vmatmul.mubr.bf16.gmra.mrb[0].mxu0 %v2400
        %v2448 = vpop.f32.mrb[0].mxu0
        %v2449 = vadd.f32 0.0, %v2448
        %v2450 = vpop.f32.mrb[0].mxu0
        %v2451 = vadd.f32 0.0, %v2450
        %v2452 = vpop.f32.mrb[0].mxu0
        %v2453 = vadd.f32 0.0, %v2452
        %v2454 = vpop.f32.mrb[0].mxu0
        %v2455 = vadd.f32 0.0, %v2454
        %2456 = vmatprep.mubr.bf16.mxu0 0
        %2457 = vmatmul.mubr.bf16.gmra.mrb[0].mxu0 %v2403
        %v2458 = vpop.f32.mrb[0].mxu0
        %v2459 = vadd.f32 0.0, %v2458
        %v2460 = vpop.f32.mrb[0].mxu0
        %v2461 = vadd.f32 0.0, %v2460
        %v2462 = vpop.f32.mrb[0].mxu0
        %v2463 = vadd.f32 0.0, %v2462
        %v2464 = vpop.f32.mrb[0].mxu0
        %v2465 = vadd.f32 0.0, %v2464
        %2466 = vmatprep.mubr.bf16.mxu0 0
        %2467 = vmatmul.mubr.bf16.gmra.mrb[0].mxu0 %v2406
        %v2468 = vpop.f32.mrb[0].mxu0
        %v2469 = vadd.f32 0.0, %v2468
        %v2470 = vpop.f32.mrb[0].mxu0
        %v2471 = vadd.f32 0.0, %v2470
        %v2472 = vpop.f32.mrb[0].mxu0
        %v2473 = vadd.f32 0.0, %v2472
        %v2474 = vpop.f32.mrb[0].mxu0
        %v2475 = vadd.f32 0.0, %v2474
        %2476 = vmatprep.mubr.bf16.mxu0 0
        %2477 = vmatmul.mubr.bf16.gmra.mrb[0].mxu0 %v2409
        %v2478 = vpop.f32.mrb[0].mxu0
        %v2479 = vadd.f32 0.0, %v2478
        %v2480 = vpop.f32.mrb[0].mxu0
        %v2481 = vadd.f32 0.0, %v2480
        %v2482 = vpop.f32.mrb[0].mxu0
        %v2483 = vadd.f32 0.0, %v2482
        %v2484 = vpop.f32.mrb[0].mxu0
        %v2485 = vadd.f32 0.0, %v2484
        %2486 = vmatprep.mubr.bf16.mxu0 0
        %2487 = vmatmul.mubr.bf16.gmra.mrb[0].mxu0 %v2412
        %v2488 = vpop.f32.mrb[0].mxu0
        %v2489 = vadd.f32 0.0, %v2488
        %v2490 = vpop.f32.mrb[0].mxu0
        %v2491 = vadd.f32 0.0, %v2490
        %v2492 = vpop.f32.mrb[0].mxu0
        %v2493 = vadd.f32 0.0, %v2492
        %v2494 = vpop.f32.mrb[0].mxu0
        %v2495 = vadd.f32 0.0, %v2494
        %2496 = vdwg.mxu0
        %v2497 = vadd.f32 %v2263, %v2449
        %v2498 = vadd.f32 %v2265, %v2451
        %v2499 = vadd.f32 %v2267, %v2453
        %v2500 = vadd.f32 %v2269, %v2455
        %v2501 = vadd.f32 %v2273, %v2459
        %v2502 = vadd.f32 %v2275, %v2461
        %v2503 = vadd.f32 %v2277, %v2463
        %v2504 = vadd.f32 %v2279, %v2465
        %v2505 = vadd.f32 %v2283, %v2469
        %v2506 = vadd.f32 %v2285, %v2471
        %v2507 = vadd.f32 %v2287, %v2473
        %v2508 = vadd.f32 %v2289, %v2475
        %v2509 = vadd.f32 %v2293, %v2479
        %v2510 = vadd.f32 %v2295, %v2481
        %v2511 = vadd.f32 %v2297, %v2483
        %v2512 = vadd.f32 %v2299, %v2485
        %v2513 = vadd.f32 %v2303, %v2489
        %v2514 = vadd.f32 %v2305, %v2491
        %v2515 = vadd.f32 %v2307, %v2493
        %v2516 = vadd.f32 %v2309, %v2495
        %s2517 = scalar_lea.vmem %s5, 288
        %v2518 = vld [vmem:[%s2517] sm:$0xff]
        %v2519 = vld [vmem:[%s2517 + $0x8] sm:$0xff]
        %v2520 = vld [vmem:[%s2517 + $0x10] sm:$0xff]
        %v2521 = vld [vmem:[%s2517 + $0x18] sm:$0xff]
        %v2522 = vld [vmem:[%s2517 + $0x20] sm:$0xff]
        %v2523 = vld [vmem:[%s2517 + $0x28] sm:$0xff]
        %v2524 = vld [vmem:[%s2517 + $0x30] sm:$0xff]
        %v2525 = vld [vmem:[%s2517 + $0x38] sm:$0xff]
        %v2526 = vld [vmem:[%s2517 + $0x40] sm:$0xff]
        %v2527 = vld [vmem:[%s2517 + $0x48] sm:$0xff]
        %v2528 = vld [vmem:[%s2517 + $0x50] sm:$0xff]
        %v2529 = vld [vmem:[%s2517 + $0x58] sm:$0xff]
        %vm2530 = vsmask.f32 6400
        %v2531 = vrot.slane %v1962, 1
        %v2532 = vrot.slane %v1964, 2
        %v2533 = vor.u32 %v2531, %v2532
        %v2534 = vrot.slane %v1973, 1
        %v2535 = vrot.slane %v1969, 2
        %v2536 = vor.u32 %v2534, %v2535
        %v2537 = vsel %vm2530, %v2533, %v2536
        %v2538 = vrot.slane %v1981, 1
        %v2539 = vrot.slane %v1977, 2
        %v2540 = vor.u32 %v2538, %v2539
        %v2541 = vsel %vm2530, %v2536, %v2540
        %v2542 = vrot.slane %v1989, 1
        %v2543 = vrot.slane %v1985, 2
        %v2544 = vor.u32 %v2542, %v2543
        %v2545 = vsel %vm2530, %v2540, %v2544
        %v2546 = vrot.slane %v1997, 1
        %v2547 = vrot.slane %v1993, 2
        %v2548 = vor.u32 %v2546, %v2547
        %v2549 = vsel %vm2530, %v2544, %v2548
        %v2562 = vunpack.c.l.b16 %v2518
        %v2563 = vunpack.c.h.b16 %v2518
        %v2564 = vunpack.c.l.b16 %v2519
        %v2565 = vunpack.c.h.b16 %v2519
        %v2566 = vunpack.c.l.b16 %v2520
        %v2567 = vunpack.c.h.b16 %v2520
        %v2568 = vunpack.c.l.b16 %v2521
        %v2569 = vunpack.c.h.b16 %v2521
        %v2570 = vunpack.c.l.b16 %v2522
        %v2571 = vunpack.c.h.b16 %v2522
        %v2572 = vunpack.c.l.b16 %v2523
        %v2573 = vunpack.c.h.b16 %v2523
        %v2574 = vunpack.c.l.b16 %v2524
        %v2575 = vunpack.c.h.b16 %v2524
        %v2576 = vunpack.c.l.b16 %v2525
        %v2577 = vunpack.c.h.b16 %v2525
        %v2578 = vunpack.c.l.b16 %v2526
        %v2579 = vunpack.c.h.b16 %v2526
        %v2580 = vunpack.c.l.b16 %v2527
        %v2581 = vunpack.c.h.b16 %v2527
        %v2582 = vunpack.c.l.b16 %v2528
        %v2583 = vunpack.c.h.b16 %v2528
        %v2584 = vunpack.c.l.b16 %v2529
        %v2585 = vunpack.c.h.b16 %v2529
        %v2586 = vpack.c.b16 %v2564, %v2562
        %v2587 = vpack.c.b16 %v2565, %v2563
        %v2588 = vpack.c.b16 %v2568, %v2566
        %v2589 = vpack.c.b16 %v2569, %v2567
        %v2590 = vpack.c.b16 %v2572, %v2570
        %v2591 = vpack.c.b16 %v2573, %v2571
        %v2592 = vpack.c.b16 %v2576, %v2574
        %v2593 = vpack.c.b16 %v2577, %v2575
        %v2594 = vpack.c.b16 %v2580, %v2578
        %v2595 = vpack.c.b16 %v2581, %v2579
        %v2596 = vpack.c.b16 %v2584, %v2582
        %v2597 = vpack.c.b16 %v2585, %v2583
        %v2611 = vsel %vm797, %v2537, 0
        %v2614 = vsel %vm797, %v2541, 0
        %v2617 = vsel %vm797, %v2545, 0
        %v2620 = vsel %vm797, %v2549, 0
        %v2623 = vsel %vm797, %v2548, 0
        %2625 = vmatprep.subr.bf16.mxu0 %v2587
        %2626 = vmatpush1.bf16.msra.mxu0 %v2586
        %2627 = vmatprep.subr.bf16.mxu0 %v2589
        %2628 = vmatpush1.bf16.msra.mxu0 %v2588
        %2629 = vmatprep.subr.bf16.mxu0 %v2591
        %2630 = vmatpush1.bf16.msra.mxu0 %v2590
        %2631 = vmatprep.subr.bf16.mxu0 %v2593
        %2632 = vmatpush1.bf16.msra.mxu0 %v2592
        %2633 = vmatprep.subr.bf16.mxu0 %v2595
        %2634 = vmatpush1.bf16.msra.mxu0 %v2594
        %2635 = vmatprep.subr.bf16.mxu0 %v2597
        %2636 = vmatpush1.bf16.msra.mxu0 %v2596
        %2637 = vmatprep.subr.bf16.mxu0 0
        %2638 = vmatpush1.bf16.msra.mxu0 0
        %2639 = vmatprep.subr.bf16.mxu0 0
        %2640 = vmatpush1.bf16.msra.mxu0 0
        %2641 = vmatprep.subr.bf16.mxu0 0
        %2642 = vmatpush1.bf16.msra.mxu0 0
        %2643 = vmatprep.subr.bf16.mxu0 0
        %2644 = vmatpush1.bf16.msra.mxu0 0
        %2645 = vmatprep.subr.bf16.mxu0 0
        %2646 = vmatpush1.bf16.msra.mxu0 0
        %2647 = vmatprep.subr.bf16.mxu0 0
        %2648 = vmatpush1.bf16.msra.mxu0 0
        %2649 = vmatprep.subr.bf16.mxu0 0
        %2650 = vmatpush1.bf16.msra.mxu0 0
        %2651 = vmatprep.subr.bf16.mxu0 0
        %2652 = vmatpush1.bf16.msra.mxu0 0
        %2653 = vmatprep.subr.bf16.mxu0 0
        %2654 = vmatpush1.bf16.msra.mxu0 0
        %2655 = vmatprep.subr.bf16.mxu0 0
        %2656 = vmatpush1.bf16.msra.mxu0 0
        %2657 = vmatprep.mubr.bf16.mxu0 0
        %2658 = vmatmul.mubr.bf16.gmra.mrb[0].mxu0 %v2611
        %v2659 = vpop.f32.mrb[0].mxu0
        %v2660 = vadd.f32 0.0, %v2659
        %v2661 = vpop.f32.mrb[0].mxu0
        %v2662 = vadd.f32 0.0, %v2661
        %v2663 = vpop.f32.mrb[0].mxu0
        %v2664 = vadd.f32 0.0, %v2663
        %v2665 = vpop.f32.mrb[0].mxu0
        %v2666 = vadd.f32 0.0, %v2665
        %2667 = vmatprep.mubr.bf16.mxu0 0
        %2668 = vmatmul.mubr.bf16.gmra.mrb[0].mxu0 %v2614
        %v2669 = vpop.f32.mrb[0].mxu0
        %v2670 = vadd.f32 0.0, %v2669
        %v2671 = vpop.f32.mrb[0].mxu0
        %v2672 = vadd.f32 0.0, %v2671
        %v2673 = vpop.f32.mrb[0].mxu0
        %v2674 = vadd.f32 0.0, %v2673
        %v2675 = vpop.f32.mrb[0].mxu0
        %v2676 = vadd.f32 0.0, %v2675
        %2677 = vmatprep.mubr.bf16.mxu0 0
        %2678 = vmatmul.mubr.bf16.gmra.mrb[0].mxu0 %v2617
        %v2679 = vpop.f32.mrb[0].mxu0
        %v2680 = vadd.f32 0.0, %v2679
        %v2681 = vpop.f32.mrb[0].mxu0
        %v2682 = vadd.f32 0.0, %v2681
        %v2683 = vpop.f32.mrb[0].mxu0
        %v2684 = vadd.f32 0.0, %v2683
        %v2685 = vpop.f32.mrb[0].mxu0
        %v2686 = vadd.f32 0.0, %v2685
        %2687 = vmatprep.mubr.bf16.mxu0 0
        %2688 = vmatmul.mubr.bf16.gmra.mrb[0].mxu0 %v2620
        %v2689 = vpop.f32.mrb[0].mxu0
        %v2690 = vadd.f32 0.0, %v2689
        %v2691 = vpop.f32.mrb[0].mxu0
        %v2692 = vadd.f32 0.0, %v2691
        %v2693 = vpop.f32.mrb[0].mxu0
        %v2694 = vadd.f32 0.0, %v2693
        %v2695 = vpop.f32.mrb[0].mxu0
        %v2696 = vadd.f32 0.0, %v2695
        %2697 = vmatprep.mubr.bf16.mxu0 0
        %2698 = vmatmul.mubr.bf16.gmra.mrb[0].mxu0 %v2623
        %v2699 = vpop.f32.mrb[0].mxu0
        %v2700 = vadd.f32 0.0, %v2699
        %v2701 = vpop.f32.mrb[0].mxu0
        %v2702 = vadd.f32 0.0, %v2701
        %v2703 = vpop.f32.mrb[0].mxu0
        %v2704 = vadd.f32 0.0, %v2703
        %v2705 = vpop.f32.mrb[0].mxu0
        %v2706 = vadd.f32 0.0, %v2705
        %2707 = vdwg.mxu0
        %v2708 = vadd.f32 %v2497, %v2660
        %v2709 = vadd.f32 %v2498, %v2662
        %v2710 = vadd.f32 %v2499, %v2664
        %v2711 = vadd.f32 %v2500, %v2666
        %v2712 = vadd.f32 %v2501, %v2670
        %v2713 = vadd.f32 %v2502, %v2672
        %v2714 = vadd.f32 %v2503, %v2674
        %v2715 = vadd.f32 %v2504, %v2676
        %v2716 = vadd.f32 %v2505, %v2680
        %v2717 = vadd.f32 %v2506, %v2682
        %v2718 = vadd.f32 %v2507, %v2684
        %v2719 = vadd.f32 %v2508, %v2686
        %v2720 = vadd.f32 %v2509, %v2690
        %v2721 = vadd.f32 %v2510, %v2692
        %v2722 = vadd.f32 %v2511, %v2694
        %v2723 = vadd.f32 %v2512, %v2696
        %v2724 = vadd.f32 %v2513, %v2700
        %v2725 = vadd.f32 %v2514, %v2702
        %v2726 = vadd.f32 %v2515, %v2704
        %v2727 = vadd.f32 %v2516, %v2706
        %s2728 = scalar_lea.vmem %s5, 384
        %v2729 = vld [vmem:[%s2728] sm:$0xff]
        %v2730 = vld [vmem:[%s2728 + $0x8] sm:$0xff]
        %v2731 = vld [vmem:[%s2728 + $0x10] sm:$0xff]
        %v2732 = vld [vmem:[%s2728 + $0x18] sm:$0xff]
        %v2733 = vld [vmem:[%s2728 + $0x20] sm:$0xff]
        %v2734 = vld [vmem:[%s2728 + $0x28] sm:$0xff]
        %v2735 = vld [vmem:[%s2728 + $0x30] sm:$0xff]
        %v2736 = vld [vmem:[%s2728 + $0x38] sm:$0xff]
        %v2737 = vld [vmem:[%s2728 + $0x40] sm:$0xff]
        %v2738 = vld [vmem:[%s2728 + $0x48] sm:$0xff]
        %v2739 = vld [vmem:[%s2728 + $0x50] sm:$0xff]
        %v2740 = vld [vmem:[%s2728 + $0x58] sm:$0xff]
        %vm2741 = vcmask 1045504
        %v2742 = vrot.slane %v1927, 2
        %v2743 = vrot.slane %v1928, 2
        %v2744 = vsel %vm2741, %v2742, %v2743
        %v2745 = vrot.slane %v1929, 2
        %v2746 = vsel %vm2741, %v2743, %v2745
        %v2747 = vrot.slane %v1930, 2
        %v2748 = vsel %vm2741, %v2745, %v2747
        %v2749 = vrot.slane %v1931, 2
        %v2750 = vsel %vm2741, %v2747, %v2749
        %v2763 = vunpack.c.l.b16 %v2729
        %v2764 = vunpack.c.h.b16 %v2729
        %v2765 = vunpack.c.l.b16 %v2730
        %v2766 = vunpack.c.h.b16 %v2730
        %v2767 = vunpack.c.l.b16 %v2731
        %v2768 = vunpack.c.h.b16 %v2731
        %v2769 = vunpack.c.l.b16 %v2732
        %v2770 = vunpack.c.h.b16 %v2732
        %v2771 = vunpack.c.l.b16 %v2733
        %v2772 = vunpack.c.h.b16 %v2733
        %v2773 = vunpack.c.l.b16 %v2734
        %v2774 = vunpack.c.h.b16 %v2734
        %v2775 = vunpack.c.l.b16 %v2735
        %v2776 = vunpack.c.h.b16 %v2735
        %v2777 = vunpack.c.l.b16 %v2736
        %v2778 = vunpack.c.h.b16 %v2736
        %v2779 = vunpack.c.l.b16 %v2737
        %v2780 = vunpack.c.h.b16 %v2737
        %v2781 = vunpack.c.l.b16 %v2738
        %v2782 = vunpack.c.h.b16 %v2738
        %v2783 = vunpack.c.l.b16 %v2739
        %v2784 = vunpack.c.h.b16 %v2739
        %v2785 = vunpack.c.l.b16 %v2740
        %v2786 = vunpack.c.h.b16 %v2740
        %v2787 = vpack.c.b16 %v2765, %v2763
        %v2788 = vpack.c.b16 %v2766, %v2764
        %v2789 = vpack.c.b16 %v2769, %v2767
        %v2790 = vpack.c.b16 %v2770, %v2768
        %v2791 = vpack.c.b16 %v2773, %v2771
        %v2792 = vpack.c.b16 %v2774, %v2772
        %v2793 = vpack.c.b16 %v2777, %v2775
        %v2794 = vpack.c.b16 %v2778, %v2776
        %v2795 = vpack.c.b16 %v2781, %v2779
        %v2796 = vpack.c.b16 %v2782, %v2780
        %v2797 = vpack.c.b16 %v2785, %v2783
        %v2798 = vpack.c.b16 %v2786, %v2784
        %v2812 = vsel %vm797, %v2744, 0
        %v2815 = vsel %vm797, %v2746, 0
        %v2818 = vsel %vm797, %v2748, 0
        %v2821 = vsel %vm797, %v2750, 0
        %v2824 = vsel %vm797, %v2749, 0
        %2826 = vmatprep.subr.bf16.mxu0 %v2788
        %2827 = vmatpush1.bf16.msra.mxu0 %v2787
        %2828 = vmatprep.subr.bf16.mxu0 %v2790
        %2829 = vmatpush1.bf16.msra.mxu0 %v2789
        %2830 = vmatprep.subr.bf16.mxu0 %v2792
        %2831 = vmatpush1.bf16.msra.mxu0 %v2791
        %2832 = vmatprep.subr.bf16.mxu0 %v2794
        %2833 = vmatpush1.bf16.msra.mxu0 %v2793
        %2834 = vmatprep.subr.bf16.mxu0 %v2796
        %2835 = vmatpush1.bf16.msra.mxu0 %v2795
        %2836 = vmatprep.subr.bf16.mxu0 %v2798
        %2837 = vmatpush1.bf16.msra.mxu0 %v2797
        %2838 = vmatprep.subr.bf16.mxu0 0
        %2839 = vmatpush1.bf16.msra.mxu0 0
        %2840 = vmatprep.subr.bf16.mxu0 0
        %2841 = vmatpush1.bf16.msra.mxu0 0
        %2842 = vmatprep.subr.bf16.mxu0 0
        %2843 = vmatpush1.bf16.msra.mxu0 0
        %2844 = vmatprep.subr.bf16.mxu0 0
        %2845 = vmatpush1.bf16.msra.mxu0 0
        %2846 = vmatprep.subr.bf16.mxu0 0
        %2847 = vmatpush1.bf16.msra.mxu0 0
        %2848 = vmatprep.subr.bf16.mxu0 0
        %2849 = vmatpush1.bf16.msra.mxu0 0
        %2850 = vmatprep.subr.bf16.mxu0 0
        %2851 = vmatpush1.bf16.msra.mxu0 0
        %2852 = vmatprep.subr.bf16.mxu0 0
        %2853 = vmatpush1.bf16.msra.mxu0 0
        %2854 = vmatprep.subr.bf16.mxu0 0
        %2855 = vmatpush1.bf16.msra.mxu0 0
        %2856 = vmatprep.subr.bf16.mxu0 0
        %2857 = vmatpush1.bf16.msra.mxu0 0
        %2858 = vmatprep.mubr.bf16.mxu0 0
        %2859 = vmatmul.mubr.bf16.gmra.mrb[0].mxu0 %v2812
        %v2860 = vpop.f32.mrb[0].mxu0
        %v2861 = vadd.f32 0.0, %v2860
        %v2862 = vpop.f32.mrb[0].mxu0
        %v2863 = vadd.f32 0.0, %v2862
        %v2864 = vpop.f32.mrb[0].mxu0
        %v2865 = vadd.f32 0.0, %v2864
        %v2866 = vpop.f32.mrb[0].mxu0
        %v2867 = vadd.f32 0.0, %v2866
        %2868 = vmatprep.mubr.bf16.mxu0 0
        %2869 = vmatmul.mubr.bf16.gmra.mrb[0].mxu0 %v2815
        %v2870 = vpop.f32.mrb[0].mxu0
        %v2871 = vadd.f32 0.0, %v2870
        %v2872 = vpop.f32.mrb[0].mxu0
        %v2873 = vadd.f32 0.0, %v2872
        %v2874 = vpop.f32.mrb[0].mxu0
        %v2875 = vadd.f32 0.0, %v2874
        %v2876 = vpop.f32.mrb[0].mxu0
        %v2877 = vadd.f32 0.0, %v2876
        %2878 = vmatprep.mubr.bf16.mxu0 0
        %2879 = vmatmul.mubr.bf16.gmra.mrb[0].mxu0 %v2818
        %v2880 = vpop.f32.mrb[0].mxu0
        %v2881 = vadd.f32 0.0, %v2880
        %v2882 = vpop.f32.mrb[0].mxu0
        %v2883 = vadd.f32 0.0, %v2882
        %v2884 = vpop.f32.mrb[0].mxu0
        %v2885 = vadd.f32 0.0, %v2884
        %v2886 = vpop.f32.mrb[0].mxu0
        %v2887 = vadd.f32 0.0, %v2886
        %2888 = vmatprep.mubr.bf16.mxu0 0
        %2889 = vmatmul.mubr.bf16.gmra.mrb[0].mxu0 %v2821
        %v2890 = vpop.f32.mrb[0].mxu0
        %v2891 = vadd.f32 0.0, %v2890
        %v2892 = vpop.f32.mrb[0].mxu0
        %v2893 = vadd.f32 0.0, %v2892
        %v2894 = vpop.f32.mrb[0].mxu0
        %v2895 = vadd.f32 0.0, %v2894
        %v2896 = vpop.f32.mrb[0].mxu0
        %v2897 = vadd.f32 0.0, %v2896
        %2898 = vmatprep.mubr.bf16.mxu0 0
        %2899 = vmatmul.mubr.bf16.gmra.mrb[0].mxu0 %v2824
        %v2900 = vpop.f32.mrb[0].mxu0
        %v2901 = vadd.f32 0.0, %v2900
        %v2902 = vpop.f32.mrb[0].mxu0
        %v2903 = vadd.f32 0.0, %v2902
        %v2904 = vpop.f32.mrb[0].mxu0
        %v2905 = vadd.f32 0.0, %v2904
        %v2906 = vpop.f32.mrb[0].mxu0
        %v2907 = vadd.f32 0.0, %v2906
        %2908 = vdwg.mxu0
        %v2909 = vadd.f32 %v2708, %v2861
        %v2910 = vadd.f32 %v2709, %v2863
        %v2911 = vadd.f32 %v2710, %v2865
        %v2912 = vadd.f32 %v2711, %v2867
        %v2913 = vadd.f32 %v2712, %v2871
        %v2914 = vadd.f32 %v2713, %v2873
        %v2915 = vadd.f32 %v2714, %v2875
        %v2916 = vadd.f32 %v2715, %v2877
        %v2917 = vadd.f32 %v2716, %v2881
        %v2918 = vadd.f32 %v2717, %v2883
        %v2919 = vadd.f32 %v2718, %v2885
        %v2920 = vadd.f32 %v2719, %v2887
        %v2921 = vadd.f32 %v2720, %v2891
        %v2922 = vadd.f32 %v2721, %v2893
        %v2923 = vadd.f32 %v2722, %v2895
        %v2924 = vadd.f32 %v2723, %v2897
        %v2925 = vadd.f32 %v2724, %v2901
        %v2926 = vadd.f32 %v2725, %v2903
        %v2927 = vadd.f32 %v2726, %v2905
        %v2928 = vadd.f32 %v2727, %v2907
        %s2929 = scalar_lea.vmem %s5, 480
        %v2930 = vld [vmem:[%s2929] sm:$0xff]
        %v2931 = vld [vmem:[%s2929 + $0x8] sm:$0xff]
        %v2932 = vld [vmem:[%s2929 + $0x10] sm:$0xff]
        %v2933 = vld [vmem:[%s2929 + $0x18] sm:$0xff]
        %v2934 = vld [vmem:[%s2929 + $0x20] sm:$0xff]
        %v2935 = vld [vmem:[%s2929 + $0x28] sm:$0xff]
        %v2936 = vld [vmem:[%s2929 + $0x30] sm:$0xff]
        %v2937 = vld [vmem:[%s2929 + $0x38] sm:$0xff]
        %v2938 = vld [vmem:[%s2929 + $0x40] sm:$0xff]
        %v2939 = vld [vmem:[%s2929 + $0x48] sm:$0xff]
        %v2940 = vld [vmem:[%s2929 + $0x50] sm:$0xff]
        %v2941 = vld [vmem:[%s2929 + $0x58] sm:$0xff]
        %vm2942 = vsmask.f32 2304
        %v2943 = vrot.slane %v1962, 5
        %v2944 = vrot.slane %v1964, 6
        %v2945 = vor.u32 %v2943, %v2944
        %v2946 = vrot.slane %v1973, 5
        %v2947 = vrot.slane %v1969, 6
        %v2948 = vor.u32 %v2946, %v2947
        %v2949 = vsel %vm2942, %v2945, %v2948
        %v2950 = vrot.slane %v1981, 5
        %v2951 = vrot.slane %v1977, 6
        %v2952 = vor.u32 %v2950, %v2951
        %v2953 = vsel %vm2942, %v2948, %v2952
        %v2954 = vrot.slane %v1989, 5
        %v2955 = vrot.slane %v1985, 6
        %v2956 = vor.u32 %v2954, %v2955
        %v2957 = vsel %vm2942, %v2952, %v2956
        %v2958 = vrot.slane %v1997, 5
        %v2959 = vrot.slane %v1993, 6
        %v2960 = vor.u32 %v2958, %v2959
        %v2961 = vsel %vm2942, %v2956, %v2960
        %v2963 = vshrl.u32 %v1932, 16
        %v2965 = vrot.slane %v2963, 5
        %v2966 = vshll.u32 %v1932, 16
        %v2968 = vrot.slane %v2966, 6
        %v2969 = vor.u32 %v2965, %v2968
        %v2970 = vsel %vm2942, %v2960, %v2969
        %v2983 = vunpack.c.l.b16 %v2930
        %v2984 = vunpack.c.h.b16 %v2930
        %v2985 = vunpack.c.l.b16 %v2931
        %v2986 = vunpack.c.h.b16 %v2931
        %v2987 = vunpack.c.l.b16 %v2932
        %v2988 = vunpack.c.h.b16 %v2932
        %v2989 = vunpack.c.l.b16 %v2933
        %v2990 = vunpack.c.h.b16 %v2933
        %v2991 = vunpack.c.l.b16 %v2934
        %v2992 = vunpack.c.h.b16 %v2934
        %v2993 = vunpack.c.l.b16 %v2935
        %v2994 = vunpack.c.h.b16 %v2935
        %v2995 = vunpack.c.l.b16 %v2936
        %v2996 = vunpack.c.h.b16 %v2936
        %v2997 = vunpack.c.l.b16 %v2937
        %v2998 = vunpack.c.h.b16 %v2937
        %v2999 = vunpack.c.l.b16 %v2938
        %v3000 = vunpack.c.h.b16 %v2938
        %v3001 = vunpack.c.l.b16 %v2939
        %v3002 = vunpack.c.h.b16 %v2939
        %v3003 = vunpack.c.l.b16 %v2940
        %v3004 = vunpack.c.h.b16 %v2940
        %v3005 = vunpack.c.l.b16 %v2941
        %v3006 = vunpack.c.h.b16 %v2941
        %v3007 = vpack.c.b16 %v2985, %v2983
        %v3008 = vpack.c.b16 %v2986, %v2984
        %v3009 = vpack.c.b16 %v2989, %v2987
        %v3010 = vpack.c.b16 %v2990, %v2988
        %v3011 = vpack.c.b16 %v2993, %v2991
        %v3012 = vpack.c.b16 %v2994, %v2992
        %v3013 = vpack.c.b16 %v2997, %v2995
        %v3014 = vpack.c.b16 %v2998, %v2996
        %v3015 = vpack.c.b16 %v3001, %v2999
        %v3016 = vpack.c.b16 %v3002, %v3000
        %v3017 = vpack.c.b16 %v3005, %v3003
        %v3018 = vpack.c.b16 %v3006, %v3004
        %v3032 = vsel %vm797, %v2949, 0
        %v3035 = vsel %vm797, %v2953, 0
        %v3038 = vsel %vm797, %v2957, 0
        %v3041 = vsel %vm797, %v2961, 0
        %v3044 = vsel %vm797, %v2970, 0
        %3046 = vmatprep.subr.bf16.mxu0 %v3008
        %3047 = vmatpush1.bf16.msra.mxu0 %v3007
        %3048 = vmatprep.subr.bf16.mxu0 %v3010
        %3049 = vmatpush1.bf16.msra.mxu0 %v3009
        %3050 = vmatprep.subr.bf16.mxu0 %v3012
        %3051 = vmatpush1.bf16.msra.mxu0 %v3011
        %3052 = vmatprep.subr.bf16.mxu0 %v3014
        %3053 = vmatpush1.bf16.msra.mxu0 %v3013
        %3054 = vmatprep.subr.bf16.mxu0 %v3016
        %3055 = vmatpush1.bf16.msra.mxu0 %v3015
        %3056 = vmatprep.subr.bf16.mxu0 %v3018
        %3057 = vmatpush1.bf16.msra.mxu0 %v3017
        %3058 = vmatprep.subr.bf16.mxu0 0
        %3059 = vmatpush1.bf16.msra.mxu0 0
        %3060 = vmatprep.subr.bf16.mxu0 0
        %3061 = vmatpush1.bf16.msra.mxu0 0
        %3062 = vmatprep.subr.bf16.mxu0 0
        %3063 = vmatpush1.bf16.msra.mxu0 0
        %3064 = vmatprep.subr.bf16.mxu0 0
        %3065 = vmatpush1.bf16.msra.mxu0 0
        %3066 = vmatprep.subr.bf16.mxu0 0
        %3067 = vmatpush1.bf16.msra.mxu0 0
        %3068 = vmatprep.subr.bf16.mxu0 0
        %3069 = vmatpush1.bf16.msra.mxu0 0
        %3070 = vmatprep.subr.bf16.mxu0 0
        %3071 = vmatpush1.bf16.msra.mxu0 0
        %3072 = vmatprep.subr.bf16.mxu0 0
        %3073 = vmatpush1.bf16.msra.mxu0 0
        %3074 = vmatprep.subr.bf16.mxu0 0
        %3075 = vmatpush1.bf16.msra.mxu0 0
        %3076 = vmatprep.subr.bf16.mxu0 0
        %3077 = vmatpush1.bf16.msra.mxu0 0
        %3078 = vmatprep.mubr.bf16.mxu0 0
        %3079 = vmatmul.mubr.bf16.gmra.mrb[0].mxu0 %v3032
        %v3080 = vpop.f32.mrb[0].mxu0
        %v3081 = vadd.f32 0.0, %v3080
        %v3082 = vpop.f32.mrb[0].mxu0
        %v3083 = vadd.f32 0.0, %v3082
        %v3084 = vpop.f32.mrb[0].mxu0
        %v3085 = vadd.f32 0.0, %v3084
        %v3086 = vpop.f32.mrb[0].mxu0
        %v3087 = vadd.f32 0.0, %v3086
        %3088 = vmatprep.mubr.bf16.mxu0 0
        %3089 = vmatmul.mubr.bf16.gmra.mrb[0].mxu0 %v3035
        %v3090 = vpop.f32.mrb[0].mxu0
        %v3091 = vadd.f32 0.0, %v3090
        %v3092 = vpop.f32.mrb[0].mxu0
        %v3093 = vadd.f32 0.0, %v3092
        %v3094 = vpop.f32.mrb[0].mxu0
        %v3095 = vadd.f32 0.0, %v3094
        %v3096 = vpop.f32.mrb[0].mxu0
        %v3097 = vadd.f32 0.0, %v3096
        %3098 = vmatprep.mubr.bf16.mxu0 0
        %3099 = vmatmul.mubr.bf16.gmra.mrb[0].mxu0 %v3038
        %v3100 = vpop.f32.mrb[0].mxu0
        %v3101 = vadd.f32 0.0, %v3100
        %v3102 = vpop.f32.mrb[0].mxu0
        %v3103 = vadd.f32 0.0, %v3102
        %v3104 = vpop.f32.mrb[0].mxu0
        %v3105 = vadd.f32 0.0, %v3104
        %v3106 = vpop.f32.mrb[0].mxu0
        %v3107 = vadd.f32 0.0, %v3106
        %3108 = vmatprep.mubr.bf16.mxu0 0
        %3109 = vmatmul.mubr.bf16.gmra.mrb[0].mxu0 %v3041
        %v3110 = vpop.f32.mrb[0].mxu0
        %v3111 = vadd.f32 0.0, %v3110
        %v3112 = vpop.f32.mrb[0].mxu0
        %v3113 = vadd.f32 0.0, %v3112
        %v3114 = vpop.f32.mrb[0].mxu0
        %v3115 = vadd.f32 0.0, %v3114
        %v3116 = vpop.f32.mrb[0].mxu0
        %v3117 = vadd.f32 0.0, %v3116
        %3118 = vmatprep.mubr.bf16.mxu0 0
        %3119 = vmatmul.mubr.bf16.gmra.mrb[0].mxu0 %v3044
        %v3120 = vpop.f32.mrb[0].mxu0
        %v3121 = vadd.f32 0.0, %v3120
        %v3122 = vpop.f32.mrb[0].mxu0
        %v3123 = vadd.f32 0.0, %v3122
        %v3124 = vpop.f32.mrb[0].mxu0
        %v3125 = vadd.f32 0.0, %v3124
        %v3126 = vpop.f32.mrb[0].mxu0
        %v3127 = vadd.f32 0.0, %v3126
        %3128 = vdwg.mxu0
        %v3129 = vadd.f32 %v2909, %v3081
        %v3130 = vadd.f32 %v2910, %v3083
        %v3131 = vadd.f32 %v2911, %v3085
        %v3132 = vadd.f32 %v2912, %v3087
        %v3133 = vadd.f32 %v2913, %v3091
        %v3134 = vadd.f32 %v2914, %v3093
        %v3135 = vadd.f32 %v2915, %v3095
        %v3136 = vadd.f32 %v2916, %v3097
        %v3137 = vadd.f32 %v2917, %v3101
        %v3138 = vadd.f32 %v2918, %v3103
        %v3139 = vadd.f32 %v2919, %v3105
        %v3140 = vadd.f32 %v2920, %v3107
        %v3141 = vadd.f32 %v2921, %v3111
        %v3142 = vadd.f32 %v2922, %v3113
        %v3143 = vadd.f32 %v2923, %v3115
        %v3144 = vadd.f32 %v2924, %v3117
        %v3145 = vadd.f32 %v2925, %v3121
        %v3146 = vadd.f32 %v2926, %v3123
        %v3147 = vadd.f32 %v2927, %v3125
        %v3148 = vadd.f32 %v2928, %v3127
        %s3149 = scalar_lea.vmem %s5, 576
        %v3150 = vld [vmem:[%s3149] sm:$0xff]
        %v3151 = vld [vmem:[%s3149 + $0x8] sm:$0xff]
        %v3152 = vld [vmem:[%s3149 + $0x10] sm:$0xff]
        %v3153 = vld [vmem:[%s3149 + $0x18] sm:$0xff]
        %v3154 = vld [vmem:[%s3149 + $0x20] sm:$0xff]
        %v3155 = vld [vmem:[%s3149 + $0x28] sm:$0xff]
        %v3156 = vld [vmem:[%s3149 + $0x30] sm:$0xff]
        %v3157 = vld [vmem:[%s3149 + $0x38] sm:$0xff]
        %v3158 = vld [vmem:[%s3149 + $0x40] sm:$0xff]
        %v3159 = vld [vmem:[%s3149 + $0x48] sm:$0xff]
        %v3160 = vld [vmem:[%s3149 + $0x50] sm:$0xff]
        %v3161 = vld [vmem:[%s3149 + $0x58] sm:$0xff]
        %vm3163 = vcmask 1041408
        %v3164 = vrot.slane %v1927, 6
        %v3165 = vrot.slane %v1928, 6
        %v3166 = vsel %vm3163, %v3164, %v3165
        %v3167 = vrot.slane %v1929, 6
        %v3168 = vsel %vm3163, %v3165, %v3167
        %v3169 = vrot.slane %v1930, 6
        %v3170 = vsel %vm3163, %v3167, %v3169
        %v3171 = vrot.slane %v1931, 6
        %v3172 = vsel %vm3163, %v3169, %v3171
        %v3173 = vrot.slane %v1932, 6
        %v3174 = vsel %vm3163, %v3171, %v3173
        %v3187 = vunpack.c.l.b16 %v3150
        %v3188 = vunpack.c.h.b16 %v3150
        %v3189 = vunpack.c.l.b16 %v3151
        %v3190 = vunpack.c.h.b16 %v3151
        %v3191 = vunpack.c.l.b16 %v3152
        %v3192 = vunpack.c.h.b16 %v3152
        %v3193 = vunpack.c.l.b16 %v3153
        %v3194 = vunpack.c.h.b16 %v3153
        %v3195 = vunpack.c.l.b16 %v3154
        %v3196 = vunpack.c.h.b16 %v3154
        %v3197 = vunpack.c.l.b16 %v3155
        %v3198 = vunpack.c.h.b16 %v3155
        %v3199 = vunpack.c.l.b16 %v3156
        %v3200 = vunpack.c.h.b16 %v3156
        %v3201 = vunpack.c.l.b16 %v3157
        %v3202 = vunpack.c.h.b16 %v3157
        %v3203 = vunpack.c.l.b16 %v3158
        %v3204 = vunpack.c.h.b16 %v3158
        %v3205 = vunpack.c.l.b16 %v3159
        %v3206 = vunpack.c.h.b16 %v3159
        %v3207 = vunpack.c.l.b16 %v3160
        %v3208 = vunpack.c.h.b16 %v3160
        %v3209 = vunpack.c.l.b16 %v3161
        %v3210 = vunpack.c.h.b16 %v3161
        %v3211 = vpack.c.b16 %v3189, %v3187
        %v3212 = vpack.c.b16 %v3190, %v3188
        %v3213 = vpack.c.b16 %v3193, %v3191
        %v3214 = vpack.c.b16 %v3194, %v3192
        %v3215 = vpack.c.b16 %v3197, %v3195
        %v3216 = vpack.c.b16 %v3198, %v3196
        %v3217 = vpack.c.b16 %v3201, %v3199
        %v3218 = vpack.c.b16 %v3202, %v3200
        %v3219 = vpack.c.b16 %v3205, %v3203
        %v3220 = vpack.c.b16 %v3206, %v3204
        %v3221 = vpack.c.b16 %v3209, %v3207
        %v3222 = vpack.c.b16 %v3210, %v3208
        %v3236 = vsel %vm797, %v3166, 0
        %v3239 = vsel %vm797, %v3168, 0
        %v3242 = vsel %vm797, %v3170, 0
        %v3245 = vsel %vm797, %v3172, 0
        %v3248 = vsel %vm797, %v3174, 0
        %3250 = vmatprep.subr.bf16.mxu0 %v3212
        %3251 = vmatpush1.bf16.msra.mxu0 %v3211
        %3252 = vmatprep.subr.bf16.mxu0 %v3214
        %3253 = vmatpush1.bf16.msra.mxu0 %v3213
        %3254 = vmatprep.subr.bf16.mxu0 %v3216
        %3255 = vmatpush1.bf16.msra.mxu0 %v3215
        %3256 = vmatprep.subr.bf16.mxu0 %v3218
        %3257 = vmatpush1.bf16.msra.mxu0 %v3217
        %3258 = vmatprep.subr.bf16.mxu0 %v3220
        %3259 = vmatpush1.bf16.msra.mxu0 %v3219
        %3260 = vmatprep.subr.bf16.mxu0 %v3222
        %3261 = vmatpush1.bf16.msra.mxu0 %v3221
        %3262 = vmatprep.subr.bf16.mxu0 0
        %3263 = vmatpush1.bf16.msra.mxu0 0
        %3264 = vmatprep.subr.bf16.mxu0 0
        %3265 = vmatpush1.bf16.msra.mxu0 0
        %3266 = vmatprep.subr.bf16.mxu0 0
        %3267 = vmatpush1.bf16.msra.mxu0 0
        %3268 = vmatprep.subr.bf16.mxu0 0
        %3269 = vmatpush1.bf16.msra.mxu0 0
        %3270 = vmatprep.subr.bf16.mxu0 0
        %3271 = vmatpush1.bf16.msra.mxu0 0
        %3272 = vmatprep.subr.bf16.mxu0 0
        %3273 = vmatpush1.bf16.msra.mxu0 0
        %3274 = vmatprep.subr.bf16.mxu0 0
        %3275 = vmatpush1.bf16.msra.mxu0 0
        %3276 = vmatprep.subr.bf16.mxu0 0
        %3277 = vmatpush1.bf16.msra.mxu0 0
        %3278 = vmatprep.subr.bf16.mxu0 0
        %3279 = vmatpush1.bf16.msra.mxu0 0
        %3280 = vmatprep.subr.bf16.mxu0 0
        %3281 = vmatpush1.bf16.msra.mxu0 0
        %3282 = vmatprep.mubr.bf16.mxu0 0
        %3283 = vmatmul.mubr.bf16.gmra.mrb[0].mxu0 %v3236
        %v3284 = vpop.f32.mrb[0].mxu0
        %v3285 = vadd.f32 0.0, %v3284
        %v3286 = vpop.f32.mrb[0].mxu0
        %v3287 = vadd.f32 0.0, %v3286
        %v3288 = vpop.f32.mrb[0].mxu0
        %v3289 = vadd.f32 0.0, %v3288
        %v3290 = vpop.f32.mrb[0].mxu0
        %v3291 = vadd.f32 0.0, %v3290
        %3292 = vmatprep.mubr.bf16.mxu0 0
        %3293 = vmatmul.mubr.bf16.gmra.mrb[0].mxu0 %v3239
        %v3294 = vpop.f32.mrb[0].mxu0
        %v3295 = vadd.f32 0.0, %v3294
        %v3296 = vpop.f32.mrb[0].mxu0
        %v3297 = vadd.f32 0.0, %v3296
        %v3298 = vpop.f32.mrb[0].mxu0
        %v3299 = vadd.f32 0.0, %v3298
        %v3300 = vpop.f32.mrb[0].mxu0
        %v3301 = vadd.f32 0.0, %v3300
        %3302 = vmatprep.mubr.bf16.mxu0 0
        %3303 = vmatmul.mubr.bf16.gmra.mrb[0].mxu0 %v3242
        %v3304 = vpop.f32.mrb[0].mxu0
        %v3305 = vadd.f32 0.0, %v3304
        %v3306 = vpop.f32.mrb[0].mxu0
        %v3307 = vadd.f32 0.0, %v3306
        %v3308 = vpop.f32.mrb[0].mxu0
        %v3309 = vadd.f32 0.0, %v3308
        %v3310 = vpop.f32.mrb[0].mxu0
        %v3311 = vadd.f32 0.0, %v3310
        %3312 = vmatprep.mubr.bf16.mxu0 0
        %3313 = vmatmul.mubr.bf16.gmra.mrb[0].mxu0 %v3245
        %v3314 = vpop.f32.mrb[0].mxu0
        %v3315 = vadd.f32 0.0, %v3314
        %v3316 = vpop.f32.mrb[0].mxu0
        %v3317 = vadd.f32 0.0, %v3316
        %v3318 = vpop.f32.mrb[0].mxu0
        %v3319 = vadd.f32 0.0, %v3318
        %v3320 = vpop.f32.mrb[0].mxu0
        %v3321 = vadd.f32 0.0, %v3320
        %3322 = vmatprep.mubr.bf16.mxu0 0
        %3323 = vmatmul.mubr.bf16.gmra.mrb[0].mxu0 %v3248
        %v3324 = vpop.f32.mrb[0].mxu0
        %v3325 = vadd.f32 0.0, %v3324
        %v3326 = vpop.f32.mrb[0].mxu0
        %v3327 = vadd.f32 0.0, %v3326
        %v3328 = vpop.f32.mrb[0].mxu0
        %v3329 = vadd.f32 0.0, %v3328
        %v3330 = vpop.f32.mrb[0].mxu0
        %v3331 = vadd.f32 0.0, %v3330
        %3332 = vdwg.mxu0
        %v3333 = vadd.f32 %v3129, %v3285
        %v3334 = vadd.f32 %v3130, %v3287
        %v3335 = vadd.f32 %v3131, %v3289
        %v3336 = vadd.f32 %v3132, %v3291
        %v3337 = vadd.f32 %v3133, %v3295
        %v3338 = vadd.f32 %v3134, %v3297
        %v3339 = vadd.f32 %v3135, %v3299
        %v3340 = vadd.f32 %v3136, %v3301
        %v3341 = vadd.f32 %v3137, %v3305
        %v3342 = vadd.f32 %v3138, %v3307
        %v3343 = vadd.f32 %v3139, %v3309
        %v3344 = vadd.f32 %v3140, %v3311
        %v3345 = vadd.f32 %v3141, %v3315
        %v3346 = vadd.f32 %v3142, %v3317
        %v3347 = vadd.f32 %v3143, %v3319
        %v3348 = vadd.f32 %v3144, %v3321
        %v3349 = vadd.f32 %v3145, %v3325
        %v3350 = vadd.f32 %v3146, %v3327
        %v3351 = vadd.f32 %v3147, %v3329
        %v3352 = vadd.f32 %v3148, %v3331
        %s3353 = scalar_lea.vmem %s5, 672
        %v3354 = vld [vmem:[%s3353] sm:$0xff]
        %v3355 = vld [vmem:[%s3353 + $0x8] sm:$0xff]
        %v3356 = vld [vmem:[%s3353 + $0x10] sm:$0xff]
        %v3357 = vld [vmem:[%s3353 + $0x18] sm:$0xff]
        %v3358 = vld [vmem:[%s3353 + $0x20] sm:$0xff]
        %v3359 = vld [vmem:[%s3353 + $0x28] sm:$0xff]
        %v3360 = vld [vmem:[%s3353 + $0x30] sm:$0xff]
        %v3361 = vld [vmem:[%s3353 + $0x38] sm:$0xff]
        %v3362 = vld [vmem:[%s3353 + $0x40] sm:$0xff]
        %v3363 = vld [vmem:[%s3353 + $0x48] sm:$0xff]
        %v3364 = vld [vmem:[%s3353 + $0x50] sm:$0xff]
        %v3365 = vld [vmem:[%s3353 + $0x58] sm:$0xff]
        %vm3366 = vsmask.f32 1280
        %v3367 = vrot.slane %v1962, 6
        %v3368 = vrot.slane %v1964, 7
        %v3369 = vor.u32 %v3367, %v3368
        %v3370 = vrot.slane %v1973, 6
        %v3371 = vrot.slane %v1969, 7
        %v3372 = vor.u32 %v3370, %v3371
        %v3373 = vsel %vm3366, %v3369, %v3372
        %v3374 = vrot.slane %v1981, 6
        %v3375 = vrot.slane %v1977, 7
        %v3376 = vor.u32 %v3374, %v3375
        %v3377 = vsel %vm3366, %v3372, %v3376
        %v3378 = vrot.slane %v1989, 6
        %v3379 = vrot.slane %v1985, 7
        %v3380 = vor.u32 %v3378, %v3379
        %v3381 = vsel %vm3366, %v3376, %v3380
        %v3382 = vrot.slane %v1997, 6
        %v3383 = vrot.slane %v1993, 7
        %v3384 = vor.u32 %v3382, %v3383
        %v3385 = vsel %vm3366, %v3380, %v3384
        %v3386 = vrot.slane %v2963, 6
        %v3387 = vrot.slane %v2966, 7
        %v3388 = vor.u32 %v3386, %v3387
        %v3389 = vsel %vm3366, %v3384, %v3388
        %v3402 = vunpack.c.l.b16 %v3354
        %v3403 = vunpack.c.h.b16 %v3354
        %v3404 = vunpack.c.l.b16 %v3355
        %v3405 = vunpack.c.h.b16 %v3355
        %v3406 = vunpack.c.l.b16 %v3356
        %v3407 = vunpack.c.h.b16 %v3356
        %v3408 = vunpack.c.l.b16 %v3357
        %v3409 = vunpack.c.h.b16 %v3357
        %v3410 = vunpack.c.l.b16 %v3358
        %v3411 = vunpack.c.h.b16 %v3358
        %v3412 = vunpack.c.l.b16 %v3359
        %v3413 = vunpack.c.h.b16 %v3359
        %v3414 = vunpack.c.l.b16 %v3360
        %v3415 = vunpack.c.h.b16 %v3360
        %v3416 = vunpack.c.l.b16 %v3361
        %v3417 = vunpack.c.h.b16 %v3361
        %v3418 = vunpack.c.l.b16 %v3362
        %v3419 = vunpack.c.h.b16 %v3362
        %v3420 = vunpack.c.l.b16 %v3363
        %v3421 = vunpack.c.h.b16 %v3363
        %v3422 = vunpack.c.l.b16 %v3364
        %v3423 = vunpack.c.h.b16 %v3364
        %v3424 = vunpack.c.l.b16 %v3365
        %v3425 = vunpack.c.h.b16 %v3365
        %v3426 = vpack.c.b16 %v3404, %v3402
        %v3427 = vpack.c.b16 %v3405, %v3403
        %v3428 = vpack.c.b16 %v3408, %v3406
        %v3429 = vpack.c.b16 %v3409, %v3407
        %v3430 = vpack.c.b16 %v3412, %v3410
        %v3431 = vpack.c.b16 %v3413, %v3411
        %v3432 = vpack.c.b16 %v3416, %v3414
        %v3433 = vpack.c.b16 %v3417, %v3415
        %v3434 = vpack.c.b16 %v3420, %v3418
        %v3435 = vpack.c.b16 %v3421, %v3419
        %v3436 = vpack.c.b16 %v3424, %v3422
        %v3437 = vpack.c.b16 %v3425, %v3423
        %v3451 = vsel %vm797, %v3373, 0
        %v3454 = vsel %vm797, %v3377, 0
        %v3457 = vsel %vm797, %v3381, 0
        %v3460 = vsel %vm797, %v3385, 0
        %v3463 = vsel %vm797, %v3389, 0
        %3465 = vmatprep.subr.bf16.mxu0 %v3427
        %3466 = vmatpush1.bf16.msra.mxu0 %v3426
        %3467 = vmatprep.subr.bf16.mxu0 %v3429
        %3468 = vmatpush1.bf16.msra.mxu0 %v3428
        %3469 = vmatprep.subr.bf16.mxu0 %v3431
        %3470 = vmatpush1.bf16.msra.mxu0 %v3430
        %3471 = vmatprep.subr.bf16.mxu0 %v3433
        %3472 = vmatpush1.bf16.msra.mxu0 %v3432
        %3473 = vmatprep.subr.bf16.mxu0 %v3435
        %3474 = vmatpush1.bf16.msra.mxu0 %v3434
        %3475 = vmatprep.subr.bf16.mxu0 %v3437
        %3476 = vmatpush1.bf16.msra.mxu0 %v3436
        %3477 = vmatprep.subr.bf16.mxu0 0
        %3478 = vmatpush1.bf16.msra.mxu0 0
        %3479 = vmatprep.subr.bf16.mxu0 0
        %3480 = vmatpush1.bf16.msra.mxu0 0
        %3481 = vmatprep.subr.bf16.mxu0 0
        %3482 = vmatpush1.bf16.msra.mxu0 0
        %3483 = vmatprep.subr.bf16.mxu0 0
        %3484 = vmatpush1.bf16.msra.mxu0 0
        %3485 = vmatprep.subr.bf16.mxu0 0
        %3486 = vmatpush1.bf16.msra.mxu0 0
        %3487 = vmatprep.subr.bf16.mxu0 0
        %3488 = vmatpush1.bf16.msra.mxu0 0
        %3489 = vmatprep.subr.bf16.mxu0 0
        %3490 = vmatpush1.bf16.msra.mxu0 0
        %3491 = vmatprep.subr.bf16.mxu0 0
        %3492 = vmatpush1.bf16.msra.mxu0 0
        %3493 = vmatprep.subr.bf16.mxu0 0
        %3494 = vmatpush1.bf16.msra.mxu0 0
        %3495 = vmatprep.subr.bf16.mxu0 0
        %3496 = vmatpush1.bf16.msra.mxu0 0
        %3497 = vmatprep.mubr.bf16.mxu0 0
        %3498 = vmatmul.mubr.bf16.gmra.mrb[0].mxu0 %v3451
        %v3499 = vpop.f32.mrb[0].mxu0
        %v3500 = vadd.f32 0.0, %v3499
        %v3501 = vpop.f32.mrb[0].mxu0
        %v3502 = vadd.f32 0.0, %v3501
        %v3503 = vpop.f32.mrb[0].mxu0
        %v3504 = vadd.f32 0.0, %v3503
        %v3505 = vpop.f32.mrb[0].mxu0
        %v3506 = vadd.f32 0.0, %v3505
        %3507 = vmatprep.mubr.bf16.mxu0 0
        %3508 = vmatmul.mubr.bf16.gmra.mrb[0].mxu0 %v3454
        %v3509 = vpop.f32.mrb[0].mxu0
        %v3510 = vadd.f32 0.0, %v3509
        %v3511 = vpop.f32.mrb[0].mxu0
        %v3512 = vadd.f32 0.0, %v3511
        %v3513 = vpop.f32.mrb[0].mxu0
        %v3514 = vadd.f32 0.0, %v3513
        %v3515 = vpop.f32.mrb[0].mxu0
        %v3516 = vadd.f32 0.0, %v3515
        %3517 = vmatprep.mubr.bf16.mxu0 0
        %3518 = vmatmul.mubr.bf16.gmra.mrb[0].mxu0 %v3457
        %v3519 = vpop.f32.mrb[0].mxu0
        %v3520 = vadd.f32 0.0, %v3519
        %v3521 = vpop.f32.mrb[0].mxu0
        %v3522 = vadd.f32 0.0, %v3521
        %v3523 = vpop.f32.mrb[0].mxu0
        %v3524 = vadd.f32 0.0, %v3523
        %v3525 = vpop.f32.mrb[0].mxu0
        %v3526 = vadd.f32 0.0, %v3525
        %3527 = vmatprep.mubr.bf16.mxu0 0
        %3528 = vmatmul.mubr.bf16.gmra.mrb[0].mxu0 %v3460
        %v3529 = vpop.f32.mrb[0].mxu0
        %v3530 = vadd.f32 0.0, %v3529
        %v3531 = vpop.f32.mrb[0].mxu0
        %v3532 = vadd.f32 0.0, %v3531
        %v3533 = vpop.f32.mrb[0].mxu0
        %v3534 = vadd.f32 0.0, %v3533
        %v3535 = vpop.f32.mrb[0].mxu0
        %v3536 = vadd.f32 0.0, %v3535
        %3537 = vmatprep.mubr.bf16.mxu0 0
        %3538 = vmatmul.mubr.bf16.gmra.mrb[0].mxu0 %v3463
        %v3539 = vpop.f32.mrb[0].mxu0
        %v3540 = vadd.f32 0.0, %v3539
        %v3541 = vpop.f32.mrb[0].mxu0
        %v3542 = vadd.f32 0.0, %v3541
        %v3543 = vpop.f32.mrb[0].mxu0
        %v3544 = vadd.f32 0.0, %v3543
        %v3545 = vpop.f32.mrb[0].mxu0
        %v3546 = vadd.f32 0.0, %v3545
        %3547 = vdwg.mxu0
        %v3548 = vadd.f32 %v3333, %v3500
        %v3549 = vadd.f32 %v3334, %v3502
        %v3550 = vadd.f32 %v3335, %v3504
        %v3551 = vadd.f32 %v3336, %v3506
        %v3552 = vadd.f32 %v3337, %v3510
        %v3553 = vadd.f32 %v3338, %v3512
        %v3554 = vadd.f32 %v3339, %v3514
        %v3555 = vadd.f32 %v3340, %v3516
        %v3556 = vadd.f32 %v3341, %v3520
        %v3557 = vadd.f32 %v3342, %v3522
        %v3558 = vadd.f32 %v3343, %v3524
        %v3559 = vadd.f32 %v3344, %v3526
        %v3560 = vadd.f32 %v3345, %v3530
        %v3561 = vadd.f32 %v3346, %v3532
        %v3562 = vadd.f32 %v3347, %v3534
        %v3563 = vadd.f32 %v3348, %v3536
        %v3564 = vadd.f32 %v3349, %v3540
        %v3565 = vadd.f32 %v3350, %v3542
        %v3566 = vadd.f32 %v3351, %v3544
        %v3567 = vadd.f32 %v3352, %v3546
        %s3568 = scalar_lea.vmem %s5, 768
        %v3569 = vld [vmem:[%s3568] sm:$0xff]
        %v3570 = vld [vmem:[%s3568 + $0x8] sm:$0xff]
        %v3571 = vld [vmem:[%s3568 + $0x10] sm:$0xff]
        %v3572 = vld [vmem:[%s3568 + $0x18] sm:$0xff]
        %v3573 = vld [vmem:[%s3568 + $0x20] sm:$0xff]
        %v3574 = vld [vmem:[%s3568 + $0x28] sm:$0xff]
        %v3575 = vld [vmem:[%s3568 + $0x30] sm:$0xff]
        %v3576 = vld [vmem:[%s3568 + $0x38] sm:$0xff]
        %v3577 = vld [vmem:[%s3568 + $0x40] sm:$0xff]
        %v3578 = vld [vmem:[%s3568 + $0x48] sm:$0xff]
        %v3579 = vld [vmem:[%s3568 + $0x50] sm:$0xff]
        %v3580 = vld [vmem:[%s3568 + $0x58] sm:$0xff]
        %vm3581 = vcmask 1040384
        %v3582 = vrot.slane %v1927, 7
        %v3583 = vrot.slane %v1928, 7
        %v3584 = vsel %vm3581, %v3582, %v3583
        %v3585 = vrot.slane %v1929, 7
        %v3586 = vsel %vm3581, %v3583, %v3585
        %v3587 = vrot.slane %v1930, 7
        %v3588 = vsel %vm3581, %v3585, %v3587
        %v3589 = vrot.slane %v1931, 7
        %v3590 = vsel %vm3581, %v3587, %v3589
        %v3591 = vrot.slane %v1932, 7
        %v3592 = vsel %vm3581, %v3589, %v3591
        %v3605 = vunpack.c.l.b16 %v3569
        %v3606 = vunpack.c.h.b16 %v3569
        %v3607 = vunpack.c.l.b16 %v3570
        %v3608 = vunpack.c.h.b16 %v3570
        %v3609 = vunpack.c.l.b16 %v3571
        %v3610 = vunpack.c.h.b16 %v3571
        %v3611 = vunpack.c.l.b16 %v3572
        %v3612 = vunpack.c.h.b16 %v3572
        %v3613 = vunpack.c.l.b16 %v3573
        %v3614 = vunpack.c.h.b16 %v3573
        %v3615 = vunpack.c.l.b16 %v3574
        %v3616 = vunpack.c.h.b16 %v3574
        %v3617 = vunpack.c.l.b16 %v3575
        %v3618 = vunpack.c.h.b16 %v3575
        %v3619 = vunpack.c.l.b16 %v3576
        %v3620 = vunpack.c.h.b16 %v3576
        %v3621 = vunpack.c.l.b16 %v3577
        %v3622 = vunpack.c.h.b16 %v3577
        %v3623 = vunpack.c.l.b16 %v3578
        %v3624 = vunpack.c.h.b16 %v3578
        %v3625 = vunpack.c.l.b16 %v3579
        %v3626 = vunpack.c.h.b16 %v3579
        %v3627 = vunpack.c.l.b16 %v3580
        %v3628 = vunpack.c.h.b16 %v3580
        %v3629 = vpack.c.b16 %v3607, %v3605
        %v3630 = vpack.c.b16 %v3608, %v3606
        %v3631 = vpack.c.b16 %v3611, %v3609
        %v3632 = vpack.c.b16 %v3612, %v3610
        %v3633 = vpack.c.b16 %v3615, %v3613
        %v3634 = vpack.c.b16 %v3616, %v3614
        %v3635 = vpack.c.b16 %v3619, %v3617
        %v3636 = vpack.c.b16 %v3620, %v3618
        %v3637 = vpack.c.b16 %v3623, %v3621
        %v3638 = vpack.c.b16 %v3624, %v3622
        %v3639 = vpack.c.b16 %v3627, %v3625
        %v3640 = vpack.c.b16 %v3628, %v3626
        %v3654 = vsel %vm797, %v3584, 0
        %v3657 = vsel %vm797, %v3586, 0
        %v3660 = vsel %vm797, %v3588, 0
        %v3663 = vsel %vm797, %v3590, 0
        %v3666 = vsel %vm797, %v3592, 0
        %3668 = vmatprep.subr.bf16.mxu0 %v3630
        %3669 = vmatpush1.bf16.msra.mxu0 %v3629
        %3670 = vmatprep.subr.bf16.mxu0 %v3632
        %3671 = vmatpush1.bf16.msra.mxu0 %v3631
        %3672 = vmatprep.subr.bf16.mxu0 %v3634
        %3673 = vmatpush1.bf16.msra.mxu0 %v3633
        %3674 = vmatprep.subr.bf16.mxu0 %v3636
        %3675 = vmatpush1.bf16.msra.mxu0 %v3635
        %3676 = vmatprep.subr.bf16.mxu0 %v3638
        %3677 = vmatpush1.bf16.msra.mxu0 %v3637
        %3678 = vmatprep.subr.bf16.mxu0 %v3640
        %3679 = vmatpush1.bf16.msra.mxu0 %v3639
        %3680 = vmatprep.subr.bf16.mxu0 0
        %3681 = vmatpush1.bf16.msra.mxu0 0
        %3682 = vmatprep.subr.bf16.mxu0 0
        %3683 = vmatpush1.bf16.msra.mxu0 0
        %3684 = vmatprep.subr.bf16.mxu0 0
        %3685 = vmatpush1.bf16.msra.mxu0 0
        %3686 = vmatprep.subr.bf16.mxu0 0
        %3687 = vmatpush1.bf16.msra.mxu0 0
        %3688 = vmatprep.subr.bf16.mxu0 0
        %3689 = vmatpush1.bf16.msra.mxu0 0
        %3690 = vmatprep.subr.bf16.mxu0 0
        %3691 = vmatpush1.bf16.msra.mxu0 0
        %3692 = vmatprep.subr.bf16.mxu0 0
        %3693 = vmatpush1.bf16.msra.mxu0 0
        %3694 = vmatprep.subr.bf16.mxu0 0
        %3695 = vmatpush1.bf16.msra.mxu0 0
        %3696 = vmatprep.subr.bf16.mxu0 0
        %3697 = vmatpush1.bf16.msra.mxu0 0
        %3698 = vmatprep.subr.bf16.mxu0 0
        %3699 = vmatpush1.bf16.msra.mxu0 0
        %3700 = vmatprep.mubr.bf16.mxu0 0
        %3701 = vmatmul.mubr.bf16.gmra.mrb[0].mxu0 %v3654
        %v3702 = vpop.f32.mrb[0].mxu0
        %v3703 = vadd.f32 0.0, %v3702
        %v3704 = vpop.f32.mrb[0].mxu0
        %v3705 = vadd.f32 0.0, %v3704
        %v3706 = vpop.f32.mrb[0].mxu0
        %v3707 = vadd.f32 0.0, %v3706
        %v3708 = vpop.f32.mrb[0].mxu0
        %v3709 = vadd.f32 0.0, %v3708
        %3710 = vmatprep.mubr.bf16.mxu0 0
        %3711 = vmatmul.mubr.bf16.gmra.mrb[0].mxu0 %v3657
        %v3712 = vpop.f32.mrb[0].mxu0
        %v3713 = vadd.f32 0.0, %v3712
        %v3714 = vpop.f32.mrb[0].mxu0
        %v3715 = vadd.f32 0.0, %v3714
        %v3716 = vpop.f32.mrb[0].mxu0
        %v3717 = vadd.f32 0.0, %v3716
        %v3718 = vpop.f32.mrb[0].mxu0
        %v3719 = vadd.f32 0.0, %v3718
        %3720 = vmatprep.mubr.bf16.mxu0 0
        %3721 = vmatmul.mubr.bf16.gmra.mrb[0].mxu0 %v3660
        %v3722 = vpop.f32.mrb[0].mxu0
        %v3723 = vadd.f32 0.0, %v3722
        %v3724 = vpop.f32.mrb[0].mxu0
        %v3725 = vadd.f32 0.0, %v3724
        %v3726 = vpop.f32.mrb[0].mxu0
        %v3727 = vadd.f32 0.0, %v3726
        %v3728 = vpop.f32.mrb[0].mxu0
        %v3729 = vadd.f32 0.0, %v3728
        %3730 = vmatprep.mubr.bf16.mxu0 0
        %3731 = vmatmul.mubr.bf16.gmra.mrb[0].mxu0 %v3663
        %v3732 = vpop.f32.mrb[0].mxu0
        %v3733 = vadd.f32 0.0, %v3732
        %v3734 = vpop.f32.mrb[0].mxu0
        %v3735 = vadd.f32 0.0, %v3734
        %v3736 = vpop.f32.mrb[0].mxu0
        %v3737 = vadd.f32 0.0, %v3736
        %v3738 = vpop.f32.mrb[0].mxu0
        %v3739 = vadd.f32 0.0, %v3738
        %3740 = vmatprep.mubr.bf16.mxu0 0
        %3741 = vmatmul.mubr.bf16.gmra.mrb[0].mxu0 %v3666
        %v3742 = vpop.f32.mrb[0].mxu0
        %v3743 = vadd.f32 0.0, %v3742
        %v3744 = vpop.f32.mrb[0].mxu0
        %v3745 = vadd.f32 0.0, %v3744
        %v3746 = vpop.f32.mrb[0].mxu0
        %v3747 = vadd.f32 0.0, %v3746
        %v3748 = vpop.f32.mrb[0].mxu0
        %v3749 = vadd.f32 0.0, %v3748
        %3750 = vdwg.mxu0
        %v3751 = vadd.f32 %v3548, %v3703
        %v3752 = vadd.f32 %v3549, %v3705
        %v3753 = vadd.f32 %v3550, %v3707
        %v3754 = vadd.f32 %v3551, %v3709
        %v3755 = vadd.f32 %v3552, %v3713
        %v3756 = vadd.f32 %v3553, %v3715
        %v3757 = vadd.f32 %v3554, %v3717
        %v3758 = vadd.f32 %v3555, %v3719
        %v3759 = vadd.f32 %v3556, %v3723
        %v3760 = vadd.f32 %v3557, %v3725
        %v3761 = vadd.f32 %v3558, %v3727
        %v3762 = vadd.f32 %v3559, %v3729
        %v3763 = vadd.f32 %v3560, %v3733
        %v3764 = vadd.f32 %v3561, %v3735
        %v3765 = vadd.f32 %v3562, %v3737
        %v3766 = vadd.f32 %v3563, %v3739
        %v3767 = vadd.f32 %v3564, %v3743
        %v3768 = vadd.f32 %v3565, %v3745
        %v3769 = vadd.f32 %v3566, %v3747
        %v3770 = vadd.f32 %v3567, %v3749
        %s3771 = scalar_lea.vmem %s5, 864
        %v3772 = vld [vmem:[%s3771] sm:$0xff]
        %v3773 = vld [vmem:[%s3771 + $0x8] sm:$0xff]
        %v3774 = vld [vmem:[%s3771 + $0x10] sm:$0xff]
        %v3775 = vld [vmem:[%s3771 + $0x18] sm:$0xff]
        %v3776 = vld [vmem:[%s3771 + $0x20] sm:$0xff]
        %v3777 = vld [vmem:[%s3771 + $0x28] sm:$0xff]
        %v3778 = vld [vmem:[%s3771 + $0x30] sm:$0xff]
        %v3779 = vld [vmem:[%s3771 + $0x38] sm:$0xff]
        %v3780 = vld [vmem:[%s3771 + $0x40] sm:$0xff]
        %v3781 = vld [vmem:[%s3771 + $0x48] sm:$0xff]
        %v3782 = vld [vmem:[%s3771 + $0x50] sm:$0xff]
        %v3783 = vld [vmem:[%s3771 + $0x58] sm:$0xff]
        %vm3784 = vsmask.f32 256
        %v3785 = vrot.slane %v1962, 7
        %v3786 = vrot.slane %v1973, 7
        %v3787 = vor.u32 %v3786, %v1969
        %v3788 = vsel %vm3784, %v3785, %v3787
        %v3789 = vrot.slane %v1981, 7
        %v3790 = vor.u32 %v3789, %v1977
        %v3791 = vsel %vm3784, %v3786, %v3790
        %v3792 = vrot.slane %v1989, 7
        %v3793 = vor.u32 %v3792, %v1985
        %v3794 = vsel %vm3784, %v3789, %v3793
        %v3795 = vrot.slane %v1997, 7
        %v3796 = vor.u32 %v3795, %v1993
        %v3797 = vsel %vm3784, %v3792, %v3796
        %v3798 = vrot.slane %v2963, 7
        %v3799 = vor.u32 %v3798, %v2966
        %v3800 = vsel %vm3784, %v3795, %v3799
        %v3813 = vunpack.c.l.b16 %v3772
        %v3814 = vunpack.c.h.b16 %v3772
        %v3815 = vunpack.c.l.b16 %v3773
        %v3816 = vunpack.c.h.b16 %v3773
        %v3817 = vunpack.c.l.b16 %v3774
        %v3818 = vunpack.c.h.b16 %v3774
        %v3819 = vunpack.c.l.b16 %v3775
        %v3820 = vunpack.c.h.b16 %v3775
        %v3821 = vunpack.c.l.b16 %v3776
        %v3822 = vunpack.c.h.b16 %v3776
        %v3823 = vunpack.c.l.b16 %v3777
        %v3824 = vunpack.c.h.b16 %v3777
        %v3825 = vunpack.c.l.b16 %v3778
        %v3826 = vunpack.c.h.b16 %v3778
        %v3827 = vunpack.c.l.b16 %v3779
        %v3828 = vunpack.c.h.b16 %v3779
        %v3829 = vunpack.c.l.b16 %v3780
        %v3830 = vunpack.c.h.b16 %v3780
        %v3831 = vunpack.c.l.b16 %v3781
        %v3832 = vunpack.c.h.b16 %v3781
        %v3833 = vunpack.c.l.b16 %v3782
        %v3834 = vunpack.c.h.b16 %v3782
        %v3835 = vunpack.c.l.b16 %v3783
        %v3836 = vunpack.c.h.b16 %v3783
        %v3837 = vpack.c.b16 %v3815, %v3813
        %v3838 = vpack.c.b16 %v3816, %v3814
        %v3839 = vpack.c.b16 %v3819, %v3817
        %v3840 = vpack.c.b16 %v3820, %v3818
        %v3841 = vpack.c.b16 %v3823, %v3821
        %v3842 = vpack.c.b16 %v3824, %v3822
        %v3843 = vpack.c.b16 %v3827, %v3825
        %v3844 = vpack.c.b16 %v3828, %v3826
        %v3845 = vpack.c.b16 %v3831, %v3829
        %v3846 = vpack.c.b16 %v3832, %v3830
        %v3847 = vpack.c.b16 %v3835, %v3833
        %v3848 = vpack.c.b16 %v3836, %v3834
        %v3862 = vsel %vm797, %v3788, 0
        %v3865 = vsel %vm797, %v3791, 0
        %v3868 = vsel %vm797, %v3794, 0
        %v3871 = vsel %vm797, %v3797, 0
        %v3874 = vsel %vm797, %v3800, 0
        %3876 = vmatprep.subr.bf16.mxu0 %v3838
        %3877 = vmatpush1.bf16.msra.mxu0 %v3837
        %3878 = vmatprep.subr.bf16.mxu0 %v3840
        %3879 = vmatpush1.bf16.msra.mxu0 %v3839
        %3880 = vmatprep.subr.bf16.mxu0 %v3842
        %3881 = vmatpush1.bf16.msra.mxu0 %v3841
        %3882 = vmatprep.subr.bf16.mxu0 %v3844
        %3883 = vmatpush1.bf16.msra.mxu0 %v3843
        %3884 = vmatprep.subr.bf16.mxu0 %v3846
        %3885 = vmatpush1.bf16.msra.mxu0 %v3845
        %3886 = vmatprep.subr.bf16.mxu0 %v3848
        %3887 = vmatpush1.bf16.msra.mxu0 %v3847
        %3888 = vmatprep.subr.bf16.mxu0 0
        %3889 = vmatpush1.bf16.msra.mxu0 0
        %3890 = vmatprep.subr.bf16.mxu0 0
        %3891 = vmatpush1.bf16.msra.mxu0 0
        %3892 = vmatprep.subr.bf16.mxu0 0
        %3893 = vmatpush1.bf16.msra.mxu0 0
        %3894 = vmatprep.subr.bf16.mxu0 0
        %3895 = vmatpush1.bf16.msra.mxu0 0
        %3896 = vmatprep.subr.bf16.mxu0 0
        %3897 = vmatpush1.bf16.msra.mxu0 0
        %3898 = vmatprep.subr.bf16.mxu0 0
        %3899 = vmatpush1.bf16.msra.mxu0 0
        %3900 = vmatprep.subr.bf16.mxu0 0
        %3901 = vmatpush1.bf16.msra.mxu0 0
        %3902 = vmatprep.subr.bf16.mxu0 0
        %3903 = vmatpush1.bf16.msra.mxu0 0
        %3904 = vmatprep.subr.bf16.mxu0 0
        %3905 = vmatpush1.bf16.msra.mxu0 0
        %3906 = vmatprep.subr.bf16.mxu0 0
        %3907 = vmatpush1.bf16.msra.mxu0 0
        %3908 = vmatprep.mubr.bf16.mxu0 0
        %3909 = vmatmul.mubr.bf16.gmra.mrb[0].mxu0 %v3862
        %v3910 = vpop.f32.mrb[0].mxu0
        %v3911 = vadd.f32 0.0, %v3910
        %v3912 = vpop.f32.mrb[0].mxu0
        %v3913 = vadd.f32 0.0, %v3912
        %v3914 = vpop.f32.mrb[0].mxu0
        %v3915 = vadd.f32 0.0, %v3914
        %v3916 = vpop.f32.mrb[0].mxu0
        %v3917 = vadd.f32 0.0, %v3916
        %3918 = vmatprep.mubr.bf16.mxu0 0
        %3919 = vmatmul.mubr.bf16.gmra.mrb[0].mxu0 %v3865
        %v3920 = vpop.f32.mrb[0].mxu0
        %v3921 = vadd.f32 0.0, %v3920
        %v3922 = vpop.f32.mrb[0].mxu0
        %v3923 = vadd.f32 0.0, %v3922
        %v3924 = vpop.f32.mrb[0].mxu0
        %v3925 = vadd.f32 0.0, %v3924
        %v3926 = vpop.f32.mrb[0].mxu0
        %v3927 = vadd.f32 0.0, %v3926
        %3928 = vmatprep.mubr.bf16.mxu0 0
        %3929 = vmatmul.mubr.bf16.gmra.mrb[0].mxu0 %v3868
        %v3930 = vpop.f32.mrb[0].mxu0
        %v3931 = vadd.f32 0.0, %v3930
        %v3932 = vpop.f32.mrb[0].mxu0
        %v3933 = vadd.f32 0.0, %v3932
        %v3934 = vpop.f32.mrb[0].mxu0
        %v3935 = vadd.f32 0.0, %v3934
        %v3936 = vpop.f32.mrb[0].mxu0
        %v3937 = vadd.f32 0.0, %v3936
        %3938 = vmatprep.mubr.bf16.mxu0 0
        %3939 = vmatmul.mubr.bf16.gmra.mrb[0].mxu0 %v3871
        %v3940 = vpop.f32.mrb[0].mxu0
        %v3941 = vadd.f32 0.0, %v3940
        %v3942 = vpop.f32.mrb[0].mxu0
        %v3943 = vadd.f32 0.0, %v3942
        %v3944 = vpop.f32.mrb[0].mxu0
        %v3945 = vadd.f32 0.0, %v3944
        %v3946 = vpop.f32.mrb[0].mxu0
        %v3947 = vadd.f32 0.0, %v3946
        %3948 = vmatprep.mubr.bf16.mxu0 0
        %3949 = vmatmul.mubr.bf16.gmra.mrb[0].mxu0 %v3874
        %v3950 = vpop.f32.mrb[0].mxu0
        %v3951 = vadd.f32 0.0, %v3950
        %v3952 = vpop.f32.mrb[0].mxu0
        %v3953 = vadd.f32 0.0, %v3952
        %v3954 = vpop.f32.mrb[0].mxu0
        %v3955 = vadd.f32 0.0, %v3954
        %v3956 = vpop.f32.mrb[0].mxu0
        %v3957 = vadd.f32 0.0, %v3956
        %3958 = vdwg.mxu0
        %v3959 = vadd.f32 %v3751, %v3911
        %v3960 = vadd.f32 %v3752, %v3913
        %v3961 = vadd.f32 %v3753, %v3915
        %v3962 = vadd.f32 %v3754, %v3917
        %v3963 = vadd.f32 %v3755, %v3921
        %v3964 = vadd.f32 %v3756, %v3923
        %v3965 = vadd.f32 %v3757, %v3925
        %v3966 = vadd.f32 %v3758, %v3927
        %v3967 = vadd.f32 %v3759, %v3931
        %v3968 = vadd.f32 %v3760, %v3933
        %v3969 = vadd.f32 %v3761, %v3935
        %v3970 = vadd.f32 %v3762, %v3937
        %v3971 = vadd.f32 %v3763, %v3941
        %v3972 = vadd.f32 %v3764, %v3943
        %v3973 = vadd.f32 %v3765, %v3945
        %v3974 = vadd.f32 %v3766, %v3947
        %v3975 = vadd.f32 %v3767, %v3951
        %v3976 = vadd.f32 %v3768, %v3953
        %v3977 = vadd.f32 %v3769, %v3955
        %v3978 = vadd.f32 %v3770, %v3957
        %s3979 = scalar_lea.vmem %s5, 960
        %v3980 = vld [vmem:[%s3979] sm:$0xff]
        %v3981 = vld [vmem:[%s3979 + $0x8] sm:$0xff]
        %v3982 = vld [vmem:[%s3979 + $0x10] sm:$0xff]
        %v3983 = vld [vmem:[%s3979 + $0x18] sm:$0xff]
        %v3984 = vld [vmem:[%s3979 + $0x20] sm:$0xff]
        %v3985 = vld [vmem:[%s3979 + $0x28] sm:$0xff]
        %v3986 = vld [vmem:[%s3979 + $0x30] sm:$0xff]
        %v3987 = vld [vmem:[%s3979 + $0x38] sm:$0xff]
        %v3988 = vld [vmem:[%s3979 + $0x40] sm:$0xff]
        %v3989 = vld [vmem:[%s3979 + $0x48] sm:$0xff]
        %v3990 = vld [vmem:[%s3979 + $0x50] sm:$0xff]
        %v3991 = vld [vmem:[%s3979 + $0x58] sm:$0xff]
        %vm3992 = vcmask 1044480
        %v3993 = vrot.slane %v1928, 3
        %v3994 = vrot.slane %v1929, 3
        %v3995 = vsel %vm3992, %v3993, %v3994
        %v3996 = vrot.slane %v1930, 3
        %v3997 = vsel %vm3992, %v3994, %v3996
        %v3998 = vrot.slane %v1931, 3
        %v3999 = vsel %vm3992, %v3996, %v3998
        %v4000 = vrot.slane %v1932, 3
        %v4001 = vsel %vm3992, %v3998, %v4000
        %v4014 = vunpack.c.l.b16 %v3980
        %v4015 = vunpack.c.h.b16 %v3980
        %v4016 = vunpack.c.l.b16 %v3981
        %v4017 = vunpack.c.h.b16 %v3981
        %v4018 = vunpack.c.l.b16 %v3982
        %v4019 = vunpack.c.h.b16 %v3982
        %v4020 = vunpack.c.l.b16 %v3983
        %v4021 = vunpack.c.h.b16 %v3983
        %v4022 = vunpack.c.l.b16 %v3984
        %v4023 = vunpack.c.h.b16 %v3984
        %v4024 = vunpack.c.l.b16 %v3985
        %v4025 = vunpack.c.h.b16 %v3985
        %v4026 = vunpack.c.l.b16 %v3986
        %v4027 = vunpack.c.h.b16 %v3986
        %v4028 = vunpack.c.l.b16 %v3987
        %v4029 = vunpack.c.h.b16 %v3987
        %v4030 = vunpack.c.l.b16 %v3988
        %v4031 = vunpack.c.h.b16 %v3988
        %v4032 = vunpack.c.l.b16 %v3989
        %v4033 = vunpack.c.h.b16 %v3989
        %v4034 = vunpack.c.l.b16 %v3990
        %v4035 = vunpack.c.h.b16 %v3990
        %v4036 = vunpack.c.l.b16 %v3991
        %v4037 = vunpack.c.h.b16 %v3991
        %v4038 = vpack.c.b16 %v4016, %v4014
        %v4039 = vpack.c.b16 %v4017, %v4015
        %v4040 = vpack.c.b16 %v4020, %v4018
        %v4041 = vpack.c.b16 %v4021, %v4019
        %v4042 = vpack.c.b16 %v4024, %v4022
        %v4043 = vpack.c.b16 %v4025, %v4023
        %v4044 = vpack.c.b16 %v4028, %v4026
        %v4045 = vpack.c.b16 %v4029, %v4027
        %v4046 = vpack.c.b16 %v4032, %v4030
        %v4047 = vpack.c.b16 %v4033, %v4031
        %v4048 = vpack.c.b16 %v4036, %v4034
        %v4049 = vpack.c.b16 %v4037, %v4035
        %v4063 = vsel %vm797, %v3995, 0
        %v4066 = vsel %vm797, %v3997, 0
        %v4069 = vsel %vm797, %v3999, 0
        %v4072 = vsel %vm797, %v4001, 0
        %v4075 = vsel %vm797, %v4000, 0
        %4077 = vmatprep.subr.bf16.mxu0 %v4039
        %4078 = vmatpush1.bf16.msra.mxu0 %v4038
        %4079 = vmatprep.subr.bf16.mxu0 %v4041
        %4080 = vmatpush1.bf16.msra.mxu0 %v4040
        %4081 = vmatprep.subr.bf16.mxu0 %v4043
        %4082 = vmatpush1.bf16.msra.mxu0 %v4042
        %4083 = vmatprep.subr.bf16.mxu0 %v4045
        %4084 = vmatpush1.bf16.msra.mxu0 %v4044
        %4085 = vmatprep.subr.bf16.mxu0 %v4047
        %4086 = vmatpush1.bf16.msra.mxu0 %v4046
        %4087 = vmatprep.subr.bf16.mxu0 %v4049
        %4088 = vmatpush1.bf16.msra.mxu0 %v4048
        %4089 = vmatprep.subr.bf16.mxu0 0
        %4090 = vmatpush1.bf16.msra.mxu0 0
        %4091 = vmatprep.subr.bf16.mxu0 0
        %4092 = vmatpush1.bf16.msra.mxu0 0
        %4093 = vmatprep.subr.bf16.mxu0 0
        %4094 = vmatpush1.bf16.msra.mxu0 0
        %4095 = vmatprep.subr.bf16.mxu0 0
        %4096 = vmatpush1.bf16.msra.mxu0 0
        %4097 = vmatprep.subr.bf16.mxu0 0
        %4098 = vmatpush1.bf16.msra.mxu0 0
        %4099 = vmatprep.subr.bf16.mxu0 0
        %4100 = vmatpush1.bf16.msra.mxu0 0
        %4101 = vmatprep.subr.bf16.mxu0 0
        %4102 = vmatpush1.bf16.msra.mxu0 0
        %4103 = vmatprep.subr.bf16.mxu0 0
        %4104 = vmatpush1.bf16.msra.mxu0 0
        %4105 = vmatprep.subr.bf16.mxu0 0
        %4106 = vmatpush1.bf16.msra.mxu0 0
        %4107 = vmatprep.subr.bf16.mxu0 0
        %4108 = vmatpush1.bf16.msra.mxu0 0
        %4109 = vmatprep.mubr.bf16.mxu0 0
        %4110 = vmatmul.mubr.bf16.gmra.mrb[0].mxu0 %v4063
        %v4111 = vpop.f32.mrb[0].mxu0
        %v4112 = vadd.f32 0.0, %v4111
        %v4113 = vpop.f32.mrb[0].mxu0
        %v4114 = vadd.f32 0.0, %v4113
        %v4115 = vpop.f32.mrb[0].mxu0
        %v4116 = vadd.f32 0.0, %v4115
        %v4117 = vpop.f32.mrb[0].mxu0
        %v4118 = vadd.f32 0.0, %v4117
        %4119 = vmatprep.mubr.bf16.mxu0 0
        %4120 = vmatmul.mubr.bf16.gmra.mrb[0].mxu0 %v4066
        %v4121 = vpop.f32.mrb[0].mxu0
        %v4122 = vadd.f32 0.0, %v4121
        %v4123 = vpop.f32.mrb[0].mxu0
        %v4124 = vadd.f32 0.0, %v4123
        %v4125 = vpop.f32.mrb[0].mxu0
        %v4126 = vadd.f32 0.0, %v4125
        %v4127 = vpop.f32.mrb[0].mxu0
        %v4128 = vadd.f32 0.0, %v4127
        %4129 = vmatprep.mubr.bf16.mxu0 0
        %4130 = vmatmul.mubr.bf16.gmra.mrb[0].mxu0 %v4069
        %v4131 = vpop.f32.mrb[0].mxu0
        %v4132 = vadd.f32 0.0, %v4131
        %v4133 = vpop.f32.mrb[0].mxu0
        %v4134 = vadd.f32 0.0, %v4133
        %v4135 = vpop.f32.mrb[0].mxu0
        %v4136 = vadd.f32 0.0, %v4135
        %v4137 = vpop.f32.mrb[0].mxu0
        %v4138 = vadd.f32 0.0, %v4137
        %4139 = vmatprep.mubr.bf16.mxu0 0
        %4140 = vmatmul.mubr.bf16.gmra.mrb[0].mxu0 %v4072
        %v4141 = vpop.f32.mrb[0].mxu0
        %v4142 = vadd.f32 0.0, %v4141
        %v4143 = vpop.f32.mrb[0].mxu0
        %v4144 = vadd.f32 0.0, %v4143
        %v4145 = vpop.f32.mrb[0].mxu0
        %v4146 = vadd.f32 0.0, %v4145
        %v4147 = vpop.f32.mrb[0].mxu0
        %v4148 = vadd.f32 0.0, %v4147
        %4149 = vmatprep.mubr.bf16.mxu0 0
        %4150 = vmatmul.mubr.bf16.gmra.mrb[0].mxu0 %v4075
        %v4151 = vpop.f32.mrb[0].mxu0
        %v4152 = vadd.f32 0.0, %v4151
        %v4153 = vpop.f32.mrb[0].mxu0
        %v4154 = vadd.f32 0.0, %v4153
        %v4155 = vpop.f32.mrb[0].mxu0
        %v4156 = vadd.f32 0.0, %v4155
        %v4157 = vpop.f32.mrb[0].mxu0
        %v4158 = vadd.f32 0.0, %v4157
        %4159 = vdwg.mxu0
        %v4160 = vadd.f32 %v3959, %v4112
        %v4161 = vadd.f32 %v3960, %v4114
        %v4162 = vadd.f32 %v3961, %v4116
        %v4163 = vadd.f32 %v3962, %v4118
        %v4164 = vadd.f32 %v3963, %v4122
        %v4165 = vadd.f32 %v3964, %v4124
        %v4166 = vadd.f32 %v3965, %v4126
        %v4167 = vadd.f32 %v3966, %v4128
        %v4168 = vadd.f32 %v3967, %v4132
        %v4169 = vadd.f32 %v3968, %v4134
        %v4170 = vadd.f32 %v3969, %v4136
        %v4171 = vadd.f32 %v3970, %v4138
        %v4172 = vadd.f32 %v3971, %v4142
        %v4173 = vadd.f32 %v3972, %v4144
        %v4174 = vadd.f32 %v3973, %v4146
        %v4175 = vadd.f32 %v3974, %v4148
        %v4176 = vadd.f32 %v3975, %v4152
        %v4177 = vadd.f32 %v3976, %v4154
        %v4178 = vadd.f32 %v3977, %v4156
        %v4179 = vadd.f32 %v3978, %v4158
        %s4180 = scalar_lea.vmem %s5, 1056
        %v4181 = vld [vmem:[%s4180] sm:$0xff]
        %v4182 = vld [vmem:[%s4180 + $0x8] sm:$0xff]
        %v4183 = vld [vmem:[%s4180 + $0x10] sm:$0xff]
        %v4184 = vld [vmem:[%s4180 + $0x18] sm:$0xff]
        %v4185 = vld [vmem:[%s4180 + $0x20] sm:$0xff]
        %v4186 = vld [vmem:[%s4180 + $0x28] sm:$0xff]
        %v4187 = vld [vmem:[%s4180 + $0x30] sm:$0xff]
        %v4188 = vld [vmem:[%s4180 + $0x38] sm:$0xff]
        %v4189 = vld [vmem:[%s4180 + $0x40] sm:$0xff]
        %v4190 = vld [vmem:[%s4180 + $0x48] sm:$0xff]
        %v4191 = vld [vmem:[%s4180 + $0x50] sm:$0xff]
        %v4192 = vld [vmem:[%s4180 + $0x58] sm:$0xff]
        %vm4193 = vsmask.f32 4352
        %v4194 = vrot.slane %v1973, 3
        %v4195 = vrot.slane %v1969, 4
        %v4196 = vor.u32 %v4194, %v4195
        %v4197 = vrot.slane %v1981, 3
        %v4198 = vrot.slane %v1977, 4
        %v4199 = vor.u32 %v4197, %v4198
        %v4200 = vsel %vm4193, %v4196, %v4199
        %v4201 = vrot.slane %v1989, 3
        %v4202 = vrot.slane %v1985, 4
        %v4203 = vor.u32 %v4201, %v4202
        %v4204 = vsel %vm4193, %v4199, %v4203
        %v4205 = vrot.slane %v1997, 3
        %v4206 = vrot.slane %v1993, 4
        %v4207 = vor.u32 %v4205, %v4206
        %v4208 = vsel %vm4193, %v4203, %v4207
        %v4209 = vrot.slane %v2963, 3
        %v4210 = vrot.slane %v2966, 4
        %v4211 = vor.u32 %v4209, %v4210
        %v4212 = vsel %vm4193, %v4207, %v4211
        %v4225 = vunpack.c.l.b16 %v4181
        %v4226 = vunpack.c.h.b16 %v4181
        %v4227 = vunpack.c.l.b16 %v4182
        %v4228 = vunpack.c.h.b16 %v4182
        %v4229 = vunpack.c.l.b16 %v4183
        %v4230 = vunpack.c.h.b16 %v4183
        %v4231 = vunpack.c.l.b16 %v4184
        %v4232 = vunpack.c.h.b16 %v4184
        %v4233 = vunpack.c.l.b16 %v4185
        %v4234 = vunpack.c.h.b16 %v4185
        %v4235 = vunpack.c.l.b16 %v4186
        %v4236 = vunpack.c.h.b16 %v4186
        %v4237 = vunpack.c.l.b16 %v4187
        %v4238 = vunpack.c.h.b16 %v4187
        %v4239 = vunpack.c.l.b16 %v4188
        %v4240 = vunpack.c.h.b16 %v4188
        %v4241 = vunpack.c.l.b16 %v4189
        %v4242 = vunpack.c.h.b16 %v4189
        %v4243 = vunpack.c.l.b16 %v4190
        %v4244 = vunpack.c.h.b16 %v4190
        %v4245 = vunpack.c.l.b16 %v4191
        %v4246 = vunpack.c.h.b16 %v4191
        %v4247 = vunpack.c.l.b16 %v4192
        %v4248 = vunpack.c.h.b16 %v4192
        %v4249 = vpack.c.b16 %v4227, %v4225
        %v4250 = vpack.c.b16 %v4228, %v4226
        %v4251 = vpack.c.b16 %v4231, %v4229
        %v4252 = vpack.c.b16 %v4232, %v4230
        %v4253 = vpack.c.b16 %v4235, %v4233
        %v4254 = vpack.c.b16 %v4236, %v4234
        %v4255 = vpack.c.b16 %v4239, %v4237
        %v4256 = vpack.c.b16 %v4240, %v4238
        %v4257 = vpack.c.b16 %v4243, %v4241
        %v4258 = vpack.c.b16 %v4244, %v4242
        %v4259 = vpack.c.b16 %v4247, %v4245
        %v4260 = vpack.c.b16 %v4248, %v4246
        %v4274 = vsel %vm797, %v4200, 0
        %v4277 = vsel %vm797, %v4204, 0
        %v4280 = vsel %vm797, %v4208, 0
        %v4283 = vsel %vm797, %v4212, 0
        %v4286 = vsel %vm797, %v4211, 0
        %4288 = vmatprep.subr.bf16.mxu0 %v4250
        %4289 = vmatpush1.bf16.msra.mxu0 %v4249
        %4290 = vmatprep.subr.bf16.mxu0 %v4252
        %4291 = vmatpush1.bf16.msra.mxu0 %v4251
        %4292 = vmatprep.subr.bf16.mxu0 %v4254
        %4293 = vmatpush1.bf16.msra.mxu0 %v4253
        %4294 = vmatprep.subr.bf16.mxu0 %v4256
        %4295 = vmatpush1.bf16.msra.mxu0 %v4255
        %4296 = vmatprep.subr.bf16.mxu0 %v4258
        %4297 = vmatpush1.bf16.msra.mxu0 %v4257
        %4298 = vmatprep.subr.bf16.mxu0 %v4260
        %4299 = vmatpush1.bf16.msra.mxu0 %v4259
        %4300 = vmatprep.subr.bf16.mxu0 0
        %4301 = vmatpush1.bf16.msra.mxu0 0
        %4302 = vmatprep.subr.bf16.mxu0 0
        %4303 = vmatpush1.bf16.msra.mxu0 0
        %4304 = vmatprep.subr.bf16.mxu0 0
        %4305 = vmatpush1.bf16.msra.mxu0 0
        %4306 = vmatprep.subr.bf16.mxu0 0
        %4307 = vmatpush1.bf16.msra.mxu0 0
        %4308 = vmatprep.subr.bf16.mxu0 0
        %4309 = vmatpush1.bf16.msra.mxu0 0
        %4310 = vmatprep.subr.bf16.mxu0 0
        %4311 = vmatpush1.bf16.msra.mxu0 0
        %4312 = vmatprep.subr.bf16.mxu0 0
        %4313 = vmatpush1.bf16.msra.mxu0 0
        %4314 = vmatprep.subr.bf16.mxu0 0
        %4315 = vmatpush1.bf16.msra.mxu0 0
        %4316 = vmatprep.subr.bf16.mxu0 0
        %4317 = vmatpush1.bf16.msra.mxu0 0
        %4318 = vmatprep.subr.bf16.mxu0 0
        %4319 = vmatpush1.bf16.msra.mxu0 0
        %4320 = vmatprep.mubr.bf16.mxu0 0
        %4321 = vmatmul.mubr.bf16.gmra.mrb[0].mxu0 %v4274
        %v4322 = vpop.f32.mrb[0].mxu0
        %v4323 = vadd.f32 0.0, %v4322
        %v4324 = vpop.f32.mrb[0].mxu0
        %v4325 = vadd.f32 0.0, %v4324
        %v4326 = vpop.f32.mrb[0].mxu0
        %v4327 = vadd.f32 0.0, %v4326
        %v4328 = vpop.f32.mrb[0].mxu0
        %v4329 = vadd.f32 0.0, %v4328
        %4330 = vmatprep.mubr.bf16.mxu0 0
        %4331 = vmatmul.mubr.bf16.gmra.mrb[0].mxu0 %v4277
        %v4332 = vpop.f32.mrb[0].mxu0
        %v4333 = vadd.f32 0.0, %v4332
        %v4334 = vpop.f32.mrb[0].mxu0
        %v4335 = vadd.f32 0.0, %v4334
        %v4336 = vpop.f32.mrb[0].mxu0
        %v4337 = vadd.f32 0.0, %v4336
        %v4338 = vpop.f32.mrb[0].mxu0
        %v4339 = vadd.f32 0.0, %v4338
        %4340 = vmatprep.mubr.bf16.mxu0 0
        %4341 = vmatmul.mubr.bf16.gmra.mrb[0].mxu0 %v4280
        %v4342 = vpop.f32.mrb[0].mxu0
        %v4343 = vadd.f32 0.0, %v4342
        %v4344 = vpop.f32.mrb[0].mxu0
        %v4345 = vadd.f32 0.0, %v4344
        %v4346 = vpop.f32.mrb[0].mxu0
        %v4347 = vadd.f32 0.0, %v4346
        %v4348 = vpop.f32.mrb[0].mxu0
        %v4349 = vadd.f32 0.0, %v4348
        %4350 = vmatprep.mubr.bf16.mxu0 0
        %4351 = vmatmul.mubr.bf16.gmra.mrb[0].mxu0 %v4283
        %v4352 = vpop.f32.mrb[0].mxu0
        %v4353 = vadd.f32 0.0, %v4352
        %v4354 = vpop.f32.mrb[0].mxu0
        %v4355 = vadd.f32 0.0, %v4354
        %v4356 = vpop.f32.mrb[0].mxu0
        %v4357 = vadd.f32 0.0, %v4356
        %v4358 = vpop.f32.mrb[0].mxu0
        %v4359 = vadd.f32 0.0, %v4358
        %4360 = vmatprep.mubr.bf16.mxu0 0
        %4361 = vmatmul.mubr.bf16.gmra.mrb[0].mxu0 %v4286
        %v4362 = vpop.f32.mrb[0].mxu0
        %v4363 = vadd.f32 0.0, %v4362
        %v4364 = vpop.f32.mrb[0].mxu0
        %v4365 = vadd.f32 0.0, %v4364
        %v4366 = vpop.f32.mrb[0].mxu0
        %v4367 = vadd.f32 0.0, %v4366
        %v4368 = vpop.f32.mrb[0].mxu0
        %v4369 = vadd.f32 0.0, %v4368
        %4370 = vdwg.mxu0
        %v4371 = vadd.f32 %v4160, %v4323
        %v4372 = vadd.f32 %v4161, %v4325
        %v4373 = vadd.f32 %v4162, %v4327
        %v4374 = vadd.f32 %v4163, %v4329
        %v4375 = vadd.f32 %v4164, %v4333
        %v4376 = vadd.f32 %v4165, %v4335
        %v4377 = vadd.f32 %v4166, %v4337
        %v4378 = vadd.f32 %v4167, %v4339
        %v4379 = vadd.f32 %v4168, %v4343
        %v4380 = vadd.f32 %v4169, %v4345
        %v4381 = vadd.f32 %v4170, %v4347
        %v4382 = vadd.f32 %v4171, %v4349
        %v4383 = vadd.f32 %v4172, %v4353
        %v4384 = vadd.f32 %v4173, %v4355
        %v4385 = vadd.f32 %v4174, %v4357
        %v4386 = vadd.f32 %v4175, %v4359
        %v4387 = vadd.f32 %v4176, %v4363
        %v4388 = vadd.f32 %v4177, %v4365
        %v4389 = vadd.f32 %v4178, %v4367
        %v4390 = vadd.f32 %v4179, %v4369
        %s4391 = scalar_lea.vmem %s5, 1152
        %v4392 = vld [vmem:[%s4391] sm:$0xff]
        %v4393 = vld [vmem:[%s4391 + $0x8] sm:$0xff]
        %v4394 = vld [vmem:[%s4391 + $0x10] sm:$0xff]
        %v4395 = vld [vmem:[%s4391 + $0x18] sm:$0xff]
        %v4396 = vld [vmem:[%s4391 + $0x20] sm:$0xff]
        %v4397 = vld [vmem:[%s4391 + $0x28] sm:$0xff]
        %v4398 = vld [vmem:[%s4391 + $0x30] sm:$0xff]
        %v4399 = vld [vmem:[%s4391 + $0x38] sm:$0xff]
        %v4400 = vld [vmem:[%s4391 + $0x40] sm:$0xff]
        %v4401 = vld [vmem:[%s4391 + $0x48] sm:$0xff]
        %v4402 = vld [vmem:[%s4391 + $0x50] sm:$0xff]
        %v4403 = vld [vmem:[%s4391 + $0x58] sm:$0xff]
        %vm4405 = vcmask 1043456
        %v4406 = vrot.slane %v1928, 4
        %v4407 = vrot.slane %v1929, 4
        %v4408 = vsel %vm4405, %v4406, %v4407
        %v4409 = vrot.slane %v1930, 4
        %v4410 = vsel %vm4405, %v4407, %v4409
        %v4411 = vrot.slane %v1931, 4
        %v4412 = vsel %vm4405, %v4409, %v4411
        %v4413 = vrot.slane %v1932, 4
        %v4414 = vsel %vm4405, %v4411, %v4413
        %v4415 = vrot.slane %v1933, 4
        %v4416 = vsel %vm4405, %v4413, %v4415
        %v4429 = vunpack.c.l.b16 %v4392
        %v4430 = vunpack.c.h.b16 %v4392
        %v4431 = vunpack.c.l.b16 %v4393
        %v4432 = vunpack.c.h.b16 %v4393
        %v4433 = vunpack.c.l.b16 %v4394
        %v4434 = vunpack.c.h.b16 %v4394
        %v4435 = vunpack.c.l.b16 %v4395
        %v4436 = vunpack.c.h.b16 %v4395
        %v4437 = vunpack.c.l.b16 %v4396
        %v4438 = vunpack.c.h.b16 %v4396
        %v4439 = vunpack.c.l.b16 %v4397
        %v4440 = vunpack.c.h.b16 %v4397
        %v4441 = vunpack.c.l.b16 %v4398
        %v4442 = vunpack.c.h.b16 %v4398
        %v4443 = vunpack.c.l.b16 %v4399
        %v4444 = vunpack.c.h.b16 %v4399
        %v4445 = vunpack.c.l.b16 %v4400
        %v4446 = vunpack.c.h.b16 %v4400
        %v4447 = vunpack.c.l.b16 %v4401
        %v4448 = vunpack.c.h.b16 %v4401
        %v4449 = vunpack.c.l.b16 %v4402
        %v4450 = vunpack.c.h.b16 %v4402
        %v4451 = vunpack.c.l.b16 %v4403
        %v4452 = vunpack.c.h.b16 %v4403
        %v4453 = vpack.c.b16 %v4431, %v4429
        %v4454 = vpack.c.b16 %v4432, %v4430
        %v4455 = vpack.c.b16 %v4435, %v4433
        %v4456 = vpack.c.b16 %v4436, %v4434
        %v4457 = vpack.c.b16 %v4439, %v4437
        %v4458 = vpack.c.b16 %v4440, %v4438
        %v4459 = vpack.c.b16 %v4443, %v4441
        %v4460 = vpack.c.b16 %v4444, %v4442
        %v4461 = vpack.c.b16 %v4447, %v4445
        %v4462 = vpack.c.b16 %v4448, %v4446
        %v4463 = vpack.c.b16 %v4451, %v4449
        %v4464 = vpack.c.b16 %v4452, %v4450
        %v4478 = vsel %vm797, %v4408, 0
        %v4481 = vsel %vm797, %v4410, 0
        %v4484 = vsel %vm797, %v4412, 0
        %v4487 = vsel %vm797, %v4414, 0
        %v4490 = vsel %vm797, %v4416, 0
        %4492 = vmatprep.subr.bf16.mxu0 %v4454
        %4493 = vmatpush1.bf16.msra.mxu0 %v4453
        %4494 = vmatprep.subr.bf16.mxu0 %v4456
        %4495 = vmatpush1.bf16.msra.mxu0 %v4455
        %4496 = vmatprep.subr.bf16.mxu0 %v4458
        %4497 = vmatpush1.bf16.msra.mxu0 %v4457
        %4498 = vmatprep.subr.bf16.mxu0 %v4460
        %4499 = vmatpush1.bf16.msra.mxu0 %v4459
        %4500 = vmatprep.subr.bf16.mxu0 %v4462
        %4501 = vmatpush1.bf16.msra.mxu0 %v4461
        %4502 = vmatprep.subr.bf16.mxu0 %v4464
        %4503 = vmatpush1.bf16.msra.mxu0 %v4463
        %4504 = vmatprep.subr.bf16.mxu0 0
        %4505 = vmatpush1.bf16.msra.mxu0 0
        %4506 = vmatprep.subr.bf16.mxu0 0
        %4507 = vmatpush1.bf16.msra.mxu0 0
        %4508 = vmatprep.subr.bf16.mxu0 0
        %4509 = vmatpush1.bf16.msra.mxu0 0
        %4510 = vmatprep.subr.bf16.mxu0 0
        %4511 = vmatpush1.bf16.msra.mxu0 0
        %4512 = vmatprep.subr.bf16.mxu0 0
        %4513 = vmatpush1.bf16.msra.mxu0 0
        %4514 = vmatprep.subr.bf16.mxu0 0
        %4515 = vmatpush1.bf16.msra.mxu0 0
        %4516 = vmatprep.subr.bf16.mxu0 0
        %4517 = vmatpush1.bf16.msra.mxu0 0
        %4518 = vmatprep.subr.bf16.mxu0 0
        %4519 = vmatpush1.bf16.msra.mxu0 0
        %4520 = vmatprep.subr.bf16.mxu0 0
        %4521 = vmatpush1.bf16.msra.mxu0 0
        %4522 = vmatprep.subr.bf16.mxu0 0
        %4523 = vmatpush1.bf16.msra.mxu0 0
        %4524 = vmatprep.mubr.bf16.mxu0 0
        %4525 = vmatmul.mubr.bf16.gmra.mrb[0].mxu0 %v4478
        %v4526 = vpop.f32.mrb[0].mxu0
        %v4527 = vadd.f32 0.0, %v4526
        %v4528 = vpop.f32.mrb[0].mxu0
        %v4529 = vadd.f32 0.0, %v4528
        %v4530 = vpop.f32.mrb[0].mxu0
        %v4531 = vadd.f32 0.0, %v4530
        %v4532 = vpop.f32.mrb[0].mxu0
        %v4533 = vadd.f32 0.0, %v4532
        %4534 = vmatprep.mubr.bf16.mxu0 0
        %4535 = vmatmul.mubr.bf16.gmra.mrb[0].mxu0 %v4481
        %v4536 = vpop.f32.mrb[0].mxu0
        %v4537 = vadd.f32 0.0, %v4536
        %v4538 = vpop.f32.mrb[0].mxu0
        %v4539 = vadd.f32 0.0, %v4538
        %v4540 = vpop.f32.mrb[0].mxu0
        %v4541 = vadd.f32 0.0, %v4540
        %v4542 = vpop.f32.mrb[0].mxu0
        %v4543 = vadd.f32 0.0, %v4542
        %4544 = vmatprep.mubr.bf16.mxu0 0
        %4545 = vmatmul.mubr.bf16.gmra.mrb[0].mxu0 %v4484
        %v4546 = vpop.f32.mrb[0].mxu0
        %v4547 = vadd.f32 0.0, %v4546
        %v4548 = vpop.f32.mrb[0].mxu0
        %v4549 = vadd.f32 0.0, %v4548
        %v4550 = vpop.f32.mrb[0].mxu0
        %v4551 = vadd.f32 0.0, %v4550
        %v4552 = vpop.f32.mrb[0].mxu0
        %v4553 = vadd.f32 0.0, %v4552
        %4554 = vmatprep.mubr.bf16.mxu0 0
        %4555 = vmatmul.mubr.bf16.gmra.mrb[0].mxu0 %v4487
        %v4556 = vpop.f32.mrb[0].mxu0
        %v4557 = vadd.f32 0.0, %v4556
        %v4558 = vpop.f32.mrb[0].mxu0
        %v4559 = vadd.f32 0.0, %v4558
        %v4560 = vpop.f32.mrb[0].mxu0
        %v4561 = vadd.f32 0.0, %v4560
        %v4562 = vpop.f32.mrb[0].mxu0
        %v4563 = vadd.f32 0.0, %v4562
        %4564 = vmatprep.mubr.bf16.mxu0 0
        %4565 = vmatmul.mubr.bf16.gmra.mrb[0].mxu0 %v4490
        %v4566 = vpop.f32.mrb[0].mxu0
        %v4567 = vadd.f32 0.0, %v4566
        %v4568 = vpop.f32.mrb[0].mxu0
        %v4569 = vadd.f32 0.0, %v4568
        %v4570 = vpop.f32.mrb[0].mxu0
        %v4571 = vadd.f32 0.0, %v4570
        %v4572 = vpop.f32.mrb[0].mxu0
        %v4573 = vadd.f32 0.0, %v4572
        %4574 = vdwg.mxu0
        %v4575 = vadd.f32 %v4371, %v4527
        %v4576 = vadd.f32 %v4372, %v4529
        %v4577 = vadd.f32 %v4373, %v4531
        %v4578 = vadd.f32 %v4374, %v4533
        %v4579 = vadd.f32 %v4375, %v4537
        %v4580 = vadd.f32 %v4376, %v4539
        %v4581 = vadd.f32 %v4377, %v4541
        %v4582 = vadd.f32 %v4378, %v4543
        %v4583 = vadd.f32 %v4379, %v4547
        %v4584 = vadd.f32 %v4380, %v4549
        %v4585 = vadd.f32 %v4381, %v4551
        %v4586 = vadd.f32 %v4382, %v4553
        %v4587 = vadd.f32 %v4383, %v4557
        %v4588 = vadd.f32 %v4384, %v4559
        %v4589 = vadd.f32 %v4385, %v4561
        %v4590 = vadd.f32 %v4386, %v4563
        %v4591 = vadd.f32 %v4387, %v4567
        %v4592 = vadd.f32 %v4388, %v4569
        %v4593 = vadd.f32 %v4389, %v4571
        %v4594 = vadd.f32 %v4390, %v4573
        %s4595 = scalar_lea.vmem %s5, 1248
        %v4596 = vld [vmem:[%s4595] sm:$0xff]
        %v4597 = vld [vmem:[%s4595 + $0x8] sm:$0xff]
        %v4598 = vld [vmem:[%s4595 + $0x10] sm:$0xff]
        %v4599 = vld [vmem:[%s4595 + $0x18] sm:$0xff]
        %v4600 = vld [vmem:[%s4595 + $0x20] sm:$0xff]
        %v4601 = vld [vmem:[%s4595 + $0x28] sm:$0xff]
        %v4602 = vld [vmem:[%s4595 + $0x30] sm:$0xff]
        %v4603 = vld [vmem:[%s4595 + $0x38] sm:$0xff]
        %v4604 = vld [vmem:[%s4595 + $0x40] sm:$0xff]
        %v4605 = vld [vmem:[%s4595 + $0x48] sm:$0xff]
        %v4606 = vld [vmem:[%s4595 + $0x50] sm:$0xff]
        %v4607 = vld [vmem:[%s4595 + $0x58] sm:$0xff]
        %vm4608 = vsmask.f32 3328
        %v4609 = vrot.slane %v1973, 4
        %v4610 = vrot.slane %v1969, 5
        %v4611 = vor.u32 %v4609, %v4610
        %v4612 = vrot.slane %v1981, 4
        %v4613 = vrot.slane %v1977, 5
        %v4614 = vor.u32 %v4612, %v4613
        %v4615 = vsel %vm4608, %v4611, %v4614
        %v4616 = vrot.slane %v1989, 4
        %v4617 = vrot.slane %v1985, 5
        %v4618 = vor.u32 %v4616, %v4617
        %v4619 = vsel %vm4608, %v4614, %v4618
        %v4620 = vrot.slane %v1997, 4
        %v4621 = vrot.slane %v1993, 5
        %v4622 = vor.u32 %v4620, %v4621
        %v4623 = vsel %vm4608, %v4618, %v4622
        %v4624 = vrot.slane %v2963, 4
        %v4625 = vrot.slane %v2966, 5
        %v4626 = vor.u32 %v4624, %v4625
        %v4627 = vsel %vm4608, %v4622, %v4626
        %v4629 = vshrl.u32 %v1933, 16
        %v4631 = vrot.slane %v4629, 4
        %v4632 = vshll.u32 %v1933, 16
        %v4634 = vrot.slane %v4632, 5
        %v4635 = vor.u32 %v4631, %v4634
        %v4636 = vsel %vm4608, %v4626, %v4635
        %v4649 = vunpack.c.l.b16 %v4596
        %v4650 = vunpack.c.h.b16 %v4596
        %v4651 = vunpack.c.l.b16 %v4597
        %v4652 = vunpack.c.h.b16 %v4597
        %v4653 = vunpack.c.l.b16 %v4598
        %v4654 = vunpack.c.h.b16 %v4598
        %v4655 = vunpack.c.l.b16 %v4599
        %v4656 = vunpack.c.h.b16 %v4599
        %v4657 = vunpack.c.l.b16 %v4600
        %v4658 = vunpack.c.h.b16 %v4600
        %v4659 = vunpack.c.l.b16 %v4601
        %v4660 = vunpack.c.h.b16 %v4601
        %v4661 = vunpack.c.l.b16 %v4602
        %v4662 = vunpack.c.h.b16 %v4602
        %v4663 = vunpack.c.l.b16 %v4603
        %v4664 = vunpack.c.h.b16 %v4603
        %v4665 = vunpack.c.l.b16 %v4604
        %v4666 = vunpack.c.h.b16 %v4604
        %v4667 = vunpack.c.l.b16 %v4605
        %v4668 = vunpack.c.h.b16 %v4605
        %v4669 = vunpack.c.l.b16 %v4606
        %v4670 = vunpack.c.h.b16 %v4606
        %v4671 = vunpack.c.l.b16 %v4607
        %v4672 = vunpack.c.h.b16 %v4607
        %v4673 = vpack.c.b16 %v4651, %v4649
        %v4674 = vpack.c.b16 %v4652, %v4650
        %v4675 = vpack.c.b16 %v4655, %v4653
        %v4676 = vpack.c.b16 %v4656, %v4654
        %v4677 = vpack.c.b16 %v4659, %v4657
        %v4678 = vpack.c.b16 %v4660, %v4658
        %v4679 = vpack.c.b16 %v4663, %v4661
        %v4680 = vpack.c.b16 %v4664, %v4662
        %v4681 = vpack.c.b16 %v4667, %v4665
        %v4682 = vpack.c.b16 %v4668, %v4666
        %v4683 = vpack.c.b16 %v4671, %v4669
        %v4684 = vpack.c.b16 %v4672, %v4670
        %v4698 = vsel %vm797, %v4615, 0
        %v4701 = vsel %vm797, %v4619, 0
        %v4704 = vsel %vm797, %v4623, 0
        %v4707 = vsel %vm797, %v4627, 0
        %v4710 = vsel %vm797, %v4636, 0
        %4712 = vmatprep.subr.bf16.mxu0 %v4674
        %4713 = vmatpush1.bf16.msra.mxu0 %v4673
        %4714 = vmatprep.subr.bf16.mxu0 %v4676
        %4715 = vmatpush1.bf16.msra.mxu0 %v4675
        %4716 = vmatprep.subr.bf16.mxu0 %v4678
        %4717 = vmatpush1.bf16.msra.mxu0 %v4677
        %4718 = vmatprep.subr.bf16.mxu0 %v4680
        %4719 = vmatpush1.bf16.msra.mxu0 %v4679
        %4720 = vmatprep.subr.bf16.mxu0 %v4682
        %4721 = vmatpush1.bf16.msra.mxu0 %v4681
        %4722 = vmatprep.subr.bf16.mxu0 %v4684
        %4723 = vmatpush1.bf16.msra.mxu0 %v4683
        %4724 = vmatprep.subr.bf16.mxu0 0
        %4725 = vmatpush1.bf16.msra.mxu0 0
        %4726 = vmatprep.subr.bf16.mxu0 0
        %4727 = vmatpush1.bf16.msra.mxu0 0
        %4728 = vmatprep.subr.bf16.mxu0 0
        %4729 = vmatpush1.bf16.msra.mxu0 0
        %4730 = vmatprep.subr.bf16.mxu0 0
        %4731 = vmatpush1.bf16.msra.mxu0 0
        %4732 = vmatprep.subr.bf16.mxu0 0
        %4733 = vmatpush1.bf16.msra.mxu0 0
        %4734 = vmatprep.subr.bf16.mxu0 0
        %4735 = vmatpush1.bf16.msra.mxu0 0
        %4736 = vmatprep.subr.bf16.mxu0 0
        %4737 = vmatpush1.bf16.msra.mxu0 0
        %4738 = vmatprep.subr.bf16.mxu0 0
        %4739 = vmatpush1.bf16.msra.mxu0 0
        %4740 = vmatprep.subr.bf16.mxu0 0
        %4741 = vmatpush1.bf16.msra.mxu0 0
        %4742 = vmatprep.subr.bf16.mxu0 0
        %4743 = vmatpush1.bf16.msra.mxu0 0
        %4744 = vmatprep.mubr.bf16.mxu0 0
        %4745 = vmatmul.mubr.bf16.gmra.mrb[0].mxu0 %v4698
        %v4746 = vpop.f32.mrb[0].mxu0
        %v4747 = vadd.f32 0.0, %v4746
        %v4748 = vpop.f32.mrb[0].mxu0
        %v4749 = vadd.f32 0.0, %v4748
        %v4750 = vpop.f32.mrb[0].mxu0
        %v4751 = vadd.f32 0.0, %v4750
        %v4752 = vpop.f32.mrb[0].mxu0
        %v4753 = vadd.f32 0.0, %v4752
        %4754 = vmatprep.mubr.bf16.mxu0 0
        %4755 = vmatmul.mubr.bf16.gmra.mrb[0].mxu0 %v4701
        %v4756 = vpop.f32.mrb[0].mxu0
        %v4757 = vadd.f32 0.0, %v4756
        %v4758 = vpop.f32.mrb[0].mxu0
        %v4759 = vadd.f32 0.0, %v4758
        %v4760 = vpop.f32.mrb[0].mxu0
        %v4761 = vadd.f32 0.0, %v4760
        %v4762 = vpop.f32.mrb[0].mxu0
        %v4763 = vadd.f32 0.0, %v4762
        %4764 = vmatprep.mubr.bf16.mxu0 0
        %4765 = vmatmul.mubr.bf16.gmra.mrb[0].mxu0 %v4704
        %v4766 = vpop.f32.mrb[0].mxu0
        %v4767 = vadd.f32 0.0, %v4766
        %v4768 = vpop.f32.mrb[0].mxu0
        %v4769 = vadd.f32 0.0, %v4768
        %v4770 = vpop.f32.mrb[0].mxu0
        %v4771 = vadd.f32 0.0, %v4770
        %v4772 = vpop.f32.mrb[0].mxu0
        %v4773 = vadd.f32 0.0, %v4772
        %4774 = vmatprep.mubr.bf16.mxu0 0
        %4775 = vmatmul.mubr.bf16.gmra.mrb[0].mxu0 %v4707
        %v4776 = vpop.f32.mrb[0].mxu0
        %v4777 = vadd.f32 0.0, %v4776
        %v4778 = vpop.f32.mrb[0].mxu0
        %v4779 = vadd.f32 0.0, %v4778
        %v4780 = vpop.f32.mrb[0].mxu0
        %v4781 = vadd.f32 0.0, %v4780
        %v4782 = vpop.f32.mrb[0].mxu0
        %v4783 = vadd.f32 0.0, %v4782
        %4784 = vmatprep.mubr.bf16.mxu0 0
        %4785 = vmatmul.mubr.bf16.gmra.mrb[0].mxu0 %v4710
        %v4786 = vpop.f32.mrb[0].mxu0
        %v4787 = vadd.f32 0.0, %v4786
        %v4788 = vpop.f32.mrb[0].mxu0
        %v4789 = vadd.f32 0.0, %v4788
        %v4790 = vpop.f32.mrb[0].mxu0
        %v4791 = vadd.f32 0.0, %v4790
        %v4792 = vpop.f32.mrb[0].mxu0
        %v4793 = vadd.f32 0.0, %v4792
        %4794 = vdwg.mxu0
        %v4795 = vadd.f32 %v4575, %v4747
        %v4796 = vadd.f32 %v4576, %v4749
        %v4797 = vadd.f32 %v4577, %v4751
        %v4798 = vadd.f32 %v4578, %v4753
        %v4799 = vadd.f32 %v4579, %v4757
        %v4800 = vadd.f32 %v4580, %v4759
        %v4801 = vadd.f32 %v4581, %v4761
        %v4802 = vadd.f32 %v4582, %v4763
        %v4803 = vadd.f32 %v4583, %v4767
        %v4804 = vadd.f32 %v4584, %v4769
        %v4805 = vadd.f32 %v4585, %v4771
        %v4806 = vadd.f32 %v4586, %v4773
        %v4807 = vadd.f32 %v4587, %v4777
        %v4808 = vadd.f32 %v4588, %v4779
        %v4809 = vadd.f32 %v4589, %v4781
        %v4810 = vadd.f32 %v4590, %v4783
        %v4811 = vadd.f32 %v4591, %v4787
        %v4812 = vadd.f32 %v4592, %v4789
        %v4813 = vadd.f32 %v4593, %v4791
        %v4814 = vadd.f32 %v4594, %v4793
        %s4815 = scalar_lea.vmem %s5, 1344
        %v4816 = vld [vmem:[%s4815] sm:$0xff]
        %v4817 = vld [vmem:[%s4815 + $0x8] sm:$0xff]
        %v4818 = vld [vmem:[%s4815 + $0x10] sm:$0xff]
        %v4819 = vld [vmem:[%s4815 + $0x18] sm:$0xff]
        %v4820 = vld [vmem:[%s4815 + $0x20] sm:$0xff]
        %v4821 = vld [vmem:[%s4815 + $0x28] sm:$0xff]
        %v4822 = vld [vmem:[%s4815 + $0x30] sm:$0xff]
        %v4823 = vld [vmem:[%s4815 + $0x38] sm:$0xff]
        %v4824 = vld [vmem:[%s4815 + $0x40] sm:$0xff]
        %v4825 = vld [vmem:[%s4815 + $0x48] sm:$0xff]
        %v4826 = vld [vmem:[%s4815 + $0x50] sm:$0xff]
        %v4827 = vld [vmem:[%s4815 + $0x58] sm:$0xff]
        %vm4828 = vcmask 1042432
        %v4829 = vrot.slane %v1928, 5
        %v4830 = vrot.slane %v1929, 5
        %v4831 = vsel %vm4828, %v4829, %v4830
        %v4832 = vrot.slane %v1930, 5
        %v4833 = vsel %vm4828, %v4830, %v4832
        %v4834 = vrot.slane %v1931, 5
        %v4835 = vsel %vm4828, %v4832, %v4834
        %v4836 = vrot.slane %v1932, 5
        %v4837 = vsel %vm4828, %v4834, %v4836
        %v4838 = vrot.slane %v1933, 5
        %v4839 = vsel %vm4828, %v4836, %v4838
        %v4852 = vunpack.c.l.b16 %v4816
        %v4853 = vunpack.c.h.b16 %v4816
        %v4854 = vunpack.c.l.b16 %v4817
        %v4855 = vunpack.c.h.b16 %v4817
        %v4856 = vunpack.c.l.b16 %v4818
        %v4857 = vunpack.c.h.b16 %v4818
        %v4858 = vunpack.c.l.b16 %v4819
        %v4859 = vunpack.c.h.b16 %v4819
        %v4860 = vunpack.c.l.b16 %v4820
        %v4861 = vunpack.c.h.b16 %v4820
        %v4862 = vunpack.c.l.b16 %v4821
        %v4863 = vunpack.c.h.b16 %v4821
        %v4864 = vunpack.c.l.b16 %v4822
        %v4865 = vunpack.c.h.b16 %v4822
        %v4866 = vunpack.c.l.b16 %v4823
        %v4867 = vunpack.c.h.b16 %v4823
        %v4868 = vunpack.c.l.b16 %v4824
        %v4869 = vunpack.c.h.b16 %v4824
        %v4870 = vunpack.c.l.b16 %v4825
        %v4871 = vunpack.c.h.b16 %v4825
        %v4872 = vunpack.c.l.b16 %v4826
        %v4873 = vunpack.c.h.b16 %v4826
        %v4874 = vunpack.c.l.b16 %v4827
        %v4875 = vunpack.c.h.b16 %v4827
        %v4876 = vpack.c.b16 %v4854, %v4852
        %v4877 = vpack.c.b16 %v4855, %v4853
        %v4878 = vpack.c.b16 %v4858, %v4856
        %v4879 = vpack.c.b16 %v4859, %v4857
        %v4880 = vpack.c.b16 %v4862, %v4860
        %v4881 = vpack.c.b16 %v4863, %v4861
        %v4882 = vpack.c.b16 %v4866, %v4864
        %v4883 = vpack.c.b16 %v4867, %v4865
        %v4884 = vpack.c.b16 %v4870, %v4868
        %v4885 = vpack.c.b16 %v4871, %v4869
        %v4886 = vpack.c.b16 %v4874, %v4872
        %v4887 = vpack.c.b16 %v4875, %v4873
        %v4901 = vsel %vm797, %v4831, 0
        %v4904 = vsel %vm797, %v4833, 0
        %v4907 = vsel %vm797, %v4835, 0
        %v4910 = vsel %vm797, %v4837, 0
        %v4913 = vsel %vm797, %v4839, 0
        %4915 = vmatprep.subr.bf16.mxu0 %v4877
        %4916 = vmatpush1.bf16.msra.mxu0 %v4876
        %4917 = vmatprep.subr.bf16.mxu0 %v4879
        %4918 = vmatpush1.bf16.msra.mxu0 %v4878
        %4919 = vmatprep.subr.bf16.mxu0 %v4881
        %4920 = vmatpush1.bf16.msra.mxu0 %v4880
        %4921 = vmatprep.subr.bf16.mxu0 %v4883
        %4922 = vmatpush1.bf16.msra.mxu0 %v4882
        %4923 = vmatprep.subr.bf16.mxu0 %v4885
        %4924 = vmatpush1.bf16.msra.mxu0 %v4884
        %4925 = vmatprep.subr.bf16.mxu0 %v4887
        %4926 = vmatpush1.bf16.msra.mxu0 %v4886
        %4927 = vmatprep.subr.bf16.mxu0 0
        %4928 = vmatpush1.bf16.msra.mxu0 0
        %4929 = vmatprep.subr.bf16.mxu0 0
        %4930 = vmatpush1.bf16.msra.mxu0 0
        %4931 = vmatprep.subr.bf16.mxu0 0
        %4932 = vmatpush1.bf16.msra.mxu0 0
        %4933 = vmatprep.subr.bf16.mxu0 0
        %4934 = vmatpush1.bf16.msra.mxu0 0
        %4935 = vmatprep.subr.bf16.mxu0 0
        %4936 = vmatpush1.bf16.msra.mxu0 0
        %4937 = vmatprep.subr.bf16.mxu0 0
        %4938 = vmatpush1.bf16.msra.mxu0 0
        %4939 = vmatprep.subr.bf16.mxu0 0
        %4940 = vmatpush1.bf16.msra.mxu0 0
        %4941 = vmatprep.subr.bf16.mxu0 0
        %4942 = vmatpush1.bf16.msra.mxu0 0
        %4943 = vmatprep.subr.bf16.mxu0 0
        %4944 = vmatpush1.bf16.msra.mxu0 0
        %4945 = vmatprep.subr.bf16.mxu0 0
        %4946 = vmatpush1.bf16.msra.mxu0 0
        %4947 = vmatprep.mubr.bf16.mxu0 0
        %4948 = vmatmul.mubr.bf16.gmra.mrb[0].mxu0 %v4901
        %v4949 = vpop.f32.mrb[0].mxu0
        %v4950 = vadd.f32 0.0, %v4949
        %v4951 = vpop.f32.mrb[0].mxu0
        %v4952 = vadd.f32 0.0, %v4951
        %v4953 = vpop.f32.mrb[0].mxu0
        %v4954 = vadd.f32 0.0, %v4953
        %v4955 = vpop.f32.mrb[0].mxu0
        %v4956 = vadd.f32 0.0, %v4955
        %4957 = vmatprep.mubr.bf16.mxu0 0
        %4958 = vmatmul.mubr.bf16.gmra.mrb[0].mxu0 %v4904
        %v4959 = vpop.f32.mrb[0].mxu0
        %v4960 = vadd.f32 0.0, %v4959
        %v4961 = vpop.f32.mrb[0].mxu0
        %v4962 = vadd.f32 0.0, %v4961
        %v4963 = vpop.f32.mrb[0].mxu0
        %v4964 = vadd.f32 0.0, %v4963
        %v4965 = vpop.f32.mrb[0].mxu0
        %v4966 = vadd.f32 0.0, %v4965
        %4967 = vmatprep.mubr.bf16.mxu0 0
        %4968 = vmatmul.mubr.bf16.gmra.mrb[0].mxu0 %v4907
        %v4969 = vpop.f32.mrb[0].mxu0
        %v4970 = vadd.f32 0.0, %v4969
        %v4971 = vpop.f32.mrb[0].mxu0
        %v4972 = vadd.f32 0.0, %v4971
        %v4973 = vpop.f32.mrb[0].mxu0
        %v4974 = vadd.f32 0.0, %v4973
        %v4975 = vpop.f32.mrb[0].mxu0
        %v4976 = vadd.f32 0.0, %v4975
        %4977 = vmatprep.mubr.bf16.mxu0 0
        %4978 = vmatmul.mubr.bf16.gmra.mrb[0].mxu0 %v4910
        %v4979 = vpop.f32.mrb[0].mxu0
        %v4980 = vadd.f32 0.0, %v4979
        %v4981 = vpop.f32.mrb[0].mxu0
        %v4982 = vadd.f32 0.0, %v4981
        %v4983 = vpop.f32.mrb[0].mxu0
        %v4984 = vadd.f32 0.0, %v4983
        %v4985 = vpop.f32.mrb[0].mxu0
        %v4986 = vadd.f32 0.0, %v4985
        %4987 = vmatprep.mubr.bf16.mxu0 0
        %4988 = vmatmul.mubr.bf16.gmra.mrb[0].mxu0 %v4913
        %v4989 = vpop.f32.mrb[0].mxu0
        %v4990 = vadd.f32 0.0, %v4989
        %v4991 = vpop.f32.mrb[0].mxu0
        %v4992 = vadd.f32 0.0, %v4991
        %v4993 = vpop.f32.mrb[0].mxu0
        %v4994 = vadd.f32 0.0, %v4993
        %v4995 = vpop.f32.mrb[0].mxu0
        %v4996 = vadd.f32 0.0, %v4995
        %4997 = vdwg.mxu0
        %v4998 = vadd.f32 %v4795, %v4950
        %v4999 = vadd.f32 %v4796, %v4952
        %v5000 = vadd.f32 %v4797, %v4954
        %v5001 = vadd.f32 %v4798, %v4956
        %v5002 = vadd.f32 %v4799, %v4960
        %v5003 = vadd.f32 %v4800, %v4962
        %v5004 = vadd.f32 %v4801, %v4964
        %v5005 = vadd.f32 %v4802, %v4966
        %v5006 = vadd.f32 %v4803, %v4970
        %v5007 = vadd.f32 %v4804, %v4972
        %v5008 = vadd.f32 %v4805, %v4974
        %v5009 = vadd.f32 %v4806, %v4976
        %v5010 = vadd.f32 %v4807, %v4980
        %v5011 = vadd.f32 %v4808, %v4982
        %v5012 = vadd.f32 %v4809, %v4984
        %v5013 = vadd.f32 %v4810, %v4986
        %v5014 = vadd.f32 %v4811, %v4990
        %v5015 = vadd.f32 %v4812, %v4992
        %v5016 = vadd.f32 %v4813, %v4994
        %v5017 = vadd.f32 %v4814, %v4996
        %s5018 = scalar_lea.vmem %s5, 1440
        %v5019 = vld [vmem:[%s5018] sm:$0xff]
        %v5020 = vld [vmem:[%s5018 + $0x8] sm:$0xff]
        %v5021 = vld [vmem:[%s5018 + $0x10] sm:$0xff]
        %v5022 = vld [vmem:[%s5018 + $0x18] sm:$0xff]
        %v5023 = vld [vmem:[%s5018 + $0x20] sm:$0xff]
        %v5024 = vld [vmem:[%s5018 + $0x28] sm:$0xff]
        %v5025 = vld [vmem:[%s5018 + $0x30] sm:$0xff]
        %v5026 = vld [vmem:[%s5018 + $0x38] sm:$0xff]
        %v5027 = vld [vmem:[%s5018 + $0x40] sm:$0xff]
        %v5028 = vld [vmem:[%s5018 + $0x48] sm:$0xff]
        %v5029 = vld [vmem:[%s5018 + $0x50] sm:$0xff]
        %v5030 = vld [vmem:[%s5018 + $0x58] sm:$0xff]
        %v5031 = vrot.slane %v2966, 1
        %v5032 = vsel %vm1960, %v1999, %v5031
        %v5033 = vor.u32 %v2963, %v5031
        %v5034 = vrot.slane %v4632, 1
        %v5035 = vsel %vm1960, %v5033, %v5034
        %v5036 = vor.u32 %v4629, %v5034
        %v5049 = vunpack.c.l.b16 %v5019
        %v5050 = vunpack.c.h.b16 %v5019
        %v5051 = vunpack.c.l.b16 %v5020
        %v5052 = vunpack.c.h.b16 %v5020
        %v5053 = vunpack.c.l.b16 %v5021
        %v5054 = vunpack.c.h.b16 %v5021
        %v5055 = vunpack.c.l.b16 %v5022
        %v5056 = vunpack.c.h.b16 %v5022
        %v5057 = vunpack.c.l.b16 %v5023
        %v5058 = vunpack.c.h.b16 %v5023
        %v5059 = vunpack.c.l.b16 %v5024
        %v5060 = vunpack.c.h.b16 %v5024
        %v5061 = vunpack.c.l.b16 %v5025
        %v5062 = vunpack.c.h.b16 %v5025
        %v5063 = vunpack.c.l.b16 %v5026
        %v5064 = vunpack.c.h.b16 %v5026
        %v5065 = vunpack.c.l.b16 %v5027
        %v5066 = vunpack.c.h.b16 %v5027
        %v5067 = vunpack.c.l.b16 %v5028
        %v5068 = vunpack.c.h.b16 %v5028
        %v5069 = vunpack.c.l.b16 %v5029
        %v5070 = vunpack.c.h.b16 %v5029
        %v5071 = vunpack.c.l.b16 %v5030
        %v5072 = vunpack.c.h.b16 %v5030
        %v5073 = vpack.c.b16 %v5051, %v5049
        %v5074 = vpack.c.b16 %v5052, %v5050
        %v5075 = vpack.c.b16 %v5055, %v5053
        %v5076 = vpack.c.b16 %v5056, %v5054
        %v5077 = vpack.c.b16 %v5059, %v5057
        %v5078 = vpack.c.b16 %v5060, %v5058
        %v5079 = vpack.c.b16 %v5063, %v5061
        %v5080 = vpack.c.b16 %v5064, %v5062
        %v5081 = vpack.c.b16 %v5067, %v5065
        %v5082 = vpack.c.b16 %v5068, %v5066
        %v5083 = vpack.c.b16 %v5071, %v5069
        %v5084 = vpack.c.b16 %v5072, %v5070
        %v5098 = vsel %vm797, %v5032, 0
        %v5101 = vsel %vm797, %v5035, 0
        %v5104 = vsel %vm797, %v5036, 0
        %5106 = vmatprep.subr.bf16.mxu0 %v5074
        %5107 = vmatpush1.bf16.msra.mxu0 %v5073
        %5108 = vmatprep.subr.bf16.mxu0 %v5076
        %5109 = vmatpush1.bf16.msra.mxu0 %v5075
        %5110 = vmatprep.subr.bf16.mxu0 %v5078
        %5111 = vmatpush1.bf16.msra.mxu0 %v5077
        %5112 = vmatprep.subr.bf16.mxu0 %v5080
        %5113 = vmatpush1.bf16.msra.mxu0 %v5079
        %5114 = vmatprep.subr.bf16.mxu0 %v5082
        %5115 = vmatpush1.bf16.msra.mxu0 %v5081
        %5116 = vmatprep.subr.bf16.mxu0 %v5084
        %5117 = vmatpush1.bf16.msra.mxu0 %v5083
        %5118 = vmatprep.subr.bf16.mxu0 0
        %5119 = vmatpush1.bf16.msra.mxu0 0
        %5120 = vmatprep.subr.bf16.mxu0 0
        %5121 = vmatpush1.bf16.msra.mxu0 0
        %5122 = vmatprep.subr.bf16.mxu0 0
        %5123 = vmatpush1.bf16.msra.mxu0 0
        %5124 = vmatprep.subr.bf16.mxu0 0
        %5125 = vmatpush1.bf16.msra.mxu0 0
        %5126 = vmatprep.subr.bf16.mxu0 0
        %5127 = vmatpush1.bf16.msra.mxu0 0
        %5128 = vmatprep.subr.bf16.mxu0 0
        %5129 = vmatpush1.bf16.msra.mxu0 0
        %5130 = vmatprep.subr.bf16.mxu0 0
        %5131 = vmatpush1.bf16.msra.mxu0 0
        %5132 = vmatprep.subr.bf16.mxu0 0
        %5133 = vmatpush1.bf16.msra.mxu0 0
        %5134 = vmatprep.subr.bf16.mxu0 0
        %5135 = vmatpush1.bf16.msra.mxu0 0
        %5136 = vmatprep.subr.bf16.mxu0 0
        %5137 = vmatpush1.bf16.msra.mxu0 0
        %5138 = vmatprep.mubr.bf16.mxu0 0
        %5139 = vmatmul.mubr.bf16.gmra.mrb[0].mxu0 %v2067
        %v5140 = vpop.f32.mrb[0].mxu0
        %v5141 = vadd.f32 0.0, %v5140
        %v5142 = vpop.f32.mrb[0].mxu0
        %v5143 = vadd.f32 0.0, %v5142
        %v5144 = vpop.f32.mrb[0].mxu0
        %v5145 = vadd.f32 0.0, %v5144
        %v5146 = vpop.f32.mrb[0].mxu0
        %v5147 = vadd.f32 0.0, %v5146
        %5148 = vmatprep.mubr.bf16.mxu0 0
        %5149 = vmatmul.mubr.bf16.gmra.mrb[0].mxu0 %v2070
        %v5150 = vpop.f32.mrb[0].mxu0
        %v5151 = vadd.f32 0.0, %v5150
        %v5152 = vpop.f32.mrb[0].mxu0
        %v5153 = vadd.f32 0.0, %v5152
        %v5154 = vpop.f32.mrb[0].mxu0
        %v5155 = vadd.f32 0.0, %v5154
        %v5156 = vpop.f32.mrb[0].mxu0
        %v5157 = vadd.f32 0.0, %v5156
        %5158 = vmatprep.mubr.bf16.mxu0 0
        %5159 = vmatmul.mubr.bf16.gmra.mrb[0].mxu0 %v5098
        %v5160 = vpop.f32.mrb[0].mxu0
        %v5161 = vadd.f32 0.0, %v5160
        %v5162 = vpop.f32.mrb[0].mxu0
        %v5163 = vadd.f32 0.0, %v5162
        %v5164 = vpop.f32.mrb[0].mxu0
        %v5165 = vadd.f32 0.0, %v5164
        %v5166 = vpop.f32.mrb[0].mxu0
        %v5167 = vadd.f32 0.0, %v5166
        %5168 = vmatprep.mubr.bf16.mxu0 0
        %5169 = vmatmul.mubr.bf16.gmra.mrb[0].mxu0 %v5101
        %v5170 = vpop.f32.mrb[0].mxu0
        %v5171 = vadd.f32 0.0, %v5170
        %v5172 = vpop.f32.mrb[0].mxu0
        %v5173 = vadd.f32 0.0, %v5172
        %v5174 = vpop.f32.mrb[0].mxu0
        %v5175 = vadd.f32 0.0, %v5174
        %v5176 = vpop.f32.mrb[0].mxu0
        %v5177 = vadd.f32 0.0, %v5176
        %5178 = vmatprep.mubr.bf16.mxu0 0
        %5179 = vmatmul.mubr.bf16.gmra.mrb[0].mxu0 %v5104
        %v5180 = vpop.f32.mrb[0].mxu0
        %v5181 = vadd.f32 0.0, %v5180
        %v5182 = vpop.f32.mrb[0].mxu0
        %v5183 = vadd.f32 0.0, %v5182
        %v5184 = vpop.f32.mrb[0].mxu0
        %v5185 = vadd.f32 0.0, %v5184
        %v5186 = vpop.f32.mrb[0].mxu0
        %v5187 = vadd.f32 0.0, %v5186
        %5188 = vdwg.mxu0
        %v5189 = vadd.f32 %v4998, %v5141
        %v5190 = vadd.f32 %v4999, %v5143
        %v5191 = vadd.f32 %v5000, %v5145
        %v5192 = vadd.f32 %v5001, %v5147
        %v5193 = vadd.f32 %v5002, %v5151
        %v5194 = vadd.f32 %v5003, %v5153
        %v5195 = vadd.f32 %v5004, %v5155
        %v5196 = vadd.f32 %v5005, %v5157
        %v5197 = vadd.f32 %v5006, %v5161
        %v5198 = vadd.f32 %v5007, %v5163
        %v5199 = vadd.f32 %v5008, %v5165
        %v5200 = vadd.f32 %v5009, %v5167
        %v5201 = vadd.f32 %v5010, %v5171
        %v5202 = vadd.f32 %v5011, %v5173
        %v5203 = vadd.f32 %v5012, %v5175
        %v5204 = vadd.f32 %v5013, %v5177
        %v5205 = vadd.f32 %v5014, %v5181
        %v5206 = vadd.f32 %v5015, %v5183
        %v5207 = vadd.f32 %v5016, %v5185
        %v5208 = vadd.f32 %v5017, %v5187
        %s5209 = scalar_lea.vmem %s5, 1536
        %v5210 = vld [vmem:[%s5209] sm:$0xff]
        %v5211 = vld [vmem:[%s5209 + $0x8] sm:$0xff]
        %v5212 = vld [vmem:[%s5209 + $0x10] sm:$0xff]
        %v5213 = vld [vmem:[%s5209 + $0x18] sm:$0xff]
        %v5214 = vld [vmem:[%s5209 + $0x20] sm:$0xff]
        %v5215 = vld [vmem:[%s5209 + $0x28] sm:$0xff]
        %v5216 = vld [vmem:[%s5209 + $0x30] sm:$0xff]
        %v5217 = vld [vmem:[%s5209 + $0x38] sm:$0xff]
        %v5218 = vld [vmem:[%s5209 + $0x40] sm:$0xff]
        %v5219 = vld [vmem:[%s5209 + $0x48] sm:$0xff]
        %v5220 = vld [vmem:[%s5209 + $0x50] sm:$0xff]
        %v5221 = vld [vmem:[%s5209 + $0x58] sm:$0xff]
        %v5222 = vrot.slane %v1932, 1
        %v5223 = vsel %vm2329, %v2337, %v5222
        %v5224 = vrot.slane %v1933, 1
        %v5225 = vsel %vm2329, %v5222, %v5224
        %v5238 = vunpack.c.l.b16 %v5210
        %v5239 = vunpack.c.h.b16 %v5210
        %v5240 = vunpack.c.l.b16 %v5211
        %v5241 = vunpack.c.h.b16 %v5211
        %v5242 = vunpack.c.l.b16 %v5212
        %v5243 = vunpack.c.h.b16 %v5212
        %v5244 = vunpack.c.l.b16 %v5213
        %v5245 = vunpack.c.h.b16 %v5213
        %v5246 = vunpack.c.l.b16 %v5214
        %v5247 = vunpack.c.h.b16 %v5214
        %v5248 = vunpack.c.l.b16 %v5215
        %v5249 = vunpack.c.h.b16 %v5215
        %v5250 = vunpack.c.l.b16 %v5216
        %v5251 = vunpack.c.h.b16 %v5216
        %v5252 = vunpack.c.l.b16 %v5217
        %v5253 = vunpack.c.h.b16 %v5217
        %v5254 = vunpack.c.l.b16 %v5218
        %v5255 = vunpack.c.h.b16 %v5218
        %v5256 = vunpack.c.l.b16 %v5219
        %v5257 = vunpack.c.h.b16 %v5219
        %v5258 = vunpack.c.l.b16 %v5220
        %v5259 = vunpack.c.h.b16 %v5220
        %v5260 = vunpack.c.l.b16 %v5221
        %v5261 = vunpack.c.h.b16 %v5221
        %v5262 = vpack.c.b16 %v5240, %v5238
        %v5263 = vpack.c.b16 %v5241, %v5239
        %v5264 = vpack.c.b16 %v5244, %v5242
        %v5265 = vpack.c.b16 %v5245, %v5243
        %v5266 = vpack.c.b16 %v5248, %v5246
        %v5267 = vpack.c.b16 %v5249, %v5247
        %v5268 = vpack.c.b16 %v5252, %v5250
        %v5269 = vpack.c.b16 %v5253, %v5251
        %v5270 = vpack.c.b16 %v5256, %v5254
        %v5271 = vpack.c.b16 %v5257, %v5255
        %v5272 = vpack.c.b16 %v5260, %v5258
        %v5273 = vpack.c.b16 %v5261, %v5259
        %v5287 = vsel %vm797, %v5223, 0
        %v5290 = vsel %vm797, %v5225, 0
        %v5293 = vsel %vm797, %v5224, 0
        %5295 = vmatprep.subr.bf16.mxu0 %v5263
        %5296 = vmatpush1.bf16.msra.mxu0 %v5262
        %5297 = vmatprep.subr.bf16.mxu0 %v5265
        %5298 = vmatpush1.bf16.msra.mxu0 %v5264
        %5299 = vmatprep.subr.bf16.mxu0 %v5267
        %5300 = vmatpush1.bf16.msra.mxu0 %v5266
        %5301 = vmatprep.subr.bf16.mxu0 %v5269
        %5302 = vmatpush1.bf16.msra.mxu0 %v5268
        %5303 = vmatprep.subr.bf16.mxu0 %v5271
        %5304 = vmatpush1.bf16.msra.mxu0 %v5270
        %5305 = vmatprep.subr.bf16.mxu0 %v5273
        %5306 = vmatpush1.bf16.msra.mxu0 %v5272
        %5307 = vmatprep.subr.bf16.mxu0 0
        %5308 = vmatpush1.bf16.msra.mxu0 0
        %5309 = vmatprep.subr.bf16.mxu0 0
        %5310 = vmatpush1.bf16.msra.mxu0 0
        %5311 = vmatprep.subr.bf16.mxu0 0
        %5312 = vmatpush1.bf16.msra.mxu0 0
        %5313 = vmatprep.subr.bf16.mxu0 0
        %5314 = vmatpush1.bf16.msra.mxu0 0
        %5315 = vmatprep.subr.bf16.mxu0 0
        %5316 = vmatpush1.bf16.msra.mxu0 0
        %5317 = vmatprep.subr.bf16.mxu0 0
        %5318 = vmatpush1.bf16.msra.mxu0 0
        %5319 = vmatprep.subr.bf16.mxu0 0
        %5320 = vmatpush1.bf16.msra.mxu0 0
        %5321 = vmatprep.subr.bf16.mxu0 0
        %5322 = vmatpush1.bf16.msra.mxu0 0
        %5323 = vmatprep.subr.bf16.mxu0 0
        %5324 = vmatpush1.bf16.msra.mxu0 0
        %5325 = vmatprep.subr.bf16.mxu0 0
        %5326 = vmatpush1.bf16.msra.mxu0 0
        %5327 = vmatprep.mubr.bf16.mxu0 0
        %5328 = vmatmul.mubr.bf16.gmra.mrb[0].mxu0 %v2406
        %v5329 = vpop.f32.mrb[0].mxu0
        %v5330 = vadd.f32 0.0, %v5329
        %v5331 = vpop.f32.mrb[0].mxu0
        %v5332 = vadd.f32 0.0, %v5331
        %v5333 = vpop.f32.mrb[0].mxu0
        %v5334 = vadd.f32 0.0, %v5333
        %v5335 = vpop.f32.mrb[0].mxu0
        %v5336 = vadd.f32 0.0, %v5335
        %5337 = vmatprep.mubr.bf16.mxu0 0
        %5338 = vmatmul.mubr.bf16.gmra.mrb[0].mxu0 %v2409
        %v5339 = vpop.f32.mrb[0].mxu0
        %v5340 = vadd.f32 0.0, %v5339
        %v5341 = vpop.f32.mrb[0].mxu0
        %v5342 = vadd.f32 0.0, %v5341
        %v5343 = vpop.f32.mrb[0].mxu0
        %v5344 = vadd.f32 0.0, %v5343
        %v5345 = vpop.f32.mrb[0].mxu0
        %v5346 = vadd.f32 0.0, %v5345
        %5347 = vmatprep.mubr.bf16.mxu0 0
        %5348 = vmatmul.mubr.bf16.gmra.mrb[0].mxu0 %v5287
        %v5349 = vpop.f32.mrb[0].mxu0
        %v5350 = vadd.f32 0.0, %v5349
        %v5351 = vpop.f32.mrb[0].mxu0
        %v5352 = vadd.f32 0.0, %v5351
        %v5353 = vpop.f32.mrb[0].mxu0
        %v5354 = vadd.f32 0.0, %v5353
        %v5355 = vpop.f32.mrb[0].mxu0
        %v5356 = vadd.f32 0.0, %v5355
        %5357 = vmatprep.mubr.bf16.mxu0 0
        %5358 = vmatmul.mubr.bf16.gmra.mrb[0].mxu0 %v5290
        %v5359 = vpop.f32.mrb[0].mxu0
        %v5360 = vadd.f32 0.0, %v5359
        %v5361 = vpop.f32.mrb[0].mxu0
        %v5362 = vadd.f32 0.0, %v5361
        %v5363 = vpop.f32.mrb[0].mxu0
        %v5364 = vadd.f32 0.0, %v5363
        %v5365 = vpop.f32.mrb[0].mxu0
        %v5366 = vadd.f32 0.0, %v5365
        %5367 = vmatprep.mubr.bf16.mxu0 0
        %5368 = vmatmul.mubr.bf16.gmra.mrb[0].mxu0 %v5293
        %v5369 = vpop.f32.mrb[0].mxu0
        %v5370 = vadd.f32 0.0, %v5369
        %v5371 = vpop.f32.mrb[0].mxu0
        %v5372 = vadd.f32 0.0, %v5371
        %v5373 = vpop.f32.mrb[0].mxu0
        %v5374 = vadd.f32 0.0, %v5373
        %v5375 = vpop.f32.mrb[0].mxu0
        %v5376 = vadd.f32 0.0, %v5375
        %5377 = vdwg.mxu0
        %v5378 = vadd.f32 %v5189, %v5330
        %v5379 = vadd.f32 %v5190, %v5332
        %v5380 = vadd.f32 %v5191, %v5334
        %v5381 = vadd.f32 %v5192, %v5336
        %v5382 = vadd.f32 %v5193, %v5340
        %v5383 = vadd.f32 %v5194, %v5342
        %v5384 = vadd.f32 %v5195, %v5344
        %v5385 = vadd.f32 %v5196, %v5346
        %v5386 = vadd.f32 %v5197, %v5350
        %v5387 = vadd.f32 %v5198, %v5352
        %v5388 = vadd.f32 %v5199, %v5354
        %v5389 = vadd.f32 %v5200, %v5356
        %v5390 = vadd.f32 %v5201, %v5360
        %v5391 = vadd.f32 %v5202, %v5362
        %v5392 = vadd.f32 %v5203, %v5364
        %v5393 = vadd.f32 %v5204, %v5366
        %v5394 = vadd.f32 %v5205, %v5370
        %v5395 = vadd.f32 %v5206, %v5372
        %v5396 = vadd.f32 %v5207, %v5374
        %v5397 = vadd.f32 %v5208, %v5376
        %s5398 = scalar_lea.vmem %s5, 1632
        %v5399 = vld [vmem:[%s5398] sm:$0xff]
        %v5400 = vld [vmem:[%s5398 + $0x8] sm:$0xff]
        %v5401 = vld [vmem:[%s5398 + $0x10] sm:$0xff]
        %v5402 = vld [vmem:[%s5398 + $0x18] sm:$0xff]
        %v5403 = vld [vmem:[%s5398 + $0x20] sm:$0xff]
        %v5404 = vld [vmem:[%s5398 + $0x28] sm:$0xff]
        %v5405 = vld [vmem:[%s5398 + $0x30] sm:$0xff]
        %v5406 = vld [vmem:[%s5398 + $0x38] sm:$0xff]
        %v5407 = vld [vmem:[%s5398 + $0x40] sm:$0xff]
        %v5408 = vld [vmem:[%s5398 + $0x48] sm:$0xff]
        %v5409 = vld [vmem:[%s5398 + $0x50] sm:$0xff]
        %v5410 = vld [vmem:[%s5398 + $0x58] sm:$0xff]
        %v5411 = vrot.slane %v2963, 1
        %v5412 = vrot.slane %v2966, 2
        %v5413 = vor.u32 %v5411, %v5412
        %v5414 = vsel %vm2530, %v2548, %v5413
        %v5415 = vrot.slane %v4629, 1
        %v5416 = vrot.slane %v4632, 2
        %v5417 = vor.u32 %v5415, %v5416
        %v5418 = vsel %vm2530, %v5413, %v5417
        %v5431 = vunpack.c.l.b16 %v5399
        %v5432 = vunpack.c.h.b16 %v5399
        %v5433 = vunpack.c.l.b16 %v5400
        %v5434 = vunpack.c.h.b16 %v5400
        %v5435 = vunpack.c.l.b16 %v5401
        %v5436 = vunpack.c.h.b16 %v5401
        %v5437 = vunpack.c.l.b16 %v5402
        %v5438 = vunpack.c.h.b16 %v5402
        %v5439 = vunpack.c.l.b16 %v5403
        %v5440 = vunpack.c.h.b16 %v5403
        %v5441 = vunpack.c.l.b16 %v5404
        %v5442 = vunpack.c.h.b16 %v5404
        %v5443 = vunpack.c.l.b16 %v5405
        %v5444 = vunpack.c.h.b16 %v5405
        %v5445 = vunpack.c.l.b16 %v5406
        %v5446 = vunpack.c.h.b16 %v5406
        %v5447 = vunpack.c.l.b16 %v5407
        %v5448 = vunpack.c.h.b16 %v5407
        %v5449 = vunpack.c.l.b16 %v5408
        %v5450 = vunpack.c.h.b16 %v5408
        %v5451 = vunpack.c.l.b16 %v5409
        %v5452 = vunpack.c.h.b16 %v5409
        %v5453 = vunpack.c.l.b16 %v5410
        %v5454 = vunpack.c.h.b16 %v5410
        %v5455 = vpack.c.b16 %v5433, %v5431
        %v5456 = vpack.c.b16 %v5434, %v5432
        %v5457 = vpack.c.b16 %v5437, %v5435
        %v5458 = vpack.c.b16 %v5438, %v5436
        %v5459 = vpack.c.b16 %v5441, %v5439
        %v5460 = vpack.c.b16 %v5442, %v5440
        %v5461 = vpack.c.b16 %v5445, %v5443
        %v5462 = vpack.c.b16 %v5446, %v5444
        %v5463 = vpack.c.b16 %v5449, %v5447
        %v5464 = vpack.c.b16 %v5450, %v5448
        %v5465 = vpack.c.b16 %v5453, %v5451
        %v5466 = vpack.c.b16 %v5454, %v5452
        %v5480 = vsel %vm797, %v5414, 0
        %v5483 = vsel %vm797, %v5418, 0
        %v5486 = vsel %vm797, %v5417, 0
        %5488 = vmatprep.subr.bf16.mxu0 %v5456
        %5489 = vmatpush1.bf16.msra.mxu0 %v5455
        %5490 = vmatprep.subr.bf16.mxu0 %v5458
        %5491 = vmatpush1.bf16.msra.mxu0 %v5457
        %5492 = vmatprep.subr.bf16.mxu0 %v5460
        %5493 = vmatpush1.bf16.msra.mxu0 %v5459
        %5494 = vmatprep.subr.bf16.mxu0 %v5462
        %5495 = vmatpush1.bf16.msra.mxu0 %v5461
        %5496 = vmatprep.subr.bf16.mxu0 %v5464
        %5497 = vmatpush1.bf16.msra.mxu0 %v5463
        %5498 = vmatprep.subr.bf16.mxu0 %v5466
        %5499 = vmatpush1.bf16.msra.mxu0 %v5465
        %5500 = vmatprep.subr.bf16.mxu0 0
        %5501 = vmatpush1.bf16.msra.mxu0 0
        %5502 = vmatprep.subr.bf16.mxu0 0
        %5503 = vmatpush1.bf16.msra.mxu0 0
        %5504 = vmatprep.subr.bf16.mxu0 0
        %5505 = vmatpush1.bf16.msra.mxu0 0
        %5506 = vmatprep.subr.bf16.mxu0 0
        %5507 = vmatpush1.bf16.msra.mxu0 0
        %5508 = vmatprep.subr.bf16.mxu0 0
        %5509 = vmatpush1.bf16.msra.mxu0 0
        %5510 = vmatprep.subr.bf16.mxu0 0
        %5511 = vmatpush1.bf16.msra.mxu0 0
        %5512 = vmatprep.subr.bf16.mxu0 0
        %5513 = vmatpush1.bf16.msra.mxu0 0
        %5514 = vmatprep.subr.bf16.mxu0 0
        %5515 = vmatpush1.bf16.msra.mxu0 0
        %5516 = vmatprep.subr.bf16.mxu0 0
        %5517 = vmatpush1.bf16.msra.mxu0 0
        %5518 = vmatprep.subr.bf16.mxu0 0
        %5519 = vmatpush1.bf16.msra.mxu0 0
        %5520 = vmatprep.mubr.bf16.mxu0 0
        %5521 = vmatmul.mubr.bf16.gmra.mrb[0].mxu0 %v2617
        %v5522 = vpop.f32.mrb[0].mxu0
        %v5523 = vadd.f32 0.0, %v5522
        %v5524 = vpop.f32.mrb[0].mxu0
        %v5525 = vadd.f32 0.0, %v5524
        %v5526 = vpop.f32.mrb[0].mxu0
        %v5527 = vadd.f32 0.0, %v5526
        %v5528 = vpop.f32.mrb[0].mxu0
        %v5529 = vadd.f32 0.0, %v5528
        %5530 = vmatprep.mubr.bf16.mxu0 0
        %5531 = vmatmul.mubr.bf16.gmra.mrb[0].mxu0 %v2620
        %v5532 = vpop.f32.mrb[0].mxu0
        %v5533 = vadd.f32 0.0, %v5532
        %v5534 = vpop.f32.mrb[0].mxu0
        %v5535 = vadd.f32 0.0, %v5534
        %v5536 = vpop.f32.mrb[0].mxu0
        %v5537 = vadd.f32 0.0, %v5536
        %v5538 = vpop.f32.mrb[0].mxu0
        %v5539 = vadd.f32 0.0, %v5538
        %5540 = vmatprep.mubr.bf16.mxu0 0
        %5541 = vmatmul.mubr.bf16.gmra.mrb[0].mxu0 %v5480
        %v5542 = vpop.f32.mrb[0].mxu0
        %v5543 = vadd.f32 0.0, %v5542
        %v5544 = vpop.f32.mrb[0].mxu0
        %v5545 = vadd.f32 0.0, %v5544
        %v5546 = vpop.f32.mrb[0].mxu0
        %v5547 = vadd.f32 0.0, %v5546
        %v5548 = vpop.f32.mrb[0].mxu0
        %v5549 = vadd.f32 0.0, %v5548
        %5550 = vmatprep.mubr.bf16.mxu0 0
        %5551 = vmatmul.mubr.bf16.gmra.mrb[0].mxu0 %v5483
        %v5552 = vpop.f32.mrb[0].mxu0
        %v5553 = vadd.f32 0.0, %v5552
        %v5554 = vpop.f32.mrb[0].mxu0
        %v5555 = vadd.f32 0.0, %v5554
        %v5556 = vpop.f32.mrb[0].mxu0
        %v5557 = vadd.f32 0.0, %v5556
        %v5558 = vpop.f32.mrb[0].mxu0
        %v5559 = vadd.f32 0.0, %v5558
        %5560 = vmatprep.mubr.bf16.mxu0 0
        %5561 = vmatmul.mubr.bf16.gmra.mrb[0].mxu0 %v5486
        %v5562 = vpop.f32.mrb[0].mxu0
        %v5563 = vadd.f32 0.0, %v5562
        %v5564 = vpop.f32.mrb[0].mxu0
        %v5565 = vadd.f32 0.0, %v5564
        %v5566 = vpop.f32.mrb[0].mxu0
        %v5567 = vadd.f32 0.0, %v5566
        %v5568 = vpop.f32.mrb[0].mxu0
        %v5569 = vadd.f32 0.0, %v5568
        %5570 = vdwg.mxu0
        %v5571 = vadd.f32 %v5378, %v5523
        %v5572 = vadd.f32 %v5379, %v5525
        %v5573 = vadd.f32 %v5380, %v5527
        %v5574 = vadd.f32 %v5381, %v5529
        %v5575 = vadd.f32 %v5382, %v5533
        %v5576 = vadd.f32 %v5383, %v5535
        %v5577 = vadd.f32 %v5384, %v5537
        %v5578 = vadd.f32 %v5385, %v5539
        %v5579 = vadd.f32 %v5386, %v5543
        %v5580 = vadd.f32 %v5387, %v5545
        %v5581 = vadd.f32 %v5388, %v5547
        %v5582 = vadd.f32 %v5389, %v5549
        %v5583 = vadd.f32 %v5390, %v5553
        %v5584 = vadd.f32 %v5391, %v5555
        %v5585 = vadd.f32 %v5392, %v5557
        %v5586 = vadd.f32 %v5393, %v5559
        %v5587 = vadd.f32 %v5394, %v5563
        %v5588 = vadd.f32 %v5395, %v5565
        %v5589 = vadd.f32 %v5396, %v5567
        %v5590 = vadd.f32 %v5397, %v5569
        %s5591 = scalar_lea.vmem %s5, 1728
        %v5592 = vld [vmem:[%s5591] sm:$0xff]
        %v5593 = vld [vmem:[%s5591 + $0x8] sm:$0xff]
        %v5594 = vld [vmem:[%s5591 + $0x10] sm:$0xff]
        %v5595 = vld [vmem:[%s5591 + $0x18] sm:$0xff]
        %v5596 = vld [vmem:[%s5591 + $0x20] sm:$0xff]
        %v5597 = vld [vmem:[%s5591 + $0x28] sm:$0xff]
        %v5598 = vld [vmem:[%s5591 + $0x30] sm:$0xff]
        %v5599 = vld [vmem:[%s5591 + $0x38] sm:$0xff]
        %v5600 = vld [vmem:[%s5591 + $0x40] sm:$0xff]
        %v5601 = vld [vmem:[%s5591 + $0x48] sm:$0xff]
        %v5602 = vld [vmem:[%s5591 + $0x50] sm:$0xff]
        %v5603 = vld [vmem:[%s5591 + $0x58] sm:$0xff]
        %v5604 = vrot.slane %v1932, 2
        %v5605 = vsel %vm2741, %v2749, %v5604
        %v5606 = vrot.slane %v1933, 2
        %v5607 = vsel %vm2741, %v5604, %v5606
        %v5620 = vunpack.c.l.b16 %v5592
        %v5621 = vunpack.c.h.b16 %v5592
        %v5622 = vunpack.c.l.b16 %v5593
        %v5623 = vunpack.c.h.b16 %v5593
        %v5624 = vunpack.c.l.b16 %v5594
        %v5625 = vunpack.c.h.b16 %v5594
        %v5626 = vunpack.c.l.b16 %v5595
        %v5627 = vunpack.c.h.b16 %v5595
        %v5628 = vunpack.c.l.b16 %v5596
        %v5629 = vunpack.c.h.b16 %v5596
        %v5630 = vunpack.c.l.b16 %v5597
        %v5631 = vunpack.c.h.b16 %v5597
        %v5632 = vunpack.c.l.b16 %v5598
        %v5633 = vunpack.c.h.b16 %v5598
        %v5634 = vunpack.c.l.b16 %v5599
        %v5635 = vunpack.c.h.b16 %v5599
        %v5636 = vunpack.c.l.b16 %v5600
        %v5637 = vunpack.c.h.b16 %v5600
        %v5638 = vunpack.c.l.b16 %v5601
        %v5639 = vunpack.c.h.b16 %v5601
        %v5640 = vunpack.c.l.b16 %v5602
        %v5641 = vunpack.c.h.b16 %v5602
        %v5642 = vunpack.c.l.b16 %v5603
        %v5643 = vunpack.c.h.b16 %v5603
        %v5644 = vpack.c.b16 %v5622, %v5620
        %v5645 = vpack.c.b16 %v5623, %v5621
        %v5646 = vpack.c.b16 %v5626, %v5624
        %v5647 = vpack.c.b16 %v5627, %v5625
        %v5648 = vpack.c.b16 %v5630, %v5628
        %v5649 = vpack.c.b16 %v5631, %v5629
        %v5650 = vpack.c.b16 %v5634, %v5632
        %v5651 = vpack.c.b16 %v5635, %v5633
        %v5652 = vpack.c.b16 %v5638, %v5636
        %v5653 = vpack.c.b16 %v5639, %v5637
        %v5654 = vpack.c.b16 %v5642, %v5640
        %v5655 = vpack.c.b16 %v5643, %v5641
        %v5669 = vsel %vm797, %v5605, 0
        %v5672 = vsel %vm797, %v5607, 0
        %v5675 = vsel %vm797, %v5606, 0
        %5677 = vmatprep.subr.bf16.mxu0 %v5645
        %5678 = vmatpush1.bf16.msra.mxu0 %v5644
        %5679 = vmatprep.subr.bf16.mxu0 %v5647
        %5680 = vmatpush1.bf16.msra.mxu0 %v5646
        %5681 = vmatprep.subr.bf16.mxu0 %v5649
        %5682 = vmatpush1.bf16.msra.mxu0 %v5648
        %5683 = vmatprep.subr.bf16.mxu0 %v5651
        %5684 = vmatpush1.bf16.msra.mxu0 %v5650
        %5685 = vmatprep.subr.bf16.mxu0 %v5653
        %5686 = vmatpush1.bf16.msra.mxu0 %v5652
        %5687 = vmatprep.subr.bf16.mxu0 %v5655
        %5688 = vmatpush1.bf16.msra.mxu0 %v5654
        %5689 = vmatprep.subr.bf16.mxu0 0
        %5690 = vmatpush1.bf16.msra.mxu0 0
        %5691 = vmatprep.subr.bf16.mxu0 0
        %5692 = vmatpush1.bf16.msra.mxu0 0
        %5693 = vmatprep.subr.bf16.mxu0 0
        %5694 = vmatpush1.bf16.msra.mxu0 0
        %5695 = vmatprep.subr.bf16.mxu0 0
        %5696 = vmatpush1.bf16.msra.mxu0 0
        %5697 = vmatprep.subr.bf16.mxu0 0
        %5698 = vmatpush1.bf16.msra.mxu0 0
        %5699 = vmatprep.subr.bf16.mxu0 0
        %5700 = vmatpush1.bf16.msra.mxu0 0
        %5701 = vmatprep.subr.bf16.mxu0 0
        %5702 = vmatpush1.bf16.msra.mxu0 0
        %5703 = vmatprep.subr.bf16.mxu0 0
        %5704 = vmatpush1.bf16.msra.mxu0 0
        %5705 = vmatprep.subr.bf16.mxu0 0
        %5706 = vmatpush1.bf16.msra.mxu0 0
        %5707 = vmatprep.subr.bf16.mxu0 0
        %5708 = vmatpush1.bf16.msra.mxu0 0
        %5709 = vmatprep.mubr.bf16.mxu0 0
        %5710 = vmatmul.mubr.bf16.gmra.mrb[0].mxu0 %v2818
        %v5711 = vpop.f32.mrb[0].mxu0
        %v5712 = vadd.f32 0.0, %v5711
        %v5713 = vpop.f32.mrb[0].mxu0
        %v5714 = vadd.f32 0.0, %v5713
        %v5715 = vpop.f32.mrb[0].mxu0
        %v5716 = vadd.f32 0.0, %v5715
        %v5717 = vpop.f32.mrb[0].mxu0
        %v5718 = vadd.f32 0.0, %v5717
        %5719 = vmatprep.mubr.bf16.mxu0 0
        %5720 = vmatmul.mubr.bf16.gmra.mrb[0].mxu0 %v2821
        %v5721 = vpop.f32.mrb[0].mxu0
        %v5722 = vadd.f32 0.0, %v5721
        %v5723 = vpop.f32.mrb[0].mxu0
        %v5724 = vadd.f32 0.0, %v5723
        %v5725 = vpop.f32.mrb[0].mxu0
        %v5726 = vadd.f32 0.0, %v5725
        %v5727 = vpop.f32.mrb[0].mxu0
        %v5728 = vadd.f32 0.0, %v5727
        %5729 = vmatprep.mubr.bf16.mxu0 0
        %5730 = vmatmul.mubr.bf16.gmra.mrb[0].mxu0 %v5669
        %v5731 = vpop.f32.mrb[0].mxu0
        %v5732 = vadd.f32 0.0, %v5731
        %v5733 = vpop.f32.mrb[0].mxu0
        %v5734 = vadd.f32 0.0, %v5733
        %v5735 = vpop.f32.mrb[0].mxu0
        %v5736 = vadd.f32 0.0, %v5735
        %v5737 = vpop.f32.mrb[0].mxu0
        %v5738 = vadd.f32 0.0, %v5737
        %5739 = vmatprep.mubr.bf16.mxu0 0
        %5740 = vmatmul.mubr.bf16.gmra.mrb[0].mxu0 %v5672
        %v5741 = vpop.f32.mrb[0].mxu0
        %v5742 = vadd.f32 0.0, %v5741
        %v5743 = vpop.f32.mrb[0].mxu0
        %v5744 = vadd.f32 0.0, %v5743
        %v5745 = vpop.f32.mrb[0].mxu0
        %v5746 = vadd.f32 0.0, %v5745
        %v5747 = vpop.f32.mrb[0].mxu0
        %v5748 = vadd.f32 0.0, %v5747
        %5749 = vmatprep.mubr.bf16.mxu0 0
        %5750 = vmatmul.mubr.bf16.gmra.mrb[0].mxu0 %v5675
        %v5751 = vpop.f32.mrb[0].mxu0
        %v5752 = vadd.f32 0.0, %v5751
        %v5753 = vpop.f32.mrb[0].mxu0
        %v5754 = vadd.f32 0.0, %v5753
        %v5755 = vpop.f32.mrb[0].mxu0
        %v5756 = vadd.f32 0.0, %v5755
        %v5757 = vpop.f32.mrb[0].mxu0
        %v5758 = vadd.f32 0.0, %v5757
        %5759 = vdwg.mxu0
        %v5760 = vadd.f32 %v5571, %v5712
        %v5761 = vadd.f32 %v5572, %v5714
        %v5762 = vadd.f32 %v5573, %v5716
        %v5763 = vadd.f32 %v5574, %v5718
        %v5764 = vadd.f32 %v5575, %v5722
        %v5765 = vadd.f32 %v5576, %v5724
        %v5766 = vadd.f32 %v5577, %v5726
        %v5767 = vadd.f32 %v5578, %v5728
        %v5768 = vadd.f32 %v5579, %v5732
        %v5769 = vadd.f32 %v5580, %v5734
        %v5770 = vadd.f32 %v5581, %v5736
        %v5771 = vadd.f32 %v5582, %v5738
        %v5772 = vadd.f32 %v5583, %v5742
        %v5773 = vadd.f32 %v5584, %v5744
        %v5774 = vadd.f32 %v5585, %v5746
        %v5775 = vadd.f32 %v5586, %v5748
        %v5776 = vadd.f32 %v5587, %v5752
        %v5777 = vadd.f32 %v5588, %v5754
        %v5778 = vadd.f32 %v5589, %v5756
        %v5779 = vadd.f32 %v5590, %v5758
        %s5780 = scalar_lea.vmem %s5, 1824
        %v5781 = vld [vmem:[%s5780] sm:$0xff]
        %v5782 = vld [vmem:[%s5780 + $0x8] sm:$0xff]
        %v5783 = vld [vmem:[%s5780 + $0x10] sm:$0xff]
        %v5784 = vld [vmem:[%s5780 + $0x18] sm:$0xff]
        %v5785 = vld [vmem:[%s5780 + $0x20] sm:$0xff]
        %v5786 = vld [vmem:[%s5780 + $0x28] sm:$0xff]
        %v5787 = vld [vmem:[%s5780 + $0x30] sm:$0xff]
        %v5788 = vld [vmem:[%s5780 + $0x38] sm:$0xff]
        %v5789 = vld [vmem:[%s5780 + $0x40] sm:$0xff]
        %v5790 = vld [vmem:[%s5780 + $0x48] sm:$0xff]
        %v5791 = vld [vmem:[%s5780 + $0x50] sm:$0xff]
        %v5792 = vld [vmem:[%s5780 + $0x58] sm:$0xff]
        %vm5793 = vsmask.f32 5376
        %v5794 = vrot.slane %v1981, 2
        %v5795 = vrot.slane %v1977, 3
        %v5796 = vor.u32 %v5794, %v5795
        %v5797 = vrot.slane %v1989, 2
        %v5798 = vrot.slane %v1985, 3
        %v5799 = vor.u32 %v5797, %v5798
        %v5800 = vsel %vm5793, %v5796, %v5799
        %v5801 = vrot.slane %v1997, 2
        %v5802 = vrot.slane %v1993, 3
        %v5803 = vor.u32 %v5801, %v5802
        %v5804 = vsel %vm5793, %v5799, %v5803
        %v5805 = vrot.slane %v2963, 2
        %v5806 = vrot.slane %v2966, 3
        %v5807 = vor.u32 %v5805, %v5806
        %v5808 = vsel %vm5793, %v5803, %v5807
        %v5809 = vrot.slane %v4629, 2
        %v5810 = vrot.slane %v4632, 3
        %v5811 = vor.u32 %v5809, %v5810
        %v5812 = vsel %vm5793, %v5807, %v5811
        %v5825 = vunpack.c.l.b16 %v5781
        %v5826 = vunpack.c.h.b16 %v5781
        %v5827 = vunpack.c.l.b16 %v5782
        %v5828 = vunpack.c.h.b16 %v5782
        %v5829 = vunpack.c.l.b16 %v5783
        %v5830 = vunpack.c.h.b16 %v5783
        %v5831 = vunpack.c.l.b16 %v5784
        %v5832 = vunpack.c.h.b16 %v5784
        %v5833 = vunpack.c.l.b16 %v5785
        %v5834 = vunpack.c.h.b16 %v5785
        %v5835 = vunpack.c.l.b16 %v5786
        %v5836 = vunpack.c.h.b16 %v5786
        %v5837 = vunpack.c.l.b16 %v5787
        %v5838 = vunpack.c.h.b16 %v5787
        %v5839 = vunpack.c.l.b16 %v5788
        %v5840 = vunpack.c.h.b16 %v5788
        %v5841 = vunpack.c.l.b16 %v5789
        %v5842 = vunpack.c.h.b16 %v5789
        %v5843 = vunpack.c.l.b16 %v5790
        %v5844 = vunpack.c.h.b16 %v5790
        %v5845 = vunpack.c.l.b16 %v5791
        %v5846 = vunpack.c.h.b16 %v5791
        %v5847 = vunpack.c.l.b16 %v5792
        %v5848 = vunpack.c.h.b16 %v5792
        %v5849 = vpack.c.b16 %v5827, %v5825
        %v5850 = vpack.c.b16 %v5828, %v5826
        %v5851 = vpack.c.b16 %v5831, %v5829
        %v5852 = vpack.c.b16 %v5832, %v5830
        %v5853 = vpack.c.b16 %v5835, %v5833
        %v5854 = vpack.c.b16 %v5836, %v5834
        %v5855 = vpack.c.b16 %v5839, %v5837
        %v5856 = vpack.c.b16 %v5840, %v5838
        %v5857 = vpack.c.b16 %v5843, %v5841
        %v5858 = vpack.c.b16 %v5844, %v5842
        %v5859 = vpack.c.b16 %v5847, %v5845
        %v5860 = vpack.c.b16 %v5848, %v5846
        %v5874 = vsel %vm797, %v5800, 0
        %v5877 = vsel %vm797, %v5804, 0
        %v5880 = vsel %vm797, %v5808, 0
        %v5883 = vsel %vm797, %v5812, 0
        %v5886 = vsel %vm797, %v5811, 0
        %5888 = vmatprep.subr.bf16.mxu0 %v5850
        %5889 = vmatpush1.bf16.msra.mxu0 %v5849
        %5890 = vmatprep.subr.bf16.mxu0 %v5852
        %5891 = vmatpush1.bf16.msra.mxu0 %v5851
        %5892 = vmatprep.subr.bf16.mxu0 %v5854
        %5893 = vmatpush1.bf16.msra.mxu0 %v5853
        %5894 = vmatprep.subr.bf16.mxu0 %v5856
        %5895 = vmatpush1.bf16.msra.mxu0 %v5855
        %5896 = vmatprep.subr.bf16.mxu0 %v5858
        %5897 = vmatpush1.bf16.msra.mxu0 %v5857
        %5898 = vmatprep.subr.bf16.mxu0 %v5860
        %5899 = vmatpush1.bf16.msra.mxu0 %v5859
        %5900 = vmatprep.subr.bf16.mxu0 0
        %5901 = vmatpush1.bf16.msra.mxu0 0
        %5902 = vmatprep.subr.bf16.mxu0 0
        %5903 = vmatpush1.bf16.msra.mxu0 0
        %5904 = vmatprep.subr.bf16.mxu0 0
        %5905 = vmatpush1.bf16.msra.mxu0 0
        %5906 = vmatprep.subr.bf16.mxu0 0
        %5907 = vmatpush1.bf16.msra.mxu0 0
        %5908 = vmatprep.subr.bf16.mxu0 0
        %5909 = vmatpush1.bf16.msra.mxu0 0
        %5910 = vmatprep.subr.bf16.mxu0 0
        %5911 = vmatpush1.bf16.msra.mxu0 0
        %5912 = vmatprep.subr.bf16.mxu0 0
        %5913 = vmatpush1.bf16.msra.mxu0 0
        %5914 = vmatprep.subr.bf16.mxu0 0
        %5915 = vmatpush1.bf16.msra.mxu0 0
        %5916 = vmatprep.subr.bf16.mxu0 0
        %5917 = vmatpush1.bf16.msra.mxu0 0
        %5918 = vmatprep.subr.bf16.mxu0 0
        %5919 = vmatpush1.bf16.msra.mxu0 0
        %5920 = vmatprep.mubr.bf16.mxu0 0
        %5921 = vmatmul.mubr.bf16.gmra.mrb[0].mxu0 %v5874
        %v5922 = vpop.f32.mrb[0].mxu0
        %v5923 = vadd.f32 0.0, %v5922
        %v5924 = vpop.f32.mrb[0].mxu0
        %v5925 = vadd.f32 0.0, %v5924
        %v5926 = vpop.f32.mrb[0].mxu0
        %v5927 = vadd.f32 0.0, %v5926
        %v5928 = vpop.f32.mrb[0].mxu0
        %v5929 = vadd.f32 0.0, %v5928
        %5930 = vmatprep.mubr.bf16.mxu0 0
        %5931 = vmatmul.mubr.bf16.gmra.mrb[0].mxu0 %v5877
        %v5932 = vpop.f32.mrb[0].mxu0
        %v5933 = vadd.f32 0.0, %v5932
        %v5934 = vpop.f32.mrb[0].mxu0
        %v5935 = vadd.f32 0.0, %v5934
        %v5936 = vpop.f32.mrb[0].mxu0
        %v5937 = vadd.f32 0.0, %v5936
        %v5938 = vpop.f32.mrb[0].mxu0
        %v5939 = vadd.f32 0.0, %v5938
        %5940 = vmatprep.mubr.bf16.mxu0 0
        %5941 = vmatmul.mubr.bf16.gmra.mrb[0].mxu0 %v5880
        %v5942 = vpop.f32.mrb[0].mxu0
        %v5943 = vadd.f32 0.0, %v5942
        %v5944 = vpop.f32.mrb[0].mxu0
        %v5945 = vadd.f32 0.0, %v5944
        %v5946 = vpop.f32.mrb[0].mxu0
        %v5947 = vadd.f32 0.0, %v5946
        %v5948 = vpop.f32.mrb[0].mxu0
        %v5949 = vadd.f32 0.0, %v5948
        %5950 = vmatprep.mubr.bf16.mxu0 0
        %5951 = vmatmul.mubr.bf16.gmra.mrb[0].mxu0 %v5883
        %v5952 = vpop.f32.mrb[0].mxu0
        %v5953 = vadd.f32 0.0, %v5952
        %v5954 = vpop.f32.mrb[0].mxu0
        %v5955 = vadd.f32 0.0, %v5954
        %v5956 = vpop.f32.mrb[0].mxu0
        %v5957 = vadd.f32 0.0, %v5956
        %v5958 = vpop.f32.mrb[0].mxu0
        %v5959 = vadd.f32 0.0, %v5958
        %5960 = vmatprep.mubr.bf16.mxu0 0
        %5961 = vmatmul.mubr.bf16.gmra.mrb[0].mxu0 %v5886
        %v5962 = vpop.f32.mrb[0].mxu0
        %v5963 = vadd.f32 0.0, %v5962
        %v5964 = vpop.f32.mrb[0].mxu0
        %v5965 = vadd.f32 0.0, %v5964
        %v5966 = vpop.f32.mrb[0].mxu0
        %v5967 = vadd.f32 0.0, %v5966
        %v5968 = vpop.f32.mrb[0].mxu0
        %v5969 = vadd.f32 0.0, %v5968
        %5970 = vdwg.mxu0
        %v5971 = vadd.f32 %v5760, %v5923
        %v5972 = vadd.f32 %v5761, %v5925
        %v5973 = vadd.f32 %v5762, %v5927
        %v5974 = vadd.f32 %v5763, %v5929
        %v5975 = vadd.f32 %v5764, %v5933
        %v5976 = vadd.f32 %v5765, %v5935
        %v5977 = vadd.f32 %v5766, %v5937
        %v5978 = vadd.f32 %v5767, %v5939
        %v5979 = vadd.f32 %v5768, %v5943
        %v5980 = vadd.f32 %v5769, %v5945
        %v5981 = vadd.f32 %v5770, %v5947
        %v5982 = vadd.f32 %v5771, %v5949
        %v5983 = vadd.f32 %v5772, %v5953
        %v5984 = vadd.f32 %v5773, %v5955
        %v5985 = vadd.f32 %v5774, %v5957
        %v5986 = vadd.f32 %v5775, %v5959
        %v5987 = vadd.f32 %v5776, %v5963
        %v5988 = vadd.f32 %v5777, %v5965
        %v5989 = vadd.f32 %v5778, %v5967
        %v5990 = vadd.f32 %v5779, %v5969
        %s5991 = scalar_lea.vmem %s5, 1920
        %v5992 = vld [vmem:[%s5991] sm:$0xff]
        %v5993 = vld [vmem:[%s5991 + $0x8] sm:$0xff]
        %v5994 = vld [vmem:[%s5991 + $0x10] sm:$0xff]
        %v5995 = vld [vmem:[%s5991 + $0x18] sm:$0xff]
        %v5996 = vld [vmem:[%s5991 + $0x20] sm:$0xff]
        %v5997 = vld [vmem:[%s5991 + $0x28] sm:$0xff]
        %v5998 = vld [vmem:[%s5991 + $0x30] sm:$0xff]
        %v5999 = vld [vmem:[%s5991 + $0x38] sm:$0xff]
        %v6000 = vld [vmem:[%s5991 + $0x40] sm:$0xff]
        %v6001 = vld [vmem:[%s5991 + $0x48] sm:$0xff]
        %v6002 = vld [vmem:[%s5991 + $0x50] sm:$0xff]
        %v6003 = vld [vmem:[%s5991 + $0x58] sm:$0xff]
        %v6005 = vrot.slane %v1933, 6
        %v6006 = vsel %vm3163, %v3173, %v6005
        %v6007 = vrot.slane %v1934, 6
        %v6008 = vsel %vm3163, %v6005, %v6007
        %v6021 = vunpack.c.l.b16 %v5992
        %v6022 = vunpack.c.h.b16 %v5992
        %v6023 = vunpack.c.l.b16 %v5993
        %v6024 = vunpack.c.h.b16 %v5993
        %v6025 = vunpack.c.l.b16 %v5994
        %v6026 = vunpack.c.h.b16 %v5994
        %v6027 = vunpack.c.l.b16 %v5995
        %v6028 = vunpack.c.h.b16 %v5995
        %v6029 = vunpack.c.l.b16 %v5996
        %v6030 = vunpack.c.h.b16 %v5996
        %v6031 = vunpack.c.l.b16 %v5997
        %v6032 = vunpack.c.h.b16 %v5997
        %v6033 = vunpack.c.l.b16 %v5998
        %v6034 = vunpack.c.h.b16 %v5998
        %v6035 = vunpack.c.l.b16 %v5999
        %v6036 = vunpack.c.h.b16 %v5999
        %v6037 = vunpack.c.l.b16 %v6000
        %v6038 = vunpack.c.h.b16 %v6000
        %v6039 = vunpack.c.l.b16 %v6001
        %v6040 = vunpack.c.h.b16 %v6001
        %v6041 = vunpack.c.l.b16 %v6002
        %v6042 = vunpack.c.h.b16 %v6002
        %v6043 = vunpack.c.l.b16 %v6003
        %v6044 = vunpack.c.h.b16 %v6003
        %v6045 = vpack.c.b16 %v6023, %v6021
        %v6046 = vpack.c.b16 %v6024, %v6022
        %v6047 = vpack.c.b16 %v6027, %v6025
        %v6048 = vpack.c.b16 %v6028, %v6026
        %v6049 = vpack.c.b16 %v6031, %v6029
        %v6050 = vpack.c.b16 %v6032, %v6030
        %v6051 = vpack.c.b16 %v6035, %v6033
        %v6052 = vpack.c.b16 %v6036, %v6034
        %v6053 = vpack.c.b16 %v6039, %v6037
        %v6054 = vpack.c.b16 %v6040, %v6038
        %v6055 = vpack.c.b16 %v6043, %v6041
        %v6056 = vpack.c.b16 %v6044, %v6042
        %v6070 = vsel %vm797, %v6006, 0
        %v6073 = vsel %vm797, %v6008, 0
        %6075 = vmatprep.subr.bf16.mxu0 %v6046
        %6076 = vmatpush1.bf16.msra.mxu0 %v6045
        %6077 = vmatprep.subr.bf16.mxu0 %v6048
        %6078 = vmatpush1.bf16.msra.mxu0 %v6047
        %6079 = vmatprep.subr.bf16.mxu0 %v6050
        %6080 = vmatpush1.bf16.msra.mxu0 %v6049
        %6081 = vmatprep.subr.bf16.mxu0 %v6052
        %6082 = vmatpush1.bf16.msra.mxu0 %v6051
        %6083 = vmatprep.subr.bf16.mxu0 %v6054
        %6084 = vmatpush1.bf16.msra.mxu0 %v6053
        %6085 = vmatprep.subr.bf16.mxu0 %v6056
        %6086 = vmatpush1.bf16.msra.mxu0 %v6055
        %6087 = vmatprep.subr.bf16.mxu0 0
        %6088 = vmatpush1.bf16.msra.mxu0 0
        %6089 = vmatprep.subr.bf16.mxu0 0
        %6090 = vmatpush1.bf16.msra.mxu0 0
        %6091 = vmatprep.subr.bf16.mxu0 0
        %6092 = vmatpush1.bf16.msra.mxu0 0
        %6093 = vmatprep.subr.bf16.mxu0 0
        %6094 = vmatpush1.bf16.msra.mxu0 0
        %6095 = vmatprep.subr.bf16.mxu0 0
        %6096 = vmatpush1.bf16.msra.mxu0 0
        %6097 = vmatprep.subr.bf16.mxu0 0
        %6098 = vmatpush1.bf16.msra.mxu0 0
        %6099 = vmatprep.subr.bf16.mxu0 0
        %6100 = vmatpush1.bf16.msra.mxu0 0
        %6101 = vmatprep.subr.bf16.mxu0 0
        %6102 = vmatpush1.bf16.msra.mxu0 0
        %6103 = vmatprep.subr.bf16.mxu0 0
        %6104 = vmatpush1.bf16.msra.mxu0 0
        %6105 = vmatprep.subr.bf16.mxu0 0
        %6106 = vmatpush1.bf16.msra.mxu0 0
        %6107 = vmatprep.mubr.bf16.mxu0 0
        %6108 = vmatmul.mubr.bf16.gmra.mrb[0].mxu0 %v3242
        %v6109 = vpop.f32.mrb[0].mxu0
        %v6110 = vadd.f32 0.0, %v6109
        %v6111 = vpop.f32.mrb[0].mxu0
        %v6112 = vadd.f32 0.0, %v6111
        %v6113 = vpop.f32.mrb[0].mxu0
        %v6114 = vadd.f32 0.0, %v6113
        %v6115 = vpop.f32.mrb[0].mxu0
        %v6116 = vadd.f32 0.0, %v6115
        %6117 = vmatprep.mubr.bf16.mxu0 0
        %6118 = vmatmul.mubr.bf16.gmra.mrb[0].mxu0 %v3245
        %v6119 = vpop.f32.mrb[0].mxu0
        %v6120 = vadd.f32 0.0, %v6119
        %v6121 = vpop.f32.mrb[0].mxu0
        %v6122 = vadd.f32 0.0, %v6121
        %v6123 = vpop.f32.mrb[0].mxu0
        %v6124 = vadd.f32 0.0, %v6123
        %v6125 = vpop.f32.mrb[0].mxu0
        %v6126 = vadd.f32 0.0, %v6125
        %6127 = vmatprep.mubr.bf16.mxu0 0
        %6128 = vmatmul.mubr.bf16.gmra.mrb[0].mxu0 %v3248
        %v6129 = vpop.f32.mrb[0].mxu0
        %v6130 = vadd.f32 0.0, %v6129
        %v6131 = vpop.f32.mrb[0].mxu0
        %v6132 = vadd.f32 0.0, %v6131
        %v6133 = vpop.f32.mrb[0].mxu0
        %v6134 = vadd.f32 0.0, %v6133
        %v6135 = vpop.f32.mrb[0].mxu0
        %v6136 = vadd.f32 0.0, %v6135
        %6137 = vmatprep.mubr.bf16.mxu0 0
        %6138 = vmatmul.mubr.bf16.gmra.mrb[0].mxu0 %v6070
        %v6139 = vpop.f32.mrb[0].mxu0
        %v6140 = vadd.f32 0.0, %v6139
        %v6141 = vpop.f32.mrb[0].mxu0
        %v6142 = vadd.f32 0.0, %v6141
        %v6143 = vpop.f32.mrb[0].mxu0
        %v6144 = vadd.f32 0.0, %v6143
        %v6145 = vpop.f32.mrb[0].mxu0
        %v6146 = vadd.f32 0.0, %v6145
        %6147 = vmatprep.mubr.bf16.mxu0 0
        %6148 = vmatmul.mubr.bf16.gmra.mrb[0].mxu0 %v6073
        %v6149 = vpop.f32.mrb[0].mxu0
        %v6150 = vadd.f32 0.0, %v6149
        %v6151 = vpop.f32.mrb[0].mxu0
        %v6152 = vadd.f32 0.0, %v6151
        %v6153 = vpop.f32.mrb[0].mxu0
        %v6154 = vadd.f32 0.0, %v6153
        %v6155 = vpop.f32.mrb[0].mxu0
        %v6156 = vadd.f32 0.0, %v6155
        %6157 = vdwg.mxu0
        %v6158 = vadd.f32 %v5971, %v6110
        %v6159 = vadd.f32 %v5972, %v6112
        %v6160 = vadd.f32 %v5973, %v6114
        %v6161 = vadd.f32 %v5974, %v6116
        %v6162 = vadd.f32 %v5975, %v6120
        %v6163 = vadd.f32 %v5976, %v6122
        %v6164 = vadd.f32 %v5977, %v6124
        %v6165 = vadd.f32 %v5978, %v6126
        %v6166 = vadd.f32 %v5979, %v6130
        %v6167 = vadd.f32 %v5980, %v6132
        %v6168 = vadd.f32 %v5981, %v6134
        %v6169 = vadd.f32 %v5982, %v6136
        %v6170 = vadd.f32 %v5983, %v6140
        %v6171 = vadd.f32 %v5984, %v6142
        %v6172 = vadd.f32 %v5985, %v6144
        %v6173 = vadd.f32 %v5986, %v6146
        %v6174 = vadd.f32 %v5987, %v6150
        %v6175 = vadd.f32 %v5988, %v6152
        %v6176 = vadd.f32 %v5989, %v6154
        %v6177 = vadd.f32 %v5990, %v6156
        %s6178 = scalar_lea.vmem %s5, 2016
        %v6179 = vld [vmem:[%s6178] sm:$0xff]
        %v6180 = vld [vmem:[%s6178 + $0x8] sm:$0xff]
        %v6181 = vld [vmem:[%s6178 + $0x10] sm:$0xff]
        %v6182 = vld [vmem:[%s6178 + $0x18] sm:$0xff]
        %v6183 = vld [vmem:[%s6178 + $0x20] sm:$0xff]
        %v6184 = vld [vmem:[%s6178 + $0x28] sm:$0xff]
        %v6185 = vld [vmem:[%s6178 + $0x30] sm:$0xff]
        %v6186 = vld [vmem:[%s6178 + $0x38] sm:$0xff]
        %v6187 = vld [vmem:[%s6178 + $0x40] sm:$0xff]
        %v6188 = vld [vmem:[%s6178 + $0x48] sm:$0xff]
        %v6189 = vld [vmem:[%s6178 + $0x50] sm:$0xff]
        %v6190 = vld [vmem:[%s6178 + $0x58] sm:$0xff]
        %v6191 = vrot.slane %v4629, 6
        %v6192 = vrot.slane %v4632, 7
        %v6193 = vor.u32 %v6191, %v6192
        %v6194 = vsel %vm3366, %v3388, %v6193
        %v6196 = vshrl.u32 %v1934, 16
        %v6198 = vrot.slane %v6196, 6
        %v6199 = vshll.u32 %v1934, 16
        %v6201 = vrot.slane %v6199, 7
        %v6202 = vor.u32 %v6198, %v6201
        %v6203 = vsel %vm3366, %v6193, %v6202
        %v6216 = vunpack.c.l.b16 %v6179
        %v6217 = vunpack.c.h.b16 %v6179
        %v6218 = vunpack.c.l.b16 %v6180
        %v6219 = vunpack.c.h.b16 %v6180
        %v6220 = vunpack.c.l.b16 %v6181
        %v6221 = vunpack.c.h.b16 %v6181
        %v6222 = vunpack.c.l.b16 %v6182
        %v6223 = vunpack.c.h.b16 %v6182
        %v6224 = vunpack.c.l.b16 %v6183
        %v6225 = vunpack.c.h.b16 %v6183
        %v6226 = vunpack.c.l.b16 %v6184
        %v6227 = vunpack.c.h.b16 %v6184
        %v6228 = vunpack.c.l.b16 %v6185
        %v6229 = vunpack.c.h.b16 %v6185
        %v6230 = vunpack.c.l.b16 %v6186
        %v6231 = vunpack.c.h.b16 %v6186
        %v6232 = vunpack.c.l.b16 %v6187
        %v6233 = vunpack.c.h.b16 %v6187
        %v6234 = vunpack.c.l.b16 %v6188
        %v6235 = vunpack.c.h.b16 %v6188
        %v6236 = vunpack.c.l.b16 %v6189
        %v6237 = vunpack.c.h.b16 %v6189
        %v6238 = vunpack.c.l.b16 %v6190
        %v6239 = vunpack.c.h.b16 %v6190
        %v6240 = vpack.c.b16 %v6218, %v6216
        %v6241 = vpack.c.b16 %v6219, %v6217
        %v6242 = vpack.c.b16 %v6222, %v6220
        %v6243 = vpack.c.b16 %v6223, %v6221
        %v6244 = vpack.c.b16 %v6226, %v6224
        %v6245 = vpack.c.b16 %v6227, %v6225
        %v6246 = vpack.c.b16 %v6230, %v6228
        %v6247 = vpack.c.b16 %v6231, %v6229
        %v6248 = vpack.c.b16 %v6234, %v6232
        %v6249 = vpack.c.b16 %v6235, %v6233
        %v6250 = vpack.c.b16 %v6238, %v6236
        %v6251 = vpack.c.b16 %v6239, %v6237
        %v6265 = vsel %vm797, %v6194, 0
        %v6268 = vsel %vm797, %v6203, 0
        %6270 = vmatprep.subr.bf16.mxu0 %v6241
        %6271 = vmatpush1.bf16.msra.mxu0 %v6240
        %6272 = vmatprep.subr.bf16.mxu0 %v6243
        %6273 = vmatpush1.bf16.msra.mxu0 %v6242
        %6274 = vmatprep.subr.bf16.mxu0 %v6245
        %6275 = vmatpush1.bf16.msra.mxu0 %v6244
        %6276 = vmatprep.subr.bf16.mxu0 %v6247
        %6277 = vmatpush1.bf16.msra.mxu0 %v6246
        %6278 = vmatprep.subr.bf16.mxu0 %v6249
        %6279 = vmatpush1.bf16.msra.mxu0 %v6248
        %6280 = vmatprep.subr.bf16.mxu0 %v6251
        %6281 = vmatpush1.bf16.msra.mxu0 %v6250
        %6282 = vmatprep.subr.bf16.mxu0 0
        %6283 = vmatpush1.bf16.msra.mxu0 0
        %6284 = vmatprep.subr.bf16.mxu0 0
        %6285 = vmatpush1.bf16.msra.mxu0 0
        %6286 = vmatprep.subr.bf16.mxu0 0
        %6287 = vmatpush1.bf16.msra.mxu0 0
        %6288 = vmatprep.subr.bf16.mxu0 0
        %6289 = vmatpush1.bf16.msra.mxu0 0
        %6290 = vmatprep.subr.bf16.mxu0 0
        %6291 = vmatpush1.bf16.msra.mxu0 0
        %6292 = vmatprep.subr.bf16.mxu0 0
        %6293 = vmatpush1.bf16.msra.mxu0 0
        %6294 = vmatprep.subr.bf16.mxu0 0
        %6295 = vmatpush1.bf16.msra.mxu0 0
        %6296 = vmatprep.subr.bf16.mxu0 0
        %6297 = vmatpush1.bf16.msra.mxu0 0
        %6298 = vmatprep.subr.bf16.mxu0 0
        %6299 = vmatpush1.bf16.msra.mxu0 0
        %6300 = vmatprep.subr.bf16.mxu0 0
        %6301 = vmatpush1.bf16.msra.mxu0 0
        %6302 = vmatprep.mubr.bf16.mxu0 0
        %6303 = vmatmul.mubr.bf16.gmra.mrb[0].mxu0 %v3457
        %v6304 = vpop.f32.mrb[0].mxu0
        %v6305 = vadd.f32 0.0, %v6304
        %v6306 = vpop.f32.mrb[0].mxu0
        %v6307 = vadd.f32 0.0, %v6306
        %v6308 = vpop.f32.mrb[0].mxu0
        %v6309 = vadd.f32 0.0, %v6308
        %v6310 = vpop.f32.mrb[0].mxu0
        %v6311 = vadd.f32 0.0, %v6310
        %6312 = vmatprep.mubr.bf16.mxu0 0
        %6313 = vmatmul.mubr.bf16.gmra.mrb[0].mxu0 %v3460
        %v6314 = vpop.f32.mrb[0].mxu0
        %v6315 = vadd.f32 0.0, %v6314
        %v6316 = vpop.f32.mrb[0].mxu0
        %v6317 = vadd.f32 0.0, %v6316
        %v6318 = vpop.f32.mrb[0].mxu0
        %v6319 = vadd.f32 0.0, %v6318
        %v6320 = vpop.f32.mrb[0].mxu0
        %v6321 = vadd.f32 0.0, %v6320
        %6322 = vmatprep.mubr.bf16.mxu0 0
        %6323 = vmatmul.mubr.bf16.gmra.mrb[0].mxu0 %v3463
        %v6324 = vpop.f32.mrb[0].mxu0
        %v6325 = vadd.f32 0.0, %v6324
        %v6326 = vpop.f32.mrb[0].mxu0
        %v6327 = vadd.f32 0.0, %v6326
        %v6328 = vpop.f32.mrb[0].mxu0
        %v6329 = vadd.f32 0.0, %v6328
        %v6330 = vpop.f32.mrb[0].mxu0
        %v6331 = vadd.f32 0.0, %v6330
        %6332 = vmatprep.mubr.bf16.mxu0 0
        %6333 = vmatmul.mubr.bf16.gmra.mrb[0].mxu0 %v6265
        %v6334 = vpop.f32.mrb[0].mxu0
        %v6335 = vadd.f32 0.0, %v6334
        %v6336 = vpop.f32.mrb[0].mxu0
        %v6337 = vadd.f32 0.0, %v6336
        %v6338 = vpop.f32.mrb[0].mxu0
        %v6339 = vadd.f32 0.0, %v6338
        %v6340 = vpop.f32.mrb[0].mxu0
        %v6341 = vadd.f32 0.0, %v6340
        %6342 = vmatprep.mubr.bf16.mxu0 0
        %6343 = vmatmul.mubr.bf16.gmra.mrb[0].mxu0 %v6268
        %v6344 = vpop.f32.mrb[0].mxu0
        %v6345 = vadd.f32 0.0, %v6344
        %v6346 = vpop.f32.mrb[0].mxu0
        %v6347 = vadd.f32 0.0, %v6346
        %v6348 = vpop.f32.mrb[0].mxu0
        %v6349 = vadd.f32 0.0, %v6348
        %v6350 = vpop.f32.mrb[0].mxu0
        %v6351 = vadd.f32 0.0, %v6350
        %6352 = vdwg.mxu0
        %v6353 = vadd.f32 %v6158, %v6305
        %v6354 = vadd.f32 %v6159, %v6307
        %v6355 = vadd.f32 %v6160, %v6309
        %v6356 = vadd.f32 %v6161, %v6311
        %v6357 = vadd.f32 %v6162, %v6315
        %v6358 = vadd.f32 %v6163, %v6317
        %v6359 = vadd.f32 %v6164, %v6319
        %v6360 = vadd.f32 %v6165, %v6321
        %v6361 = vadd.f32 %v6166, %v6325
        %v6362 = vadd.f32 %v6167, %v6327
        %v6363 = vadd.f32 %v6168, %v6329
        %v6364 = vadd.f32 %v6169, %v6331
        %v6365 = vadd.f32 %v6170, %v6335
        %v6366 = vadd.f32 %v6171, %v6337
        %v6367 = vadd.f32 %v6172, %v6339
        %v6368 = vadd.f32 %v6173, %v6341
        %v6369 = vadd.f32 %v6174, %v6345
        %v6370 = vadd.f32 %v6175, %v6347
        %v6371 = vadd.f32 %v6176, %v6349
        %v6372 = vadd.f32 %v6177, %v6351
        %s6373 = scalar_lea.vmem %s5, 2112
        %v6374 = vld [vmem:[%s6373] sm:$0xff]
        %v6375 = vld [vmem:[%s6373 + $0x8] sm:$0xff]
        %v6376 = vld [vmem:[%s6373 + $0x10] sm:$0xff]
        %v6377 = vld [vmem:[%s6373 + $0x18] sm:$0xff]
        %v6378 = vld [vmem:[%s6373 + $0x20] sm:$0xff]
        %v6379 = vld [vmem:[%s6373 + $0x28] sm:$0xff]
        %v6380 = vld [vmem:[%s6373 + $0x30] sm:$0xff]
        %v6381 = vld [vmem:[%s6373 + $0x38] sm:$0xff]
        %v6382 = vld [vmem:[%s6373 + $0x40] sm:$0xff]
        %v6383 = vld [vmem:[%s6373 + $0x48] sm:$0xff]
        %v6384 = vld [vmem:[%s6373 + $0x50] sm:$0xff]
        %v6385 = vld [vmem:[%s6373 + $0x58] sm:$0xff]
        %v6386 = vrot.slane %v1933, 7
        %v6387 = vsel %vm3581, %v3591, %v6386
        %v6388 = vrot.slane %v1934, 7
        %v6389 = vsel %vm3581, %v6386, %v6388
        %v6402 = vunpack.c.l.b16 %v6374
        %v6403 = vunpack.c.h.b16 %v6374
        %v6404 = vunpack.c.l.b16 %v6375
        %v6405 = vunpack.c.h.b16 %v6375
        %v6406 = vunpack.c.l.b16 %v6376
        %v6407 = vunpack.c.h.b16 %v6376
        %v6408 = vunpack.c.l.b16 %v6377
        %v6409 = vunpack.c.h.b16 %v6377
        %v6410 = vunpack.c.l.b16 %v6378
        %v6411 = vunpack.c.h.b16 %v6378
        %v6412 = vunpack.c.l.b16 %v6379
        %v6413 = vunpack.c.h.b16 %v6379
        %v6414 = vunpack.c.l.b16 %v6380
        %v6415 = vunpack.c.h.b16 %v6380
        %v6416 = vunpack.c.l.b16 %v6381
        %v6417 = vunpack.c.h.b16 %v6381
        %v6418 = vunpack.c.l.b16 %v6382
        %v6419 = vunpack.c.h.b16 %v6382
        %v6420 = vunpack.c.l.b16 %v6383
        %v6421 = vunpack.c.h.b16 %v6383
        %v6422 = vunpack.c.l.b16 %v6384
        %v6423 = vunpack.c.h.b16 %v6384
        %v6424 = vunpack.c.l.b16 %v6385
        %v6425 = vunpack.c.h.b16 %v6385
        %v6426 = vpack.c.b16 %v6404, %v6402
        %v6427 = vpack.c.b16 %v6405, %v6403
        %v6428 = vpack.c.b16 %v6408, %v6406
        %v6429 = vpack.c.b16 %v6409, %v6407
        %v6430 = vpack.c.b16 %v6412, %v6410
        %v6431 = vpack.c.b16 %v6413, %v6411
        %v6432 = vpack.c.b16 %v6416, %v6414
        %v6433 = vpack.c.b16 %v6417, %v6415
        %v6434 = vpack.c.b16 %v6420, %v6418
        %v6435 = vpack.c.b16 %v6421, %v6419
        %v6436 = vpack.c.b16 %v6424, %v6422
        %v6437 = vpack.c.b16 %v6425, %v6423
        %v6451 = vsel %vm797, %v6387, 0
        %v6454 = vsel %vm797, %v6389, 0
        %6456 = vmatprep.subr.bf16.mxu0 %v6427
        %6457 = vmatpush1.bf16.msra.mxu0 %v6426
        %6458 = vmatprep.subr.bf16.mxu0 %v6429
        %6459 = vmatpush1.bf16.msra.mxu0 %v6428
        %6460 = vmatprep.subr.bf16.mxu0 %v6431
        %6461 = vmatpush1.bf16.msra.mxu0 %v6430
        %6462 = vmatprep.subr.bf16.mxu0 %v6433
        %6463 = vmatpush1.bf16.msra.mxu0 %v6432
        %6464 = vmatprep.subr.bf16.mxu0 %v6435
        %6465 = vmatpush1.bf16.msra.mxu0 %v6434
        %6466 = vmatprep.subr.bf16.mxu0 %v6437
        %6467 = vmatpush1.bf16.msra.mxu0 %v6436
        %6468 = vmatprep.subr.bf16.mxu0 0
        %6469 = vmatpush1.bf16.msra.mxu0 0
        %6470 = vmatprep.subr.bf16.mxu0 0
        %6471 = vmatpush1.bf16.msra.mxu0 0
        %6472 = vmatprep.subr.bf16.mxu0 0
        %6473 = vmatpush1.bf16.msra.mxu0 0
        %6474 = vmatprep.subr.bf16.mxu0 0
        %6475 = vmatpush1.bf16.msra.mxu0 0
        %6476 = vmatprep.subr.bf16.mxu0 0
        %6477 = vmatpush1.bf16.msra.mxu0 0
        %6478 = vmatprep.subr.bf16.mxu0 0
        %6479 = vmatpush1.bf16.msra.mxu0 0
        %6480 = vmatprep.subr.bf16.mxu0 0
        %6481 = vmatpush1.bf16.msra.mxu0 0
        %6482 = vmatprep.subr.bf16.mxu0 0
        %6483 = vmatpush1.bf16.msra.mxu0 0
        %6484 = vmatprep.subr.bf16.mxu0 0
        %6485 = vmatpush1.bf16.msra.mxu0 0
        %6486 = vmatprep.subr.bf16.mxu0 0
        %6487 = vmatpush1.bf16.msra.mxu0 0
        %6488 = vmatprep.mubr.bf16.mxu0 0
        %6489 = vmatmul.mubr.bf16.gmra.mrb[0].mxu0 %v3660
        %v6490 = vpop.f32.mrb[0].mxu0
        %v6491 = vadd.f32 0.0, %v6490
        %v6492 = vpop.f32.mrb[0].mxu0
        %v6493 = vadd.f32 0.0, %v6492
        %v6494 = vpop.f32.mrb[0].mxu0
        %v6495 = vadd.f32 0.0, %v6494
        %v6496 = vpop.f32.mrb[0].mxu0
        %v6497 = vadd.f32 0.0, %v6496
        %6498 = vmatprep.mubr.bf16.mxu0 0
        %6499 = vmatmul.mubr.bf16.gmra.mrb[0].mxu0 %v3663
        %v6500 = vpop.f32.mrb[0].mxu0
        %v6501 = vadd.f32 0.0, %v6500
        %v6502 = vpop.f32.mrb[0].mxu0
        %v6503 = vadd.f32 0.0, %v6502
        %v6504 = vpop.f32.mrb[0].mxu0
        %v6505 = vadd.f32 0.0, %v6504
        %v6506 = vpop.f32.mrb[0].mxu0
        %v6507 = vadd.f32 0.0, %v6506
        %6508 = vmatprep.mubr.bf16.mxu0 0
        %6509 = vmatmul.mubr.bf16.gmra.mrb[0].mxu0 %v3666
        %v6510 = vpop.f32.mrb[0].mxu0
        %v6511 = vadd.f32 0.0, %v6510
        %v6512 = vpop.f32.mrb[0].mxu0
        %v6513 = vadd.f32 0.0, %v6512
        %v6514 = vpop.f32.mrb[0].mxu0
        %v6515 = vadd.f32 0.0, %v6514
        %v6516 = vpop.f32.mrb[0].mxu0
        %v6517 = vadd.f32 0.0, %v6516
        %6518 = vmatprep.mubr.bf16.mxu0 0
        %6519 = vmatmul.mubr.bf16.gmra.mrb[0].mxu0 %v6451
        %v6520 = vpop.f32.mrb[0].mxu0
        %v6521 = vadd.f32 0.0, %v6520
        %v6522 = vpop.f32.mrb[0].mxu0
        %v6523 = vadd.f32 0.0, %v6522
        %v6524 = vpop.f32.mrb[0].mxu0
        %v6525 = vadd.f32 0.0, %v6524
        %v6526 = vpop.f32.mrb[0].mxu0
        %v6527 = vadd.f32 0.0, %v6526
        %6528 = vmatprep.mubr.bf16.mxu0 0
        %6529 = vmatmul.mubr.bf16.gmra.mrb[0].mxu0 %v6454
        %v6530 = vpop.f32.mrb[0].mxu0
        %v6531 = vadd.f32 0.0, %v6530
        %v6532 = vpop.f32.mrb[0].mxu0
        %v6533 = vadd.f32 0.0, %v6532
        %v6534 = vpop.f32.mrb[0].mxu0
        %v6535 = vadd.f32 0.0, %v6534
        %v6536 = vpop.f32.mrb[0].mxu0
        %v6537 = vadd.f32 0.0, %v6536
        %6538 = vdwg.mxu0
        %v6539 = vadd.f32 %v6353, %v6491
        %v6540 = vadd.f32 %v6354, %v6493
        %v6541 = vadd.f32 %v6355, %v6495
        %v6542 = vadd.f32 %v6356, %v6497
        %v6543 = vadd.f32 %v6357, %v6501
        %v6544 = vadd.f32 %v6358, %v6503
        %v6545 = vadd.f32 %v6359, %v6505
        %v6546 = vadd.f32 %v6360, %v6507
        %v6547 = vadd.f32 %v6361, %v6511
        %v6548 = vadd.f32 %v6362, %v6513
        %v6549 = vadd.f32 %v6363, %v6515
        %v6550 = vadd.f32 %v6364, %v6517
        %v6551 = vadd.f32 %v6365, %v6521
        %v6552 = vadd.f32 %v6366, %v6523
        %v6553 = vadd.f32 %v6367, %v6525
        %v6554 = vadd.f32 %v6368, %v6527
        %v6555 = vadd.f32 %v6369, %v6531
        %v6556 = vadd.f32 %v6370, %v6533
        %v6557 = vadd.f32 %v6371, %v6535
        %v6558 = vadd.f32 %v6372, %v6537
        %s6559 = scalar_lea.vmem %s5, 2208
        %v6560 = vld [vmem:[%s6559] sm:$0xff]
        %v6561 = vld [vmem:[%s6559 + $0x8] sm:$0xff]
        %v6562 = vld [vmem:[%s6559 + $0x10] sm:$0xff]
        %v6563 = vld [vmem:[%s6559 + $0x18] sm:$0xff]
        %v6564 = vld [vmem:[%s6559 + $0x20] sm:$0xff]
        %v6565 = vld [vmem:[%s6559 + $0x28] sm:$0xff]
        %v6566 = vld [vmem:[%s6559 + $0x30] sm:$0xff]
        %v6567 = vld [vmem:[%s6559 + $0x38] sm:$0xff]
        %v6568 = vld [vmem:[%s6559 + $0x40] sm:$0xff]
        %v6569 = vld [vmem:[%s6559 + $0x48] sm:$0xff]
        %v6570 = vld [vmem:[%s6559 + $0x50] sm:$0xff]
        %v6571 = vld [vmem:[%s6559 + $0x58] sm:$0xff]
        %v6572 = vrot.slane %v4629, 7
        %v6573 = vor.u32 %v6572, %v4632
        %v6574 = vsel %vm3784, %v3798, %v6573
        %v6575 = vrot.slane %v6196, 7
        %v6576 = vor.u32 %v6575, %v6199
        %v6577 = vsel %vm3784, %v6572, %v6576
        %v6590 = vunpack.c.l.b16 %v6560
        %v6591 = vunpack.c.h.b16 %v6560
        %v6592 = vunpack.c.l.b16 %v6561
        %v6593 = vunpack.c.h.b16 %v6561
        %v6594 = vunpack.c.l.b16 %v6562
        %v6595 = vunpack.c.h.b16 %v6562
        %v6596 = vunpack.c.l.b16 %v6563
        %v6597 = vunpack.c.h.b16 %v6563
        %v6598 = vunpack.c.l.b16 %v6564
        %v6599 = vunpack.c.h.b16 %v6564
        %v6600 = vunpack.c.l.b16 %v6565
        %v6601 = vunpack.c.h.b16 %v6565
        %v6602 = vunpack.c.l.b16 %v6566
        %v6603 = vunpack.c.h.b16 %v6566
        %v6604 = vunpack.c.l.b16 %v6567
        %v6605 = vunpack.c.h.b16 %v6567
        %v6606 = vunpack.c.l.b16 %v6568
        %v6607 = vunpack.c.h.b16 %v6568
        %v6608 = vunpack.c.l.b16 %v6569
        %v6609 = vunpack.c.h.b16 %v6569
        %v6610 = vunpack.c.l.b16 %v6570
        %v6611 = vunpack.c.h.b16 %v6570
        %v6612 = vunpack.c.l.b16 %v6571
        %v6613 = vunpack.c.h.b16 %v6571
        %v6614 = vpack.c.b16 %v6592, %v6590
        %v6615 = vpack.c.b16 %v6593, %v6591
        %v6616 = vpack.c.b16 %v6596, %v6594
        %v6617 = vpack.c.b16 %v6597, %v6595
        %v6618 = vpack.c.b16 %v6600, %v6598
        %v6619 = vpack.c.b16 %v6601, %v6599
        %v6620 = vpack.c.b16 %v6604, %v6602
        %v6621 = vpack.c.b16 %v6605, %v6603
        %v6622 = vpack.c.b16 %v6608, %v6606
        %v6623 = vpack.c.b16 %v6609, %v6607
        %v6624 = vpack.c.b16 %v6612, %v6610
        %v6625 = vpack.c.b16 %v6613, %v6611
        %v6639 = vsel %vm797, %v6574, 0
        %v6642 = vsel %vm797, %v6577, 0
        %6644 = vmatprep.subr.bf16.mxu0 %v6615
        %6645 = vmatpush1.bf16.msra.mxu0 %v6614
        %6646 = vmatprep.subr.bf16.mxu0 %v6617
        %6647 = vmatpush1.bf16.msra.mxu0 %v6616
        %6648 = vmatprep.subr.bf16.mxu0 %v6619
        %6649 = vmatpush1.bf16.msra.mxu0 %v6618
        %6650 = vmatprep.subr.bf16.mxu0 %v6621
        %6651 = vmatpush1.bf16.msra.mxu0 %v6620
        %6652 = vmatprep.subr.bf16.mxu0 %v6623
        %6653 = vmatpush1.bf16.msra.mxu0 %v6622
        %6654 = vmatprep.subr.bf16.mxu0 %v6625
        %6655 = vmatpush1.bf16.msra.mxu0 %v6624
        %6656 = vmatprep.subr.bf16.mxu0 0
        %6657 = vmatpush1.bf16.msra.mxu0 0
        %6658 = vmatprep.subr.bf16.mxu0 0
        %6659 = vmatpush1.bf16.msra.mxu0 0
        %6660 = vmatprep.subr.bf16.mxu0 0
        %6661 = vmatpush1.bf16.msra.mxu0 0
        %6662 = vmatprep.subr.bf16.mxu0 0
        %6663 = vmatpush1.bf16.msra.mxu0 0
        %6664 = vmatprep.subr.bf16.mxu0 0
        %6665 = vmatpush1.bf16.msra.mxu0 0
        %6666 = vmatprep.subr.bf16.mxu0 0
        %6667 = vmatpush1.bf16.msra.mxu0 0
        %6668 = vmatprep.subr.bf16.mxu0 0
        %6669 = vmatpush1.bf16.msra.mxu0 0
        %6670 = vmatprep.subr.bf16.mxu0 0
        %6671 = vmatpush1.bf16.msra.mxu0 0
        %6672 = vmatprep.subr.bf16.mxu0 0
        %6673 = vmatpush1.bf16.msra.mxu0 0
        %6674 = vmatprep.subr.bf16.mxu0 0
        %6675 = vmatpush1.bf16.msra.mxu0 0
        %6676 = vmatprep.mubr.bf16.mxu0 0
        %6677 = vmatmul.mubr.bf16.gmra.mrb[0].mxu0 %v3868
        %v6678 = vpop.f32.mrb[0].mxu0
        %v6679 = vadd.f32 0.0, %v6678
        %v6680 = vpop.f32.mrb[0].mxu0
        %v6681 = vadd.f32 0.0, %v6680
        %v6682 = vpop.f32.mrb[0].mxu0
        %v6683 = vadd.f32 0.0, %v6682
        %v6684 = vpop.f32.mrb[0].mxu0
        %v6685 = vadd.f32 0.0, %v6684
        %6686 = vmatprep.mubr.bf16.mxu0 0
        %6687 = vmatmul.mubr.bf16.gmra.mrb[0].mxu0 %v3871
        %v6688 = vpop.f32.mrb[0].mxu0
        %v6689 = vadd.f32 0.0, %v6688
        %v6690 = vpop.f32.mrb[0].mxu0
        %v6691 = vadd.f32 0.0, %v6690
        %v6692 = vpop.f32.mrb[0].mxu0
        %v6693 = vadd.f32 0.0, %v6692
        %v6694 = vpop.f32.mrb[0].mxu0
        %v6695 = vadd.f32 0.0, %v6694
        %6696 = vmatprep.mubr.bf16.mxu0 0
        %6697 = vmatmul.mubr.bf16.gmra.mrb[0].mxu0 %v3874
        %v6698 = vpop.f32.mrb[0].mxu0
        %v6699 = vadd.f32 0.0, %v6698
        %v6700 = vpop.f32.mrb[0].mxu0
        %v6701 = vadd.f32 0.0, %v6700
        %v6702 = vpop.f32.mrb[0].mxu0
        %v6703 = vadd.f32 0.0, %v6702
        %v6704 = vpop.f32.mrb[0].mxu0
        %v6705 = vadd.f32 0.0, %v6704
        %6706 = vmatprep.mubr.bf16.mxu0 0
        %6707 = vmatmul.mubr.bf16.gmra.mrb[0].mxu0 %v6639
        %v6708 = vpop.f32.mrb[0].mxu0
        %v6709 = vadd.f32 0.0, %v6708
        %v6710 = vpop.f32.mrb[0].mxu0
        %v6711 = vadd.f32 0.0, %v6710
        %v6712 = vpop.f32.mrb[0].mxu0
        %v6713 = vadd.f32 0.0, %v6712
        %v6714 = vpop.f32.mrb[0].mxu0
        %v6715 = vadd.f32 0.0, %v6714
        %6716 = vmatprep.mubr.bf16.mxu0 0
        %6717 = vmatmul.mubr.bf16.gmra.mrb[0].mxu0 %v6642
        %v6718 = vpop.f32.mrb[0].mxu0
        %v6719 = vadd.f32 0.0, %v6718
        %v6720 = vpop.f32.mrb[0].mxu0
        %v6721 = vadd.f32 0.0, %v6720
        %v6722 = vpop.f32.mrb[0].mxu0
        %v6723 = vadd.f32 0.0, %v6722
        %v6724 = vpop.f32.mrb[0].mxu0
        %v6725 = vadd.f32 0.0, %v6724
        %6726 = vdwg.mxu0
        %v6727 = vadd.f32 %v6539, %v6679
        %v6728 = vadd.f32 %v6540, %v6681
        %v6729 = vadd.f32 %v6541, %v6683
        %v6730 = vadd.f32 %v6542, %v6685
        %v6731 = vadd.f32 %v6543, %v6689
        %v6732 = vadd.f32 %v6544, %v6691
        %v6733 = vadd.f32 %v6545, %v6693
        %v6734 = vadd.f32 %v6546, %v6695
        %v6735 = vadd.f32 %v6547, %v6699
        %v6736 = vadd.f32 %v6548, %v6701
        %v6737 = vadd.f32 %v6549, %v6703
        %v6738 = vadd.f32 %v6550, %v6705
        %v6739 = vadd.f32 %v6551, %v6709
        %v6740 = vadd.f32 %v6552, %v6711
        %v6741 = vadd.f32 %v6553, %v6713
        %v6742 = vadd.f32 %v6554, %v6715
        %v6743 = vadd.f32 %v6555, %v6719
        %v6744 = vadd.f32 %v6556, %v6721
        %v6745 = vadd.f32 %v6557, %v6723
        %v6746 = vadd.f32 %v6558, %v6725
        %s6747 = scalar_lea.vmem %s5, 2304
        %v6748 = vld [vmem:[%s6747] sm:$0xff]
        %v6749 = vld [vmem:[%s6747 + $0x8] sm:$0xff]
        %v6750 = vld [vmem:[%s6747 + $0x10] sm:$0xff]
        %v6751 = vld [vmem:[%s6747 + $0x18] sm:$0xff]
        %v6752 = vld [vmem:[%s6747 + $0x20] sm:$0xff]
        %v6753 = vld [vmem:[%s6747 + $0x28] sm:$0xff]
        %v6754 = vld [vmem:[%s6747 + $0x30] sm:$0xff]
        %v6755 = vld [vmem:[%s6747 + $0x38] sm:$0xff]
        %v6756 = vld [vmem:[%s6747 + $0x40] sm:$0xff]
        %v6757 = vld [vmem:[%s6747 + $0x48] sm:$0xff]
        %v6758 = vld [vmem:[%s6747 + $0x50] sm:$0xff]
        %v6759 = vld [vmem:[%s6747 + $0x58] sm:$0xff]
        %v6772 = vunpack.c.l.b16 %v6748
        %v6773 = vunpack.c.h.b16 %v6748
        %v6774 = vunpack.c.l.b16 %v6749
        %v6775 = vunpack.c.h.b16 %v6749
        %v6776 = vunpack.c.l.b16 %v6750
        %v6777 = vunpack.c.h.b16 %v6750
        %v6778 = vunpack.c.l.b16 %v6751
        %v6779 = vunpack.c.h.b16 %v6751
        %v6780 = vunpack.c.l.b16 %v6752
        %v6781 = vunpack.c.h.b16 %v6752
        %v6782 = vunpack.c.l.b16 %v6753
        %v6783 = vunpack.c.h.b16 %v6753
        %v6784 = vunpack.c.l.b16 %v6754
        %v6785 = vunpack.c.h.b16 %v6754
        %v6786 = vunpack.c.l.b16 %v6755
        %v6787 = vunpack.c.h.b16 %v6755
        %v6788 = vunpack.c.l.b16 %v6756
        %v6789 = vunpack.c.h.b16 %v6756
        %v6790 = vunpack.c.l.b16 %v6757
        %v6791 = vunpack.c.h.b16 %v6757
        %v6792 = vunpack.c.l.b16 %v6758
        %v6793 = vunpack.c.h.b16 %v6758
        %v6794 = vunpack.c.l.b16 %v6759
        %v6795 = vunpack.c.h.b16 %v6759
        %v6796 = vpack.c.b16 %v6774, %v6772
        %v6797 = vpack.c.b16 %v6775, %v6773
        %v6798 = vpack.c.b16 %v6778, %v6776
        %v6799 = vpack.c.b16 %v6779, %v6777
        %v6800 = vpack.c.b16 %v6782, %v6780
        %v6801 = vpack.c.b16 %v6783, %v6781
        %v6802 = vpack.c.b16 %v6786, %v6784
        %v6803 = vpack.c.b16 %v6787, %v6785
        %v6804 = vpack.c.b16 %v6790, %v6788
        %v6805 = vpack.c.b16 %v6791, %v6789
        %v6806 = vpack.c.b16 %v6794, %v6792
        %v6807 = vpack.c.b16 %v6795, %v6793
        %v6820 = vsel %vm797, %v1932, 0
        %v6822 = vsel %vm797, %v1933, 0
        %v6824 = vsel %vm797, %v1934, 0
        %6826 = vmatprep.subr.bf16.mxu0 %v6797
        %6827 = vmatpush1.bf16.msra.mxu0 %v6796
        %6828 = vmatprep.subr.bf16.mxu0 %v6799
        %6829 = vmatpush1.bf16.msra.mxu0 %v6798
        %6830 = vmatprep.subr.bf16.mxu0 %v6801
        %6831 = vmatpush1.bf16.msra.mxu0 %v6800
        %6832 = vmatprep.subr.bf16.mxu0 %v6803
        %6833 = vmatpush1.bf16.msra.mxu0 %v6802
        %6834 = vmatprep.subr.bf16.mxu0 %v6805
        %6835 = vmatpush1.bf16.msra.mxu0 %v6804
        %6836 = vmatprep.subr.bf16.mxu0 %v6807
        %6837 = vmatpush1.bf16.msra.mxu0 %v6806
        %6838 = vmatprep.subr.bf16.mxu0 0
        %6839 = vmatpush1.bf16.msra.mxu0 0
        %6840 = vmatprep.subr.bf16.mxu0 0
        %6841 = vmatpush1.bf16.msra.mxu0 0
        %6842 = vmatprep.subr.bf16.mxu0 0
        %6843 = vmatpush1.bf16.msra.mxu0 0
        %6844 = vmatprep.subr.bf16.mxu0 0
        %6845 = vmatpush1.bf16.msra.mxu0 0
        %6846 = vmatprep.subr.bf16.mxu0 0
        %6847 = vmatpush1.bf16.msra.mxu0 0
        %6848 = vmatprep.subr.bf16.mxu0 0
        %6849 = vmatpush1.bf16.msra.mxu0 0
        %6850 = vmatprep.subr.bf16.mxu0 0
        %6851 = vmatpush1.bf16.msra.mxu0 0
        %6852 = vmatprep.subr.bf16.mxu0 0
        %6853 = vmatpush1.bf16.msra.mxu0 0
        %6854 = vmatprep.subr.bf16.mxu0 0
        %6855 = vmatpush1.bf16.msra.mxu0 0
        %6856 = vmatprep.subr.bf16.mxu0 0
        %6857 = vmatpush1.bf16.msra.mxu0 0
        %6858 = vmatprep.mubr.bf16.mxu0 0
        %6859 = vmatmul.mubr.bf16.gmra.mrb[0].mxu0 %v2224
        %v6860 = vpop.f32.mrb[0].mxu0
        %v6861 = vadd.f32 0.0, %v6860
        %v6862 = vpop.f32.mrb[0].mxu0
        %v6863 = vadd.f32 0.0, %v6862
        %v6864 = vpop.f32.mrb[0].mxu0
        %v6865 = vadd.f32 0.0, %v6864
        %v6866 = vpop.f32.mrb[0].mxu0
        %v6867 = vadd.f32 0.0, %v6866
        %6868 = vmatprep.mubr.bf16.mxu0 0
        %6869 = vmatmul.mubr.bf16.gmra.mrb[0].mxu0 %v2226
        %v6870 = vpop.f32.mrb[0].mxu0
        %v6871 = vadd.f32 0.0, %v6870
        %v6872 = vpop.f32.mrb[0].mxu0
        %v6873 = vadd.f32 0.0, %v6872
        %v6874 = vpop.f32.mrb[0].mxu0
        %v6875 = vadd.f32 0.0, %v6874
        %v6876 = vpop.f32.mrb[0].mxu0
        %v6877 = vadd.f32 0.0, %v6876
        %6878 = vmatprep.mubr.bf16.mxu0 0
        %6879 = vmatmul.mubr.bf16.gmra.mrb[0].mxu0 %v6820
        %v6880 = vpop.f32.mrb[0].mxu0
        %v6881 = vadd.f32 0.0, %v6880
        %v6882 = vpop.f32.mrb[0].mxu0
        %v6883 = vadd.f32 0.0, %v6882
        %v6884 = vpop.f32.mrb[0].mxu0
        %v6885 = vadd.f32 0.0, %v6884
        %v6886 = vpop.f32.mrb[0].mxu0
        %v6887 = vadd.f32 0.0, %v6886
        %6888 = vmatprep.mubr.bf16.mxu0 0
        %6889 = vmatmul.mubr.bf16.gmra.mrb[0].mxu0 %v6822
        %v6890 = vpop.f32.mrb[0].mxu0
        %v6891 = vadd.f32 0.0, %v6890
        %v6892 = vpop.f32.mrb[0].mxu0
        %v6893 = vadd.f32 0.0, %v6892
        %v6894 = vpop.f32.mrb[0].mxu0
        %v6895 = vadd.f32 0.0, %v6894
        %v6896 = vpop.f32.mrb[0].mxu0
        %v6897 = vadd.f32 0.0, %v6896
        %6898 = vmatprep.mubr.bf16.mxu0 0
        %6899 = vmatmul.mubr.bf16.gmra.mrb[0].mxu0 %v6824
        %v6900 = vpop.f32.mrb[0].mxu0
        %v6901 = vadd.f32 0.0, %v6900
        %v6902 = vpop.f32.mrb[0].mxu0
        %v6903 = vadd.f32 0.0, %v6902
        %v6904 = vpop.f32.mrb[0].mxu0
        %v6905 = vadd.f32 0.0, %v6904
        %v6906 = vpop.f32.mrb[0].mxu0
        %v6907 = vadd.f32 0.0, %v6906
        %6908 = vdwg.mxu0
        %v6909 = vadd.f32 %v6727, %v6861
        %v6910 = vadd.f32 %v6728, %v6863
        %v6911 = vadd.f32 %v6729, %v6865
        %v6912 = vadd.f32 %v6730, %v6867
        %v6913 = vadd.f32 %v6731, %v6871
        %v6914 = vadd.f32 %v6732, %v6873
        %v6915 = vadd.f32 %v6733, %v6875
        %v6916 = vadd.f32 %v6734, %v6877
        %v6917 = vadd.f32 %v6735, %v6881
        %v6918 = vadd.f32 %v6736, %v6883
        %v6919 = vadd.f32 %v6737, %v6885
        %v6920 = vadd.f32 %v6738, %v6887
        %v6921 = vadd.f32 %v6739, %v6891
        %v6922 = vadd.f32 %v6740, %v6893
        %v6923 = vadd.f32 %v6741, %v6895
        %v6924 = vadd.f32 %v6742, %v6897
        %v6925 = vadd.f32 %v6743, %v6901
        %v6926 = vadd.f32 %v6744, %v6903
        %v6927 = vadd.f32 %v6745, %v6905
        %v6928 = vadd.f32 %v6746, %v6907
        %v6929 = vld [vmem:[%s6] sm:$0x3]
        %v6931 = vlaneseq
        %v6932 = vshrl.u32 %v6931, 7
        %v6933 = vsub.s32 0, %v6932
        %v6934 = vrot.slane %v6929, %v6933
        %v6935 = vlaneseq
        %v6936 = vshrl.u32 %v6935, 7
        %v6937 = vsub.s32 1, %v6936
        %v6938 = vrot.slane %v6929, %v6937
        %v6941 = vadd.f32 %v6909, %v6934
        %v6942 = vadd.f32 %v6910, %v6938
        %v6943 = vadd.f32 %v6911, %v6934
        %v6944 = vadd.f32 %v6912, %v6938
        %v6945 = vadd.f32 %v6913, %v6934
        %v6946 = vadd.f32 %v6914, %v6938
        %v6947 = vadd.f32 %v6915, %v6934
        %v6948 = vadd.f32 %v6916, %v6938
        %v6949 = vadd.f32 %v6917, %v6934
        %v6950 = vadd.f32 %v6918, %v6938
        %v6951 = vadd.f32 %v6919, %v6934
        %v6952 = vadd.f32 %v6920, %v6938
        %v6953 = vadd.f32 %v6921, %v6934
        %v6954 = vadd.f32 %v6922, %v6938
        %v6955 = vadd.f32 %v6923, %v6934
        %v6956 = vadd.f32 %v6924, %v6938
        %v6957 = vadd.f32 %v6925, %v6934
        %v6958 = vadd.f32 %v6926, %v6938
        %v6959 = vadd.f32 %v6927, %v6934
        %v6960 = vadd.f32 %v6928, %v6938
        %v6961 = vmax.f32 %v6941, 0.0
        %v6962 = vmax.f32 %v6942, 0.0
        %v6963 = vmax.f32 %v6943, 0.0
        %v6964 = vmax.f32 %v6944, 0.0
        %v6965 = vmax.f32 %v6945, 0.0
        %v6966 = vmax.f32 %v6946, 0.0
        %v6967 = vmax.f32 %v6947, 0.0
        %v6968 = vmax.f32 %v6948, 0.0
        %v6969 = vmax.f32 %v6949, 0.0
        %v6970 = vmax.f32 %v6950, 0.0
        %v6971 = vmax.f32 %v6951, 0.0
        %v6972 = vmax.f32 %v6952, 0.0
        %v6973 = vmax.f32 %v6953, 0.0
        %v6974 = vmax.f32 %v6954, 0.0
        %v6975 = vmax.f32 %v6955, 0.0
        %v6976 = vmax.f32 %v6956, 0.0
        %v6977 = vmax.f32 %v6957, 0.0
        %v6978 = vmax.f32 %v6958, 0.0
        %v6979 = vmax.f32 %v6959, 0.0
        %v6980 = vmax.f32 %v6960, 0.0
        %v6981 = vpack.c.bf16 %v6963, %v6961
        %v6982 = vpack.c.bf16 %v6964, %v6962
        %v6983 = vpack.c.bf16 %v6967, %v6965
        %v6984 = vpack.c.bf16 %v6968, %v6966
        %v6985 = vpack.c.bf16 %v6971, %v6969
        %v6986 = vpack.c.bf16 %v6972, %v6970
        %v6987 = vpack.c.bf16 %v6975, %v6973
        %v6988 = vpack.c.bf16 %v6976, %v6974
        %v6989 = vpack.c.bf16 %v6979, %v6977
        %v6990 = vpack.c.bf16 %v6980, %v6978
        %v6991 = vld [vmem:[%s7] sm:$0xff]
        %v6992 = vld [vmem:[%s7 + $0x8] sm:$0xff]
        %v6993 = vld [vmem:[%s7 + $0x10] sm:$0xff]
        %v6994 = vld [vmem:[%s7 + $0x18] sm:$0xff]
        %v6995 = vld [vmem:[%s7 + $0x20] sm:$0xff]
        %v6996 = vld [vmem:[%s7 + $0x28] sm:$0xff]
        %v6997 = vld [vmem:[%s7 + $0x30] sm:$0xff]
        %v6998 = vld [vmem:[%s7 + $0x38] sm:$0xff]
        %v6999 = vld [vmem:[%s7 + $0x40] sm:$0xff]
        %v7000 = vld [vmem:[%s7 + $0x48] sm:$0xff]
        %v7001 = vld [vmem:[%s7 + $0x50] sm:$0xff]
        %v7002 = vld [vmem:[%s7 + $0x58] sm:$0xff]
        %v7003 = vld [vmem:[%s7 + $0x60] sm:$0xff]
        %v7004 = vld [vmem:[%s7 + $0x68] sm:$0xff]
        %v7005 = vld [vmem:[%s7 + $0x70] sm:$0xff]
        %v7006 = vld [vmem:[%s7 + $0x78] sm:$0xff]
        %v7007 = vld [vmem:[%s7 + $0x80] sm:$0xff]
        %v7008 = vld [vmem:[%s7 + $0x88] sm:$0xff]
        %v7009 = vld [vmem:[%s7 + $0x90] sm:$0xff]
        %v7010 = vld [vmem:[%s7 + $0x98] sm:$0xff]
        %v7011 = vld [vmem:[%s7 + $0xa0] sm:$0xff]
        %v7012 = vld [vmem:[%s7 + $0xa8] sm:$0xff]
        %v7013 = vld [vmem:[%s7 + $0xb0] sm:$0xff]
        %v7014 = vld [vmem:[%s7 + $0xb8] sm:$0xff]
        %v7015 = vld [vmem:[%s8] sm:$0x3]
        %v7017 = vlaneseq
        %v7018 = vshrl.u32 %v7017, 7
        %v7019 = vsub.s32 0, %v7018
        %v7020 = vrot.slane %v7015, %v7019
        %v7021 = vlaneseq
        %v7022 = vshrl.u32 %v7021, 7
        %v7023 = vsub.s32 1, %v7022
        %v7024 = vrot.slane %v7015, %v7023
        %v7051 = vunpack.c.l.b16 %v6991
        %v7052 = vunpack.c.h.b16 %v6991
        %v7053 = vunpack.c.l.b16 %v6992
        %v7054 = vunpack.c.h.b16 %v6992
        %v7055 = vunpack.c.l.b16 %v6993
        %v7056 = vunpack.c.h.b16 %v6993
        %v7057 = vunpack.c.l.b16 %v6994
        %v7058 = vunpack.c.h.b16 %v6994
        %v7059 = vunpack.c.l.b16 %v6995
        %v7060 = vunpack.c.h.b16 %v6995
        %v7061 = vunpack.c.l.b16 %v6996
        %v7062 = vunpack.c.h.b16 %v6996
        %v7063 = vunpack.c.l.b16 %v6997
        %v7064 = vunpack.c.h.b16 %v6997
        %v7065 = vunpack.c.l.b16 %v6998
        %v7066 = vunpack.c.h.b16 %v6998
        %v7067 = vunpack.c.l.b16 %v6999
        %v7068 = vunpack.c.h.b16 %v6999
        %v7069 = vunpack.c.l.b16 %v7000
        %v7070 = vunpack.c.h.b16 %v7000
        %v7071 = vunpack.c.l.b16 %v7001
        %v7072 = vunpack.c.h.b16 %v7001
        %v7073 = vunpack.c.l.b16 %v7002
        %v7074 = vunpack.c.h.b16 %v7002
        %v7075 = vunpack.c.l.b16 %v7003
        %v7076 = vunpack.c.h.b16 %v7003
        %v7077 = vunpack.c.l.b16 %v7004
        %v7078 = vunpack.c.h.b16 %v7004
        %v7079 = vunpack.c.l.b16 %v7005
        %v7080 = vunpack.c.h.b16 %v7005
        %v7081 = vunpack.c.l.b16 %v7006
        %v7082 = vunpack.c.h.b16 %v7006
        %v7083 = vunpack.c.l.b16 %v7007
        %v7084 = vunpack.c.h.b16 %v7007
        %v7085 = vunpack.c.l.b16 %v7008
        %v7086 = vunpack.c.h.b16 %v7008
        %v7087 = vunpack.c.l.b16 %v7009
        %v7088 = vunpack.c.h.b16 %v7009
        %v7089 = vunpack.c.l.b16 %v7010
        %v7090 = vunpack.c.h.b16 %v7010
        %v7091 = vunpack.c.l.b16 %v7011
        %v7092 = vunpack.c.h.b16 %v7011
        %v7093 = vunpack.c.l.b16 %v7012
        %v7094 = vunpack.c.h.b16 %v7012
        %v7095 = vunpack.c.l.b16 %v7013
        %v7096 = vunpack.c.h.b16 %v7013
        %v7097 = vunpack.c.l.b16 %v7014
        %v7098 = vunpack.c.h.b16 %v7014
        %v7099 = vpack.c.b16 %v7053, %v7051
        %v7100 = vpack.c.b16 %v7054, %v7052
        %v7101 = vpack.c.b16 %v7057, %v7055
        %v7102 = vpack.c.b16 %v7058, %v7056
        %v7103 = vpack.c.b16 %v7061, %v7059
        %v7104 = vpack.c.b16 %v7062, %v7060
        %v7105 = vpack.c.b16 %v7065, %v7063
        %v7106 = vpack.c.b16 %v7066, %v7064
        %v7107 = vpack.c.b16 %v7069, %v7067
        %v7108 = vpack.c.b16 %v7070, %v7068
        %v7109 = vpack.c.b16 %v7073, %v7071
        %v7110 = vpack.c.b16 %v7074, %v7072
        %v7111 = vpack.c.b16 %v7077, %v7075
        %v7112 = vpack.c.b16 %v7078, %v7076
        %v7113 = vpack.c.b16 %v7081, %v7079
        %v7114 = vpack.c.b16 %v7082, %v7080
        %v7115 = vpack.c.b16 %v7085, %v7083
        %v7116 = vpack.c.b16 %v7086, %v7084
        %v7117 = vpack.c.b16 %v7089, %v7087
        %v7118 = vpack.c.b16 %v7090, %v7088
        %v7119 = vpack.c.b16 %v7093, %v7091
        %v7120 = vpack.c.b16 %v7094, %v7092
        %v7121 = vpack.c.b16 %v7097, %v7095
        %v7122 = vpack.c.b16 %v7098, %v7096
        %vm7147 = vcmask 523264
        %v7149 = vsel %vm7147, %v6982, 0
        %v7152 = vsel %vm7147, %v6984, 0
        %v7155 = vsel %vm7147, %v6986, 0
        %v7158 = vsel %vm7147, %v6988, 0
        %v7161 = vsel %vm7147, %v6990, 0
        %7163 = vmatprep.subr.bf16.mxu0 %v7100
        %7164 = vmatpush1.bf16.msra.mxu0 %v7099
        %7165 = vmatprep.subr.bf16.mxu0 %v7102
        %7166 = vmatpush1.bf16.msra.mxu0 %v7101
        %7167 = vmatprep.subr.bf16.mxu0 %v7104
        %7168 = vmatpush1.bf16.msra.mxu0 %v7103
        %7169 = vmatprep.subr.bf16.mxu0 %v7106
        %7170 = vmatpush1.bf16.msra.mxu0 %v7105
        %7171 = vmatprep.subr.bf16.mxu0 %v7108
        %7172 = vmatpush1.bf16.msra.mxu0 %v7107
        %7173 = vmatprep.subr.bf16.mxu0 %v7110
        %7174 = vmatpush1.bf16.msra.mxu0 %v7109
        %7175 = vmatprep.subr.bf16.mxu0 %v7112
        %7176 = vmatpush1.bf16.msra.mxu0 %v7111
        %7177 = vmatprep.subr.bf16.mxu0 %v7114
        %7178 = vmatpush1.bf16.msra.mxu0 %v7113
        %7179 = vmatprep.subr.bf16.mxu0 %v7116
        %7180 = vmatpush1.bf16.msra.mxu0 %v7115
        %7181 = vmatprep.subr.bf16.mxu0 %v7118
        %7182 = vmatpush1.bf16.msra.mxu0 %v7117
        %7183 = vmatprep.subr.bf16.mxu0 %v7120
        %7184 = vmatpush1.bf16.msra.mxu0 %v7119
        %7185 = vmatprep.subr.bf16.mxu0 %v7122
        %7186 = vmatpush1.bf16.msra.mxu0 %v7121
        %7187 = vmatprep.subr.bf16.mxu0 0
        %7188 = vmatpush1.bf16.msra.mxu0 0
        %7189 = vmatprep.subr.bf16.mxu0 0
        %7190 = vmatpush1.bf16.msra.mxu0 0
        %7191 = vmatprep.subr.bf16.mxu0 0
        %7192 = vmatpush1.bf16.msra.mxu0 0
        %7193 = vmatprep.subr.bf16.mxu0 0
        %7194 = vmatpush1.bf16.msra.mxu0 0
        %7195 = vmatprep.mubr.bf16.mxu0 %v7149
        %7196 = vmatmul.mubr.bf16.gmra.mrb[0].mxu0 %v6981
        %v7197 = vpop.f32.mrb[0].mxu0
        %v7198 = vadd.f32 %v7020, %v7197
        %v7199 = vpop.f32.mrb[0].mxu0
        %v7200 = vadd.f32 %v7024, %v7199
        %v7201 = vpop.f32.mrb[0].mxu0
        %v7202 = vadd.f32 %v7020, %v7201
        %v7203 = vpop.f32.mrb[0].mxu0
        %v7204 = vadd.f32 %v7024, %v7203
        %7205 = vmatprep.mubr.bf16.mxu0 %v7152
        %7206 = vmatmul.mubr.bf16.gmra.mrb[0].mxu0 %v6983
        %v7207 = vpop.f32.mrb[0].mxu0
        %v7208 = vadd.f32 %v7020, %v7207
        %v7209 = vpop.f32.mrb[0].mxu0
        %v7210 = vadd.f32 %v7024, %v7209
        %v7211 = vpop.f32.mrb[0].mxu0
        %v7212 = vadd.f32 %v7020, %v7211
        %v7213 = vpop.f32.mrb[0].mxu0
        %v7214 = vadd.f32 %v7024, %v7213
        %7215 = vmatprep.mubr.bf16.mxu0 %v7155
        %7216 = vmatmul.mubr.bf16.gmra.mrb[0].mxu0 %v6985
        %v7217 = vpop.f32.mrb[0].mxu0
        %v7218 = vadd.f32 %v7020, %v7217
        %v7219 = vpop.f32.mrb[0].mxu0
        %v7220 = vadd.f32 %v7024, %v7219
        %v7221 = vpop.f32.mrb[0].mxu0
        %v7222 = vadd.f32 %v7020, %v7221
        %v7223 = vpop.f32.mrb[0].mxu0
        %v7224 = vadd.f32 %v7024, %v7223
        %7225 = vmatprep.mubr.bf16.mxu0 %v7158
        %7226 = vmatmul.mubr.bf16.gmra.mrb[0].mxu0 %v6987
        %v7227 = vpop.f32.mrb[0].mxu0
        %v7228 = vadd.f32 %v7020, %v7227
        %v7229 = vpop.f32.mrb[0].mxu0
        %v7230 = vadd.f32 %v7024, %v7229
        %v7231 = vpop.f32.mrb[0].mxu0
        %v7232 = vadd.f32 %v7020, %v7231
        %v7233 = vpop.f32.mrb[0].mxu0
        %v7234 = vadd.f32 %v7024, %v7233
        %7235 = vmatprep.mubr.bf16.mxu0 %v7161
        %7236 = vmatmul.mubr.bf16.gmra.mrb[0].mxu0 %v6989
        %v7237 = vpop.f32.mrb[0].mxu0
        %v7238 = vadd.f32 %v7020, %v7237
        %v7239 = vpop.f32.mrb[0].mxu0
        %v7240 = vadd.f32 %v7024, %v7239
        %v7241 = vpop.f32.mrb[0].mxu0
        %v7242 = vadd.f32 %v7020, %v7241
        %v7243 = vpop.f32.mrb[0].mxu0
        %v7244 = vadd.f32 %v7024, %v7243
        %7245 = vdwg.mxu0
        %v7246 = vmax.f32 %v7198, 0.0
        %v7247 = vmax.f32 %v7200, 0.0
        %v7248 = vmax.f32 %v7202, 0.0
        %v7249 = vmax.f32 %v7204, 0.0
        %v7250 = vmax.f32 %v7208, 0.0
        %v7251 = vmax.f32 %v7210, 0.0
        %v7252 = vmax.f32 %v7212, 0.0
        %v7253 = vmax.f32 %v7214, 0.0
        %v7254 = vmax.f32 %v7218, 0.0
        %v7255 = vmax.f32 %v7220, 0.0
        %v7256 = vmax.f32 %v7222, 0.0
        %v7257 = vmax.f32 %v7224, 0.0
        %v7258 = vmax.f32 %v7228, 0.0
        %v7259 = vmax.f32 %v7230, 0.0
        %v7260 = vmax.f32 %v7232, 0.0
        %v7261 = vmax.f32 %v7234, 0.0
        %v7262 = vmax.f32 %v7238, 0.0
        %v7263 = vmax.f32 %v7240, 0.0
        %v7264 = vmax.f32 %v7242, 0.0
        %v7265 = vmax.f32 %v7244, 0.0
        %7266 = vst [vmem:[#allocation4] sm:$0xff] 0.0
        %7267 = vst.msk [vmem:[#allocation4 + $0x8] sm:$0xff] %vm7147, 0.0
        %7268 = vst [vmem:[#allocation4 + $0x10] sm:$0xff] 0.0
        %7269 = vst.msk [vmem:[#allocation4 + $0x18] sm:$0xff] %vm7147, 0.0
        %7270 = vst [vmem:[#allocation4 + $0x20] sm:$0xff] 0.0
        %7271 = vst.msk [vmem:[#allocation4 + $0x28] sm:$0xff] %vm7147, 0.0
        %7272 = vst [vmem:[#allocation4 + $0x30] sm:$0xff] 0.0
        %7273 = vst.msk [vmem:[#allocation4 + $0x38] sm:$0xff] %vm7147, 0.0
        %7274 = vst [vmem:[#allocation4 + $0x40] sm:$0xff] 0.0
        %7275 = vst.msk [vmem:[#allocation4 + $0x48] sm:$0xff] %vm7147, 0.0
        %7276 = vst [vmem:[#allocation4 + $0x50] sm:$0xff] 0.0
        %7277 = vst.msk [vmem:[#allocation4 + $0x58] sm:$0xff] %vm7147, 0.0
        %7278 = vst [vmem:[#allocation4 + $0x60] sm:$0xff] 0.0
        %7279 = vst.msk [vmem:[#allocation4 + $0x68] sm:$0xff] %vm7147, 0.0
        %7280 = vst [vmem:[#allocation4 + $0x70] sm:$0xff] 0.0
        %7281 = vst.msk [vmem:[#allocation4 + $0x78] sm:$0xff] %vm7147, 0.0
        %7282 = vst [vmem:[#allocation4 + $0x80] sm:$0xff] 0.0
        %7283 = vst.msk [vmem:[#allocation4 + $0x88] sm:$0xff] %vm7147, 0.0
        %7284 = vst [vmem:[#allocation4 + $0x90] sm:$0xff] 0.0
        %7285 = vst.msk [vmem:[#allocation4 + $0x98] sm:$0xff] %vm7147, 0.0
        %7286 = vst [vmem:[#allocation4 + $0xa0] sm:$0x1] 0.0
        %vm7287 = vcmask 516096
        %7288 = vst.msk [vmem:[#allocation4 + $0xa8] sm:$0x1] %vm7287, 0.0
        %v7293 = vrot.slane %v7248, 3
        %v7294 = vrot.slane %v7250, 3
        %v7295 = vsel %vm1497, %v7293, %v7294
        %v7296 = vrot.slane %v7249, 3
        %v7297 = vrot.slane %v7251, 3
        %v7298 = vsel %vm1497, %v7296, %v7297
        %v7301 = vmax.f32 %v7246, %v7295
        %v7302 = vmax.f32 %v7247, %v7298
        %v7305 = vrot.slane %v7250, 6
        %v7306 = vrot.slane %v7252, 6
        %v7307 = vsel %vm1491, %v7305, %v7306
        %v7308 = vrot.slane %v7251, 6
        %v7309 = vrot.slane %v7253, 6
        %v7310 = vsel %vm1491, %v7308, %v7309
        %v7313 = vmax.f32 %v7301, %v7307
        %v7314 = vmax.f32 %v7302, %v7310
        %v7315 = vsel %vm1493, %v7313, -inf
        %v7316 = vrot.slane %v7315, 4
        %v7317 = vmax.f32 %v7315, %v7316
        %v7318 = vrot.slane %v7317, 2
        %v7319 = vmax.f32 %v7317, %v7318
        %v7320 = vrot.slane %v7319, 1
        %v7321 = vmax.f32 %v7319, %v7320
        %vm7322 = vcmask 518144
        %v7323 = vsel %vm7322, %v7314, -inf
        %v7324 = vrot.slane %v7323, 4
        %v7325 = vmax.f32 %v7323, %v7324
        %v7326 = vrot.slane %v7325, 2
        %v7327 = vmax.f32 %v7325, %v7326
        %v7328 = vrot.slane %v7327, 1
        %v7329 = vmax.f32 %v7327, %v7328
        %vm7330 = vcmask 1044482
        %v7331 = vsel %vm7330, %v7313, -inf
        %v7332 = vrot.slane %v7331, 4
        %v7333 = vmax.f32 %v7331, %v7332
        %v7334 = vrot.slane %v7333, 2
        %v7335 = vmax.f32 %v7333, %v7334
        %v7336 = vrot.slane %v7335, 1
        %v7337 = vmax.f32 %v7335, %v7336
        %vm7338 = vcmask 520194
        %v7339 = vsel %vm7338, %v7314, -inf
        %v7340 = vrot.slane %v7339, 4
        %v7341 = vmax.f32 %v7339, %v7340
        %v7342 = vrot.slane %v7341, 2
        %v7343 = vmax.f32 %v7341, %v7342
        %v7344 = vrot.slane %v7343, 1
        %v7345 = vmax.f32 %v7343, %v7344
        %vm7346 = vcmask 1046532
        %v7347 = vsel %vm7346, %v7313, -inf
        %v7348 = vrot.slane %v7347, 4
        %v7349 = vmax.f32 %v7347, %v7348
        %v7350 = vrot.slane %v7349, 2
        %v7351 = vmax.f32 %v7349, %v7350
        %v7352 = vrot.slane %v7351, 1
        %v7353 = vmax.f32 %v7351, %v7352
        %vm7354 = vcmask 522244
        %v7355 = vsel %vm7354, %v7314, -inf
        %v7356 = vrot.slane %v7355, 4
        %v7357 = vmax.f32 %v7355, %v7356
        %v7358 = vrot.slane %v7357, 2
        %v7359 = vmax.f32 %v7357, %v7358
        %v7360 = vrot.slane %v7359, 1
        %v7361 = vmax.f32 %v7359, %v7360
        %v7362 = vsel %vm1489, %v7321, %v7337
        %v7363 = vsel %vm1489, %v7329, %v7345
        %v7364 = vsel %vm1491, %v7362, %v7353
        %v7365 = vsel %vm1491, %v7363, %v7361
        %v7368 = vrot.slane %v7364, 2
        %v7369 = vrot.slane %v7365, 2
        %7372 = vst [vmem:[#allocation4 + $0x30] sm:$0xc0] %v7368
        %vm7373 = vcmask 523270
        %7374 = vst.msk [vmem:[#allocation4 + $0x38] sm:$0xc0] %vm7373, %v7369
        %7375 = vst [vmem:[#allocation4 + $0x40] sm:$0x1] %v7368
        %7376 = vst.msk [vmem:[#allocation4 + $0x48] sm:$0x1] %vm7287, %v7369
        %v7379 = vrot.slane %v7254, 3
        %v7380 = vrot.slane %v7255, 3
        %v7383 = vmax.f32 %v7250, %v7379
        %v7384 = vmax.f32 %v7251, %v7380
        %v7385 = vmax.f32 %v7252, %v7379
        %v7386 = vmax.f32 %v7253, %v7380
        %v7391 = vrot.slane %v7256, 6
        %v7392 = vrot.slane %v7257, 6
        %v7393 = vrot.slane %v7258, 6
        %v7394 = vsel %vm1491, %v7391, %v7393
        %v7395 = vrot.slane %v7259, 6
        %v7396 = vsel %vm1491, %v7392, %v7395
        %v7401 = vmax.f32 %v7383, %v7391
        %v7402 = vmax.f32 %v7384, %v7392
        %v7403 = vmax.f32 %v7385, %v7394
        %v7404 = vmax.f32 %v7386, %v7396
        %vm7405 = vcmask 1047558
        %v7406 = vsel %vm7405, %v7401, -inf
        %v7407 = vsel %vm1489, %v7403, -inf
        %v7408 = vmax.f32 %v7406, %v7407
        %v7409 = vrot.slane %v7408, 4
        %v7410 = vmax.f32 %v7408, %v7409
        %v7411 = vrot.slane %v7410, 2
        %v7412 = vmax.f32 %v7410, %v7411
        %v7413 = vrot.slane %v7412, 1
        %v7414 = vmax.f32 %v7412, %v7413
        %v7415 = vsel %vm7373, %v7402, -inf
        %v7416 = vsel %vm7287, %v7404, -inf
        %v7417 = vmax.f32 %v7415, %v7416
        %v7418 = vrot.slane %v7417, 4
        %v7419 = vmax.f32 %v7417, %v7418
        %v7420 = vrot.slane %v7419, 2
        %v7421 = vmax.f32 %v7419, %v7420
        %v7422 = vrot.slane %v7421, 1
        %v7423 = vmax.f32 %v7421, %v7422
        %v7424 = vsel %vm1493, %v7403, -inf
        %v7425 = vrot.slane %v7424, 4
        %v7426 = vmax.f32 %v7424, %v7425
        %v7427 = vrot.slane %v7426, 2
        %v7428 = vmax.f32 %v7426, %v7427
        %v7429 = vrot.slane %v7428, 1
        %v7430 = vmax.f32 %v7428, %v7429
        %v7431 = vsel %vm7322, %v7404, -inf
        %v7432 = vrot.slane %v7431, 4
        %v7433 = vmax.f32 %v7431, %v7432
        %v7434 = vrot.slane %v7433, 2
        %v7435 = vmax.f32 %v7433, %v7434
        %v7436 = vrot.slane %v7435, 1
        %v7437 = vmax.f32 %v7435, %v7436
        %v7438 = vsel %vm7330, %v7403, -inf
        %v7439 = vrot.slane %v7438, 4
        %v7440 = vmax.f32 %v7438, %v7439
        %v7441 = vrot.slane %v7440, 2
        %v7442 = vmax.f32 %v7440, %v7441
        %v7443 = vrot.slane %v7442, 1
        %v7444 = vmax.f32 %v7442, %v7443
        %v7445 = vsel %vm7338, %v7404, -inf
        %v7446 = vrot.slane %v7445, 4
        %v7447 = vmax.f32 %v7445, %v7446
        %v7448 = vrot.slane %v7447, 2
        %v7449 = vmax.f32 %v7447, %v7448
        %v7450 = vrot.slane %v7449, 1
        %v7451 = vmax.f32 %v7449, %v7450
        %v7452 = vsel %vm1489, %v7414, %v7430
        %v7453 = vsel %vm1489, %v7423, %v7437
        %v7454 = vsel %vm1491, %v7452, %v7444
        %v7455 = vsel %vm1491, %v7453, %v7451
        %v7458 = vrot.slane %v7454, 1
        %v7459 = vrot.slane %v7455, 1
        %7462 = vst [vmem:[#allocation4 + $0x40] sm:$0x80] %v7458
        %vm7463 = vcmask 523271
        %7464 = vst.msk [vmem:[#allocation4 + $0x48] sm:$0x80] %vm7463, %v7459
        %7465 = vst [vmem:[#allocation4 + $0x50] sm:$0x3] %v7458
        %vm7466 = vcmask 517120
        %7467 = vst.msk [vmem:[#allocation4 + $0x58] sm:$0x3] %vm7466, %v7459
        %v7470 = vrot.slane %v7258, 3
        %v7471 = vrot.slane %v7260, 3
        %v7472 = vsel %vm1497, %v7470, %v7471
        %v7473 = vrot.slane %v7259, 3
        %v7474 = vrot.slane %v7261, 3
        %v7475 = vsel %vm1497, %v7473, %v7474
        %v7480 = vmax.f32 %v7256, %v7472
        %v7481 = vmax.f32 %v7257, %v7475
        %v7482 = vmax.f32 %v7258, %v7471
        %v7483 = vmax.f32 %v7259, %v7474
        %v7488 = vrot.slane %v7262, 6
        %v7489 = vrot.slane %v7263, 6
        %v7490 = vrot.slane %v7264, 6
        %v7491 = vsel %vm1491, %v7488, %v7490
        %v7492 = vrot.slane %v7265, 6
        %v7493 = vsel %vm1491, %v7489, %v7492
        %v7498 = vmax.f32 %v7480, %v7488
        %v7499 = vmax.f32 %v7481, %v7489
        %v7500 = vmax.f32 %v7482, %v7491
        %v7501 = vmax.f32 %v7483, %v7493
        %v7502 = vsel %vm7346, %v7498, -inf
        %v7503 = vrot.slane %v7502, 4
        %v7504 = vmax.f32 %v7502, %v7503
        %v7505 = vrot.slane %v7504, 2
        %v7506 = vmax.f32 %v7504, %v7505
        %v7507 = vrot.slane %v7506, 1
        %v7508 = vmax.f32 %v7506, %v7507
        %v7509 = vsel %vm7354, %v7499, -inf
        %v7510 = vrot.slane %v7509, 4
        %v7511 = vmax.f32 %v7509, %v7510
        %v7512 = vrot.slane %v7511, 2
        %v7513 = vmax.f32 %v7511, %v7512
        %v7514 = vrot.slane %v7513, 1
        %v7515 = vmax.f32 %v7513, %v7514
        %v7516 = vsel %vm7405, %v7498, -inf
        %v7517 = vsel %vm1489, %v7500, -inf
        %v7518 = vmax.f32 %v7516, %v7517
        %v7519 = vrot.slane %v7518, 4
        %v7520 = vmax.f32 %v7518, %v7519
        %v7521 = vrot.slane %v7520, 2
        %v7522 = vmax.f32 %v7520, %v7521
        %v7523 = vrot.slane %v7522, 1
        %v7524 = vmax.f32 %v7522, %v7523
        %v7525 = vsel %vm7373, %v7499, -inf
        %v7526 = vsel %vm7287, %v7501, -inf
        %v7527 = vmax.f32 %v7525, %v7526
        %v7528 = vrot.slane %v7527, 4
        %v7529 = vmax.f32 %v7527, %v7528
        %v7530 = vrot.slane %v7529, 2
        %v7531 = vmax.f32 %v7529, %v7530
        %v7532 = vrot.slane %v7531, 1
        %v7533 = vmax.f32 %v7531, %v7532
        %v7534 = vsel %vm1493, %v7500, -inf
        %v7535 = vrot.slane %v7534, 4
        %v7536 = vmax.f32 %v7534, %v7535
        %v7537 = vrot.slane %v7536, 2
        %v7538 = vmax.f32 %v7536, %v7537
        %v7539 = vrot.slane %v7538, 1
        %v7540 = vmax.f32 %v7538, %v7539
        %v7541 = vsel %vm7322, %v7501, -inf
        %v7542 = vrot.slane %v7541, 4
        %v7543 = vmax.f32 %v7541, %v7542
        %v7544 = vrot.slane %v7543, 2
        %v7545 = vmax.f32 %v7543, %v7544
        %v7546 = vrot.slane %v7545, 1
        %v7547 = vmax.f32 %v7545, %v7546
        %v7548 = vsel %vm1489, %v7508, %v7524
        %v7549 = vsel %vm1489, %v7515, %v7533
        %v7550 = vsel %vm1491, %v7548, %v7540
        %v7551 = vsel %vm1491, %v7549, %v7547
        %7552 = vst [vmem:[#allocation4 + $0x60] sm:$0x7] %v7550
        %7553 = vst.msk [vmem:[#allocation4 + $0x68] sm:$0x7] %vm7322, %v7551
        %v7554 = vld [vmem:[#allocation4] sm:$0xff]
        %v7555 = vld [vmem:[#allocation4 + $0x8] sm:$0xff]
        %v7556 = vld [vmem:[#allocation4 + $0x10] sm:$0xff]
        %v7557 = vld [vmem:[#allocation4 + $0x18] sm:$0xff]
        %v7558 = vld [vmem:[#allocation4 + $0x20] sm:$0xff]
        %v7559 = vld [vmem:[#allocation4 + $0x28] sm:$0xff]
        %v7560 = vld [vmem:[#allocation4 + $0x30] sm:$0xff]
        %v7561 = vld [vmem:[#allocation4 + $0x38] sm:$0xff]
        %v7562 = vld [vmem:[#allocation4 + $0x40] sm:$0xff]
        %v7563 = vld [vmem:[#allocation4 + $0x48] sm:$0xff]
        %v7564 = vld [vmem:[#allocation4 + $0x50] sm:$0xff]
        %v7565 = vld [vmem:[#allocation4 + $0x58] sm:$0xff]
        %v7566 = vld [vmem:[#allocation4 + $0x60] sm:$0xff]
        %v7567 = vld [vmem:[#allocation4 + $0x68] sm:$0xff]
        %v7568 = vld [vmem:[#allocation4 + $0x70] sm:$0xff]
        %v7569 = vld [vmem:[#allocation4 + $0x78] sm:$0xff]
        %v7570 = vld [vmem:[#allocation4 + $0x80] sm:$0xff]
        %v7571 = vld [vmem:[#allocation4 + $0x88] sm:$0xff]
        %v7572 = vld [vmem:[#allocation4 + $0x90] sm:$0xff]
        %v7573 = vld [vmem:[#allocation4 + $0x98] sm:$0xff]
        %v7574 = vld [vmem:[#allocation4 + $0xa0] sm:$0x1]
        %v7575 = vld [vmem:[#allocation4 + $0xa8] sm:$0x1]
        %v7576 = vpack.c.bf16 %v7556, %v7554
        %v7577 = vpack.c.bf16 %v7557, %v7555
        %v7578 = vpack.c.bf16 %v7560, %v7558
        %v7579 = vpack.c.bf16 %v7561, %v7559
        %v7580 = vpack.c.bf16 %v7564, %v7562
        %v7581 = vpack.c.bf16 %v7565, %v7563
        %v7582 = vpack.c.bf16 %v7568, %v7566
        %v7583 = vpack.c.bf16 %v7569, %v7567
        %v7584 = vpack.c.bf16 %v7572, %v7570
        %v7585 = vpack.c.bf16 %v7573, %v7571
        %v7586 = vpack.c.bf16 %v7574, %v7574
        %v7587 = vpack.c.bf16 %v7575, %v7575
        %v7588 = vld [vmem:[%s9] sm:$0xff]
        %v7589 = vld [vmem:[%s9 + $0x8] sm:$0xff]
        %v7590 = vld [vmem:[%s9 + $0x10] sm:$0xff]
        %v7591 = vld [vmem:[%s9 + $0x18] sm:$0xff]
        %v7592 = vld [vmem:[%s9 + $0x20] sm:$0xff]
        %v7593 = vld [vmem:[%s9 + $0x28] sm:$0xff]
        %v7594 = vld [vmem:[%s9 + $0x30] sm:$0xff]
        %v7595 = vld [vmem:[%s9 + $0x38] sm:$0xff]
        %v7596 = vld [vmem:[%s9 + $0x40] sm:$0xff]
        %v7597 = vld [vmem:[%s9 + $0x48] sm:$0xff]
        %v7598 = vld [vmem:[%s9 + $0x50] sm:$0xff]
        %v7599 = vld [vmem:[%s9 + $0x58] sm:$0xff]
        %v7600 = vld [vmem:[%s9 + $0x60] sm:$0xff]
        %v7601 = vld [vmem:[%s9 + $0x68] sm:$0xff]
        %v7602 = vld [vmem:[%s9 + $0x70] sm:$0xff]
        %v7603 = vld [vmem:[%s9 + $0x78] sm:$0xff]
        %v7604 = vld [vmem:[%s9 + $0x80] sm:$0xff]
        %v7605 = vld [vmem:[%s9 + $0x88] sm:$0xff]
        %v7606 = vld [vmem:[%s9 + $0x90] sm:$0xff]
        %v7607 = vld [vmem:[%s9 + $0x98] sm:$0xff]
        %v7608 = vld [vmem:[%s9 + $0xa0] sm:$0xff]
        %v7609 = vld [vmem:[%s9 + $0xa8] sm:$0xff]
        %v7610 = vld [vmem:[%s9 + $0xb0] sm:$0xff]
        %v7611 = vld [vmem:[%s9 + $0xb8] sm:$0xff]
        %s7612 = scalar_lea.vmem %s9, 192
        %v7613 = vld [vmem:[%s7612] sm:$0xff]
        %v7614 = vld [vmem:[%s7612 + $0x8] sm:$0xff]
        %v7615 = vld [vmem:[%s7612 + $0x10] sm:$0xff]
        %v7616 = vld [vmem:[%s7612 + $0x18] sm:$0xff]
        %v7617 = vld [vmem:[%s7612 + $0x20] sm:$0xff]
        %v7618 = vld [vmem:[%s7612 + $0x28] sm:$0xff]
        %v7619 = vld [vmem:[%s7612 + $0x30] sm:$0xff]
        %v7620 = vld [vmem:[%s7612 + $0x38] sm:$0xff]
        %v7621 = vld [vmem:[%s7612 + $0x40] sm:$0xff]
        %v7622 = vld [vmem:[%s7612 + $0x48] sm:$0xff]
        %v7623 = vld [vmem:[%s7612 + $0x50] sm:$0xff]
        %v7624 = vld [vmem:[%s7612 + $0x58] sm:$0xff]
        %v7625 = vld [vmem:[%s7612 + $0x60] sm:$0xff]
        %v7626 = vld [vmem:[%s7612 + $0x68] sm:$0xff]
        %v7627 = vld [vmem:[%s7612 + $0x70] sm:$0xff]
        %v7628 = vld [vmem:[%s7612 + $0x78] sm:$0xff]
        %v7629 = vld [vmem:[%s7612 + $0x80] sm:$0xff]
        %v7630 = vld [vmem:[%s7612 + $0x88] sm:$0xff]
        %v7631 = vld [vmem:[%s7612 + $0x90] sm:$0xff]
        %v7632 = vld [vmem:[%s7612 + $0x98] sm:$0xff]
        %v7633 = vld [vmem:[%s7612 + $0xa0] sm:$0xff]
        %v7634 = vld [vmem:[%s7612 + $0xa8] sm:$0xff]
        %v7635 = vld [vmem:[%s7612 + $0xb0] sm:$0xff]
        %v7636 = vld [vmem:[%s7612 + $0xb8] sm:$0xff]
        %v7638 = vshrl.u32 %v7576, 16
        %v7640 = vshll.u32 %v7576, 16
        %v7642 = vrot.slane %v7640, 1
        %v7643 = vor.u32 %v7638, %v7642
        %v7645 = vshll.u32 %v7578, 16
        %v7647 = vrot.slane %v7645, 1
        %v7648 = vsel %vm1960, %v7643, %v7647
        %v7650 = vshrl.u32 %v7577, 16
        %v7652 = vshll.u32 %v7577, 16
        %v7654 = vrot.slane %v7652, 1
        %v7655 = vor.u32 %v7650, %v7654
        %v7657 = vshll.u32 %v7579, 16
        %v7659 = vrot.slane %v7657, 1
        %v7660 = vsel %vm1960, %v7655, %v7659
        %v7661 = vshrl.u32 %v7578, 16
        %v7663 = vor.u32 %v7661, %v7647
        %v7665 = vshll.u32 %v7580, 16
        %v7667 = vrot.slane %v7665, 1
        %v7668 = vsel %vm1960, %v7663, %v7667
        %v7669 = vshrl.u32 %v7579, 16
        %v7671 = vor.u32 %v7669, %v7659
        %v7673 = vshll.u32 %v7581, 16
        %v7675 = vrot.slane %v7673, 1
        %v7676 = vsel %vm1960, %v7671, %v7675
        %v7677 = vshrl.u32 %v7580, 16
        %v7679 = vor.u32 %v7677, %v7667
        %v7681 = vshll.u32 %v7582, 16
        %v7683 = vrot.slane %v7681, 1
        %v7684 = vsel %vm1960, %v7679, %v7683
        %v7685 = vshrl.u32 %v7581, 16
        %v7687 = vor.u32 %v7685, %v7675
        %v7689 = vshll.u32 %v7583, 16
        %v7691 = vrot.slane %v7689, 1
        %v7692 = vsel %vm1960, %v7687, %v7691
        %v7693 = vshrl.u32 %v7582, 16
        %v7695 = vor.u32 %v7693, %v7683
        %v7696 = vshrl.u32 %v7583, 16
        %v7698 = vor.u32 %v7696, %v7691
        %v7727 = vunpack.c.l.b16 %v7613
        %v7728 = vunpack.c.h.b16 %v7613
        %v7729 = vunpack.c.l.b16 %v7614
        %v7730 = vunpack.c.h.b16 %v7614
        %v7731 = vunpack.c.l.b16 %v7615
        %v7732 = vunpack.c.h.b16 %v7615
        %v7733 = vunpack.c.l.b16 %v7616
        %v7734 = vunpack.c.h.b16 %v7616
        %v7735 = vunpack.c.l.b16 %v7617
        %v7736 = vunpack.c.h.b16 %v7617
        %v7737 = vunpack.c.l.b16 %v7618
        %v7738 = vunpack.c.h.b16 %v7618
        %v7739 = vunpack.c.l.b16 %v7619
        %v7740 = vunpack.c.h.b16 %v7619
        %v7741 = vunpack.c.l.b16 %v7620
        %v7742 = vunpack.c.h.b16 %v7620
        %v7743 = vunpack.c.l.b16 %v7621
        %v7744 = vunpack.c.h.b16 %v7621
        %v7745 = vunpack.c.l.b16 %v7622
        %v7746 = vunpack.c.h.b16 %v7622
        %v7747 = vunpack.c.l.b16 %v7623
        %v7748 = vunpack.c.h.b16 %v7623
        %v7749 = vunpack.c.l.b16 %v7624
        %v7750 = vunpack.c.h.b16 %v7624
        %v7751 = vunpack.c.l.b16 %v7625
        %v7752 = vunpack.c.h.b16 %v7625
        %v7753 = vunpack.c.l.b16 %v7626
        %v7754 = vunpack.c.h.b16 %v7626
        %v7755 = vunpack.c.l.b16 %v7627
        %v7756 = vunpack.c.h.b16 %v7627
        %v7757 = vunpack.c.l.b16 %v7628
        %v7758 = vunpack.c.h.b16 %v7628
        %v7759 = vunpack.c.l.b16 %v7629
        %v7760 = vunpack.c.h.b16 %v7629
        %v7761 = vunpack.c.l.b16 %v7630
        %v7762 = vunpack.c.h.b16 %v7630
        %v7763 = vunpack.c.l.b16 %v7631
        %v7764 = vunpack.c.h.b16 %v7631
        %v7765 = vunpack.c.l.b16 %v7632
        %v7766 = vunpack.c.h.b16 %v7632
        %v7767 = vunpack.c.l.b16 %v7633
        %v7768 = vunpack.c.h.b16 %v7633
        %v7769 = vunpack.c.l.b16 %v7634
        %v7770 = vunpack.c.h.b16 %v7634
        %v7771 = vunpack.c.l.b16 %v7635
        %v7772 = vunpack.c.h.b16 %v7635
        %v7773 = vunpack.c.l.b16 %v7636
        %v7774 = vunpack.c.h.b16 %v7636
        %v7775 = vpack.c.b16 %v7729, %v7727
        %v7776 = vpack.c.b16 %v7730, %v7728
        %v7777 = vpack.c.b16 %v7733, %v7731
        %v7778 = vpack.c.b16 %v7734, %v7732
        %v7779 = vpack.c.b16 %v7737, %v7735
        %v7780 = vpack.c.b16 %v7738, %v7736
        %v7781 = vpack.c.b16 %v7741, %v7739
        %v7782 = vpack.c.b16 %v7742, %v7740
        %v7783 = vpack.c.b16 %v7745, %v7743
        %v7784 = vpack.c.b16 %v7746, %v7744
        %v7785 = vpack.c.b16 %v7749, %v7747
        %v7786 = vpack.c.b16 %v7750, %v7748
        %v7787 = vpack.c.b16 %v7753, %v7751
        %v7788 = vpack.c.b16 %v7754, %v7752
        %v7789 = vpack.c.b16 %v7757, %v7755
        %v7790 = vpack.c.b16 %v7758, %v7756
        %v7791 = vpack.c.b16 %v7761, %v7759
        %v7792 = vpack.c.b16 %v7762, %v7760
        %v7793 = vpack.c.b16 %v7765, %v7763
        %v7794 = vpack.c.b16 %v7766, %v7764
        %v7795 = vpack.c.b16 %v7769, %v7767
        %v7796 = vpack.c.b16 %v7770, %v7768
        %v7797 = vpack.c.b16 %v7773, %v7771
        %v7798 = vpack.c.b16 %v7774, %v7772
        %v7824 = vsel %vm7147, %v7660, 0
        %v7827 = vsel %vm7147, %v7676, 0
        %v7830 = vsel %vm7147, %v7692, 0
        %v7833 = vsel %vm7147, %v7698, 0
        %7835 = vmatprep.subr.bf16.mxu0 %v7776
        %7836 = vmatpush1.bf16.msra.mxu0 %v7775
        %7837 = vmatprep.subr.bf16.mxu0 %v7778
        %7838 = vmatpush1.bf16.msra.mxu0 %v7777
        %7839 = vmatprep.subr.bf16.mxu0 %v7780
        %7840 = vmatpush1.bf16.msra.mxu0 %v7779
        %7841 = vmatprep.subr.bf16.mxu0 %v7782
        %7842 = vmatpush1.bf16.msra.mxu0 %v7781
        %7843 = vmatprep.subr.bf16.mxu0 %v7784
        %7844 = vmatpush1.bf16.msra.mxu0 %v7783
        %7845 = vmatprep.subr.bf16.mxu0 %v7786
        %7846 = vmatpush1.bf16.msra.mxu0 %v7785
        %7847 = vmatprep.subr.bf16.mxu0 %v7788
        %7848 = vmatpush1.bf16.msra.mxu0 %v7787
        %7849 = vmatprep.subr.bf16.mxu0 %v7790
        %7850 = vmatpush1.bf16.msra.mxu0 %v7789
        %7851 = vmatprep.subr.bf16.mxu0 %v7792
        %7852 = vmatpush1.bf16.msra.mxu0 %v7791
        %7853 = vmatprep.subr.bf16.mxu0 %v7794
        %7854 = vmatpush1.bf16.msra.mxu0 %v7793
        %7855 = vmatprep.subr.bf16.mxu0 %v7796
        %7856 = vmatpush1.bf16.msra.mxu0 %v7795
        %7857 = vmatprep.subr.bf16.mxu0 %v7798
        %7858 = vmatpush1.bf16.msra.mxu0 %v7797
        %7859 = vmatprep.subr.bf16.mxu0 0
        %7860 = vmatpush1.bf16.msra.mxu0 0
        %7861 = vmatprep.subr.bf16.mxu0 0
        %7862 = vmatpush1.bf16.msra.mxu0 0
        %7863 = vmatprep.subr.bf16.mxu0 0
        %7864 = vmatpush1.bf16.msra.mxu0 0
        %7865 = vmatprep.subr.bf16.mxu0 0
        %7866 = vmatpush1.bf16.msra.mxu0 0
        %7867 = vmatprep.mubr.bf16.mxu0 %v7824
        %7868 = vmatmul.mubr.bf16.gmra.mrb[0].mxu0 %v7648
        %v7869 = vpop.f32.mrb[0].mxu0
        %v7870 = vadd.f32 0.0, %v7869
        %v7871 = vpop.f32.mrb[0].mxu0
        %v7872 = vadd.f32 0.0, %v7871
        %v7873 = vpop.f32.mrb[0].mxu0
        %v7874 = vadd.f32 0.0, %v7873
        %v7875 = vpop.f32.mrb[0].mxu0
        %v7876 = vadd.f32 0.0, %v7875
        %7877 = vmatprep.mubr.bf16.mxu0 %v7827
        %7878 = vmatmul.mubr.bf16.gmra.mrb[0].mxu0 %v7668
        %v7879 = vpop.f32.mrb[0].mxu0
        %v7880 = vadd.f32 0.0, %v7879
        %v7881 = vpop.f32.mrb[0].mxu0
        %v7882 = vadd.f32 0.0, %v7881
        %v7883 = vpop.f32.mrb[0].mxu0
        %v7884 = vadd.f32 0.0, %v7883
        %v7885 = vpop.f32.mrb[0].mxu0
        %v7886 = vadd.f32 0.0, %v7885
        %7887 = vmatprep.mubr.bf16.mxu0 %v7830
        %7888 = vmatmul.mubr.bf16.gmra.mrb[0].mxu0 %v7684
        %v7889 = vpop.f32.mrb[0].mxu0
        %v7890 = vadd.f32 0.0, %v7889
        %v7891 = vpop.f32.mrb[0].mxu0
        %v7892 = vadd.f32 0.0, %v7891
        %v7893 = vpop.f32.mrb[0].mxu0
        %v7894 = vadd.f32 0.0, %v7893
        %v7895 = vpop.f32.mrb[0].mxu0
        %v7896 = vadd.f32 0.0, %v7895
        %7897 = vmatprep.mubr.bf16.mxu0 %v7833
        %7898 = vmatmul.mubr.bf16.gmra.mrb[0].mxu0 %v7695
        %v7899 = vpop.f32.mrb[0].mxu0
        %v7900 = vadd.f32 0.0, %v7899
        %v7901 = vpop.f32.mrb[0].mxu0
        %v7902 = vadd.f32 0.0, %v7901
        %v7903 = vpop.f32.mrb[0].mxu0
        %v7904 = vadd.f32 0.0, %v7903
        %v7905 = vpop.f32.mrb[0].mxu0
        %v7906 = vadd.f32 0.0, %v7905
        %7907 = vdwg.mxu0
        %v7932 = vunpack.c.l.b16 %v7588
        %v7933 = vunpack.c.h.b16 %v7588
        %v7934 = vunpack.c.l.b16 %v7589
        %v7935 = vunpack.c.h.b16 %v7589
        %v7936 = vunpack.c.l.b16 %v7590
        %v7937 = vunpack.c.h.b16 %v7590
        %v7938 = vunpack.c.l.b16 %v7591
        %v7939 = vunpack.c.h.b16 %v7591
        %v7940 = vunpack.c.l.b16 %v7592
        %v7941 = vunpack.c.h.b16 %v7592
        %v7942 = vunpack.c.l.b16 %v7593
        %v7943 = vunpack.c.h.b16 %v7593
        %v7944 = vunpack.c.l.b16 %v7594
        %v7945 = vunpack.c.h.b16 %v7594
        %v7946 = vunpack.c.l.b16 %v7595
        %v7947 = vunpack.c.h.b16 %v7595
        %v7948 = vunpack.c.l.b16 %v7596
        %v7949 = vunpack.c.h.b16 %v7596
        %v7950 = vunpack.c.l.b16 %v7597
        %v7951 = vunpack.c.h.b16 %v7597
        %v7952 = vunpack.c.l.b16 %v7598
        %v7953 = vunpack.c.h.b16 %v7598
        %v7954 = vunpack.c.l.b16 %v7599
        %v7955 = vunpack.c.h.b16 %v7599
        %v7956 = vunpack.c.l.b16 %v7600
        %v7957 = vunpack.c.h.b16 %v7600
        %v7958 = vunpack.c.l.b16 %v7601
        %v7959 = vunpack.c.h.b16 %v7601
        %v7960 = vunpack.c.l.b16 %v7602
        %v7961 = vunpack.c.h.b16 %v7602
        %v7962 = vunpack.c.l.b16 %v7603
        %v7963 = vunpack.c.h.b16 %v7603
        %v7964 = vunpack.c.l.b16 %v7604
        %v7965 = vunpack.c.h.b16 %v7604
        %v7966 = vunpack.c.l.b16 %v7605
        %v7967 = vunpack.c.h.b16 %v7605
        %v7968 = vunpack.c.l.b16 %v7606
        %v7969 = vunpack.c.h.b16 %v7606
        %v7970 = vunpack.c.l.b16 %v7607
        %v7971 = vunpack.c.h.b16 %v7607
        %v7972 = vunpack.c.l.b16 %v7608
        %v7973 = vunpack.c.h.b16 %v7608
        %v7974 = vunpack.c.l.b16 %v7609
        %v7975 = vunpack.c.h.b16 %v7609
        %v7976 = vunpack.c.l.b16 %v7610
        %v7977 = vunpack.c.h.b16 %v7610
        %v7978 = vunpack.c.l.b16 %v7611
        %v7979 = vunpack.c.h.b16 %v7611
        %v7980 = vpack.c.b16 %v7934, %v7932
        %v7981 = vpack.c.b16 %v7935, %v7933
        %v7982 = vpack.c.b16 %v7938, %v7936
        %v7983 = vpack.c.b16 %v7939, %v7937
        %v7984 = vpack.c.b16 %v7942, %v7940
        %v7985 = vpack.c.b16 %v7943, %v7941
        %v7986 = vpack.c.b16 %v7946, %v7944
        %v7987 = vpack.c.b16 %v7947, %v7945
        %v7988 = vpack.c.b16 %v7950, %v7948
        %v7989 = vpack.c.b16 %v7951, %v7949
        %v7990 = vpack.c.b16 %v7954, %v7952
        %v7991 = vpack.c.b16 %v7955, %v7953
        %v7992 = vpack.c.b16 %v7958, %v7956
        %v7993 = vpack.c.b16 %v7959, %v7957
        %v7994 = vpack.c.b16 %v7962, %v7960
        %v7995 = vpack.c.b16 %v7963, %v7961
        %v7996 = vpack.c.b16 %v7966, %v7964
        %v7997 = vpack.c.b16 %v7967, %v7965
        %v7998 = vpack.c.b16 %v7970, %v7968
        %v7999 = vpack.c.b16 %v7971, %v7969
        %v8000 = vpack.c.b16 %v7974, %v7972
        %v8001 = vpack.c.b16 %v7975, %v7973
        %v8002 = vpack.c.b16 %v7978, %v7976
        %v8003 = vpack.c.b16 %v7979, %v7977
        %v8028 = vsel %vm7147, %v7577, 0
        %v8030 = vsel %vm7147, %v7579, 0
        %v8032 = vsel %vm7147, %v7581, 0
        %v8034 = vsel %vm7147, %v7583, 0
        %8036 = vmatprep.subr.bf16.mxu0 %v7981
        %8037 = vmatpush1.bf16.msra.mxu0 %v7980
        %8038 = vmatprep.subr.bf16.mxu0 %v7983
        %8039 = vmatpush1.bf16.msra.mxu0 %v7982
        %8040 = vmatprep.subr.bf16.mxu0 %v7985
        %8041 = vmatpush1.bf16.msra.mxu0 %v7984
        %8042 = vmatprep.subr.bf16.mxu0 %v7987
        %8043 = vmatpush1.bf16.msra.mxu0 %v7986
        %8044 = vmatprep.subr.bf16.mxu0 %v7989
        %8045 = vmatpush1.bf16.msra.mxu0 %v7988
        %8046 = vmatprep.subr.bf16.mxu0 %v7991
        %8047 = vmatpush1.bf16.msra.mxu0 %v7990
        %8048 = vmatprep.subr.bf16.mxu0 %v7993
        %8049 = vmatpush1.bf16.msra.mxu0 %v7992
        %8050 = vmatprep.subr.bf16.mxu0 %v7995
        %8051 = vmatpush1.bf16.msra.mxu0 %v7994
        %8052 = vmatprep.subr.bf16.mxu0 %v7997
        %8053 = vmatpush1.bf16.msra.mxu0 %v7996
        %8054 = vmatprep.subr.bf16.mxu0 %v7999
        %8055 = vmatpush1.bf16.msra.mxu0 %v7998
        %8056 = vmatprep.subr.bf16.mxu0 %v8001
        %8057 = vmatpush1.bf16.msra.mxu0 %v8000
        %8058 = vmatprep.subr.bf16.mxu0 %v8003
        %8059 = vmatpush1.bf16.msra.mxu0 %v8002
        %8060 = vmatprep.subr.bf16.mxu0 0
        %8061 = vmatpush1.bf16.msra.mxu0 0
        %8062 = vmatprep.subr.bf16.mxu0 0
        %8063 = vmatpush1.bf16.msra.mxu0 0
        %8064 = vmatprep.subr.bf16.mxu0 0
        %8065 = vmatpush1.bf16.msra.mxu0 0
        %8066 = vmatprep.subr.bf16.mxu0 0
        %8067 = vmatpush1.bf16.msra.mxu0 0
        %8068 = vmatprep.mubr.bf16.mxu0 %v8028
        %8069 = vmatmul.mubr.bf16.gmra.mrb[0].mxu0 %v7576
        %v8070 = vpop.f32.mrb[0].mxu0
        %v8071 = vadd.f32 %v7870, %v8070
        %v8072 = vpop.f32.mrb[0].mxu0
        %v8073 = vadd.f32 %v7872, %v8072
        %v8074 = vpop.f32.mrb[0].mxu0
        %v8075 = vadd.f32 %v7874, %v8074
        %v8076 = vpop.f32.mrb[0].mxu0
        %v8077 = vadd.f32 %v7876, %v8076
        %8078 = vmatprep.mubr.bf16.mxu0 %v8030
        %8079 = vmatmul.mubr.bf16.gmra.mrb[0].mxu0 %v7578
        %v8080 = vpop.f32.mrb[0].mxu0
        %v8081 = vadd.f32 %v7880, %v8080
        %v8082 = vpop.f32.mrb[0].mxu0
        %v8083 = vadd.f32 %v7882, %v8082
        %v8084 = vpop.f32.mrb[0].mxu0
        %v8085 = vadd.f32 %v7884, %v8084
        %v8086 = vpop.f32.mrb[0].mxu0
        %v8087 = vadd.f32 %v7886, %v8086
        %8088 = vmatprep.mubr.bf16.mxu0 %v8032
        %8089 = vmatmul.mubr.bf16.gmra.mrb[0].mxu0 %v7580
        %v8090 = vpop.f32.mrb[0].mxu0
        %v8091 = vadd.f32 %v7890, %v8090
        %v8092 = vpop.f32.mrb[0].mxu0
        %v8093 = vadd.f32 %v7892, %v8092
        %v8094 = vpop.f32.mrb[0].mxu0
        %v8095 = vadd.f32 %v7894, %v8094
        %v8096 = vpop.f32.mrb[0].mxu0
        %v8097 = vadd.f32 %v7896, %v8096
        %8098 = vmatprep.mubr.bf16.mxu0 %v8034
        %8099 = vmatmul.mubr.bf16.gmra.mrb[0].mxu0 %v7582
        %v8100 = vpop.f32.mrb[0].mxu0
        %v8101 = vadd.f32 %v7900, %v8100
        %v8102 = vpop.f32.mrb[0].mxu0
        %v8103 = vadd.f32 %v7902, %v8102
        %v8104 = vpop.f32.mrb[0].mxu0
        %v8105 = vadd.f32 %v7904, %v8104
        %v8106 = vpop.f32.mrb[0].mxu0
        %v8107 = vadd.f32 %v7906, %v8106
        %8108 = vdwg.mxu0
        %s8109 = scalar_lea.vmem %s9, 384
        %v8110 = vld [vmem:[%s8109] sm:$0xff]
        %v8111 = vld [vmem:[%s8109 + $0x8] sm:$0xff]
        %v8112 = vld [vmem:[%s8109 + $0x10] sm:$0xff]
        %v8113 = vld [vmem:[%s8109 + $0x18] sm:$0xff]
        %v8114 = vld [vmem:[%s8109 + $0x20] sm:$0xff]
        %v8115 = vld [vmem:[%s8109 + $0x28] sm:$0xff]
        %v8116 = vld [vmem:[%s8109 + $0x30] sm:$0xff]
        %v8117 = vld [vmem:[%s8109 + $0x38] sm:$0xff]
        %v8118 = vld [vmem:[%s8109 + $0x40] sm:$0xff]
        %v8119 = vld [vmem:[%s8109 + $0x48] sm:$0xff]
        %v8120 = vld [vmem:[%s8109 + $0x50] sm:$0xff]
        %v8121 = vld [vmem:[%s8109 + $0x58] sm:$0xff]
        %v8122 = vld [vmem:[%s8109 + $0x60] sm:$0xff]
        %v8123 = vld [vmem:[%s8109 + $0x68] sm:$0xff]
        %v8124 = vld [vmem:[%s8109 + $0x70] sm:$0xff]
        %v8125 = vld [vmem:[%s8109 + $0x78] sm:$0xff]
        %v8126 = vld [vmem:[%s8109 + $0x80] sm:$0xff]
        %v8127 = vld [vmem:[%s8109 + $0x88] sm:$0xff]
        %v8128 = vld [vmem:[%s8109 + $0x90] sm:$0xff]
        %v8129 = vld [vmem:[%s8109 + $0x98] sm:$0xff]
        %v8130 = vld [vmem:[%s8109 + $0xa0] sm:$0xff]
        %v8131 = vld [vmem:[%s8109 + $0xa8] sm:$0xff]
        %v8132 = vld [vmem:[%s8109 + $0xb0] sm:$0xff]
        %v8133 = vld [vmem:[%s8109 + $0xb8] sm:$0xff]
        %v8142 = vrot.slane %v7576, 1
        %v8143 = vrot.slane %v7578, 1
        %v8144 = vsel %vm2329, %v8142, %v8143
        %v8145 = vrot.slane %v7577, 1
        %v8146 = vrot.slane %v7579, 1
        %v8147 = vsel %vm2329, %v8145, %v8146
        %v8148 = vrot.slane %v7580, 1
        %v8149 = vsel %vm2329, %v8143, %v8148
        %v8150 = vrot.slane %v7581, 1
        %v8151 = vsel %vm2329, %v8146, %v8150
        %v8152 = vrot.slane %v7582, 1
        %v8153 = vsel %vm2329, %v8148, %v8152
        %v8154 = vrot.slane %v7583, 1
        %v8155 = vsel %vm2329, %v8150, %v8154
        %v8184 = vunpack.c.l.b16 %v8110
        %v8185 = vunpack.c.h.b16 %v8110
        %v8186 = vunpack.c.l.b16 %v8111
        %v8187 = vunpack.c.h.b16 %v8111
        %v8188 = vunpack.c.l.b16 %v8112
        %v8189 = vunpack.c.h.b16 %v8112
        %v8190 = vunpack.c.l.b16 %v8113
        %v8191 = vunpack.c.h.b16 %v8113
        %v8192 = vunpack.c.l.b16 %v8114
        %v8193 = vunpack.c.h.b16 %v8114
        %v8194 = vunpack.c.l.b16 %v8115
        %v8195 = vunpack.c.h.b16 %v8115
        %v8196 = vunpack.c.l.b16 %v8116
        %v8197 = vunpack.c.h.b16 %v8116
        %v8198 = vunpack.c.l.b16 %v8117
        %v8199 = vunpack.c.h.b16 %v8117
        %v8200 = vunpack.c.l.b16 %v8118
        %v8201 = vunpack.c.h.b16 %v8118
        %v8202 = vunpack.c.l.b16 %v8119
        %v8203 = vunpack.c.h.b16 %v8119
        %v8204 = vunpack.c.l.b16 %v8120
        %v8205 = vunpack.c.h.b16 %v8120
        %v8206 = vunpack.c.l.b16 %v8121
        %v8207 = vunpack.c.h.b16 %v8121
        %v8208 = vunpack.c.l.b16 %v8122
        %v8209 = vunpack.c.h.b16 %v8122
        %v8210 = vunpack.c.l.b16 %v8123
        %v8211 = vunpack.c.h.b16 %v8123
        %v8212 = vunpack.c.l.b16 %v8124
        %v8213 = vunpack.c.h.b16 %v8124
        %v8214 = vunpack.c.l.b16 %v8125
        %v8215 = vunpack.c.h.b16 %v8125
        %v8216 = vunpack.c.l.b16 %v8126
        %v8217 = vunpack.c.h.b16 %v8126
        %v8218 = vunpack.c.l.b16 %v8127
        %v8219 = vunpack.c.h.b16 %v8127
        %v8220 = vunpack.c.l.b16 %v8128
        %v8221 = vunpack.c.h.b16 %v8128
        %v8222 = vunpack.c.l.b16 %v8129
        %v8223 = vunpack.c.h.b16 %v8129
        %v8224 = vunpack.c.l.b16 %v8130
        %v8225 = vunpack.c.h.b16 %v8130
        %v8226 = vunpack.c.l.b16 %v8131
        %v8227 = vunpack.c.h.b16 %v8131
        %v8228 = vunpack.c.l.b16 %v8132
        %v8229 = vunpack.c.h.b16 %v8132
        %v8230 = vunpack.c.l.b16 %v8133
        %v8231 = vunpack.c.h.b16 %v8133
        %v8232 = vpack.c.b16 %v8186, %v8184
        %v8233 = vpack.c.b16 %v8187, %v8185
        %v8234 = vpack.c.b16 %v8190, %v8188
        %v8235 = vpack.c.b16 %v8191, %v8189
        %v8236 = vpack.c.b16 %v8194, %v8192
        %v8237 = vpack.c.b16 %v8195, %v8193
        %v8238 = vpack.c.b16 %v8198, %v8196
        %v8239 = vpack.c.b16 %v8199, %v8197
        %v8240 = vpack.c.b16 %v8202, %v8200
        %v8241 = vpack.c.b16 %v8203, %v8201
        %v8242 = vpack.c.b16 %v8206, %v8204
        %v8243 = vpack.c.b16 %v8207, %v8205
        %v8244 = vpack.c.b16 %v8210, %v8208
        %v8245 = vpack.c.b16 %v8211, %v8209
        %v8246 = vpack.c.b16 %v8214, %v8212
        %v8247 = vpack.c.b16 %v8215, %v8213
        %v8248 = vpack.c.b16 %v8218, %v8216
        %v8249 = vpack.c.b16 %v8219, %v8217
        %v8250 = vpack.c.b16 %v8222, %v8220
        %v8251 = vpack.c.b16 %v8223, %v8221
        %v8252 = vpack.c.b16 %v8226, %v8224
        %v8253 = vpack.c.b16 %v8227, %v8225
        %v8254 = vpack.c.b16 %v8230, %v8228
        %v8255 = vpack.c.b16 %v8231, %v8229
        %v8281 = vsel %vm7147, %v8147, 0
        %v8284 = vsel %vm7147, %v8151, 0
        %v8287 = vsel %vm7147, %v8155, 0
        %v8290 = vsel %vm7147, %v8154, 0
        %8292 = vmatprep.subr.bf16.mxu0 %v8233
        %8293 = vmatpush1.bf16.msra.mxu0 %v8232
        %8294 = vmatprep.subr.bf16.mxu0 %v8235
        %8295 = vmatpush1.bf16.msra.mxu0 %v8234
        %8296 = vmatprep.subr.bf16.mxu0 %v8237
        %8297 = vmatpush1.bf16.msra.mxu0 %v8236
        %8298 = vmatprep.subr.bf16.mxu0 %v8239
        %8299 = vmatpush1.bf16.msra.mxu0 %v8238
        %8300 = vmatprep.subr.bf16.mxu0 %v8241
        %8301 = vmatpush1.bf16.msra.mxu0 %v8240
        %8302 = vmatprep.subr.bf16.mxu0 %v8243
        %8303 = vmatpush1.bf16.msra.mxu0 %v8242
        %8304 = vmatprep.subr.bf16.mxu0 %v8245
        %8305 = vmatpush1.bf16.msra.mxu0 %v8244
        %8306 = vmatprep.subr.bf16.mxu0 %v8247
        %8307 = vmatpush1.bf16.msra.mxu0 %v8246
        %8308 = vmatprep.subr.bf16.mxu0 %v8249
        %8309 = vmatpush1.bf16.msra.mxu0 %v8248
        %8310 = vmatprep.subr.bf16.mxu0 %v8251
        %8311 = vmatpush1.bf16.msra.mxu0 %v8250
        %8312 = vmatprep.subr.bf16.mxu0 %v8253
        %8313 = vmatpush1.bf16.msra.mxu0 %v8252
        %8314 = vmatprep.subr.bf16.mxu0 %v8255
        %8315 = vmatpush1.bf16.msra.mxu0 %v8254
        %8316 = vmatprep.subr.bf16.mxu0 0
        %8317 = vmatpush1.bf16.msra.mxu0 0
        %8318 = vmatprep.subr.bf16.mxu0 0
        %8319 = vmatpush1.bf16.msra.mxu0 0
        %8320 = vmatprep.subr.bf16.mxu0 0
        %8321 = vmatpush1.bf16.msra.mxu0 0
        %8322 = vmatprep.subr.bf16.mxu0 0
        %8323 = vmatpush1.bf16.msra.mxu0 0
        %8324 = vmatprep.mubr.bf16.mxu0 %v8281
        %8325 = vmatmul.mubr.bf16.gmra.mrb[0].mxu0 %v8144
        %v8326 = vpop.f32.mrb[0].mxu0
        %v8327 = vadd.f32 0.0, %v8326
        %v8328 = vpop.f32.mrb[0].mxu0
        %v8329 = vadd.f32 0.0, %v8328
        %v8330 = vpop.f32.mrb[0].mxu0
        %v8331 = vadd.f32 0.0, %v8330
        %v8332 = vpop.f32.mrb[0].mxu0
        %v8333 = vadd.f32 0.0, %v8332
        %8334 = vmatprep.mubr.bf16.mxu0 %v8284
        %8335 = vmatmul.mubr.bf16.gmra.mrb[0].mxu0 %v8149
        %v8336 = vpop.f32.mrb[0].mxu0
        %v8337 = vadd.f32 0.0, %v8336
        %v8338 = vpop.f32.mrb[0].mxu0
        %v8339 = vadd.f32 0.0, %v8338
        %v8340 = vpop.f32.mrb[0].mxu0
        %v8341 = vadd.f32 0.0, %v8340
        %v8342 = vpop.f32.mrb[0].mxu0
        %v8343 = vadd.f32 0.0, %v8342
        %8344 = vmatprep.mubr.bf16.mxu0 %v8287
        %8345 = vmatmul.mubr.bf16.gmra.mrb[0].mxu0 %v8153
        %v8346 = vpop.f32.mrb[0].mxu0
        %v8347 = vadd.f32 0.0, %v8346
        %v8348 = vpop.f32.mrb[0].mxu0
        %v8349 = vadd.f32 0.0, %v8348
        %v8350 = vpop.f32.mrb[0].mxu0
        %v8351 = vadd.f32 0.0, %v8350
        %v8352 = vpop.f32.mrb[0].mxu0
        %v8353 = vadd.f32 0.0, %v8352
        %8354 = vmatprep.mubr.bf16.mxu0 %v8290
        %8355 = vmatmul.mubr.bf16.gmra.mrb[0].mxu0 %v8152
        %v8356 = vpop.f32.mrb[0].mxu0
        %v8357 = vadd.f32 0.0, %v8356
        %v8358 = vpop.f32.mrb[0].mxu0
        %v8359 = vadd.f32 0.0, %v8358
        %v8360 = vpop.f32.mrb[0].mxu0
        %v8361 = vadd.f32 0.0, %v8360
        %v8362 = vpop.f32.mrb[0].mxu0
        %v8363 = vadd.f32 0.0, %v8362
        %8364 = vdwg.mxu0
        %v8365 = vadd.f32 %v8071, %v8327
        %v8366 = vadd.f32 %v8073, %v8329
        %v8367 = vadd.f32 %v8075, %v8331
        %v8368 = vadd.f32 %v8077, %v8333
        %v8369 = vadd.f32 %v8081, %v8337
        %v8370 = vadd.f32 %v8083, %v8339
        %v8371 = vadd.f32 %v8085, %v8341
        %v8372 = vadd.f32 %v8087, %v8343
        %v8373 = vadd.f32 %v8091, %v8347
        %v8374 = vadd.f32 %v8093, %v8349
        %v8375 = vadd.f32 %v8095, %v8351
        %v8376 = vadd.f32 %v8097, %v8353
        %v8377 = vadd.f32 %v8101, %v8357
        %v8378 = vadd.f32 %v8103, %v8359
        %v8379 = vadd.f32 %v8105, %v8361
        %v8380 = vadd.f32 %v8107, %v8363
        %s8381 = scalar_lea.vmem %s9, 576
        %v8382 = vld [vmem:[%s8381] sm:$0xff]
        %v8383 = vld [vmem:[%s8381 + $0x8] sm:$0xff]
        %v8384 = vld [vmem:[%s8381 + $0x10] sm:$0xff]
        %v8385 = vld [vmem:[%s8381 + $0x18] sm:$0xff]
        %v8386 = vld [vmem:[%s8381 + $0x20] sm:$0xff]
        %v8387 = vld [vmem:[%s8381 + $0x28] sm:$0xff]
        %v8388 = vld [vmem:[%s8381 + $0x30] sm:$0xff]
        %v8389 = vld [vmem:[%s8381 + $0x38] sm:$0xff]
        %v8390 = vld [vmem:[%s8381 + $0x40] sm:$0xff]
        %v8391 = vld [vmem:[%s8381 + $0x48] sm:$0xff]
        %v8392 = vld [vmem:[%s8381 + $0x50] sm:$0xff]
        %v8393 = vld [vmem:[%s8381 + $0x58] sm:$0xff]
        %v8394 = vld [vmem:[%s8381 + $0x60] sm:$0xff]
        %v8395 = vld [vmem:[%s8381 + $0x68] sm:$0xff]
        %v8396 = vld [vmem:[%s8381 + $0x70] sm:$0xff]
        %v8397 = vld [vmem:[%s8381 + $0x78] sm:$0xff]
        %v8398 = vld [vmem:[%s8381 + $0x80] sm:$0xff]
        %v8399 = vld [vmem:[%s8381 + $0x88] sm:$0xff]
        %v8400 = vld [vmem:[%s8381 + $0x90] sm:$0xff]
        %v8401 = vld [vmem:[%s8381 + $0x98] sm:$0xff]
        %v8402 = vld [vmem:[%s8381 + $0xa0] sm:$0xff]
        %v8403 = vld [vmem:[%s8381 + $0xa8] sm:$0xff]
        %v8404 = vld [vmem:[%s8381 + $0xb0] sm:$0xff]
        %v8405 = vld [vmem:[%s8381 + $0xb8] sm:$0xff]
        %v8406 = vrot.slane %v7638, 4
        %v8407 = vrot.slane %v7640, 5
        %v8408 = vor.u32 %v8406, %v8407
        %v8409 = vrot.slane %v7661, 4
        %v8410 = vrot.slane %v7645, 5
        %v8411 = vor.u32 %v8409, %v8410
        %v8412 = vsel %vm4608, %v8408, %v8411
        %v8413 = vrot.slane %v7650, 4
        %v8414 = vrot.slane %v7652, 5
        %v8415 = vor.u32 %v8413, %v8414
        %v8416 = vrot.slane %v7669, 4
        %v8417 = vrot.slane %v7657, 5
        %v8418 = vor.u32 %v8416, %v8417
        %v8419 = vsel %vm4608, %v8415, %v8418
        %v8420 = vrot.slane %v7677, 4
        %v8421 = vrot.slane %v7665, 5
        %v8422 = vor.u32 %v8420, %v8421
        %v8423 = vsel %vm4608, %v8411, %v8422
        %v8424 = vrot.slane %v7685, 4
        %v8425 = vrot.slane %v7673, 5
        %v8426 = vor.u32 %v8424, %v8425
        %v8427 = vsel %vm4608, %v8418, %v8426
        %v8428 = vrot.slane %v7693, 4
        %v8429 = vrot.slane %v7681, 5
        %v8430 = vor.u32 %v8428, %v8429
        %v8431 = vsel %vm4608, %v8422, %v8430
        %v8432 = vrot.slane %v7696, 4
        %v8433 = vrot.slane %v7689, 5
        %v8434 = vor.u32 %v8432, %v8433
        %v8435 = vsel %vm4608, %v8426, %v8434
        %v8437 = vshrl.u32 %v7584, 16
        %v8439 = vrot.slane %v8437, 4
        %v8440 = vshll.u32 %v7584, 16
        %v8442 = vrot.slane %v8440, 5
        %v8443 = vor.u32 %v8439, %v8442
        %v8444 = vsel %vm4608, %v8430, %v8443
        %v8446 = vshrl.u32 %v7585, 16
        %v8448 = vrot.slane %v8446, 4
        %v8449 = vshll.u32 %v7585, 16
        %v8451 = vrot.slane %v8449, 5
        %v8452 = vor.u32 %v8448, %v8451
        %v8453 = vsel %vm4608, %v8434, %v8452
        %v8482 = vunpack.c.l.b16 %v8382
        %v8483 = vunpack.c.h.b16 %v8382
        %v8484 = vunpack.c.l.b16 %v8383
        %v8485 = vunpack.c.h.b16 %v8383
        %v8486 = vunpack.c.l.b16 %v8384
        %v8487 = vunpack.c.h.b16 %v8384
        %v8488 = vunpack.c.l.b16 %v8385
        %v8489 = vunpack.c.h.b16 %v8385
        %v8490 = vunpack.c.l.b16 %v8386
        %v8491 = vunpack.c.h.b16 %v8386
        %v8492 = vunpack.c.l.b16 %v8387
        %v8493 = vunpack.c.h.b16 %v8387
        %v8494 = vunpack.c.l.b16 %v8388
        %v8495 = vunpack.c.h.b16 %v8388
        %v8496 = vunpack.c.l.b16 %v8389
        %v8497 = vunpack.c.h.b16 %v8389
        %v8498 = vunpack.c.l.b16 %v8390
        %v8499 = vunpack.c.h.b16 %v8390
        %v8500 = vunpack.c.l.b16 %v8391
        %v8501 = vunpack.c.h.b16 %v8391
        %v8502 = vunpack.c.l.b16 %v8392
        %v8503 = vunpack.c.h.b16 %v8392
        %v8504 = vunpack.c.l.b16 %v8393
        %v8505 = vunpack.c.h.b16 %v8393
        %v8506 = vunpack.c.l.b16 %v8394
        %v8507 = vunpack.c.h.b16 %v8394
        %v8508 = vunpack.c.l.b16 %v8395
        %v8509 = vunpack.c.h.b16 %v8395
        %v8510 = vunpack.c.l.b16 %v8396
        %v8511 = vunpack.c.h.b16 %v8396
        %v8512 = vunpack.c.l.b16 %v8397
        %v8513 = vunpack.c.h.b16 %v8397
        %v8514 = vunpack.c.l.b16 %v8398
        %v8515 = vunpack.c.h.b16 %v8398
        %v8516 = vunpack.c.l.b16 %v8399
        %v8517 = vunpack.c.h.b16 %v8399
        %v8518 = vunpack.c.l.b16 %v8400
        %v8519 = vunpack.c.h.b16 %v8400
        %v8520 = vunpack.c.l.b16 %v8401
        %v8521 = vunpack.c.h.b16 %v8401
        %v8522 = vunpack.c.l.b16 %v8402
        %v8523 = vunpack.c.h.b16 %v8402
        %v8524 = vunpack.c.l.b16 %v8403
        %v8525 = vunpack.c.h.b16 %v8403
        %v8526 = vunpack.c.l.b16 %v8404
        %v8527 = vunpack.c.h.b16 %v8404
        %v8528 = vunpack.c.l.b16 %v8405
        %v8529 = vunpack.c.h.b16 %v8405
        %v8530 = vpack.c.b16 %v8484, %v8482
        %v8531 = vpack.c.b16 %v8485, %v8483
        %v8532 = vpack.c.b16 %v8488, %v8486
        %v8533 = vpack.c.b16 %v8489, %v8487
        %v8534 = vpack.c.b16 %v8492, %v8490
        %v8535 = vpack.c.b16 %v8493, %v8491
        %v8536 = vpack.c.b16 %v8496, %v8494
        %v8537 = vpack.c.b16 %v8497, %v8495
        %v8538 = vpack.c.b16 %v8500, %v8498
        %v8539 = vpack.c.b16 %v8501, %v8499
        %v8540 = vpack.c.b16 %v8504, %v8502
        %v8541 = vpack.c.b16 %v8505, %v8503
        %v8542 = vpack.c.b16 %v8508, %v8506
        %v8543 = vpack.c.b16 %v8509, %v8507
        %v8544 = vpack.c.b16 %v8512, %v8510
        %v8545 = vpack.c.b16 %v8513, %v8511
        %v8546 = vpack.c.b16 %v8516, %v8514
        %v8547 = vpack.c.b16 %v8517, %v8515
        %v8548 = vpack.c.b16 %v8520, %v8518
        %v8549 = vpack.c.b16 %v8521, %v8519
        %v8550 = vpack.c.b16 %v8524, %v8522
        %v8551 = vpack.c.b16 %v8525, %v8523
        %v8552 = vpack.c.b16 %v8528, %v8526
        %v8553 = vpack.c.b16 %v8529, %v8527
        %v8579 = vsel %vm7147, %v8419, 0
        %v8582 = vsel %vm7147, %v8427, 0
        %v8585 = vsel %vm7147, %v8435, 0
        %v8588 = vsel %vm7147, %v8453, 0
        %8590 = vmatprep.subr.bf16.mxu0 %v8531
        %8591 = vmatpush1.bf16.msra.mxu0 %v8530
        %8592 = vmatprep.subr.bf16.mxu0 %v8533
        %8593 = vmatpush1.bf16.msra.mxu0 %v8532
        %8594 = vmatprep.subr.bf16.mxu0 %v8535
        %8595 = vmatpush1.bf16.msra.mxu0 %v8534
        %8596 = vmatprep.subr.bf16.mxu0 %v8537
        %8597 = vmatpush1.bf16.msra.mxu0 %v8536
        %8598 = vmatprep.subr.bf16.mxu0 %v8539
        %8599 = vmatpush1.bf16.msra.mxu0 %v8538
        %8600 = vmatprep.subr.bf16.mxu0 %v8541
        %8601 = vmatpush1.bf16.msra.mxu0 %v8540
        %8602 = vmatprep.subr.bf16.mxu0 %v8543
        %8603 = vmatpush1.bf16.msra.mxu0 %v8542
        %8604 = vmatprep.subr.bf16.mxu0 %v8545
        %8605 = vmatpush1.bf16.msra.mxu0 %v8544
        %8606 = vmatprep.subr.bf16.mxu0 %v8547
        %8607 = vmatpush1.bf16.msra.mxu0 %v8546
        %8608 = vmatprep.subr.bf16.mxu0 %v8549
        %8609 = vmatpush1.bf16.msra.mxu0 %v8548
        %8610 = vmatprep.subr.bf16.mxu0 %v8551
        %8611 = vmatpush1.bf16.msra.mxu0 %v8550
        %8612 = vmatprep.subr.bf16.mxu0 %v8553
        %8613 = vmatpush1.bf16.msra.mxu0 %v8552
        %8614 = vmatprep.subr.bf16.mxu0 0
        %8615 = vmatpush1.bf16.msra.mxu0 0
        %8616 = vmatprep.subr.bf16.mxu0 0
        %8617 = vmatpush1.bf16.msra.mxu0 0
        %8618 = vmatprep.subr.bf16.mxu0 0
        %8619 = vmatpush1.bf16.msra.mxu0 0
        %8620 = vmatprep.subr.bf16.mxu0 0
        %8621 = vmatpush1.bf16.msra.mxu0 0
        %8622 = vmatprep.mubr.bf16.mxu0 %v8579
        %8623 = vmatmul.mubr.bf16.gmra.mrb[0].mxu0 %v8412
        %v8624 = vpop.f32.mrb[0].mxu0
        %v8625 = vadd.f32 0.0, %v8624
        %v8626 = vpop.f32.mrb[0].mxu0
        %v8627 = vadd.f32 0.0, %v8626
        %v8628 = vpop.f32.mrb[0].mxu0
        %v8629 = vadd.f32 0.0, %v8628
        %v8630 = vpop.f32.mrb[0].mxu0
        %v8631 = vadd.f32 0.0, %v8630
        %8632 = vmatprep.mubr.bf16.mxu0 %v8582
        %8633 = vmatmul.mubr.bf16.gmra.mrb[0].mxu0 %v8423
        %v8634 = vpop.f32.mrb[0].mxu0
        %v8635 = vadd.f32 0.0, %v8634
        %v8636 = vpop.f32.mrb[0].mxu0
        %v8637 = vadd.f32 0.0, %v8636
        %v8638 = vpop.f32.mrb[0].mxu0
        %v8639 = vadd.f32 0.0, %v8638
        %v8640 = vpop.f32.mrb[0].mxu0
        %v8641 = vadd.f32 0.0, %v8640
        %8642 = vmatprep.mubr.bf16.mxu0 %v8585
        %8643 = vmatmul.mubr.bf16.gmra.mrb[0].mxu0 %v8431
        %v8644 = vpop.f32.mrb[0].mxu0
        %v8645 = vadd.f32 0.0, %v8644
        %v8646 = vpop.f32.mrb[0].mxu0
        %v8647 = vadd.f32 0.0, %v8646
        %v8648 = vpop.f32.mrb[0].mxu0
        %v8649 = vadd.f32 0.0, %v8648
        %v8650 = vpop.f32.mrb[0].mxu0
        %v8651 = vadd.f32 0.0, %v8650
        %8652 = vmatprep.mubr.bf16.mxu0 %v8588
        %8653 = vmatmul.mubr.bf16.gmra.mrb[0].mxu0 %v8444
        %v8654 = vpop.f32.mrb[0].mxu0
        %v8655 = vadd.f32 0.0, %v8654
        %v8656 = vpop.f32.mrb[0].mxu0
        %v8657 = vadd.f32 0.0, %v8656
        %v8658 = vpop.f32.mrb[0].mxu0
        %v8659 = vadd.f32 0.0, %v8658
        %v8660 = vpop.f32.mrb[0].mxu0
        %v8661 = vadd.f32 0.0, %v8660
        %8662 = vdwg.mxu0
        %v8663 = vadd.f32 %v8365, %v8625
        %v8664 = vadd.f32 %v8366, %v8627
        %v8665 = vadd.f32 %v8367, %v8629
        %v8666 = vadd.f32 %v8368, %v8631
        %v8667 = vadd.f32 %v8369, %v8635
        %v8668 = vadd.f32 %v8370, %v8637
        %v8669 = vadd.f32 %v8371, %v8639
        %v8670 = vadd.f32 %v8372, %v8641
        %v8671 = vadd.f32 %v8373, %v8645
        %v8672 = vadd.f32 %v8374, %v8647
        %v8673 = vadd.f32 %v8375, %v8649
        %v8674 = vadd.f32 %v8376, %v8651
        %v8675 = vadd.f32 %v8377, %v8655
        %v8676 = vadd.f32 %v8378, %v8657
        %v8677 = vadd.f32 %v8379, %v8659
        %v8678 = vadd.f32 %v8380, %v8661
        %s8679 = scalar_lea.vmem %s9, 768
        %v8680 = vld [vmem:[%s8679] sm:$0xff]
        %v8681 = vld [vmem:[%s8679 + $0x8] sm:$0xff]
        %v8682 = vld [vmem:[%s8679 + $0x10] sm:$0xff]
        %v8683 = vld [vmem:[%s8679 + $0x18] sm:$0xff]
        %v8684 = vld [vmem:[%s8679 + $0x20] sm:$0xff]
        %v8685 = vld [vmem:[%s8679 + $0x28] sm:$0xff]
        %v8686 = vld [vmem:[%s8679 + $0x30] sm:$0xff]
        %v8687 = vld [vmem:[%s8679 + $0x38] sm:$0xff]
        %v8688 = vld [vmem:[%s8679 + $0x40] sm:$0xff]
        %v8689 = vld [vmem:[%s8679 + $0x48] sm:$0xff]
        %v8690 = vld [vmem:[%s8679 + $0x50] sm:$0xff]
        %v8691 = vld [vmem:[%s8679 + $0x58] sm:$0xff]
        %v8692 = vld [vmem:[%s8679 + $0x60] sm:$0xff]
        %v8693 = vld [vmem:[%s8679 + $0x68] sm:$0xff]
        %v8694 = vld [vmem:[%s8679 + $0x70] sm:$0xff]
        %v8695 = vld [vmem:[%s8679 + $0x78] sm:$0xff]
        %v8696 = vld [vmem:[%s8679 + $0x80] sm:$0xff]
        %v8697 = vld [vmem:[%s8679 + $0x88] sm:$0xff]
        %v8698 = vld [vmem:[%s8679 + $0x90] sm:$0xff]
        %v8699 = vld [vmem:[%s8679 + $0x98] sm:$0xff]
        %v8700 = vld [vmem:[%s8679 + $0xa0] sm:$0xff]
        %v8701 = vld [vmem:[%s8679 + $0xa8] sm:$0xff]
        %v8702 = vld [vmem:[%s8679 + $0xb0] sm:$0xff]
        %v8703 = vld [vmem:[%s8679 + $0xb8] sm:$0xff]
        %v8706 = vrot.slane %v7576, 5
        %v8707 = vrot.slane %v7578, 5
        %v8708 = vsel %vm4828, %v8706, %v8707
        %v8709 = vrot.slane %v7577, 5
        %v8710 = vrot.slane %v7579, 5
        %v8711 = vsel %vm4828, %v8709, %v8710
        %v8712 = vrot.slane %v7580, 5
        %v8713 = vsel %vm4828, %v8707, %v8712
        %v8714 = vrot.slane %v7581, 5
        %v8715 = vsel %vm4828, %v8710, %v8714
        %v8716 = vrot.slane %v7582, 5
        %v8717 = vsel %vm4828, %v8712, %v8716
        %v8718 = vrot.slane %v7583, 5
        %v8719 = vsel %vm4828, %v8714, %v8718
        %v8720 = vrot.slane %v7584, 5
        %v8721 = vsel %vm4828, %v8716, %v8720
        %v8722 = vrot.slane %v7585, 5
        %v8723 = vsel %vm4828, %v8718, %v8722
        %v8752 = vunpack.c.l.b16 %v8680
        %v8753 = vunpack.c.h.b16 %v8680
        %v8754 = vunpack.c.l.b16 %v8681
        %v8755 = vunpack.c.h.b16 %v8681
        %v8756 = vunpack.c.l.b16 %v8682
        %v8757 = vunpack.c.h.b16 %v8682
        %v8758 = vunpack.c.l.b16 %v8683
        %v8759 = vunpack.c.h.b16 %v8683
        %v8760 = vunpack.c.l.b16 %v8684
        %v8761 = vunpack.c.h.b16 %v8684
        %v8762 = vunpack.c.l.b16 %v8685
        %v8763 = vunpack.c.h.b16 %v8685
        %v8764 = vunpack.c.l.b16 %v8686
        %v8765 = vunpack.c.h.b16 %v8686
        %v8766 = vunpack.c.l.b16 %v8687
        %v8767 = vunpack.c.h.b16 %v8687
        %v8768 = vunpack.c.l.b16 %v8688
        %v8769 = vunpack.c.h.b16 %v8688
        %v8770 = vunpack.c.l.b16 %v8689
        %v8771 = vunpack.c.h.b16 %v8689
        %v8772 = vunpack.c.l.b16 %v8690
        %v8773 = vunpack.c.h.b16 %v8690
        %v8774 = vunpack.c.l.b16 %v8691
        %v8775 = vunpack.c.h.b16 %v8691
        %v8776 = vunpack.c.l.b16 %v8692
        %v8777 = vunpack.c.h.b16 %v8692
        %v8778 = vunpack.c.l.b16 %v8693
        %v8779 = vunpack.c.h.b16 %v8693
        %v8780 = vunpack.c.l.b16 %v8694
        %v8781 = vunpack.c.h.b16 %v8694
        %v8782 = vunpack.c.l.b16 %v8695
        %v8783 = vunpack.c.h.b16 %v8695
        %v8784 = vunpack.c.l.b16 %v8696
        %v8785 = vunpack.c.h.b16 %v8696
        %v8786 = vunpack.c.l.b16 %v8697
        %v8787 = vunpack.c.h.b16 %v8697
        %v8788 = vunpack.c.l.b16 %v8698
        %v8789 = vunpack.c.h.b16 %v8698
        %v8790 = vunpack.c.l.b16 %v8699
        %v8791 = vunpack.c.h.b16 %v8699
        %v8792 = vunpack.c.l.b16 %v8700
        %v8793 = vunpack.c.h.b16 %v8700
        %v8794 = vunpack.c.l.b16 %v8701
        %v8795 = vunpack.c.h.b16 %v8701
        %v8796 = vunpack.c.l.b16 %v8702
        %v8797 = vunpack.c.h.b16 %v8702
        %v8798 = vunpack.c.l.b16 %v8703
        %v8799 = vunpack.c.h.b16 %v8703
        %v8800 = vpack.c.b16 %v8754, %v8752
        %v8801 = vpack.c.b16 %v8755, %v8753
        %v8802 = vpack.c.b16 %v8758, %v8756
        %v8803 = vpack.c.b16 %v8759, %v8757
        %v8804 = vpack.c.b16 %v8762, %v8760
        %v8805 = vpack.c.b16 %v8763, %v8761
        %v8806 = vpack.c.b16 %v8766, %v8764
        %v8807 = vpack.c.b16 %v8767, %v8765
        %v8808 = vpack.c.b16 %v8770, %v8768
        %v8809 = vpack.c.b16 %v8771, %v8769
        %v8810 = vpack.c.b16 %v8774, %v8772
        %v8811 = vpack.c.b16 %v8775, %v8773
        %v8812 = vpack.c.b16 %v8778, %v8776
        %v8813 = vpack.c.b16 %v8779, %v8777
        %v8814 = vpack.c.b16 %v8782, %v8780
        %v8815 = vpack.c.b16 %v8783, %v8781
        %v8816 = vpack.c.b16 %v8786, %v8784
        %v8817 = vpack.c.b16 %v8787, %v8785
        %v8818 = vpack.c.b16 %v8790, %v8788
        %v8819 = vpack.c.b16 %v8791, %v8789
        %v8820 = vpack.c.b16 %v8794, %v8792
        %v8821 = vpack.c.b16 %v8795, %v8793
        %v8822 = vpack.c.b16 %v8798, %v8796
        %v8823 = vpack.c.b16 %v8799, %v8797
        %v8849 = vsel %vm7147, %v8711, 0
        %v8852 = vsel %vm7147, %v8715, 0
        %v8855 = vsel %vm7147, %v8719, 0
        %v8858 = vsel %vm7147, %v8723, 0
        %8860 = vmatprep.subr.bf16.mxu0 %v8801
        %8861 = vmatpush1.bf16.msra.mxu0 %v8800
        %8862 = vmatprep.subr.bf16.mxu0 %v8803
        %8863 = vmatpush1.bf16.msra.mxu0 %v8802
        %8864 = vmatprep.subr.bf16.mxu0 %v8805
        %8865 = vmatpush1.bf16.msra.mxu0 %v8804
        %8866 = vmatprep.subr.bf16.mxu0 %v8807
        %8867 = vmatpush1.bf16.msra.mxu0 %v8806
        %8868 = vmatprep.subr.bf16.mxu0 %v8809
        %8869 = vmatpush1.bf16.msra.mxu0 %v8808
        %8870 = vmatprep.subr.bf16.mxu0 %v8811
        %8871 = vmatpush1.bf16.msra.mxu0 %v8810
        %8872 = vmatprep.subr.bf16.mxu0 %v8813
        %8873 = vmatpush1.bf16.msra.mxu0 %v8812
        %8874 = vmatprep.subr.bf16.mxu0 %v8815
        %8875 = vmatpush1.bf16.msra.mxu0 %v8814
        %8876 = vmatprep.subr.bf16.mxu0 %v8817
        %8877 = vmatpush1.bf16.msra.mxu0 %v8816
        %8878 = vmatprep.subr.bf16.mxu0 %v8819
        %8879 = vmatpush1.bf16.msra.mxu0 %v8818
        %8880 = vmatprep.subr.bf16.mxu0 %v8821
        %8881 = vmatpush1.bf16.msra.mxu0 %v8820
        %8882 = vmatprep.subr.bf16.mxu0 %v8823
        %8883 = vmatpush1.bf16.msra.mxu0 %v8822
        %8884 = vmatprep.subr.bf16.mxu0 0
        %8885 = vmatpush1.bf16.msra.mxu0 0
        %8886 = vmatprep.subr.bf16.mxu0 0
        %8887 = vmatpush1.bf16.msra.mxu0 0
        %8888 = vmatprep.subr.bf16.mxu0 0
        %8889 = vmatpush1.bf16.msra.mxu0 0
        %8890 = vmatprep.subr.bf16.mxu0 0
        %8891 = vmatpush1.bf16.msra.mxu0 0
        %8892 = vmatprep.mubr.bf16.mxu0 %v8849
        %8893 = vmatmul.mubr.bf16.gmra.mrb[0].mxu0 %v8708
        %v8894 = vpop.f32.mrb[0].mxu0
        %v8895 = vadd.f32 0.0, %v8894
        %v8896 = vpop.f32.mrb[0].mxu0
        %v8897 = vadd.f32 0.0, %v8896
        %v8898 = vpop.f32.mrb[0].mxu0
        %v8899 = vadd.f32 0.0, %v8898
        %v8900 = vpop.f32.mrb[0].mxu0
        %v8901 = vadd.f32 0.0, %v8900
        %8902 = vmatprep.mubr.bf16.mxu0 %v8852
        %8903 = vmatmul.mubr.bf16.gmra.mrb[0].mxu0 %v8713
        %v8904 = vpop.f32.mrb[0].mxu0
        %v8905 = vadd.f32 0.0, %v8904
        %v8906 = vpop.f32.mrb[0].mxu0
        %v8907 = vadd.f32 0.0, %v8906
        %v8908 = vpop.f32.mrb[0].mxu0
        %v8909 = vadd.f32 0.0, %v8908
        %v8910 = vpop.f32.mrb[0].mxu0
        %v8911 = vadd.f32 0.0, %v8910
        %8912 = vmatprep.mubr.bf16.mxu0 %v8855
        %8913 = vmatmul.mubr.bf16.gmra.mrb[0].mxu0 %v8717
        %v8914 = vpop.f32.mrb[0].mxu0
        %v8915 = vadd.f32 0.0, %v8914
        %v8916 = vpop.f32.mrb[0].mxu0
        %v8917 = vadd.f32 0.0, %v8916
        %v8918 = vpop.f32.mrb[0].mxu0
        %v8919 = vadd.f32 0.0, %v8918
        %v8920 = vpop.f32.mrb[0].mxu0
        %v8921 = vadd.f32 0.0, %v8920
        %8922 = vmatprep.mubr.bf16.mxu0 %v8858
        %8923 = vmatmul.mubr.bf16.gmra.mrb[0].mxu0 %v8721
        %v8924 = vpop.f32.mrb[0].mxu0
        %v8925 = vadd.f32 0.0, %v8924
        %v8926 = vpop.f32.mrb[0].mxu0
        %v8927 = vadd.f32 0.0, %v8926
        %v8928 = vpop.f32.mrb[0].mxu0
        %v8929 = vadd.f32 0.0, %v8928
        %v8930 = vpop.f32.mrb[0].mxu0
        %v8931 = vadd.f32 0.0, %v8930
        %8932 = vdwg.mxu0
        %v8933 = vadd.f32 %v8663, %v8895
        %v8934 = vadd.f32 %v8664, %v8897
        %v8935 = vadd.f32 %v8665, %v8899
        %v8936 = vadd.f32 %v8666, %v8901
        %v8937 = vadd.f32 %v8667, %v8905
        %v8938 = vadd.f32 %v8668, %v8907
        %v8939 = vadd.f32 %v8669, %v8909
        %v8940 = vadd.f32 %v8670, %v8911
        %v8941 = vadd.f32 %v8671, %v8915
        %v8942 = vadd.f32 %v8672, %v8917
        %v8943 = vadd.f32 %v8673, %v8919
        %v8944 = vadd.f32 %v8674, %v8921
        %v8945 = vadd.f32 %v8675, %v8925
        %v8946 = vadd.f32 %v8676, %v8927
        %v8947 = vadd.f32 %v8677, %v8929
        %v8948 = vadd.f32 %v8678, %v8931
        %s8949 = scalar_lea.vmem %s9, 960
        %v8950 = vld [vmem:[%s8949] sm:$0xff]
        %v8951 = vld [vmem:[%s8949 + $0x8] sm:$0xff]
        %v8952 = vld [vmem:[%s8949 + $0x10] sm:$0xff]
        %v8953 = vld [vmem:[%s8949 + $0x18] sm:$0xff]
        %v8954 = vld [vmem:[%s8949 + $0x20] sm:$0xff]
        %v8955 = vld [vmem:[%s8949 + $0x28] sm:$0xff]
        %v8956 = vld [vmem:[%s8949 + $0x30] sm:$0xff]
        %v8957 = vld [vmem:[%s8949 + $0x38] sm:$0xff]
        %v8958 = vld [vmem:[%s8949 + $0x40] sm:$0xff]
        %v8959 = vld [vmem:[%s8949 + $0x48] sm:$0xff]
        %v8960 = vld [vmem:[%s8949 + $0x50] sm:$0xff]
        %v8961 = vld [vmem:[%s8949 + $0x58] sm:$0xff]
        %v8962 = vld [vmem:[%s8949 + $0x60] sm:$0xff]
        %v8963 = vld [vmem:[%s8949 + $0x68] sm:$0xff]
        %v8964 = vld [vmem:[%s8949 + $0x70] sm:$0xff]
        %v8965 = vld [vmem:[%s8949 + $0x78] sm:$0xff]
        %v8966 = vld [vmem:[%s8949 + $0x80] sm:$0xff]
        %v8967 = vld [vmem:[%s8949 + $0x88] sm:$0xff]
        %v8968 = vld [vmem:[%s8949 + $0x90] sm:$0xff]
        %v8969 = vld [vmem:[%s8949 + $0x98] sm:$0xff]
        %v8970 = vld [vmem:[%s8949 + $0xa0] sm:$0xff]
        %v8971 = vld [vmem:[%s8949 + $0xa8] sm:$0xff]
        %v8972 = vld [vmem:[%s8949 + $0xb0] sm:$0xff]
        %v8973 = vld [vmem:[%s8949 + $0xb8] sm:$0xff]
        %v8974 = vrot.slane %v7638, 5
        %v8975 = vrot.slane %v7640, 6
        %v8976 = vor.u32 %v8974, %v8975
        %v8977 = vrot.slane %v7661, 5
        %v8978 = vrot.slane %v7645, 6
        %v8979 = vor.u32 %v8977, %v8978
        %v8980 = vsel %vm2942, %v8976, %v8979
        %v8981 = vrot.slane %v7650, 5
        %v8982 = vrot.slane %v7652, 6
        %v8983 = vor.u32 %v8981, %v8982
        %v8984 = vrot.slane %v7669, 5
        %v8985 = vrot.slane %v7657, 6
        %v8986 = vor.u32 %v8984, %v8985
        %v8987 = vsel %vm2942, %v8983, %v8986
        %v8988 = vrot.slane %v7677, 5
        %v8989 = vrot.slane %v7665, 6
        %v8990 = vor.u32 %v8988, %v8989
        %v8991 = vsel %vm2942, %v8979, %v8990
        %v8992 = vrot.slane %v7685, 5
        %v8993 = vrot.slane %v7673, 6
        %v8994 = vor.u32 %v8992, %v8993
        %v8995 = vsel %vm2942, %v8986, %v8994
        %v8996 = vrot.slane %v7693, 5
        %v8997 = vrot.slane %v7681, 6
        %v8998 = vor.u32 %v8996, %v8997
        %v8999 = vsel %vm2942, %v8990, %v8998
        %v9000 = vrot.slane %v7696, 5
        %v9001 = vrot.slane %v7689, 6
        %v9002 = vor.u32 %v9000, %v9001
        %v9003 = vsel %vm2942, %v8994, %v9002
        %v9004 = vrot.slane %v8437, 5
        %v9005 = vrot.slane %v8440, 6
        %v9006 = vor.u32 %v9004, %v9005
        %v9007 = vsel %vm2942, %v8998, %v9006
        %v9008 = vrot.slane %v8446, 5
        %v9009 = vrot.slane %v8449, 6
        %v9010 = vor.u32 %v9008, %v9009
        %v9011 = vsel %vm2942, %v9002, %v9010
        %v9040 = vunpack.c.l.b16 %v8950
        %v9041 = vunpack.c.h.b16 %v8950
        %v9042 = vunpack.c.l.b16 %v8951
        %v9043 = vunpack.c.h.b16 %v8951
        %v9044 = vunpack.c.l.b16 %v8952
        %v9045 = vunpack.c.h.b16 %v8952
        %v9046 = vunpack.c.l.b16 %v8953
        %v9047 = vunpack.c.h.b16 %v8953
        %v9048 = vunpack.c.l.b16 %v8954
        %v9049 = vunpack.c.h.b16 %v8954
        %v9050 = vunpack.c.l.b16 %v8955
        %v9051 = vunpack.c.h.b16 %v8955
        %v9052 = vunpack.c.l.b16 %v8956
        %v9053 = vunpack.c.h.b16 %v8956
        %v9054 = vunpack.c.l.b16 %v8957
        %v9055 = vunpack.c.h.b16 %v8957
        %v9056 = vunpack.c.l.b16 %v8958
        %v9057 = vunpack.c.h.b16 %v8958
        %v9058 = vunpack.c.l.b16 %v8959
        %v9059 = vunpack.c.h.b16 %v8959
        %v9060 = vunpack.c.l.b16 %v8960
        %v9061 = vunpack.c.h.b16 %v8960
        %v9062 = vunpack.c.l.b16 %v8961
        %v9063 = vunpack.c.h.b16 %v8961
        %v9064 = vunpack.c.l.b16 %v8962
        %v9065 = vunpack.c.h.b16 %v8962
        %v9066 = vunpack.c.l.b16 %v8963
        %v9067 = vunpack.c.h.b16 %v8963
        %v9068 = vunpack.c.l.b16 %v8964
        %v9069 = vunpack.c.h.b16 %v8964
        %v9070 = vunpack.c.l.b16 %v8965
        %v9071 = vunpack.c.h.b16 %v8965
        %v9072 = vunpack.c.l.b16 %v8966
        %v9073 = vunpack.c.h.b16 %v8966
        %v9074 = vunpack.c.l.b16 %v8967
        %v9075 = vunpack.c.h.b16 %v8967
        %v9076 = vunpack.c.l.b16 %v8968
        %v9077 = vunpack.c.h.b16 %v8968
        %v9078 = vunpack.c.l.b16 %v8969
        %v9079 = vunpack.c.h.b16 %v8969
        %v9080 = vunpack.c.l.b16 %v8970
        %v9081 = vunpack.c.h.b16 %v8970
        %v9082 = vunpack.c.l.b16 %v8971
        %v9083 = vunpack.c.h.b16 %v8971
        %v9084 = vunpack.c.l.b16 %v8972
        %v9085 = vunpack.c.h.b16 %v8972
        %v9086 = vunpack.c.l.b16 %v8973
        %v9087 = vunpack.c.h.b16 %v8973
        %v9088 = vpack.c.b16 %v9042, %v9040
        %v9089 = vpack.c.b16 %v9043, %v9041
        %v9090 = vpack.c.b16 %v9046, %v9044
        %v9091 = vpack.c.b16 %v9047, %v9045
        %v9092 = vpack.c.b16 %v9050, %v9048
        %v9093 = vpack.c.b16 %v9051, %v9049
        %v9094 = vpack.c.b16 %v9054, %v9052
        %v9095 = vpack.c.b16 %v9055, %v9053
        %v9096 = vpack.c.b16 %v9058, %v9056
        %v9097 = vpack.c.b16 %v9059, %v9057
        %v9098 = vpack.c.b16 %v9062, %v9060
        %v9099 = vpack.c.b16 %v9063, %v9061
        %v9100 = vpack.c.b16 %v9066, %v9064
        %v9101 = vpack.c.b16 %v9067, %v9065
        %v9102 = vpack.c.b16 %v9070, %v9068
        %v9103 = vpack.c.b16 %v9071, %v9069
        %v9104 = vpack.c.b16 %v9074, %v9072
        %v9105 = vpack.c.b16 %v9075, %v9073
        %v9106 = vpack.c.b16 %v9078, %v9076
        %v9107 = vpack.c.b16 %v9079, %v9077
        %v9108 = vpack.c.b16 %v9082, %v9080
        %v9109 = vpack.c.b16 %v9083, %v9081
        %v9110 = vpack.c.b16 %v9086, %v9084
        %v9111 = vpack.c.b16 %v9087, %v9085
        %v9137 = vsel %vm7147, %v8987, 0
        %v9140 = vsel %vm7147, %v8995, 0
        %v9143 = vsel %vm7147, %v9003, 0
        %v9146 = vsel %vm7147, %v9011, 0
        %9148 = vmatprep.subr.bf16.mxu0 %v9089
        %9149 = vmatpush1.bf16.msra.mxu0 %v9088
        %9150 = vmatprep.subr.bf16.mxu0 %v9091
        %9151 = vmatpush1.bf16.msra.mxu0 %v9090
        %9152 = vmatprep.subr.bf16.mxu0 %v9093
        %9153 = vmatpush1.bf16.msra.mxu0 %v9092
        %9154 = vmatprep.subr.bf16.mxu0 %v9095
        %9155 = vmatpush1.bf16.msra.mxu0 %v9094
        %9156 = vmatprep.subr.bf16.mxu0 %v9097
        %9157 = vmatpush1.bf16.msra.mxu0 %v9096
        %9158 = vmatprep.subr.bf16.mxu0 %v9099
        %9159 = vmatpush1.bf16.msra.mxu0 %v9098
        %9160 = vmatprep.subr.bf16.mxu0 %v9101
        %9161 = vmatpush1.bf16.msra.mxu0 %v9100
        %9162 = vmatprep.subr.bf16.mxu0 %v9103
        %9163 = vmatpush1.bf16.msra.mxu0 %v9102
        %9164 = vmatprep.subr.bf16.mxu0 %v9105
        %9165 = vmatpush1.bf16.msra.mxu0 %v9104
        %9166 = vmatprep.subr.bf16.mxu0 %v9107
        %9167 = vmatpush1.bf16.msra.mxu0 %v9106
        %9168 = vmatprep.subr.bf16.mxu0 %v9109
        %9169 = vmatpush1.bf16.msra.mxu0 %v9108
        %9170 = vmatprep.subr.bf16.mxu0 %v9111
        %9171 = vmatpush1.bf16.msra.mxu0 %v9110
        %9172 = vmatprep.subr.bf16.mxu0 0
        %9173 = vmatpush1.bf16.msra.mxu0 0
        %9174 = vmatprep.subr.bf16.mxu0 0
        %9175 = vmatpush1.bf16.msra.mxu0 0
        %9176 = vmatprep.subr.bf16.mxu0 0
        %9177 = vmatpush1.bf16.msra.mxu0 0
        %9178 = vmatprep.subr.bf16.mxu0 0
        %9179 = vmatpush1.bf16.msra.mxu0 0
        %9180 = vmatprep.mubr.bf16.mxu0 %v9137
        %9181 = vmatmul.mubr.bf16.gmra.mrb[0].mxu0 %v8980
        %v9182 = vpop.f32.mrb[0].mxu0
        %v9183 = vadd.f32 0.0, %v9182
        %v9184 = vpop.f32.mrb[0].mxu0
        %v9185 = vadd.f32 0.0, %v9184
        %v9186 = vpop.f32.mrb[0].mxu0
        %v9187 = vadd.f32 0.0, %v9186
        %v9188 = vpop.f32.mrb[0].mxu0
        %v9189 = vadd.f32 0.0, %v9188
        %9190 = vmatprep.mubr.bf16.mxu0 %v9140
        %9191 = vmatmul.mubr.bf16.gmra.mrb[0].mxu0 %v8991
        %v9192 = vpop.f32.mrb[0].mxu0
        %v9193 = vadd.f32 0.0, %v9192
        %v9194 = vpop.f32.mrb[0].mxu0
        %v9195 = vadd.f32 0.0, %v9194
        %v9196 = vpop.f32.mrb[0].mxu0
        %v9197 = vadd.f32 0.0, %v9196
        %v9198 = vpop.f32.mrb[0].mxu0
        %v9199 = vadd.f32 0.0, %v9198
        %9200 = vmatprep.mubr.bf16.mxu0 %v9143
        %9201 = vmatmul.mubr.bf16.gmra.mrb[0].mxu0 %v8999
        %v9202 = vpop.f32.mrb[0].mxu0
        %v9203 = vadd.f32 0.0, %v9202
        %v9204 = vpop.f32.mrb[0].mxu0
        %v9205 = vadd.f32 0.0, %v9204
        %v9206 = vpop.f32.mrb[0].mxu0
        %v9207 = vadd.f32 0.0, %v9206
        %v9208 = vpop.f32.mrb[0].mxu0
        %v9209 = vadd.f32 0.0, %v9208
        %9210 = vmatprep.mubr.bf16.mxu0 %v9146
        %9211 = vmatmul.mubr.bf16.gmra.mrb[0].mxu0 %v9007
        %v9212 = vpop.f32.mrb[0].mxu0
        %v9213 = vadd.f32 0.0, %v9212
        %v9214 = vpop.f32.mrb[0].mxu0
        %v9215 = vadd.f32 0.0, %v9214
        %v9216 = vpop.f32.mrb[0].mxu0
        %v9217 = vadd.f32 0.0, %v9216
        %v9218 = vpop.f32.mrb[0].mxu0
        %v9219 = vadd.f32 0.0, %v9218
        %9220 = vdwg.mxu0
        %v9221 = vadd.f32 %v8933, %v9183
        %v9222 = vadd.f32 %v8934, %v9185
        %v9223 = vadd.f32 %v8935, %v9187
        %v9224 = vadd.f32 %v8936, %v9189
        %v9225 = vadd.f32 %v8937, %v9193
        %v9226 = vadd.f32 %v8938, %v9195
        %v9227 = vadd.f32 %v8939, %v9197
        %v9228 = vadd.f32 %v8940, %v9199
        %v9229 = vadd.f32 %v8941, %v9203
        %v9230 = vadd.f32 %v8942, %v9205
        %v9231 = vadd.f32 %v8943, %v9207
        %v9232 = vadd.f32 %v8944, %v9209
        %v9233 = vadd.f32 %v8945, %v9213
        %v9234 = vadd.f32 %v8946, %v9215
        %v9235 = vadd.f32 %v8947, %v9217
        %v9236 = vadd.f32 %v8948, %v9219
        %s9237 = scalar_lea.vmem %s9, 1152
        %v9238 = vld [vmem:[%s9237] sm:$0xff]
        %v9239 = vld [vmem:[%s9237 + $0x8] sm:$0xff]
        %v9240 = vld [vmem:[%s9237 + $0x10] sm:$0xff]
        %v9241 = vld [vmem:[%s9237 + $0x18] sm:$0xff]
        %v9242 = vld [vmem:[%s9237 + $0x20] sm:$0xff]
        %v9243 = vld [vmem:[%s9237 + $0x28] sm:$0xff]
        %v9244 = vld [vmem:[%s9237 + $0x30] sm:$0xff]
        %v9245 = vld [vmem:[%s9237 + $0x38] sm:$0xff]
        %v9246 = vld [vmem:[%s9237 + $0x40] sm:$0xff]
        %v9247 = vld [vmem:[%s9237 + $0x48] sm:$0xff]
        %v9248 = vld [vmem:[%s9237 + $0x50] sm:$0xff]
        %v9249 = vld [vmem:[%s9237 + $0x58] sm:$0xff]
        %v9250 = vld [vmem:[%s9237 + $0x60] sm:$0xff]
        %v9251 = vld [vmem:[%s9237 + $0x68] sm:$0xff]
        %v9252 = vld [vmem:[%s9237 + $0x70] sm:$0xff]
        %v9253 = vld [vmem:[%s9237 + $0x78] sm:$0xff]
        %v9254 = vld [vmem:[%s9237 + $0x80] sm:$0xff]
        %v9255 = vld [vmem:[%s9237 + $0x88] sm:$0xff]
        %v9256 = vld [vmem:[%s9237 + $0x90] sm:$0xff]
        %v9257 = vld [vmem:[%s9237 + $0x98] sm:$0xff]
        %v9258 = vld [vmem:[%s9237 + $0xa0] sm:$0xff]
        %v9259 = vld [vmem:[%s9237 + $0xa8] sm:$0xff]
        %v9260 = vld [vmem:[%s9237 + $0xb0] sm:$0xff]
        %v9261 = vld [vmem:[%s9237 + $0xb8] sm:$0xff]
        %v9262 = vrot.slane %v7584, 1
        %v9263 = vsel %vm2329, %v8152, %v9262
        %v9264 = vrot.slane %v7585, 1
        %v9265 = vsel %vm2329, %v8154, %v9264
        %v9292 = vunpack.c.l.b16 %v9238
        %v9293 = vunpack.c.h.b16 %v9238
        %v9294 = vunpack.c.l.b16 %v9239
        %v9295 = vunpack.c.h.b16 %v9239
        %v9296 = vunpack.c.l.b16 %v9240
        %v9297 = vunpack.c.h.b16 %v9240
        %v9298 = vunpack.c.l.b16 %v9241
        %v9299 = vunpack.c.h.b16 %v9241
        %v9300 = vunpack.c.l.b16 %v9242
        %v9301 = vunpack.c.h.b16 %v9242
        %v9302 = vunpack.c.l.b16 %v9243
        %v9303 = vunpack.c.h.b16 %v9243
        %v9304 = vunpack.c.l.b16 %v9244
        %v9305 = vunpack.c.h.b16 %v9244
        %v9306 = vunpack.c.l.b16 %v9245
        %v9307 = vunpack.c.h.b16 %v9245
        %v9308 = vunpack.c.l.b16 %v9246
        %v9309 = vunpack.c.h.b16 %v9246
        %v9310 = vunpack.c.l.b16 %v9247
        %v9311 = vunpack.c.h.b16 %v9247
        %v9312 = vunpack.c.l.b16 %v9248
        %v9313 = vunpack.c.h.b16 %v9248
        %v9314 = vunpack.c.l.b16 %v9249
        %v9315 = vunpack.c.h.b16 %v9249
        %v9316 = vunpack.c.l.b16 %v9250
        %v9317 = vunpack.c.h.b16 %v9250
        %v9318 = vunpack.c.l.b16 %v9251
        %v9319 = vunpack.c.h.b16 %v9251
        %v9320 = vunpack.c.l.b16 %v9252
        %v9321 = vunpack.c.h.b16 %v9252
        %v9322 = vunpack.c.l.b16 %v9253
        %v9323 = vunpack.c.h.b16 %v9253
        %v9324 = vunpack.c.l.b16 %v9254
        %v9325 = vunpack.c.h.b16 %v9254
        %v9326 = vunpack.c.l.b16 %v9255
        %v9327 = vunpack.c.h.b16 %v9255
        %v9328 = vunpack.c.l.b16 %v9256
        %v9329 = vunpack.c.h.b16 %v9256
        %v9330 = vunpack.c.l.b16 %v9257
        %v9331 = vunpack.c.h.b16 %v9257
        %v9332 = vunpack.c.l.b16 %v9258
        %v9333 = vunpack.c.h.b16 %v9258
        %v9334 = vunpack.c.l.b16 %v9259
        %v9335 = vunpack.c.h.b16 %v9259
        %v9336 = vunpack.c.l.b16 %v9260
        %v9337 = vunpack.c.h.b16 %v9260
        %v9338 = vunpack.c.l.b16 %v9261
        %v9339 = vunpack.c.h.b16 %v9261
        %v9340 = vpack.c.b16 %v9294, %v9292
        %v9341 = vpack.c.b16 %v9295, %v9293
        %v9342 = vpack.c.b16 %v9298, %v9296
        %v9343 = vpack.c.b16 %v9299, %v9297
        %v9344 = vpack.c.b16 %v9302, %v9300
        %v9345 = vpack.c.b16 %v9303, %v9301
        %v9346 = vpack.c.b16 %v9306, %v9304
        %v9347 = vpack.c.b16 %v9307, %v9305
        %v9348 = vpack.c.b16 %v9310, %v9308
        %v9349 = vpack.c.b16 %v9311, %v9309
        %v9350 = vpack.c.b16 %v9314, %v9312
        %v9351 = vpack.c.b16 %v9315, %v9313
        %v9352 = vpack.c.b16 %v9318, %v9316
        %v9353 = vpack.c.b16 %v9319, %v9317
        %v9354 = vpack.c.b16 %v9322, %v9320
        %v9355 = vpack.c.b16 %v9323, %v9321
        %v9356 = vpack.c.b16 %v9326, %v9324
        %v9357 = vpack.c.b16 %v9327, %v9325
        %v9358 = vpack.c.b16 %v9330, %v9328
        %v9359 = vpack.c.b16 %v9331, %v9329
        %v9360 = vpack.c.b16 %v9334, %v9332
        %v9361 = vpack.c.b16 %v9335, %v9333
        %v9362 = vpack.c.b16 %v9338, %v9336
        %v9363 = vpack.c.b16 %v9339, %v9337
        %v9389 = vsel %vm7147, %v9265, 0
        %v9392 = vsel %vm7147, %v9264, 0
        %9394 = vmatprep.subr.bf16.mxu0 %v9341
        %9395 = vmatpush1.bf16.msra.mxu0 %v9340
        %9396 = vmatprep.subr.bf16.mxu0 %v9343
        %9397 = vmatpush1.bf16.msra.mxu0 %v9342
        %9398 = vmatprep.subr.bf16.mxu0 %v9345
        %9399 = vmatpush1.bf16.msra.mxu0 %v9344
        %9400 = vmatprep.subr.bf16.mxu0 %v9347
        %9401 = vmatpush1.bf16.msra.mxu0 %v9346
        %9402 = vmatprep.subr.bf16.mxu0 %v9349
        %9403 = vmatpush1.bf16.msra.mxu0 %v9348
        %9404 = vmatprep.subr.bf16.mxu0 %v9351
        %9405 = vmatpush1.bf16.msra.mxu0 %v9350
        %9406 = vmatprep.subr.bf16.mxu0 %v9353
        %9407 = vmatpush1.bf16.msra.mxu0 %v9352
        %9408 = vmatprep.subr.bf16.mxu0 %v9355
        %9409 = vmatpush1.bf16.msra.mxu0 %v9354
        %9410 = vmatprep.subr.bf16.mxu0 %v9357
        %9411 = vmatpush1.bf16.msra.mxu0 %v9356
        %9412 = vmatprep.subr.bf16.mxu0 %v9359
        %9413 = vmatpush1.bf16.msra.mxu0 %v9358
        %9414 = vmatprep.subr.bf16.mxu0 %v9361
        %9415 = vmatpush1.bf16.msra.mxu0 %v9360
        %9416 = vmatprep.subr.bf16.mxu0 %v9363
        %9417 = vmatpush1.bf16.msra.mxu0 %v9362
        %9418 = vmatprep.subr.bf16.mxu0 0
        %9419 = vmatpush1.bf16.msra.mxu0 0
        %9420 = vmatprep.subr.bf16.mxu0 0
        %9421 = vmatpush1.bf16.msra.mxu0 0
        %9422 = vmatprep.subr.bf16.mxu0 0
        %9423 = vmatpush1.bf16.msra.mxu0 0
        %9424 = vmatprep.subr.bf16.mxu0 0
        %9425 = vmatpush1.bf16.msra.mxu0 0
        %9426 = vmatprep.mubr.bf16.mxu0 %v8284
        %9427 = vmatmul.mubr.bf16.gmra.mrb[0].mxu0 %v8149
        %v9428 = vpop.f32.mrb[0].mxu0
        %v9429 = vadd.f32 0.0, %v9428
        %v9430 = vpop.f32.mrb[0].mxu0
        %v9431 = vadd.f32 0.0, %v9430
        %v9432 = vpop.f32.mrb[0].mxu0
        %v9433 = vadd.f32 0.0, %v9432
        %v9434 = vpop.f32.mrb[0].mxu0
        %v9435 = vadd.f32 0.0, %v9434
        %9436 = vmatprep.mubr.bf16.mxu0 %v8287
        %9437 = vmatmul.mubr.bf16.gmra.mrb[0].mxu0 %v8153
        %v9438 = vpop.f32.mrb[0].mxu0
        %v9439 = vadd.f32 0.0, %v9438
        %v9440 = vpop.f32.mrb[0].mxu0
        %v9441 = vadd.f32 0.0, %v9440
        %v9442 = vpop.f32.mrb[0].mxu0
        %v9443 = vadd.f32 0.0, %v9442
        %v9444 = vpop.f32.mrb[0].mxu0
        %v9445 = vadd.f32 0.0, %v9444
        %9446 = vmatprep.mubr.bf16.mxu0 %v9389
        %9447 = vmatmul.mubr.bf16.gmra.mrb[0].mxu0 %v9263
        %v9448 = vpop.f32.mrb[0].mxu0
        %v9449 = vadd.f32 0.0, %v9448
        %v9450 = vpop.f32.mrb[0].mxu0
        %v9451 = vadd.f32 0.0, %v9450
        %v9452 = vpop.f32.mrb[0].mxu0
        %v9453 = vadd.f32 0.0, %v9452
        %v9454 = vpop.f32.mrb[0].mxu0
        %v9455 = vadd.f32 0.0, %v9454
        %9456 = vmatprep.mubr.bf16.mxu0 %v9392
        %9457 = vmatmul.mubr.bf16.gmra.mrb[0].mxu0 %v9262
        %v9458 = vpop.f32.mrb[0].mxu0
        %v9459 = vadd.f32 0.0, %v9458
        %v9460 = vpop.f32.mrb[0].mxu0
        %v9461 = vadd.f32 0.0, %v9460
        %v9462 = vpop.f32.mrb[0].mxu0
        %v9463 = vadd.f32 0.0, %v9462
        %v9464 = vpop.f32.mrb[0].mxu0
        %v9465 = vadd.f32 0.0, %v9464
        %9466 = vdwg.mxu0
        %v9467 = vadd.f32 %v9221, %v9429
        %v9468 = vadd.f32 %v9222, %v9431
        %v9469 = vadd.f32 %v9223, %v9433
        %v9470 = vadd.f32 %v9224, %v9435
        %v9471 = vadd.f32 %v9225, %v9439
        %v9472 = vadd.f32 %v9226, %v9441
        %v9473 = vadd.f32 %v9227, %v9443
        %v9474 = vadd.f32 %v9228, %v9445
        %v9475 = vadd.f32 %v9229, %v9449
        %v9476 = vadd.f32 %v9230, %v9451
        %v9477 = vadd.f32 %v9231, %v9453
        %v9478 = vadd.f32 %v9232, %v9455
        %v9479 = vadd.f32 %v9233, %v9459
        %v9480 = vadd.f32 %v9234, %v9461
        %v9481 = vadd.f32 %v9235, %v9463
        %v9482 = vadd.f32 %v9236, %v9465
        %s9483 = scalar_lea.vmem %s9, 1344
        %v9484 = vld [vmem:[%s9483] sm:$0xff]
        %v9485 = vld [vmem:[%s9483 + $0x8] sm:$0xff]
        %v9486 = vld [vmem:[%s9483 + $0x10] sm:$0xff]
        %v9487 = vld [vmem:[%s9483 + $0x18] sm:$0xff]
        %v9488 = vld [vmem:[%s9483 + $0x20] sm:$0xff]
        %v9489 = vld [vmem:[%s9483 + $0x28] sm:$0xff]
        %v9490 = vld [vmem:[%s9483 + $0x30] sm:$0xff]
        %v9491 = vld [vmem:[%s9483 + $0x38] sm:$0xff]
        %v9492 = vld [vmem:[%s9483 + $0x40] sm:$0xff]
        %v9493 = vld [vmem:[%s9483 + $0x48] sm:$0xff]
        %v9494 = vld [vmem:[%s9483 + $0x50] sm:$0xff]
        %v9495 = vld [vmem:[%s9483 + $0x58] sm:$0xff]
        %v9496 = vld [vmem:[%s9483 + $0x60] sm:$0xff]
        %v9497 = vld [vmem:[%s9483 + $0x68] sm:$0xff]
        %v9498 = vld [vmem:[%s9483 + $0x70] sm:$0xff]
        %v9499 = vld [vmem:[%s9483 + $0x78] sm:$0xff]
        %v9500 = vld [vmem:[%s9483 + $0x80] sm:$0xff]
        %v9501 = vld [vmem:[%s9483 + $0x88] sm:$0xff]
        %v9502 = vld [vmem:[%s9483 + $0x90] sm:$0xff]
        %v9503 = vld [vmem:[%s9483 + $0x98] sm:$0xff]
        %v9504 = vld [vmem:[%s9483 + $0xa0] sm:$0xff]
        %v9505 = vld [vmem:[%s9483 + $0xa8] sm:$0xff]
        %v9506 = vld [vmem:[%s9483 + $0xb0] sm:$0xff]
        %v9507 = vld [vmem:[%s9483 + $0xb8] sm:$0xff]
        %v9508 = vrot.slane %v7661, 1
        %v9509 = vrot.slane %v7645, 2
        %v9510 = vor.u32 %v9508, %v9509
        %v9511 = vrot.slane %v7677, 1
        %v9512 = vrot.slane %v7665, 2
        %v9513 = vor.u32 %v9511, %v9512
        %v9514 = vsel %vm2530, %v9510, %v9513
        %v9515 = vrot.slane %v7669, 1
        %v9516 = vrot.slane %v7657, 2
        %v9517 = vor.u32 %v9515, %v9516
        %v9518 = vrot.slane %v7685, 1
        %v9519 = vrot.slane %v7673, 2
        %v9520 = vor.u32 %v9518, %v9519
        %v9521 = vsel %vm2530, %v9517, %v9520
        %v9522 = vrot.slane %v7693, 1
        %v9523 = vrot.slane %v7681, 2
        %v9524 = vor.u32 %v9522, %v9523
        %v9525 = vsel %vm2530, %v9513, %v9524
        %v9526 = vrot.slane %v7696, 1
        %v9527 = vrot.slane %v7689, 2
        %v9528 = vor.u32 %v9526, %v9527
        %v9529 = vsel %vm2530, %v9520, %v9528
        %v9530 = vrot.slane %v8437, 1
        %v9531 = vrot.slane %v8440, 2
        %v9532 = vor.u32 %v9530, %v9531
        %v9533 = vsel %vm2530, %v9524, %v9532
        %v9534 = vrot.slane %v8446, 1
        %v9535 = vrot.slane %v8449, 2
        %v9536 = vor.u32 %v9534, %v9535
        %v9537 = vsel %vm2530, %v9528, %v9536
        %v9566 = vunpack.c.l.b16 %v9484
        %v9567 = vunpack.c.h.b16 %v9484
        %v9568 = vunpack.c.l.b16 %v9485
        %v9569 = vunpack.c.h.b16 %v9485
        %v9570 = vunpack.c.l.b16 %v9486
        %v9571 = vunpack.c.h.b16 %v9486
        %v9572 = vunpack.c.l.b16 %v9487
        %v9573 = vunpack.c.h.b16 %v9487
        %v9574 = vunpack.c.l.b16 %v9488
        %v9575 = vunpack.c.h.b16 %v9488
        %v9576 = vunpack.c.l.b16 %v9489
        %v9577 = vunpack.c.h.b16 %v9489
        %v9578 = vunpack.c.l.b16 %v9490
        %v9579 = vunpack.c.h.b16 %v9490
        %v9580 = vunpack.c.l.b16 %v9491
        %v9581 = vunpack.c.h.b16 %v9491
        %v9582 = vunpack.c.l.b16 %v9492
        %v9583 = vunpack.c.h.b16 %v9492
        %v9584 = vunpack.c.l.b16 %v9493
        %v9585 = vunpack.c.h.b16 %v9493
        %v9586 = vunpack.c.l.b16 %v9494
        %v9587 = vunpack.c.h.b16 %v9494
        %v9588 = vunpack.c.l.b16 %v9495
        %v9589 = vunpack.c.h.b16 %v9495
        %v9590 = vunpack.c.l.b16 %v9496
        %v9591 = vunpack.c.h.b16 %v9496
        %v9592 = vunpack.c.l.b16 %v9497
        %v9593 = vunpack.c.h.b16 %v9497
        %v9594 = vunpack.c.l.b16 %v9498
        %v9595 = vunpack.c.h.b16 %v9498
        %v9596 = vunpack.c.l.b16 %v9499
        %v9597 = vunpack.c.h.b16 %v9499
        %v9598 = vunpack.c.l.b16 %v9500
        %v9599 = vunpack.c.h.b16 %v9500
        %v9600 = vunpack.c.l.b16 %v9501
        %v9601 = vunpack.c.h.b16 %v9501
        %v9602 = vunpack.c.l.b16 %v9502
        %v9603 = vunpack.c.h.b16 %v9502
        %v9604 = vunpack.c.l.b16 %v9503
        %v9605 = vunpack.c.h.b16 %v9503
        %v9606 = vunpack.c.l.b16 %v9504
        %v9607 = vunpack.c.h.b16 %v9504
        %v9608 = vunpack.c.l.b16 %v9505
        %v9609 = vunpack.c.h.b16 %v9505
        %v9610 = vunpack.c.l.b16 %v9506
        %v9611 = vunpack.c.h.b16 %v9506
        %v9612 = vunpack.c.l.b16 %v9507
        %v9613 = vunpack.c.h.b16 %v9507
        %v9614 = vpack.c.b16 %v9568, %v9566
        %v9615 = vpack.c.b16 %v9569, %v9567
        %v9616 = vpack.c.b16 %v9572, %v9570
        %v9617 = vpack.c.b16 %v9573, %v9571
        %v9618 = vpack.c.b16 %v9576, %v9574
        %v9619 = vpack.c.b16 %v9577, %v9575
        %v9620 = vpack.c.b16 %v9580, %v9578
        %v9621 = vpack.c.b16 %v9581, %v9579
        %v9622 = vpack.c.b16 %v9584, %v9582
        %v9623 = vpack.c.b16 %v9585, %v9583
        %v9624 = vpack.c.b16 %v9588, %v9586
        %v9625 = vpack.c.b16 %v9589, %v9587
        %v9626 = vpack.c.b16 %v9592, %v9590
        %v9627 = vpack.c.b16 %v9593, %v9591
        %v9628 = vpack.c.b16 %v9596, %v9594
        %v9629 = vpack.c.b16 %v9597, %v9595
        %v9630 = vpack.c.b16 %v9600, %v9598
        %v9631 = vpack.c.b16 %v9601, %v9599
        %v9632 = vpack.c.b16 %v9604, %v9602
        %v9633 = vpack.c.b16 %v9605, %v9603
        %v9634 = vpack.c.b16 %v9608, %v9606
        %v9635 = vpack.c.b16 %v9609, %v9607
        %v9636 = vpack.c.b16 %v9612, %v9610
        %v9637 = vpack.c.b16 %v9613, %v9611
        %v9663 = vsel %vm7147, %v9521, 0
        %v9666 = vsel %vm7147, %v9529, 0
        %v9669 = vsel %vm7147, %v9537, 0
        %v9672 = vsel %vm7147, %v9536, 0
        %9674 = vmatprep.subr.bf16.mxu0 %v9615
        %9675 = vmatpush1.bf16.msra.mxu0 %v9614
        %9676 = vmatprep.subr.bf16.mxu0 %v9617
        %9677 = vmatpush1.bf16.msra.mxu0 %v9616
        %9678 = vmatprep.subr.bf16.mxu0 %v9619
        %9679 = vmatpush1.bf16.msra.mxu0 %v9618
        %9680 = vmatprep.subr.bf16.mxu0 %v9621
        %9681 = vmatpush1.bf16.msra.mxu0 %v9620
        %9682 = vmatprep.subr.bf16.mxu0 %v9623
        %9683 = vmatpush1.bf16.msra.mxu0 %v9622
        %9684 = vmatprep.subr.bf16.mxu0 %v9625
        %9685 = vmatpush1.bf16.msra.mxu0 %v9624
        %9686 = vmatprep.subr.bf16.mxu0 %v9627
        %9687 = vmatpush1.bf16.msra.mxu0 %v9626
        %9688 = vmatprep.subr.bf16.mxu0 %v9629
        %9689 = vmatpush1.bf16.msra.mxu0 %v9628
        %9690 = vmatprep.subr.bf16.mxu0 %v9631
        %9691 = vmatpush1.bf16.msra.mxu0 %v9630
        %9692 = vmatprep.subr.bf16.mxu0 %v9633
        %9693 = vmatpush1.bf16.msra.mxu0 %v9632
        %9694 = vmatprep.subr.bf16.mxu0 %v9635
        %9695 = vmatpush1.bf16.msra.mxu0 %v9634
        %9696 = vmatprep.subr.bf16.mxu0 %v9637
        %9697 = vmatpush1.bf16.msra.mxu0 %v9636
        %9698 = vmatprep.subr.bf16.mxu0 0
        %9699 = vmatpush1.bf16.msra.mxu0 0
        %9700 = vmatprep.subr.bf16.mxu0 0
        %9701 = vmatpush1.bf16.msra.mxu0 0
        %9702 = vmatprep.subr.bf16.mxu0 0
        %9703 = vmatpush1.bf16.msra.mxu0 0
        %9704 = vmatprep.subr.bf16.mxu0 0
        %9705 = vmatpush1.bf16.msra.mxu0 0
        %9706 = vmatprep.mubr.bf16.mxu0 %v9663
        %9707 = vmatmul.mubr.bf16.gmra.mrb[0].mxu0 %v9514
        %v9708 = vpop.f32.mrb[0].mxu0
        %v9709 = vadd.f32 0.0, %v9708
        %v9710 = vpop.f32.mrb[0].mxu0
        %v9711 = vadd.f32 0.0, %v9710
        %v9712 = vpop.f32.mrb[0].mxu0
        %v9713 = vadd.f32 0.0, %v9712
        %v9714 = vpop.f32.mrb[0].mxu0
        %v9715 = vadd.f32 0.0, %v9714
        %9716 = vmatprep.mubr.bf16.mxu0 %v9666
        %9717 = vmatmul.mubr.bf16.gmra.mrb[0].mxu0 %v9525
        %v9718 = vpop.f32.mrb[0].mxu0
        %v9719 = vadd.f32 0.0, %v9718
        %v9720 = vpop.f32.mrb[0].mxu0
        %v9721 = vadd.f32 0.0, %v9720
        %v9722 = vpop.f32.mrb[0].mxu0
        %v9723 = vadd.f32 0.0, %v9722
        %v9724 = vpop.f32.mrb[0].mxu0
        %v9725 = vadd.f32 0.0, %v9724
        %9726 = vmatprep.mubr.bf16.mxu0 %v9669
        %9727 = vmatmul.mubr.bf16.gmra.mrb[0].mxu0 %v9533
        %v9728 = vpop.f32.mrb[0].mxu0
        %v9729 = vadd.f32 0.0, %v9728
        %v9730 = vpop.f32.mrb[0].mxu0
        %v9731 = vadd.f32 0.0, %v9730
        %v9732 = vpop.f32.mrb[0].mxu0
        %v9733 = vadd.f32 0.0, %v9732
        %v9734 = vpop.f32.mrb[0].mxu0
        %v9735 = vadd.f32 0.0, %v9734
        %9736 = vmatprep.mubr.bf16.mxu0 %v9672
        %9737 = vmatmul.mubr.bf16.gmra.mrb[0].mxu0 %v9532
        %v9738 = vpop.f32.mrb[0].mxu0
        %v9739 = vadd.f32 0.0, %v9738
        %v9740 = vpop.f32.mrb[0].mxu0
        %v9741 = vadd.f32 0.0, %v9740
        %v9742 = vpop.f32.mrb[0].mxu0
        %v9743 = vadd.f32 0.0, %v9742
        %v9744 = vpop.f32.mrb[0].mxu0
        %v9745 = vadd.f32 0.0, %v9744
        %9746 = vdwg.mxu0
        %v9747 = vadd.f32 %v9467, %v9709
        %v9748 = vadd.f32 %v9468, %v9711
        %v9749 = vadd.f32 %v9469, %v9713
        %v9750 = vadd.f32 %v9470, %v9715
        %v9751 = vadd.f32 %v9471, %v9719
        %v9752 = vadd.f32 %v9472, %v9721
        %v9753 = vadd.f32 %v9473, %v9723
        %v9754 = vadd.f32 %v9474, %v9725
        %v9755 = vadd.f32 %v9475, %v9729
        %v9756 = vadd.f32 %v9476, %v9731
        %v9757 = vadd.f32 %v9477, %v9733
        %v9758 = vadd.f32 %v9478, %v9735
        %v9759 = vadd.f32 %v9479, %v9739
        %v9760 = vadd.f32 %v9480, %v9741
        %v9761 = vadd.f32 %v9481, %v9743
        %v9762 = vadd.f32 %v9482, %v9745
        %s9763 = scalar_lea.vmem %s9, 1536
        %v9764 = vld [vmem:[%s9763] sm:$0xff]
        %v9765 = vld [vmem:[%s9763 + $0x8] sm:$0xff]
        %v9766 = vld [vmem:[%s9763 + $0x10] sm:$0xff]
        %v9767 = vld [vmem:[%s9763 + $0x18] sm:$0xff]
        %v9768 = vld [vmem:[%s9763 + $0x20] sm:$0xff]
        %v9769 = vld [vmem:[%s9763 + $0x28] sm:$0xff]
        %v9770 = vld [vmem:[%s9763 + $0x30] sm:$0xff]
        %v9771 = vld [vmem:[%s9763 + $0x38] sm:$0xff]
        %v9772 = vld [vmem:[%s9763 + $0x40] sm:$0xff]
        %v9773 = vld [vmem:[%s9763 + $0x48] sm:$0xff]
        %v9774 = vld [vmem:[%s9763 + $0x50] sm:$0xff]
        %v9775 = vld [vmem:[%s9763 + $0x58] sm:$0xff]
        %v9776 = vld [vmem:[%s9763 + $0x60] sm:$0xff]
        %v9777 = vld [vmem:[%s9763 + $0x68] sm:$0xff]
        %v9778 = vld [vmem:[%s9763 + $0x70] sm:$0xff]
        %v9779 = vld [vmem:[%s9763 + $0x78] sm:$0xff]
        %v9780 = vld [vmem:[%s9763 + $0x80] sm:$0xff]
        %v9781 = vld [vmem:[%s9763 + $0x88] sm:$0xff]
        %v9782 = vld [vmem:[%s9763 + $0x90] sm:$0xff]
        %v9783 = vld [vmem:[%s9763 + $0x98] sm:$0xff]
        %v9784 = vld [vmem:[%s9763 + $0xa0] sm:$0xff]
        %v9785 = vld [vmem:[%s9763 + $0xa8] sm:$0xff]
        %v9786 = vld [vmem:[%s9763 + $0xb0] sm:$0xff]
        %v9787 = vld [vmem:[%s9763 + $0xb8] sm:$0xff]
        %v9790 = vrot.slane %v7578, 2
        %v9791 = vrot.slane %v7580, 2
        %v9792 = vsel %vm2741, %v9790, %v9791
        %v9793 = vrot.slane %v7579, 2
        %v9794 = vrot.slane %v7581, 2
        %v9795 = vsel %vm2741, %v9793, %v9794
        %v9796 = vrot.slane %v7582, 2
        %v9797 = vsel %vm2741, %v9791, %v9796
        %v9798 = vrot.slane %v7583, 2
        %v9799 = vsel %vm2741, %v9794, %v9798
        %v9800 = vrot.slane %v7584, 2
        %v9801 = vsel %vm2741, %v9796, %v9800
        %v9802 = vrot.slane %v7585, 2
        %v9803 = vsel %vm2741, %v9798, %v9802
        %v9804 = vrot.slane %v7586, 2
        %v9805 = vsel %vm2741, %v9800, %v9804
        %v9806 = vrot.slane %v7587, 2
        %v9807 = vsel %vm2741, %v9802, %v9806
        %v9836 = vunpack.c.l.b16 %v9764
        %v9837 = vunpack.c.h.b16 %v9764
        %v9838 = vunpack.c.l.b16 %v9765
        %v9839 = vunpack.c.h.b16 %v9765
        %v9840 = vunpack.c.l.b16 %v9766
        %v9841 = vunpack.c.h.b16 %v9766
        %v9842 = vunpack.c.l.b16 %v9767
        %v9843 = vunpack.c.h.b16 %v9767
        %v9844 = vunpack.c.l.b16 %v9768
        %v9845 = vunpack.c.h.b16 %v9768
        %v9846 = vunpack.c.l.b16 %v9769
        %v9847 = vunpack.c.h.b16 %v9769
        %v9848 = vunpack.c.l.b16 %v9770
        %v9849 = vunpack.c.h.b16 %v9770
        %v9850 = vunpack.c.l.b16 %v9771
        %v9851 = vunpack.c.h.b16 %v9771
        %v9852 = vunpack.c.l.b16 %v9772
        %v9853 = vunpack.c.h.b16 %v9772
        %v9854 = vunpack.c.l.b16 %v9773
        %v9855 = vunpack.c.h.b16 %v9773
        %v9856 = vunpack.c.l.b16 %v9774
        %v9857 = vunpack.c.h.b16 %v9774
        %v9858 = vunpack.c.l.b16 %v9775
        %v9859 = vunpack.c.h.b16 %v9775
        %v9860 = vunpack.c.l.b16 %v9776
        %v9861 = vunpack.c.h.b16 %v9776
        %v9862 = vunpack.c.l.b16 %v9777
        %v9863 = vunpack.c.h.b16 %v9777
        %v9864 = vunpack.c.l.b16 %v9778
        %v9865 = vunpack.c.h.b16 %v9778
        %v9866 = vunpack.c.l.b16 %v9779
        %v9867 = vunpack.c.h.b16 %v9779
        %v9868 = vunpack.c.l.b16 %v9780
        %v9869 = vunpack.c.h.b16 %v9780
        %v9870 = vunpack.c.l.b16 %v9781
        %v9871 = vunpack.c.h.b16 %v9781
        %v9872 = vunpack.c.l.b16 %v9782
        %v9873 = vunpack.c.h.b16 %v9782
        %v9874 = vunpack.c.l.b16 %v9783
        %v9875 = vunpack.c.h.b16 %v9783
        %v9876 = vunpack.c.l.b16 %v9784
        %v9877 = vunpack.c.h.b16 %v9784
        %v9878 = vunpack.c.l.b16 %v9785
        %v9879 = vunpack.c.h.b16 %v9785
        %v9880 = vunpack.c.l.b16 %v9786
        %v9881 = vunpack.c.h.b16 %v9786
        %v9882 = vunpack.c.l.b16 %v9787
        %v9883 = vunpack.c.h.b16 %v9787
        %v9884 = vpack.c.b16 %v9838, %v9836
        %v9885 = vpack.c.b16 %v9839, %v9837
        %v9886 = vpack.c.b16 %v9842, %v9840
        %v9887 = vpack.c.b16 %v9843, %v9841
        %v9888 = vpack.c.b16 %v9846, %v9844
        %v9889 = vpack.c.b16 %v9847, %v9845
        %v9890 = vpack.c.b16 %v9850, %v9848
        %v9891 = vpack.c.b16 %v9851, %v9849
        %v9892 = vpack.c.b16 %v9854, %v9852
        %v9893 = vpack.c.b16 %v9855, %v9853
        %v9894 = vpack.c.b16 %v9858, %v9856
        %v9895 = vpack.c.b16 %v9859, %v9857
        %v9896 = vpack.c.b16 %v9862, %v9860
        %v9897 = vpack.c.b16 %v9863, %v9861
        %v9898 = vpack.c.b16 %v9866, %v9864
        %v9899 = vpack.c.b16 %v9867, %v9865
        %v9900 = vpack.c.b16 %v9870, %v9868
        %v9901 = vpack.c.b16 %v9871, %v9869
        %v9902 = vpack.c.b16 %v9874, %v9872
        %v9903 = vpack.c.b16 %v9875, %v9873
        %v9904 = vpack.c.b16 %v9878, %v9876
        %v9905 = vpack.c.b16 %v9879, %v9877
        %v9906 = vpack.c.b16 %v9882, %v9880
        %v9907 = vpack.c.b16 %v9883, %v9881
        %v9933 = vsel %vm7147, %v9795, 0
        %v9936 = vsel %vm7147, %v9799, 0
        %v9939 = vsel %vm7147, %v9803, 0
        %v9942 = vsel %vm7147, %v9807, 0
        %9944 = vmatprep.subr.bf16.mxu0 %v9885
        %9945 = vmatpush1.bf16.msra.mxu0 %v9884
        %9946 = vmatprep.subr.bf16.mxu0 %v9887
        %9947 = vmatpush1.bf16.msra.mxu0 %v9886
        %9948 = vmatprep.subr.bf16.mxu0 %v9889
        %9949 = vmatpush1.bf16.msra.mxu0 %v9888
        %9950 = vmatprep.subr.bf16.mxu0 %v9891
        %9951 = vmatpush1.bf16.msra.mxu0 %v9890
        %9952 = vmatprep.subr.bf16.mxu0 %v9893
        %9953 = vmatpush1.bf16.msra.mxu0 %v9892
        %9954 = vmatprep.subr.bf16.mxu0 %v9895
        %9955 = vmatpush1.bf16.msra.mxu0 %v9894
        %9956 = vmatprep.subr.bf16.mxu0 %v9897
        %9957 = vmatpush1.bf16.msra.mxu0 %v9896
        %9958 = vmatprep.subr.bf16.mxu0 %v9899
        %9959 = vmatpush1.bf16.msra.mxu0 %v9898
        %9960 = vmatprep.subr.bf16.mxu0 %v9901
        %9961 = vmatpush1.bf16.msra.mxu0 %v9900
        %9962 = vmatprep.subr.bf16.mxu0 %v9903
        %9963 = vmatpush1.bf16.msra.mxu0 %v9902
        %9964 = vmatprep.subr.bf16.mxu0 %v9905
        %9965 = vmatpush1.bf16.msra.mxu0 %v9904
        %9966 = vmatprep.subr.bf16.mxu0 %v9907
        %9967 = vmatpush1.bf16.msra.mxu0 %v9906
        %9968 = vmatprep.subr.bf16.mxu0 0
        %9969 = vmatpush1.bf16.msra.mxu0 0
        %9970 = vmatprep.subr.bf16.mxu0 0
        %9971 = vmatpush1.bf16.msra.mxu0 0
        %9972 = vmatprep.subr.bf16.mxu0 0
        %9973 = vmatpush1.bf16.msra.mxu0 0
        %9974 = vmatprep.subr.bf16.mxu0 0
        %9975 = vmatpush1.bf16.msra.mxu0 0
        %9976 = vmatprep.mubr.bf16.mxu0 %v9933
        %9977 = vmatmul.mubr.bf16.gmra.mrb[0].mxu0 %v9792
        %v9978 = vpop.f32.mrb[0].mxu0
        %v9979 = vadd.f32 0.0, %v9978
        %v9980 = vpop.f32.mrb[0].mxu0
        %v9981 = vadd.f32 0.0, %v9980
        %v9982 = vpop.f32.mrb[0].mxu0
        %v9983 = vadd.f32 0.0, %v9982
        %v9984 = vpop.f32.mrb[0].mxu0
        %v9985 = vadd.f32 0.0, %v9984
        %9986 = vmatprep.mubr.bf16.mxu0 %v9936
        %9987 = vmatmul.mubr.bf16.gmra.mrb[0].mxu0 %v9797
        %v9988 = vpop.f32.mrb[0].mxu0
        %v9989 = vadd.f32 0.0, %v9988
        %v9990 = vpop.f32.mrb[0].mxu0
        %v9991 = vadd.f32 0.0, %v9990
        %v9992 = vpop.f32.mrb[0].mxu0
        %v9993 = vadd.f32 0.0, %v9992
        %v9994 = vpop.f32.mrb[0].mxu0
        %v9995 = vadd.f32 0.0, %v9994
        %9996 = vmatprep.mubr.bf16.mxu0 %v9939
        %9997 = vmatmul.mubr.bf16.gmra.mrb[0].mxu0 %v9801
        %v9998 = vpop.f32.mrb[0].mxu0
        %v9999 = vadd.f32 0.0, %v9998
        %v10000 = vpop.f32.mrb[0].mxu0
        %v10001 = vadd.f32 0.0, %v10000
        %v10002 = vpop.f32.mrb[0].mxu0
        %v10003 = vadd.f32 0.0, %v10002
        %v10004 = vpop.f32.mrb[0].mxu0
        %v10005 = vadd.f32 0.0, %v10004
        %10006 = vmatprep.mubr.bf16.mxu0 %v9942
        %10007 = vmatmul.mubr.bf16.gmra.mrb[0].mxu0 %v9805
        %v10008 = vpop.f32.mrb[0].mxu0
        %v10009 = vadd.f32 0.0, %v10008
        %v10010 = vpop.f32.mrb[0].mxu0
        %v10011 = vadd.f32 0.0, %v10010
        %v10012 = vpop.f32.mrb[0].mxu0
        %v10013 = vadd.f32 0.0, %v10012
        %v10014 = vpop.f32.mrb[0].mxu0
        %v10015 = vadd.f32 0.0, %v10014
        %10016 = vdwg.mxu0
        %v10017 = vadd.f32 %v9747, %v9979
        %v10018 = vadd.f32 %v9748, %v9981
        %v10019 = vadd.f32 %v9749, %v9983
        %v10020 = vadd.f32 %v9750, %v9985
        %v10021 = vadd.f32 %v9751, %v9989
        %v10022 = vadd.f32 %v9752, %v9991
        %v10023 = vadd.f32 %v9753, %v9993
        %v10024 = vadd.f32 %v9754, %v9995
        %v10025 = vadd.f32 %v9755, %v9999
        %v10026 = vadd.f32 %v9756, %v10001
        %v10027 = vadd.f32 %v9757, %v10003
        %v10028 = vadd.f32 %v9758, %v10005
        %v10029 = vadd.f32 %v9759, %v10009
        %v10030 = vadd.f32 %v9760, %v10011
        %v10031 = vadd.f32 %v9761, %v10013
        %v10032 = vadd.f32 %v9762, %v10015
        %v10033 = vld [vmem:[%s10] sm:$0x3]
        %v10035 = vlaneseq
        %v10036 = vshrl.u32 %v10035, 7
        %v10037 = vsub.s32 0, %v10036
        %v10038 = vrot.slane %v10033, %v10037
        %v10039 = vlaneseq
        %v10040 = vshrl.u32 %v10039, 7
        %v10041 = vsub.s32 1, %v10040
        %v10042 = vrot.slane %v10033, %v10041
        %v10045 = vadd.f32 %v10017, %v10038
        %v10046 = vadd.f32 %v10018, %v10042
        %v10047 = vadd.f32 %v10019, %v10038
        %v10048 = vadd.f32 %v10020, %v10042
        %v10049 = vadd.f32 %v10021, %v10038
        %v10050 = vadd.f32 %v10022, %v10042
        %v10051 = vadd.f32 %v10023, %v10038
        %v10052 = vadd.f32 %v10024, %v10042
        %v10053 = vadd.f32 %v10025, %v10038
        %v10054 = vadd.f32 %v10026, %v10042
        %v10055 = vadd.f32 %v10027, %v10038
        %v10056 = vadd.f32 %v10028, %v10042
        %v10057 = vadd.f32 %v10029, %v10038
        %v10058 = vadd.f32 %v10030, %v10042
        %v10059 = vadd.f32 %v10031, %v10038
        %v10060 = vadd.f32 %v10032, %v10042
        %v10061 = vmax.f32 %v10045, 0.0
        %v10062 = vmax.f32 %v10046, 0.0
        %v10063 = vmax.f32 %v10047, 0.0
        %v10064 = vmax.f32 %v10048, 0.0
        %v10065 = vmax.f32 %v10049, 0.0
        %v10066 = vmax.f32 %v10050, 0.0
        %v10067 = vmax.f32 %v10051, 0.0
        %v10068 = vmax.f32 %v10052, 0.0
        %v10069 = vmax.f32 %v10053, 0.0
        %v10070 = vmax.f32 %v10054, 0.0
        %v10071 = vmax.f32 %v10055, 0.0
        %v10072 = vmax.f32 %v10056, 0.0
        %v10073 = vmax.f32 %v10057, 0.0
        %v10074 = vmax.f32 %v10058, 0.0
        %v10075 = vmax.f32 %v10059, 0.0
        %v10076 = vmax.f32 %v10060, 0.0
        %v10077 = vpack.c.bf16 %v10063, %v10061
        %v10078 = vpack.c.bf16 %v10064, %v10062
        %v10079 = vpack.c.bf16 %v10067, %v10065
        %v10080 = vpack.c.bf16 %v10068, %v10066
        %v10081 = vpack.c.bf16 %v10071, %v10069
        %v10082 = vpack.c.bf16 %v10072, %v10070
        %v10083 = vpack.c.bf16 %v10075, %v10073
        %v10084 = vpack.c.bf16 %v10076, %v10074
        %v10085 = vld [vmem:[%s11] sm:$0xff]
        %v10086 = vld [vmem:[%s11 + $0x8] sm:$0xff]
        %v10087 = vld [vmem:[%s11 + $0x10] sm:$0xff]
        %v10088 = vld [vmem:[%s11 + $0x18] sm:$0xff]
        %v10089 = vld [vmem:[%s11 + $0x20] sm:$0xff]
        %v10090 = vld [vmem:[%s11 + $0x28] sm:$0xff]
        %v10091 = vld [vmem:[%s11 + $0x30] sm:$0xff]
        %v10092 = vld [vmem:[%s11 + $0x38] sm:$0xff]
        %v10093 = vld [vmem:[%s11 + $0x40] sm:$0xff]
        %v10094 = vld [vmem:[%s11 + $0x48] sm:$0xff]
        %v10095 = vld [vmem:[%s11 + $0x50] sm:$0xff]
        %v10096 = vld [vmem:[%s11 + $0x58] sm:$0xff]
        %v10097 = vld [vmem:[%s11 + $0x60] sm:$0xff]
        %v10098 = vld [vmem:[%s11 + $0x68] sm:$0xff]
        %v10099 = vld [vmem:[%s11 + $0x70] sm:$0xff]
        %v10100 = vld [vmem:[%s11 + $0x78] sm:$0xff]
        %v10101 = vld [vmem:[%s11 + $0x80] sm:$0xff]
        %v10102 = vld [vmem:[%s11 + $0x88] sm:$0xff]
        %v10103 = vld [vmem:[%s11 + $0x90] sm:$0xff]
        %v10104 = vld [vmem:[%s11 + $0x98] sm:$0xff]
        %v10105 = vld [vmem:[%s11 + $0xa0] sm:$0xff]
        %v10106 = vld [vmem:[%s11 + $0xa8] sm:$0xff]
        %v10107 = vld [vmem:[%s11 + $0xb0] sm:$0xff]
        %v10108 = vld [vmem:[%s11 + $0xb8] sm:$0xff]
        %v10109 = vld [vmem:[%s12] sm:$0x3]
        %v10111 = vlaneseq
        %v10112 = vshrl.u32 %v10111, 7
        %v10113 = vsub.s32 0, %v10112
        %v10114 = vrot.slane %v10109, %v10113
        %v10115 = vlaneseq
        %v10116 = vshrl.u32 %v10115, 7
        %v10117 = vsub.s32 1, %v10116
        %v10118 = vrot.slane %v10109, %v10117
        %v10145 = vunpack.c.l.b16 %v10085
        %v10146 = vunpack.c.h.b16 %v10085
        %v10147 = vunpack.c.l.b16 %v10086
        %v10148 = vunpack.c.h.b16 %v10086
        %v10149 = vunpack.c.l.b16 %v10087
        %v10150 = vunpack.c.h.b16 %v10087
        %v10151 = vunpack.c.l.b16 %v10088
        %v10152 = vunpack.c.h.b16 %v10088
        %v10153 = vunpack.c.l.b16 %v10089
        %v10154 = vunpack.c.h.b16 %v10089
        %v10155 = vunpack.c.l.b16 %v10090
        %v10156 = vunpack.c.h.b16 %v10090
        %v10157 = vunpack.c.l.b16 %v10091
        %v10158 = vunpack.c.h.b16 %v10091
        %v10159 = vunpack.c.l.b16 %v10092
        %v10160 = vunpack.c.h.b16 %v10092
        %v10161 = vunpack.c.l.b16 %v10093
        %v10162 = vunpack.c.h.b16 %v10093
        %v10163 = vunpack.c.l.b16 %v10094
        %v10164 = vunpack.c.h.b16 %v10094
        %v10165 = vunpack.c.l.b16 %v10095
        %v10166 = vunpack.c.h.b16 %v10095
        %v10167 = vunpack.c.l.b16 %v10096
        %v10168 = vunpack.c.h.b16 %v10096
        %v10169 = vunpack.c.l.b16 %v10097
        %v10170 = vunpack.c.h.b16 %v10097
        %v10171 = vunpack.c.l.b16 %v10098
        %v10172 = vunpack.c.h.b16 %v10098
        %v10173 = vunpack.c.l.b16 %v10099
        %v10174 = vunpack.c.h.b16 %v10099
        %v10175 = vunpack.c.l.b16 %v10100
        %v10176 = vunpack.c.h.b16 %v10100
        %v10177 = vunpack.c.l.b16 %v10101
        %v10178 = vunpack.c.h.b16 %v10101
        %v10179 = vunpack.c.l.b16 %v10102
        %v10180 = vunpack.c.h.b16 %v10102
        %v10181 = vunpack.c.l.b16 %v10103
        %v10182 = vunpack.c.h.b16 %v10103
        %v10183 = vunpack.c.l.b16 %v10104
        %v10184 = vunpack.c.h.b16 %v10104
        %v10185 = vunpack.c.l.b16 %v10105
        %v10186 = vunpack.c.h.b16 %v10105
        %v10187 = vunpack.c.l.b16 %v10106
        %v10188 = vunpack.c.h.b16 %v10106
        %v10189 = vunpack.c.l.b16 %v10107
        %v10190 = vunpack.c.h.b16 %v10107
        %v10191 = vunpack.c.l.b16 %v10108
        %v10192 = vunpack.c.h.b16 %v10108
        %v10193 = vpack.c.b16 %v10147, %v10145
        %v10194 = vpack.c.b16 %v10148, %v10146
        %v10195 = vpack.c.b16 %v10151, %v10149
        %v10196 = vpack.c.b16 %v10152, %v10150
        %v10197 = vpack.c.b16 %v10155, %v10153
        %v10198 = vpack.c.b16 %v10156, %v10154
        %v10199 = vpack.c.b16 %v10159, %v10157
        %v10200 = vpack.c.b16 %v10160, %v10158
        %v10201 = vpack.c.b16 %v10163, %v10161
        %v10202 = vpack.c.b16 %v10164, %v10162
        %v10203 = vpack.c.b16 %v10167, %v10165
        %v10204 = vpack.c.b16 %v10168, %v10166
        %v10205 = vpack.c.b16 %v10171, %v10169
        %v10206 = vpack.c.b16 %v10172, %v10170
        %v10207 = vpack.c.b16 %v10175, %v10173
        %v10208 = vpack.c.b16 %v10176, %v10174
        %v10209 = vpack.c.b16 %v10179, %v10177
        %v10210 = vpack.c.b16 %v10180, %v10178
        %v10211 = vpack.c.b16 %v10183, %v10181
        %v10212 = vpack.c.b16 %v10184, %v10182
        %v10213 = vpack.c.b16 %v10187, %v10185
        %v10214 = vpack.c.b16 %v10188, %v10186
        %v10215 = vpack.c.b16 %v10191, %v10189
        %v10216 = vpack.c.b16 %v10192, %v10190
        %v10242 = vsel %vm7147, %v10078, 0
        %v10245 = vsel %vm7147, %v10080, 0
        %v10248 = vsel %vm7147, %v10082, 0
        %v10251 = vsel %vm7147, %v10084, 0
        %10253 = vmatprep.subr.bf16.mxu0 %v10194
        %10254 = vmatpush1.bf16.msra.mxu0 %v10193
        %10255 = vmatprep.subr.bf16.mxu0 %v10196
        %10256 = vmatpush1.bf16.msra.mxu0 %v10195
        %10257 = vmatprep.subr.bf16.mxu0 %v10198
        %10258 = vmatpush1.bf16.msra.mxu0 %v10197
        %10259 = vmatprep.subr.bf16.mxu0 %v10200
        %10260 = vmatpush1.bf16.msra.mxu0 %v10199
        %10261 = vmatprep.subr.bf16.mxu0 %v10202
        %10262 = vmatpush1.bf16.msra.mxu0 %v10201
        %10263 = vmatprep.subr.bf16.mxu0 %v10204
        %10264 = vmatpush1.bf16.msra.mxu0 %v10203
        %10265 = vmatprep.subr.bf16.mxu0 %v10206
        %10266 = vmatpush1.bf16.msra.mxu0 %v10205
        %10267 = vmatprep.subr.bf16.mxu0 %v10208
        %10268 = vmatpush1.bf16.msra.mxu0 %v10207
        %10269 = vmatprep.subr.bf16.mxu0 %v10210
        %10270 = vmatpush1.bf16.msra.mxu0 %v10209
        %10271 = vmatprep.subr.bf16.mxu0 %v10212
        %10272 = vmatpush1.bf16.msra.mxu0 %v10211
        %10273 = vmatprep.subr.bf16.mxu0 %v10214
        %10274 = vmatpush1.bf16.msra.mxu0 %v10213
        %10275 = vmatprep.subr.bf16.mxu0 %v10216
        %10276 = vmatpush1.bf16.msra.mxu0 %v10215
        %10277 = vmatprep.subr.bf16.mxu0 0
        %10278 = vmatpush1.bf16.msra.mxu0 0
        %10279 = vmatprep.subr.bf16.mxu0 0
        %10280 = vmatpush1.bf16.msra.mxu0 0
        %10281 = vmatprep.subr.bf16.mxu0 0
        %10282 = vmatpush1.bf16.msra.mxu0 0
        %10283 = vmatprep.subr.bf16.mxu0 0
        %10284 = vmatpush1.bf16.msra.mxu0 0
        %10285 = vmatprep.mubr.bf16.mxu0 %v10242
        %10286 = vmatmul.mubr.bf16.gmra.mrb[0].mxu0 %v10077
        %v10287 = vpop.f32.mrb[0].mxu0
        %v10288 = vadd.f32 %v10114, %v10287
        %v10289 = vpop.f32.mrb[0].mxu0
        %v10290 = vadd.f32 %v10118, %v10289
        %v10291 = vpop.f32.mrb[0].mxu0
        %v10292 = vadd.f32 %v10114, %v10291
        %v10293 = vpop.f32.mrb[0].mxu0
        %v10294 = vadd.f32 %v10118, %v10293
        %10295 = vmatprep.mubr.bf16.mxu0 %v10245
        %10296 = vmatmul.mubr.bf16.gmra.mrb[0].mxu0 %v10079
        %v10297 = vpop.f32.mrb[0].mxu0
        %v10298 = vadd.f32 %v10114, %v10297
        %v10299 = vpop.f32.mrb[0].mxu0
        %v10300 = vadd.f32 %v10118, %v10299
        %v10301 = vpop.f32.mrb[0].mxu0
        %v10302 = vadd.f32 %v10114, %v10301
        %v10303 = vpop.f32.mrb[0].mxu0
        %v10304 = vadd.f32 %v10118, %v10303
        %10305 = vmatprep.mubr.bf16.mxu0 %v10248
        %10306 = vmatmul.mubr.bf16.gmra.mrb[0].mxu0 %v10081
        %v10307 = vpop.f32.mrb[0].mxu0
        %v10308 = vadd.f32 %v10114, %v10307
        %v10309 = vpop.f32.mrb[0].mxu0
        %v10310 = vadd.f32 %v10118, %v10309
        %v10311 = vpop.f32.mrb[0].mxu0
        %v10312 = vadd.f32 %v10114, %v10311
        %v10313 = vpop.f32.mrb[0].mxu0
        %v10314 = vadd.f32 %v10118, %v10313
        %10315 = vmatprep.mubr.bf16.mxu0 %v10251
        %10316 = vmatmul.mubr.bf16.gmra.mrb[0].mxu0 %v10083
        %v10317 = vpop.f32.mrb[0].mxu0
        %v10318 = vadd.f32 %v10114, %v10317
        %v10319 = vpop.f32.mrb[0].mxu0
        %v10320 = vadd.f32 %v10118, %v10319
        %v10321 = vpop.f32.mrb[0].mxu0
        %v10322 = vadd.f32 %v10114, %v10321
        %v10323 = vpop.f32.mrb[0].mxu0
        %v10324 = vadd.f32 %v10118, %v10323
        %10325 = vdwg.mxu0
        %v10326 = vmax.f32 %v10288, 0.0
        %v10327 = vmax.f32 %v10290, 0.0
        %v10328 = vmax.f32 %v10292, 0.0
        %v10329 = vmax.f32 %v10294, 0.0
        %v10330 = vmax.f32 %v10298, 0.0
        %v10331 = vmax.f32 %v10300, 0.0
        %v10332 = vmax.f32 %v10302, 0.0
        %v10333 = vmax.f32 %v10304, 0.0
        %v10334 = vmax.f32 %v10308, 0.0
        %v10335 = vmax.f32 %v10310, 0.0
        %v10336 = vmax.f32 %v10312, 0.0
        %v10337 = vmax.f32 %v10314, 0.0
        %v10338 = vmax.f32 %v10318, 0.0
        %v10339 = vmax.f32 %v10320, 0.0
        %v10340 = vmax.f32 %v10322, 0.0
        %v10341 = vmax.f32 %v10324, 0.0
        %v10342 = vpack.c.bf16 %v10328, %v10326
        %v10343 = vpack.c.bf16 %v10329, %v10327
        %v10344 = vpack.c.bf16 %v10332, %v10330
        %v10345 = vpack.c.bf16 %v10333, %v10331
        %v10346 = vpack.c.bf16 %v10336, %v10334
        %v10347 = vpack.c.bf16 %v10337, %v10335
        %v10348 = vpack.c.bf16 %v10340, %v10338
        %v10349 = vpack.c.bf16 %v10341, %v10339
        %v10350 = vld [vmem:[%s13] sm:$0xf]
        %v10351 = vld [vmem:[%s13 + $0x4] sm:$0xf]
        %v10352 = vld [vmem:[%s13 + $0x8] sm:$0xf]
        %v10353 = vld [vmem:[%s13 + $0xc] sm:$0xf]
        %v10354 = vld [vmem:[%s13 + $0x10] sm:$0xf]
        %v10355 = vld [vmem:[%s13 + $0x14] sm:$0xf]
        %v10356 = vld [vmem:[%s13 + $0x18] sm:$0xf]
        %v10357 = vld [vmem:[%s13 + $0x1c] sm:$0xf]
        %v10358 = vld [vmem:[%s13 + $0x20] sm:$0xf]
        %v10359 = vld [vmem:[%s13 + $0x24] sm:$0xf]
        %v10360 = vld [vmem:[%s13 + $0x28] sm:$0xf]
        %v10361 = vld [vmem:[%s13 + $0x2c] sm:$0xf]
        %v10362 = vld [vmem:[%s13 + $0x30] sm:$0xf]
        %v10363 = vld [vmem:[%s13 + $0x34] sm:$0xf]
        %v10364 = vld [vmem:[%s13 + $0x38] sm:$0xf]
        %v10365 = vld [vmem:[%s13 + $0x3c] sm:$0xf]
        %v10366 = vld [vmem:[%s13 + $0x40] sm:$0xf]
        %v10367 = vld [vmem:[%s13 + $0x44] sm:$0xf]
        %v10368 = vld [vmem:[%s13 + $0x48] sm:$0xf]
        %v10369 = vld [vmem:[%s13 + $0x4c] sm:$0xf]
        %v10370 = vld [vmem:[%s13 + $0x50] sm:$0xf]
        %v10371 = vld [vmem:[%s13 + $0x54] sm:$0xf]
        %v10372 = vld [vmem:[%s13 + $0x58] sm:$0xf]
        %v10373 = vld [vmem:[%s13 + $0x5c] sm:$0xf]
        %v10374 = vld [vmem:[%s14] sm:$0x1]
        %v10376 = vlaneseq
        %v10377 = vshrl.u32 %v10376, 7
        %v10378 = vsub.s32 0, %v10377
        %v10379 = vrot.slane %v10374, %v10378
        %v10405 = vunpack.c.l.b16 %v10350
        %v10406 = vunpack.c.l.b16 %v10351
        %v10407 = vunpack.c.l.b16 %v10352
        %v10408 = vunpack.c.l.b16 %v10353
        %v10409 = vunpack.c.l.b16 %v10354
        %v10410 = vunpack.c.l.b16 %v10355
        %v10411 = vunpack.c.l.b16 %v10356
        %v10412 = vunpack.c.l.b16 %v10357
        %v10413 = vunpack.c.l.b16 %v10358
        %v10414 = vunpack.c.l.b16 %v10359
        %v10415 = vunpack.c.l.b16 %v10360
        %v10416 = vunpack.c.l.b16 %v10361
        %v10417 = vunpack.c.l.b16 %v10362
        %v10418 = vunpack.c.l.b16 %v10363
        %v10419 = vunpack.c.l.b16 %v10364
        %v10420 = vunpack.c.l.b16 %v10365
        %v10421 = vunpack.c.l.b16 %v10366
        %v10422 = vunpack.c.l.b16 %v10367
        %v10423 = vunpack.c.l.b16 %v10368
        %v10424 = vunpack.c.l.b16 %v10369
        %v10425 = vunpack.c.l.b16 %v10370
        %v10426 = vunpack.c.l.b16 %v10371
        %v10427 = vunpack.c.l.b16 %v10372
        %v10428 = vunpack.c.l.b16 %v10373
        %v10429 = vpack.c.b16 %v10406, %v10405
        %v10430 = vpack.c.b16 %v10408, %v10407
        %v10431 = vpack.c.b16 %v10410, %v10409
        %v10432 = vpack.c.b16 %v10412, %v10411
        %v10433 = vpack.c.b16 %v10414, %v10413
        %v10434 = vpack.c.b16 %v10416, %v10415
        %v10435 = vpack.c.b16 %v10418, %v10417
        %v10436 = vpack.c.b16 %v10420, %v10419
        %v10437 = vpack.c.b16 %v10422, %v10421
        %v10438 = vpack.c.b16 %v10424, %v10423
        %v10439 = vpack.c.b16 %v10426, %v10425
        %v10440 = vpack.c.b16 %v10428, %v10427
        %v10454 = vsel %vm7147, %v10343, 0
        %v10457 = vsel %vm7147, %v10345, 0
        %v10460 = vsel %vm7147, %v10347, 0
        %v10463 = vsel %vm7147, %v10349, 0
        %10465 = vmatprep.subr.bf16.mxu0 0
        %10466 = vmatpush1.bf16.msra.mxu0 %v10429
        %10467 = vmatprep.subr.bf16.mxu0 0
        %10468 = vmatpush1.bf16.msra.mxu0 %v10430
        %10469 = vmatprep.subr.bf16.mxu0 0
        %10470 = vmatpush1.bf16.msra.mxu0 %v10431
        %10471 = vmatprep.subr.bf16.mxu0 0
        %10472 = vmatpush1.bf16.msra.mxu0 %v10432
        %10473 = vmatprep.subr.bf16.mxu0 0
        %10474 = vmatpush1.bf16.msra.mxu0 %v10433
        %10475 = vmatprep.subr.bf16.mxu0 0
        %10476 = vmatpush1.bf16.msra.mxu0 %v10434
        %10477 = vmatprep.subr.bf16.mxu0 0
        %10478 = vmatpush1.bf16.msra.mxu0 %v10435
        %10479 = vmatprep.subr.bf16.mxu0 0
        %10480 = vmatpush1.bf16.msra.mxu0 %v10436
        %10481 = vmatprep.subr.bf16.mxu0 0
        %10482 = vmatpush1.bf16.msra.mxu0 %v10437
        %10483 = vmatprep.subr.bf16.mxu0 0
        %10484 = vmatpush1.bf16.msra.mxu0 %v10438
        %10485 = vmatprep.subr.bf16.mxu0 0
        %10486 = vmatpush1.bf16.msra.mxu0 %v10439
        %10487 = vmatprep.subr.bf16.mxu0 0
        %10488 = vmatpush1.bf16.msra.mxu0 %v10440
        %10489 = vmatprep.subr.bf16.mxu0 0
        %10490 = vmatpush1.bf16.msra.mxu0 0
        %10491 = vmatprep.subr.bf16.mxu0 0
        %10492 = vmatpush1.bf16.msra.mxu0 0
        %10493 = vmatprep.subr.bf16.mxu0 0
        %10494 = vmatpush1.bf16.msra.mxu0 0
        %10495 = vmatprep.subr.bf16.mxu0 0
        %10496 = vmatpush1.bf16.msra.mxu0 0
        %10497 = vmatprep.mubr.bf16.mxu0 %v10454
        %10498 = vmatmul.mubr.bf16.gmra.mrb[0].mxu0 %v10342
        %v10499 = vpop.f32.mrb[0].mxu0
        %v10500 = vadd.f32 %v10379, %v10499
        %v10501 = vpop.f32.mrb[0].mxu0
        %v10502 = vpop.f32.mrb[0].mxu0
        %v10503 = vadd.f32 %v10379, %v10502
        %v10504 = vpop.f32.mrb[0].mxu0
        %10505 = vmatprep.mubr.bf16.mxu0 %v10457
        %10506 = vmatmul.mubr.bf16.gmra.mrb[0].mxu0 %v10344
        %v10507 = vpop.f32.mrb[0].mxu0
        %v10508 = vadd.f32 %v10379, %v10507
        %v10509 = vpop.f32.mrb[0].mxu0
        %v10510 = vpop.f32.mrb[0].mxu0
        %v10511 = vadd.f32 %v10379, %v10510
        %v10512 = vpop.f32.mrb[0].mxu0
        %10513 = vmatprep.mubr.bf16.mxu0 %v10460
        %10514 = vmatmul.mubr.bf16.gmra.mrb[0].mxu0 %v10346
        %v10515 = vpop.f32.mrb[0].mxu0
        %v10516 = vadd.f32 %v10379, %v10515
        %v10517 = vpop.f32.mrb[0].mxu0
        %v10518 = vpop.f32.mrb[0].mxu0
        %v10519 = vadd.f32 %v10379, %v10518
        %v10520 = vpop.f32.mrb[0].mxu0
        %10521 = vmatprep.mubr.bf16.mxu0 %v10463
        %10522 = vmatmul.mubr.bf16.gmra.mrb[0].mxu0 %v10348
        %v10523 = vpop.f32.mrb[0].mxu0
        %v10524 = vadd.f32 %v10379, %v10523
        %v10525 = vpop.f32.mrb[0].mxu0
        %v10526 = vpop.f32.mrb[0].mxu0
        %v10527 = vpop.f32.mrb[0].mxu0
        %10528 = vdwg.mxu0
        %v10529 = vmax.f32 %v10500, 0.0
        %v10530 = vmax.f32 %v10503, 0.0
        %v10531 = vmax.f32 %v10508, 0.0
        %v10532 = vmax.f32 %v10511, 0.0
        %v10533 = vmax.f32 %v10516, 0.0
        %v10534 = vmax.f32 %v10519, 0.0
        %v10535 = vmax.f32 %v10524, 0.0
        %vm10536 = vcmask 78848
        %v10537 = vsel %vm10536, %v10529, 0.0
        %v10538 = vrot.slane %v10537, 4
        %v10539 = vadd.f32 %v10537, %v10538
        %v10540 = vrot.slane %v10539, 2
        %v10541 = vadd.f32 %v10539, %v10540
        %v10542 = vrot.slane %v10541, 1
        %v10543 = vadd.f32 %v10541, %v10542
        %v10544 = vadd.f32 %v10543, 0.0
        %v10546 = vrot.slane %v10530, 1
        %v10548 = vsel %vm10536, %v10546, 0.0
        %v10549 = vrot.slane %v10548, 4
        %v10550 = vadd.f32 %v10548, %v10549
        %v10551 = vrot.slane %v10550, 2
        %v10552 = vadd.f32 %v10550, %v10551
        %v10553 = vrot.slane %v10552, 1
        %v10554 = vadd.f32 %v10552, %v10553
        %v10555 = vadd.f32 %v10544, %v10554
        %v10557 = vrot.slane %v10531, 2
        %v10559 = vsel %vm10536, %v10557, 0.0
        %v10560 = vrot.slane %v10559, 4
        %v10561 = vadd.f32 %v10559, %v10560
        %v10562 = vrot.slane %v10561, 2
        %v10563 = vadd.f32 %v10561, %v10562
        %v10564 = vrot.slane %v10563, 1
        %v10565 = vadd.f32 %v10563, %v10564
        %v10566 = vadd.f32 %v10555, %v10565
        %v10569 = vrot.slane %v10532, 3
        %v10570 = vrot.slane %v10533, 3
        %v10571 = vsel %vm1497, %v10569, %v10570
        %v10573 = vsel %vm10536, %v10571, 0.0
        %v10574 = vrot.slane %v10573, 4
        %v10575 = vadd.f32 %v10573, %v10574
        %v10576 = vrot.slane %v10575, 2
        %v10577 = vadd.f32 %v10575, %v10576
        %v10578 = vrot.slane %v10577, 1
        %v10579 = vadd.f32 %v10577, %v10578
        %v10580 = vadd.f32 %v10566, %v10579
        %v10582 = vrot.slane %v10533, 4
        %v10583 = vrot.slane %v10534, 4
        %v10584 = vsel %vm1495, %v10582, %v10583
        %v10586 = vsel %vm10536, %v10584, 0.0
        %v10587 = vrot.slane %v10586, 4
        %v10588 = vadd.f32 %v10586, %v10587
        %v10589 = vrot.slane %v10588, 2
        %v10590 = vadd.f32 %v10588, %v10589
        %v10591 = vrot.slane %v10590, 1
        %v10592 = vadd.f32 %v10590, %v10591
        %v10593 = vadd.f32 %v10580, %v10592
        %v10595 = vrot.slane %v10534, 5
        %v10596 = vrot.slane %v10535, 5
        %v10597 = vsel %vm1493, %v10595, %v10596
        %v10599 = vsel %vm10536, %v10597, 0.0
        %v10600 = vrot.slane %v10599, 4
        %v10601 = vadd.f32 %v10599, %v10600
        %v10602 = vrot.slane %v10601, 2
        %v10603 = vadd.f32 %v10601, %v10602
        %v10604 = vrot.slane %v10603, 1
        %v10605 = vadd.f32 %v10603, %v10604
        %v10606 = vadd.f32 %v10593, %v10605
        %v10607 = vmul.f32 %v10606, 0.027777778
        %vm10608 = vcmask 73728
        %10609 = vst.msk [vmem:[%s486] sm:$0x1] %vm10608, %v10607
        %s10610 = sand.u32 %s357, 1
        %s10611 = scalar_lea.sflag [#allocation6], %s10610
        %s10612 = sand.u32 %s357, 1
        %s10613 = scalar_lea.vmem [#allocation5], %s10612
        // Predicated region
        $region81: #{basenet_b_forward.1} parent=79 // pred_check
          %p10614 = pneg %p367
        $region82: #{basenet_b_forward.1} parent=79 // pred_check_branch
          %10616 = sbr.rel (%p10614) target = $region84
        $region83: #{basenet_b_forward.1} parent=79 // pred_region
          %s10618 = ssub.s32 16, 16
          %10619 = vsyncadd %s10611, %s10618
          %s10620 = smul.addr %s29, 16
          %s10621 = scalar_lea.hbm %s15, %s10620
          %s10623 = sshll.u32 %s10613, 4
          %s10624 = int_to_ptr.vmem [resolvable:$true] %s10623
          %10626 = dma.vmem_to_hbm [thread:$0]  %s10624, 16, %s10621, %s10611
        $region84: #{basenet_b_forward.1} parent=79 // pred_fallthru
          _
      $region80: #{basenet_b_forward.1} parent=5 // pred_fallthru
        _
      %p10627 = scmp.le.s32.totalorder 2, %s24
      // Predicated region
      $region85: #{basenet_b_forward.1} parent=5 // pred_check
        %p10628 = pneg %p10627
      $region86: #{basenet_b_forward.1} parent=5 // pred_check_branch
        %10630 = sbr.rel (%p10628) target = $region88
      $region87: #{basenet_b_forward.1} parent=5 // pred_region
        %s10631 = ssub.s32 %s24, 2
        // Predicated region
        $region89: #{basenet_b_forward.1} parent=87 // pred_check
          %p10632 = pneg %p373
        $region90: #{basenet_b_forward.1} parent=87 // pred_check_branch
          %10634 = sbr.rel (%p10632) target = $region92
        $region91: #{basenet_b_forward.1} parent=87 // pred_region
          %s10635 = sand.u32 %s358, 1
          %s10636 = scalar_lea.sflag [#allocation6], %s10635
          %s10637 = sand.u32 %s358, 1
          %s10638 = scalar_lea.vmem [#allocation5], %s10637
          %10639 = dma.done %s10636, 16
        $region92: #{basenet_b_forward.1} parent=87 // pred_fallthru
          _
      $region88: #{basenet_b_forward.1} parent=5 // pred_fallthru
        _
    $region6: #{basenet_b_forward.1} parent=1 // loop_footer
      %s28 = sadd.s32 1, %s24
    $region7: #{basenet_b_forward.1} parent=1 // loop_footer_branch
      %23 = sbr.rel target = $region3
    $region8: #{basenet_b_forward.1} parent=1 // loop_exit
      _
    %10640 = vsyncpa [#allocation6], 1
    %s10641 = scalar_lea.sflag [#allocation6], 1
    %10642 = vsyncpa %s10641, 1

</llo_original>
